<compile_context>
chip_gen: v6e
topology: v6e:2x2x1
jax: 0.10.0
libtpu: 0.0.40
codegen_flags: <defaults>
</compile_context>

<pallas_src>
import jax
import jax.numpy as jnp
from jax import lax
from jax.experimental import pallas as pl
from jax.experimental.pallas import tpu as pltpu


def _sigmoid(x):
    # keep the divide on the EUP (approx reciprocal) alongside exp/tanh
    return pl.reciprocal(1.0 + jnp.exp(-x), approx=True)


def _conv3x3_relu(xp_ref, w_ref, b_ref):
    """3x3 'valid' conv over a pre-padded (H+2, W+2, Cin) VMEM tile.

    w_ref is the im2col-reshaped weight (9*Cin, Cout).  Returns
    relu(conv + bias) as an (H*W, Cout) f32 value, rows ordered h*W + w.
    """
    Hp, Wp, Cin = xp_ref.shape
    H, W = Hp - 2, Wp - 2
    Cout = b_ref.shape[-1]
    taps = [xp_ref[kh:kh + H, kw:kw + W, :].reshape(H * W, Cin).astype(w_ref.dtype)
            for kh in range(3) for kw in range(3)]
    if Cin % 8 == 0:
        # im2col: one deep-K matmul actually fills the MXU's systolic depth
        patches = jnp.concatenate(taps, axis=-1)                     # (H*W, 9*Cin)
        acc = jnp.dot(patches, w_ref[...], preferred_element_type=jnp.float32)
    else:
        # narrow channels: 9 flat per-tap matmuls, no broadcasts / batched dots
        acc = jnp.zeros((H * W, Cout), jnp.float32)
        for t, tap in enumerate(taps):
            acc = acc + jnp.dot(tap, w_ref[t * Cin:(t + 1) * Cin, :],
                                preferred_element_type=jnp.float32)
    return jnp.maximum(acc + b_ref[...], 0.0)


def _maxpool2x2(conv2d, H, W):
    """2x2/2 max-pool of an (H*W, C) map (rows = h*W + w) -> (H/2*W/2, C)."""
    _, C = conv2d.shape
    h2, w2 = H // 2, W // 2
    # height: pair adjacent rows-of-W via a layout-preserving leading reshape
    c4 = conv2d.reshape(h2, 2, W, C)
    hp = jnp.maximum(c4[:, 0], c4[:, 1]).reshape(h2 * W, C)          # (h2*W, C)
    # width: ONE one-hot gather matmul producing [even rows ; odd rows], then max
    n_out, n_in = h2 * w2, h2 * W
    row = lax.broadcasted_iota(jnp.int32, (2 * n_out, n_in), 0)
    col = lax.broadcasted_iota(jnp.int32, (2 * n_out, n_in), 1)
    src = jnp.where(row < n_out, 2 * row, 2 * (row - n_out) + 1)
    sel = (col == src).astype(jnp.float32)
    both = jnp.dot(sel, hp, preferred_element_type=jnp.float32)      # (2*n_out, C)
    return jnp.maximum(both[:n_out], both[n_out:])                   # (h2*w2, C)


def _crnn_kernel(x_ref, w1_ref, b1_ref, w2_ref, b2_ref,
                 wih_f_ref, whh_f_ref, bias_f_ref,
                 wih_b_ref, whh_b_ref, bias_b_ref,
                 fcw_f_ref, fcw_b_ref, fcb_ref,
                 o_ref, pad1_ref, pad2_ref):
    _, H1, W1, _ = x_ref.shape
    H2, W2 = H1 // 2, W1 // 2

    # ---------------- conv1 (3x3, pad 1) + ReLU + maxpool 2x2 ----------------
    pad1_ref[...] = jnp.zeros(pad1_ref.shape, pad1_ref.dtype)
    pad1_ref[1:H1 + 1, 1:W1 + 1, :] = x_ref[0]
    c1 = _conv3x3_relu(pad1_ref, w1_ref, b1_ref)         # (H1*W1, 64)
    p1 = _maxpool2x2(c1, H1, W1)                         # (H2*W2, 64)

    # ---------------- conv2 (3x3, pad 1) + ReLU + maxpool 2x2 ----------------
    pad2_ref[...] = jnp.zeros(pad2_ref.shape, pad2_ref.dtype)
    pad2_ref[1:H2 + 1, 1:W2 + 1, :] = p1.reshape(H2, W2, p1.shape[-1])
    c2 = _conv3x3_relu(pad2_ref, w2_ref, b2_ref)         # (H2*W2, 128)
    seq = _maxpool2x2(c2, H2, W2)                        # (T, 128); t = h*(W1//4)+w

    # --------------- bidirectional LSTM (last timestep) + Linear -------------
    T = seq.shape[0]
    Hh = whh_f_ref.shape[0]

    def gates(pre):                                      # PyTorch order [i, f, g, o]
        i = _sigmoid(pre[:, 0 * Hh:1 * Hh])
        f = _sigmoid(pre[:, 1 * Hh:2 * Hh])
        g = jnp.tanh(pre[:, 2 * Hh:3 * Hh])
        o = _sigmoid(pre[:, 3 * Hh:4 * Hh])
        return i, f, g, o

    # forward direction: hoist the (T,D)x(D,4H) input projection out of the
    # recurrence; the serial path per step is one (1,H)x(H,4H) matmul + gates.
    xw = (jnp.dot(seq, wih_f_ref[...], preferred_element_type=jnp.float32)
          + bias_f_ref[...])                             # (T, 4H)
    whh_f = whh_f_ref[...]
    h = jnp.zeros((1, Hh), jnp.float32)
    c = jnp.zeros((1, Hh), jnp.float32)
    for t in range(T):                                   # static trip count -> unrolled
        pre = xw[t:t + 1, :] + jnp.dot(h, whh_f, preferred_element_type=jnp.float32)
        i, f, g, o = gates(pre)
        c = f * c + i * g
        h = o * jnp.tanh(c)
    h_fwd = h

    # reverse direction at t = T-1 is its first step from the zero state
    pre_b = (jnp.dot(seq[T - 1:T, :], wih_b_ref[...],
                     preferred_element_type=jnp.float32) + bias_b_ref[...])
    i, _, g, o = gates(pre_b)
    h_bwd = o * jnp.tanh(i * g)

    o_ref[0] = (jnp.dot(h_fwd, fcw_f_ref[...], preferred_element_type=jnp.float32)
                + jnp.dot(h_bwd, fcw_b_ref[...], preferred_element_type=jnp.float32)
                + fcb_ref[...])


def init_params(key, in_ch, hidden, num_classes):
    ks = jax.random.split(key, 13)
    s = 0.1
    D = 128
    return {
        "w1": s * jax.random.normal(ks[0], (3, 3, in_ch, 64), jnp.float32),
        "b1": s * jax.random.normal(ks[1], (1, 64), jnp.float32),
        "w2": s * jax.random.normal(ks[2], (3, 3, 64, 128), jnp.float32),
        "b2": s * jax.random.normal(ks[3], (1, 128), jnp.float32),
        # gate-fused LSTM params, gate order [i, f, g, o] along the last axis
        "wih_f": s * jax.random.normal(ks[4], (D, 4 * hidden), jnp.float32),
        "whh_f": s * jax.random.normal(ks[5], (hidden, 4 * hidden), jnp.float32),
        "b_f": s * jax.random.normal(ks[6], (1, 4 * hidden), jnp.float32),
        "wih_b": s * jax.random.normal(ks[7], (D, 4 * hidden), jnp.float32),
        "whh_b": s * jax.random.normal(ks[8], (hidden, 4 * hidden), jnp.float32),
        "b_b": s * jax.random.normal(ks[9], (1, 4 * hidden), jnp.float32),
        "fcw_f": s * jax.random.normal(ks[10], (hidden, num_classes), jnp.float32),
        "fcw_b": s * jax.random.normal(ks[11], (hidden, num_classes), jnp.float32),
        "fcb": s * jax.random.normal(ks[12], (1, num_classes), jnp.float32),
    }


@jax.jit
def crnn_forward(x_nchw, params):
    # PyTorch input is NCHW -> NHWC for the fused kernel.
    x = jnp.transpose(x_nchw, (0, 2, 3, 1)).astype(jnp.float32)
    N, H, W, Cin = x.shape
    assert H % 4 == 0 and W % 4 == 0, "two 2x2 pools require H, W % 4 == 0"
    K = params["fcb"].shape[-1]

    # conv weights in im2col layout (9*Cin, Cout); the wide layer feeds the MXU
    # in bf16 with f32 accumulation.
    w1 = params["w1"].reshape(9 * Cin, 64)
    w2 = params["w2"].reshape(9 * 64, 128).astype(jnp.bfloat16)

    def rep(arr):  # whole-array block, same block every grid step (DMA'd once)
        nd = arr.ndim
        return pl.BlockSpec(arr.shape, lambda n, _nd=nd: (0,) * _nd)

    weights = (w1, params["b1"], w2, params["b2"],
               params["wih_f"], params["whh_f"], params["b_f"],
               params["wih_b"], params["whh_b"], params["b_b"],
               params["fcw_f"], params["fcw_b"], params["fcb"])

    out = pl.pallas_call(
        _crnn_kernel,
        out_shape=jax.ShapeDtypeStruct((N, 1, K), jnp.float32),
        grid=(N,),
        in_specs=[pl.BlockSpec((1, H, W, Cin), lambda n: (n, 0, 0, 0))]
                 + [rep(a) for a in weights],
        out_specs=pl.BlockSpec((1, 1, K), lambda n: (n, 0, 0)),
        scratch_shapes=[
            pltpu.VMEM((H + 2, W + 2, Cin), jnp.float32),          # padded conv1 input
            pltpu.VMEM((H // 2 + 2, W // 2 + 2, 64), jnp.float32),  # padded conv2 input
        ],
        compiler_params=pltpu.CompilerParams(
            dimension_semantics=("parallel",)),
    )(x, *weights)
    return out.reshape(N, K)


if __name__ == "__main__":
    B, Cin, Himg, Wimg = 2, 4, 16, 16
    hidden, num_classes = 32, 8

    key = jax.random.PRNGKey(0)
    kp, kx = jax.random.split(key)
    params = init_params(kp, Cin, hidden, num_classes)
    x = jax.random.normal(kx, (B, Cin, Himg, Wimg), jnp.float32)  # NCHW like PyTorch

    out = jax.block_until_ready(crnn_forward(x, params))
    assert out.shape == (B, num_classes), out.shape
    assert bool(jnp.all(jnp.isfinite(out)))
    print("KERNEL_OK")
</pallas_src>

<mosaic_0001>
module attributes {stable_mosaic.version = 11 : i64} {
  func.func @_crnn_kernel(%arg0: i32, %arg1: memref<1x16x16x4xf32, #tpu.memory_space<vmem>>, %arg2: memref<36x64xf32, #tpu.memory_space<vmem>>, %arg3: memref<1x64xf32, #tpu.memory_space<vmem>>, %arg4: memref<576x128xbf16, #tpu.memory_space<vmem>>, %arg5: memref<1x128xf32, #tpu.memory_space<vmem>>, %arg6: memref<128x128xf32, #tpu.memory_space<vmem>>, %arg7: memref<32x128xf32, #tpu.memory_space<vmem>>, %arg8: memref<1x128xf32, #tpu.memory_space<vmem>>, %arg9: memref<128x128xf32, #tpu.memory_space<vmem>>, %arg10: memref<32x128xf32, #tpu.memory_space<vmem>>, %arg11: memref<1x128xf32, #tpu.memory_space<vmem>>, %arg12: memref<32x8xf32, #tpu.memory_space<vmem>>, %arg13: memref<32x8xf32, #tpu.memory_space<vmem>>, %arg14: memref<1x8xf32, #tpu.memory_space<vmem>>, %arg15: memref<1x1x8xf32, #tpu.memory_space<vmem>>, %arg16: memref<18x18x4xf32, #tpu.memory_space<vmem>>, %arg17: memref<10x10x64xf32, #tpu.memory_space<vmem>>) attributes {dimension_semantics = [#tpu.dimension_semantics<parallel>], iteration_bounds = array<i64: 2>, scalar_prefetch = 0 : i64, scratch_operands = 2 : i64, tpu.core_type = #tpu.core_type<tc>, window_params = [{transform_indices = @transform_0, window_bounds = array<i64: 1, 16, 16, 4>}, {pipeline_mode = #tpu.pipeline_mode<synchronous>, transform_indices = @transform_1, window_bounds = array<i64: 36, 64>}, {pipeline_mode = #tpu.pipeline_mode<synchronous>, transform_indices = @transform_2, window_bounds = array<i64: 1, 64>}, {pipeline_mode = #tpu.pipeline_mode<synchronous>, transform_indices = @transform_3, window_bounds = array<i64: 576, 128>}, {pipeline_mode = #tpu.pipeline_mode<synchronous>, transform_indices = @transform_4, window_bounds = array<i64: 1, 128>}, {pipeline_mode = #tpu.pipeline_mode<synchronous>, transform_indices = @transform_5, window_bounds = array<i64: 128, 128>}, {pipeline_mode = #tpu.pipeline_mode<synchronous>, transform_indices = @transform_6, window_bounds = array<i64: 32, 128>}, {pipeline_mode = #tpu.pipeline_mode<synchronous>, transform_indices = @transform_7, window_bounds = array<i64: 1, 128>}, {pipeline_mode = #tpu.pipeline_mode<synchronous>, transform_indices = @transform_8, window_bounds = array<i64: 128, 128>}, {pipeline_mode = #tpu.pipeline_mode<synchronous>, transform_indices = @transform_9, window_bounds = array<i64: 32, 128>}, {pipeline_mode = #tpu.pipeline_mode<synchronous>, transform_indices = @transform_10, window_bounds = array<i64: 1, 128>}, {pipeline_mode = #tpu.pipeline_mode<synchronous>, transform_indices = @transform_11, window_bounds = array<i64: 32, 8>}, {pipeline_mode = #tpu.pipeline_mode<synchronous>, transform_indices = @transform_12, window_bounds = array<i64: 32, 8>}, {pipeline_mode = #tpu.pipeline_mode<synchronous>, transform_indices = @transform_13, window_bounds = array<i64: 1, 8>}, {transform_indices = @transform_14, window_bounds = array<i64: 1, 1, 8>}]} {
    %cst = arith.constant 0.000000e+00 : f32
    %0 = vector.broadcast %cst : f32 to vector<18x18x4xf32>
    %c0 = arith.constant 0 : index
    %c0_0 = arith.constant 0 : index
    %c0_1 = arith.constant 0 : index
    %1 = vector.load %arg16[%c0, %c0_0, %c0_1] : memref<18x18x4xf32, #tpu.memory_space<vmem>>, vector<18x18x4xf32>
    tpu.vector_store %arg16[%c0, %c0_0, %c0_1], %0 {strides = array<i32>} : memref<18x18x4xf32, #tpu.memory_space<vmem>>, vector<18x18x4xf32>,
    %c0_2 = arith.constant 0 : index
    %c0_3 = arith.constant 0 : index
    %c0_4 = arith.constant 0 : index
    %c0_5 = arith.constant 0 : index
    %2 = vector.load %arg1[%c0_2, %c0_3, %c0_4, %c0_5] : memref<1x16x16x4xf32, #tpu.memory_space<vmem>>, vector<1x16x16x4xf32>
    %3 = vector.shape_cast %2 : vector<1x16x16x4xf32> to vector<16x16x4xf32>
    %c1 = arith.constant 1 : index
    %c1_6 = arith.constant 1 : index
    %c0_7 = arith.constant 0 : index
    %4 = vector.load %arg16[%c1, %c1_6, %c0_7] : memref<18x18x4xf32, #tpu.memory_space<vmem>>, vector<16x16x4xf32>
    tpu.vector_store %arg16[%c1, %c1_6, %c0_7], %3 {strides = array<i32>} : memref<18x18x4xf32, #tpu.memory_space<vmem>>, vector<16x16x4xf32>,
    %c0_8 = arith.constant 0 : index
    %c0_9 = arith.constant 0 : index
    %c0_10 = arith.constant 0 : index
    %5 = vector.load %arg16[%c0_8, %c0_9, %c0_10] : memref<18x18x4xf32, #tpu.memory_space<vmem>>, vector<16x16x4xf32>
    %6 = vector.shape_cast %5 : vector<16x16x4xf32> to vector<256x4xf32>
    %c0_11 = arith.constant 0 : index
    %c1_12 = arith.constant 1 : index
    %c0_13 = arith.constant 0 : index
    %7 = vector.load %arg16[%c0_11, %c1_12, %c0_13] : memref<18x18x4xf32, #tpu.memory_space<vmem>>, vector<16x16x4xf32>
    %8 = vector.shape_cast %7 : vector<16x16x4xf32> to vector<256x4xf32>
    %c0_14 = arith.constant 0 : index
    %c2 = arith.constant 2 : index
    %c0_15 = arith.constant 0 : index
    %9 = vector.load %arg16[%c0_14, %c2, %c0_15] : memref<18x18x4xf32, #tpu.memory_space<vmem>>, vector<16x16x4xf32>
    %10 = vector.shape_cast %9 : vector<16x16x4xf32> to vector<256x4xf32>
    %c1_16 = arith.constant 1 : index
    %c0_17 = arith.constant 0 : index
    %c0_18 = arith.constant 0 : index
    %11 = vector.load %arg16[%c1_16, %c0_17, %c0_18] : memref<18x18x4xf32, #tpu.memory_space<vmem>>, vector<16x16x4xf32>
    %12 = vector.shape_cast %11 : vector<16x16x4xf32> to vector<256x4xf32>
    %c1_19 = arith.constant 1 : index
    %c1_20 = arith.constant 1 : index
    %c0_21 = arith.constant 0 : index
    %13 = vector.load %arg16[%c1_19, %c1_20, %c0_21] : memref<18x18x4xf32, #tpu.memory_space<vmem>>, vector<16x16x4xf32>
    %14 = vector.shape_cast %13 : vector<16x16x4xf32> to vector<256x4xf32>
    %c1_22 = arith.constant 1 : index
    %c2_23 = arith.constant 2 : index
    %c0_24 = arith.constant 0 : index
    %15 = vector.load %arg16[%c1_22, %c2_23, %c0_24] : memref<18x18x4xf32, #tpu.memory_space<vmem>>, vector<16x16x4xf32>
    %16 = vector.shape_cast %15 : vector<16x16x4xf32> to vector<256x4xf32>
    %c2_25 = arith.constant 2 : index
    %c0_26 = arith.constant 0 : index
    %c0_27 = arith.constant 0 : index
    %17 = vector.load %arg16[%c2_25, %c0_26, %c0_27] : memref<18x18x4xf32, #tpu.memory_space<vmem>>, vector<16x16x4xf32>
    %18 = vector.shape_cast %17 : vector<16x16x4xf32> to vector<256x4xf32>
    %c2_28 = arith.constant 2 : index
    %c1_29 = arith.constant 1 : index
    %c0_30 = arith.constant 0 : index
    %19 = vector.load %arg16[%c2_28, %c1_29, %c0_30] : memref<18x18x4xf32, #tpu.memory_space<vmem>>, vector<16x16x4xf32>
    %20 = vector.shape_cast %19 : vector<16x16x4xf32> to vector<256x4xf32>
    %c2_31 = arith.constant 2 : index
    %c2_32 = arith.constant 2 : index
    %c0_33 = arith.constant 0 : index
    %21 = vector.load %arg16[%c2_31, %c2_32, %c0_33] : memref<18x18x4xf32, #tpu.memory_space<vmem>>, vector<16x16x4xf32>
    %22 = vector.shape_cast %21 : vector<16x16x4xf32> to vector<256x4xf32>
    %cst_34 = arith.constant 0.000000e+00 : f32
    %23 = vector.broadcast %cst_34 : f32 to vector<256x64xf32>
    %c0_35 = arith.constant 0 : index
    %c0_36 = arith.constant 0 : index
    %24 = vector.load %arg2[%c0_35, %c0_36] : memref<36x64xf32, #tpu.memory_space<vmem>>, vector<4x64xf32>
    %cst_37 = arith.constant dense<0.000000e+00> : vector<256x64xf32>
    %25 = tpu.matmul %6, %24, %cst_37 {dimension_numbers = #tpu.dot_dimension_numbers<[1], [0], [0], [1], [0, 0, 1, 1], [], []>} : vector<256x4xf32>, vector<4x64xf32>, vector<256x64xf32> -> vector<256x64xf32>
    %26 = arith.addf %23, %25 : vector<256x64xf32>
    %c4 = arith.constant 4 : index
    %c0_38 = arith.constant 0 : index
    %27 = vector.load %arg2[%c4, %c0_38] : memref<36x64xf32, #tpu.memory_space<vmem>>, vector<4x64xf32>
    %cst_39 = arith.constant dense<0.000000e+00> : vector<256x64xf32>
    %28 = tpu.matmul %8, %27, %cst_39 {dimension_numbers = #tpu.dot_dimension_numbers<[1], [0], [0], [1], [0, 0, 1, 1], [], []>} : vector<256x4xf32>, vector<4x64xf32>, vector<256x64xf32> -> vector<256x64xf32>
    %29 = arith.addf %26, %28 : vector<256x64xf32>
    %c8 = arith.constant 8 : index
    %c0_40 = arith.constant 0 : index
    %30 = vector.load %arg2[%c8, %c0_40] : memref<36x64xf32, #tpu.memory_space<vmem>>, vector<4x64xf32>
    %cst_41 = arith.constant dense<0.000000e+00> : vector<256x64xf32>
    %31 = tpu.matmul %10, %30, %cst_41 {dimension_numbers = #tpu.dot_dimension_numbers<[1], [0], [0], [1], [0, 0, 1, 1], [], []>} : vector<256x4xf32>, vector<4x64xf32>, vector<256x64xf32> -> vector<256x64xf32>
    %32 = arith.addf %29, %31 : vector<256x64xf32>
    %c12 = arith.constant 12 : index
    %c0_42 = arith.constant 0 : index
    %33 = vector.load %arg2[%c12, %c0_42] : memref<36x64xf32, #tpu.memory_space<vmem>>, vector<4x64xf32>
    %cst_43 = arith.constant dense<0.000000e+00> : vector<256x64xf32>
    %34 = tpu.matmul %12, %33, %cst_43 {dimension_numbers = #tpu.dot_dimension_numbers<[1], [0], [0], [1], [0, 0, 1, 1], [], []>} : vector<256x4xf32>, vector<4x64xf32>, vector<256x64xf32> -> vector<256x64xf32>
    %35 = arith.addf %32, %34 : vector<256x64xf32>
    %c16 = arith.constant 16 : index
    %c0_44 = arith.constant 0 : index
    %36 = vector.load %arg2[%c16, %c0_44] : memref<36x64xf32, #tpu.memory_space<vmem>>, vector<4x64xf32>
    %cst_45 = arith.constant dense<0.000000e+00> : vector<256x64xf32>
    %37 = tpu.matmul %14, %36, %cst_45 {dimension_numbers = #tpu.dot_dimension_numbers<[1], [0], [0], [1], [0, 0, 1, 1], [], []>} : vector<256x4xf32>, vector<4x64xf32>, vector<256x64xf32> -> vector<256x64xf32>
    %38 = arith.addf %35, %37 : vector<256x64xf32>
    %c20 = arith.constant 20 : index
    %c0_46 = arith.constant 0 : index
    %39 = vector.load %arg2[%c20, %c0_46] : memref<36x64xf32, #tpu.memory_space<vmem>>, vector<4x64xf32>
    %cst_47 = arith.constant dense<0.000000e+00> : vector<256x64xf32>
    %40 = tpu.matmul %16, %39, %cst_47 {dimension_numbers = #tpu.dot_dimension_numbers<[1], [0], [0], [1], [0, 0, 1, 1], [], []>} : vector<256x4xf32>, vector<4x64xf32>, vector<256x64xf32> -> vector<256x64xf32>
    %41 = arith.addf %38, %40 : vector<256x64xf32>
    %c24 = arith.constant 24 : index
    %c0_48 = arith.constant 0 : index
    %42 = vector.load %arg2[%c24, %c0_48] : memref<36x64xf32, #tpu.memory_space<vmem>>, vector<4x64xf32>
    %cst_49 = arith.constant dense<0.000000e+00> : vector<256x64xf32>
    %43 = tpu.matmul %18, %42, %cst_49 {dimension_numbers = #tpu.dot_dimension_numbers<[1], [0], [0], [1], [0, 0, 1, 1], [], []>} : vector<256x4xf32>, vector<4x64xf32>, vector<256x64xf32> -> vector<256x64xf32>
    %44 = arith.addf %41, %43 : vector<256x64xf32>
    %c28 = arith.constant 28 : index
    %c0_50 = arith.constant 0 : index
    %45 = vector.load %arg2[%c28, %c0_50] : memref<36x64xf32, #tpu.memory_space<vmem>>, vector<4x64xf32>
    %cst_51 = arith.constant dense<0.000000e+00> : vector<256x64xf32>
    %46 = tpu.matmul %20, %45, %cst_51 {dimension_numbers = #tpu.dot_dimension_numbers<[1], [0], [0], [1], [0, 0, 1, 1], [], []>} : vector<256x4xf32>, vector<4x64xf32>, vector<256x64xf32> -> vector<256x64xf32>
    %47 = arith.addf %44, %46 : vector<256x64xf32>
    %c32 = arith.constant 32 : index
    %c0_52 = arith.constant 0 : index
    %48 = vector.load %arg2[%c32, %c0_52] : memref<36x64xf32, #tpu.memory_space<vmem>>, vector<4x64xf32>
    %cst_53 = arith.constant dense<0.000000e+00> : vector<256x64xf32>
    %49 = tpu.matmul %22, %48, %cst_53 {dimension_numbers = #tpu.dot_dimension_numbers<[1], [0], [0], [1], [0, 0, 1, 1], [], []>} : vector<256x4xf32>, vector<4x64xf32>, vector<256x64xf32> -> vector<256x64xf32>
    %50 = arith.addf %47, %49 : vector<256x64xf32>
    %c0_54 = arith.constant 0 : index
    %c0_55 = arith.constant 0 : index
    %51 = vector.load %arg3[%c0_54, %c0_55] : memref<1x64xf32, #tpu.memory_space<vmem>>, vector<1x64xf32>
    %52 = vector.broadcast %51 : vector<1x64xf32> to vector<256x64xf32>
    %53 = arith.addf %50, %52 : vector<256x64xf32>
    %cst_56 = arith.constant 0.000000e+00 : f32
    %54 = vector.broadcast %cst_56 : f32 to vector<256x64xf32>
    %55 = arith.maximumf %53, %54 : vector<256x64xf32>
    %56 = vector.shape_cast %55 : vector<256x64xf32> to vector<8x2x16x64xf32>
    %57 = vector.extract_strided_slice %56 {offsets = [0, 0, 0, 0], sizes = [8, 1, 16, 64], strides = [1, 1, 1, 1]} : vector<8x2x16x64xf32> to vector<8x1x16x64xf32>
    %58 = vector.shape_cast %57 : vector<8x1x16x64xf32> to vector<8x16x64xf32>
    %59 = vector.extract_strided_slice %56 {offsets = [0, 1, 0, 0], sizes = [8, 1, 16, 64], strides = [1, 1, 1, 1]} : vector<8x2x16x64xf32> to vector<8x1x16x64xf32>
    %60 = vector.shape_cast %59 : vector<8x1x16x64xf32> to vector<8x16x64xf32>
    %61 = arith.maximumf %58, %60 : vector<8x16x64xf32>
    %62 = vector.shape_cast %61 : vector<8x16x64xf32> to vector<128x64xf32>
    %63 = tpu.iota {dimensions = array<i32: 0>} : vector<128x128xi32>
    %64 = tpu.iota {dimensions = array<i32: 1>} : vector<128x128xi32>
    %c64_i32 = arith.constant 64 : i32
    %65 = vector.broadcast %c64_i32 : i32 to vector<128x128xi32>
    %66 = arith.cmpi slt, %63, %65 : vector<128x128xi32>
    %c2_i32 = arith.constant 2 : i32
    %67 = vector.broadcast %c2_i32 : i32 to vector<128x128xi32>
    %68 = arith.muli %67, %63 : vector<128x128xi32>
    %c64_i32_57 = arith.constant 64 : i32
    %69 = vector.broadcast %c64_i32_57 : i32 to vector<128x128xi32>
    %70 = arith.subi %63, %69 : vector<128x128xi32>
    %c2_i32_58 = arith.constant 2 : i32
    %71 = vector.broadcast %c2_i32_58 : i32 to vector<128x128xi32>
    %72 = arith.muli %71, %70 : vector<128x128xi32>
    %c1_i32 = arith.constant 1 : i32
    %73 = vector.broadcast %c1_i32 : i32 to vector<128x128xi32>
    %74 = arith.addi %72, %73 : vector<128x128xi32>
    %75 = arith.select %66, %68, %74 : vector<128x128xi1>, vector<128x128xi32>
    %76 = arith.cmpi eq, %64, %75 : vector<128x128xi32>
    %77 = arith.extui %76 : vector<128x128xi1> to vector<128x128xi32>
    %78 = arith.sitofp %77 : vector<128x128xi32> to vector<128x128xf32>
    %cst_59 = arith.constant dense<0.000000e+00> : vector<128x64xf32>
    %79 = tpu.matmul %78, %62, %cst_59 {dimension_numbers = #tpu.dot_dimension_numbers<[1], [0], [0], [1], [0, 0, 1, 1], [], []>} : vector<128x128xf32>, vector<128x64xf32>, vector<128x64xf32> -> vector<128x64xf32>
    %80 = vector.extract_strided_slice %79 {offsets = [0, 0], sizes = [64, 64], strides = [1, 1]} : vector<128x64xf32> to vector<64x64xf32>
    %81 = vector.extract_strided_slice %79 {offsets = [64, 0], sizes = [64, 64], strides = [1, 1]} : vector<128x64xf32> to vector<64x64xf32>
    %82 = arith.maximumf %80, %81 : vector<64x64xf32>
    %cst_60 = arith.constant 0.000000e+00 : f32
    %83 = vector.broadcast %cst_60 : f32 to vector<10x10x64xf32>
    %c0_61 = arith.constant 0 : index
    %c0_62 = arith.constant 0 : index
    %c0_63 = arith.constant 0 : index
    %84 = vector.load %arg17[%c0_61, %c0_62, %c0_63] : memref<10x10x64xf32, #tpu.memory_space<vmem>>, vector<10x10x64xf32>
    tpu.vector_store %arg17[%c0_61, %c0_62, %c0_63], %83 {strides = array<i32>} : memref<10x10x64xf32, #tpu.memory_space<vmem>>, vector<10x10x64xf32>,
    %85 = vector.shape_cast %82 : vector<64x64xf32> to vector<8x8x64xf32>
    %c1_64 = arith.constant 1 : index
    %c1_65 = arith.constant 1 : index
    %c0_66 = arith.constant 0 : index
    %86 = vector.load %arg17[%c1_64, %c1_65, %c0_66] : memref<10x10x64xf32, #tpu.memory_space<vmem>>, vector<8x8x64xf32>
    tpu.vector_store %arg17[%c1_64, %c1_65, %c0_66], %85 {strides = array<i32>} : memref<10x10x64xf32, #tpu.memory_space<vmem>>, vector<8x8x64xf32>,
    %c0_67 = arith.constant 0 : index
    %c0_68 = arith.constant 0 : index
    %c0_69 = arith.constant 0 : index
    %87 = vector.load %arg17[%c0_67, %c0_68, %c0_69] : memref<10x10x64xf32, #tpu.memory_space<vmem>>, vector<8x8x64xf32>
    %88 = vector.shape_cast %87 : vector<8x8x64xf32> to vector<64x64xf32>
    %89 = arith.truncf %88 : vector<64x64xf32> to vector<64x64xbf16>
    %c0_70 = arith.constant 0 : index
    %c1_71 = arith.constant 1 : index
    %c0_72 = arith.constant 0 : index
    %90 = vector.load %arg17[%c0_70, %c1_71, %c0_72] : memref<10x10x64xf32, #tpu.memory_space<vmem>>, vector<8x8x64xf32>
    %91 = vector.shape_cast %90 : vector<8x8x64xf32> to vector<64x64xf32>
    %92 = arith.truncf %91 : vector<64x64xf32> to vector<64x64xbf16>
    %c0_73 = arith.constant 0 : index
    %c2_74 = arith.constant 2 : index
    %c0_75 = arith.constant 0 : index
    %93 = vector.load %arg17[%c0_73, %c2_74, %c0_75] : memref<10x10x64xf32, #tpu.memory_space<vmem>>, vector<8x8x64xf32>
    %94 = vector.shape_cast %93 : vector<8x8x64xf32> to vector<64x64xf32>
    %95 = arith.truncf %94 : vector<64x64xf32> to vector<64x64xbf16>
    %c1_76 = arith.constant 1 : index
    %c0_77 = arith.constant 0 : index
    %c0_78 = arith.constant 0 : index
    %96 = vector.load %arg17[%c1_76, %c0_77, %c0_78] : memref<10x10x64xf32, #tpu.memory_space<vmem>>, vector<8x8x64xf32>
    %97 = vector.shape_cast %96 : vector<8x8x64xf32> to vector<64x64xf32>
    %98 = arith.truncf %97 : vector<64x64xf32> to vector<64x64xbf16>
    %c1_79 = arith.constant 1 : index
    %c1_80 = arith.constant 1 : index
    %c0_81 = arith.constant 0 : index
    %99 = vector.load %arg17[%c1_79, %c1_80, %c0_81] : memref<10x10x64xf32, #tpu.memory_space<vmem>>, vector<8x8x64xf32>
    %100 = vector.shape_cast %99 : vector<8x8x64xf32> to vector<64x64xf32>
    %101 = arith.truncf %100 : vector<64x64xf32> to vector<64x64xbf16>
    %c1_82 = arith.constant 1 : index
    %c2_83 = arith.constant 2 : index
    %c0_84 = arith.constant 0 : index
    %102 = vector.load %arg17[%c1_82, %c2_83, %c0_84] : memref<10x10x64xf32, #tpu.memory_space<vmem>>, vector<8x8x64xf32>
    %103 = vector.shape_cast %102 : vector<8x8x64xf32> to vector<64x64xf32>
    %104 = arith.truncf %103 : vector<64x64xf32> to vector<64x64xbf16>
    %c2_85 = arith.constant 2 : index
    %c0_86 = arith.constant 0 : index
    %c0_87 = arith.constant 0 : index
    %105 = vector.load %arg17[%c2_85, %c0_86, %c0_87] : memref<10x10x64xf32, #tpu.memory_space<vmem>>, vector<8x8x64xf32>
    %106 = vector.shape_cast %105 : vector<8x8x64xf32> to vector<64x64xf32>
    %107 = arith.truncf %106 : vector<64x64xf32> to vector<64x64xbf16>
    %c2_88 = arith.constant 2 : index
    %c1_89 = arith.constant 1 : index
    %c0_90 = arith.constant 0 : index
    %108 = vector.load %arg17[%c2_88, %c1_89, %c0_90] : memref<10x10x64xf32, #tpu.memory_space<vmem>>, vector<8x8x64xf32>
    %109 = vector.shape_cast %108 : vector<8x8x64xf32> to vector<64x64xf32>
    %110 = arith.truncf %109 : vector<64x64xf32> to vector<64x64xbf16>
    %c2_91 = arith.constant 2 : index
    %c2_92 = arith.constant 2 : index
    %c0_93 = arith.constant 0 : index
    %111 = vector.load %arg17[%c2_91, %c2_92, %c0_93] : memref<10x10x64xf32, #tpu.memory_space<vmem>>, vector<8x8x64xf32>
    %112 = vector.shape_cast %111 : vector<8x8x64xf32> to vector<64x64xf32>
    %113 = arith.truncf %112 : vector<64x64xf32> to vector<64x64xbf16>
    %114 = tpu.concatenate %89, %92, %95, %98, %101, %104, %107, %110, %113 in 1 : vector<64x64xbf16>, vector<64x64xbf16>, vector<64x64xbf16>, vector<64x64xbf16>, vector<64x64xbf16>, vector<64x64xbf16>, vector<64x64xbf16>, vector<64x64xbf16>, vector<64x64xbf16> -> vector<64x576xbf16>
    %c0_94 = arith.constant 0 : index
    %c0_95 = arith.constant 0 : index
    %115 = vector.load %arg4[%c0_94, %c0_95] : memref<576x128xbf16, #tpu.memory_space<vmem>>, vector<576x128xbf16>
    %cst_96 = arith.constant dense<0.000000e+00> : vector<64x128xf32>
    %116 = tpu.matmul %114, %115, %cst_96 {dimension_numbers = #tpu.dot_dimension_numbers<[1], [0], [0], [1], [0, 0, 1, 1], [], []>} : vector<64x576xbf16>, vector<576x128xbf16>, vector<64x128xf32> -> vector<64x128xf32>
    %c0_97 = arith.constant 0 : index
    %c0_98 = arith.constant 0 : index
    %117 = vector.load %arg5[%c0_97, %c0_98] : memref<1x128xf32, #tpu.memory_space<vmem>>, vector<1x128xf32>
    %118 = vector.broadcast %117 : vector<1x128xf32> to vector<64x128xf32>
    %119 = arith.addf %116, %118 : vector<64x128xf32>
    %cst_99 = arith.constant 0.000000e+00 : f32
    %120 = vector.broadcast %cst_99 : f32 to vector<64x128xf32>
    %121 = arith.maximumf %119, %120 : vector<64x128xf32>
    %122 = vector.shape_cast %121 : vector<64x128xf32> to vector<4x2x8x128xf32>
    %123 = vector.extract_strided_slice %122 {offsets = [0, 0, 0, 0], sizes = [4, 1, 8, 128], strides = [1, 1, 1, 1]} : vector<4x2x8x128xf32> to vector<4x1x8x128xf32>
    %124 = vector.shape_cast %123 : vector<4x1x8x128xf32> to vector<4x8x128xf32>
    %125 = vector.extract_strided_slice %122 {offsets = [0, 1, 0, 0], sizes = [4, 1, 8, 128], strides = [1, 1, 1, 1]} : vector<4x2x8x128xf32> to vector<4x1x8x128xf32>
    %126 = vector.shape_cast %125 : vector<4x1x8x128xf32> to vector<4x8x128xf32>
    %127 = arith.maximumf %124, %126 : vector<4x8x128xf32>
    %128 = vector.shape_cast %127 : vector<4x8x128xf32> to vector<32x128xf32>
    %129 = tpu.iota {dimensions = array<i32: 0>} : vector<32x32xi32>
    %130 = tpu.iota {dimensions = array<i32: 1>} : vector<32x32xi32>
    %c16_i32 = arith.constant 16 : i32
    %131 = vector.broadcast %c16_i32 : i32 to vector<32x32xi32>
    %132 = arith.cmpi slt, %129, %131 : vector<32x32xi32>
    %c2_i32_100 = arith.constant 2 : i32
    %133 = vector.broadcast %c2_i32_100 : i32 to vector<32x32xi32>
    %134 = arith.muli %133, %129 : vector<32x32xi32>
    %c16_i32_101 = arith.constant 16 : i32
    %135 = vector.broadcast %c16_i32_101 : i32 to vector<32x32xi32>
    %136 = arith.subi %129, %135 : vector<32x32xi32>
    %c2_i32_102 = arith.constant 2 : i32
    %137 = vector.broadcast %c2_i32_102 : i32 to vector<32x32xi32>
    %138 = arith.muli %137, %136 : vector<32x32xi32>
    %c1_i32_103 = arith.constant 1 : i32
    %139 = vector.broadcast %c1_i32_103 : i32 to vector<32x32xi32>
    %140 = arith.addi %138, %139 : vector<32x32xi32>
    %141 = arith.select %132, %134, %140 : vector<32x32xi1>, vector<32x32xi32>
    %142 = arith.cmpi eq, %130, %141 : vector<32x32xi32>
    %143 = arith.extui %142 : vector<32x32xi1> to vector<32x32xi32>
    %144 = arith.sitofp %143 : vector<32x32xi32> to vector<32x32xf32>
    %cst_104 = arith.constant dense<0.000000e+00> : vector<32x128xf32>
    %145 = tpu.matmul %144, %128, %cst_104 {dimension_numbers = #tpu.dot_dimension_numbers<[1], [0], [0], [1], [0, 0, 1, 1], [], []>} : vector<32x32xf32>, vector<32x128xf32>, vector<32x128xf32> -> vector<32x128xf32>
    %146 = vector.extract_strided_slice %145 {offsets = [0, 0], sizes = [16, 128], strides = [1, 1]} : vector<32x128xf32> to vector<16x128xf32>
    %147 = vector.extract_strided_slice %145 {offsets = [16, 0], sizes = [16, 128], strides = [1, 1]} : vector<32x128xf32> to vector<16x128xf32>
    %148 = arith.maximumf %146, %147 : vector<16x128xf32>
    %c0_105 = arith.constant 0 : index
    %c0_106 = arith.constant 0 : index
    %149 = vector.load %arg6[%c0_105, %c0_106] : memref<128x128xf32, #tpu.memory_space<vmem>>, vector<128x128xf32>
    %cst_107 = arith.constant dense<0.000000e+00> : vector<16x128xf32>
    %150 = tpu.matmul %148, %149, %cst_107 {dimension_numbers = #tpu.dot_dimension_numbers<[1], [0], [0], [1], [0, 0, 1, 1], [], []>} : vector<16x128xf32>, vector<128x128xf32>, vector<16x128xf32> -> vector<16x128xf32>
    %c0_108 = arith.constant 0 : index
    %c0_109 = arith.constant 0 : index
    %151 = vector.load %arg8[%c0_108, %c0_109] : memref<1x128xf32, #tpu.memory_space<vmem>>, vector<1x128xf32>
    %152 = vector.broadcast %151 : vector<1x128xf32> to vector<16x128xf32>
    %153 = arith.addf %150, %152 : vector<16x128xf32>
    %c0_110 = arith.constant 0 : index
    %c0_111 = arith.constant 0 : index
    %154 = vector.load %arg7[%c0_110, %c0_111] : memref<32x128xf32, #tpu.memory_space<vmem>>, vector<32x128xf32>
    %cst_112 = arith.constant 0.000000e+00 : f32
    %155 = vector.broadcast %cst_112 : f32 to vector<1x32xf32>
    %cst_113 = arith.constant 0.000000e+00 : f32
    %156 = vector.broadcast %cst_113 : f32 to vector<1x32xf32>
    %157 = vector.extract_strided_slice %153 {offsets = [0, 0], sizes = [1, 128], strides = [1, 1]} : vector<16x128xf32> to vector<1x128xf32>
    %cst_114 = arith.constant dense<0.000000e+00> : vector<1x128xf32>
    %158 = tpu.matmul %155, %154, %cst_114 {dimension_numbers = #tpu.dot_dimension_numbers<[1], [0], [0], [1], [0, 0, 1, 1], [], []>} : vector<1x32xf32>, vector<32x128xf32>, vector<1x128xf32> -> vector<1x128xf32>
    %159 = arith.addf %157, %158 : vector<1x128xf32>
    %160 = vector.extract_strided_slice %159 {offsets = [0, 0], sizes = [1, 32], strides = [1, 1]} : vector<1x128xf32> to vector<1x32xf32>
    %cst_115 = arith.constant 0.000000e+00 : f32
    %161 = vector.broadcast %cst_115 : f32 to vector<1x32xf32>
    %162 = arith.subf %161, %160 : vector<1x32xf32>
    %163 = math.exp %162 : vector<1x32xf32>
    %cst_116 = arith.constant 1.000000e+00 : f32
    %164 = vector.broadcast %cst_116 : f32 to vector<1x32xf32>
    %165 = arith.addf %164, %163 : vector<1x32xf32>
    %166 = tpu.reciprocal %165 {approx = true} : vector<1x32xf32> -> vector<1x32xf32>
    %167 = vector.extract_strided_slice %159 {offsets = [0, 32], sizes = [1, 32], strides = [1, 1]} : vector<1x128xf32> to vector<1x32xf32>
    %cst_117 = arith.constant 0.000000e+00 : f32
    %168 = vector.broadcast %cst_117 : f32 to vector<1x32xf32>
    %169 = arith.subf %168, %167 : vector<1x32xf32>
    %170 = math.exp %169 : vector<1x32xf32>
    %cst_118 = arith.constant 1.000000e+00 : f32
    %171 = vector.broadcast %cst_118 : f32 to vector<1x32xf32>
    %172 = arith.addf %171, %170 : vector<1x32xf32>
    %173 = tpu.reciprocal %172 {approx = true} : vector<1x32xf32> -> vector<1x32xf32>
    %174 = vector.extract_strided_slice %159 {offsets = [0, 64], sizes = [1, 32], strides = [1, 1]} : vector<1x128xf32> to vector<1x32xf32>
    %175 = math.tanh %174 : vector<1x32xf32>
    %176 = vector.extract_strided_slice %159 {offsets = [0, 96], sizes = [1, 32], strides = [1, 1]} : vector<1x128xf32> to vector<1x32xf32>
    %cst_119 = arith.constant 0.000000e+00 : f32
    %177 = vector.broadcast %cst_119 : f32 to vector<1x32xf32>
    %178 = arith.subf %177, %176 : vector<1x32xf32>
    %179 = math.exp %178 : vector<1x32xf32>
    %cst_120 = arith.constant 1.000000e+00 : f32
    %180 = vector.broadcast %cst_120 : f32 to vector<1x32xf32>
    %181 = arith.addf %180, %179 : vector<1x32xf32>
    %182 = tpu.reciprocal %181 {approx = true} : vector<1x32xf32> -> vector<1x32xf32>
    %183 = arith.mulf %173, %156 : vector<1x32xf32>
    %184 = arith.mulf %166, %175 : vector<1x32xf32>
    %185 = arith.addf %183, %184 : vector<1x32xf32>
    %186 = math.tanh %185 : vector<1x32xf32>
    %187 = arith.mulf %182, %186 : vector<1x32xf32>
    %188 = vector.extract_strided_slice %153 {offsets = [1, 0], sizes = [1, 128], strides = [1, 1]} : vector<16x128xf32> to vector<1x128xf32>
    %cst_121 = arith.constant dense<0.000000e+00> : vector<1x128xf32>
    %189 = tpu.matmul %187, %154, %cst_121 {dimension_numbers = #tpu.dot_dimension_numbers<[1], [0], [0], [1], [0, 0, 1, 1], [], []>} : vector<1x32xf32>, vector<32x128xf32>, vector<1x128xf32> -> vector<1x128xf32>
    %190 = arith.addf %188, %189 : vector<1x128xf32>
    %191 = vector.extract_strided_slice %190 {offsets = [0, 0], sizes = [1, 32], strides = [1, 1]} : vector<1x128xf32> to vector<1x32xf32>
    %cst_122 = arith.constant 0.000000e+00 : f32
    %192 = vector.broadcast %cst_122 : f32 to vector<1x32xf32>
    %193 = arith.subf %192, %191 : vector<1x32xf32>
    %194 = math.exp %193 : vector<1x32xf32>
    %cst_123 = arith.constant 1.000000e+00 : f32
    %195 = vector.broadcast %cst_123 : f32 to vector<1x32xf32>
    %196 = arith.addf %195, %194 : vector<1x32xf32>
    %197 = tpu.reciprocal %196 {approx = true} : vector<1x32xf32> -> vector<1x32xf32>
    %198 = vector.extract_strided_slice %190 {offsets = [0, 32], sizes = [1, 32], strides = [1, 1]} : vector<1x128xf32> to vector<1x32xf32>
    %cst_124 = arith.constant 0.000000e+00 : f32
    %199 = vector.broadcast %cst_124 : f32 to vector<1x32xf32>
    %200 = arith.subf %199, %198 : vector<1x32xf32>
    %201 = math.exp %200 : vector<1x32xf32>
    %cst_125 = arith.constant 1.000000e+00 : f32
    %202 = vector.broadcast %cst_125 : f32 to vector<1x32xf32>
    %203 = arith.addf %202, %201 : vector<1x32xf32>
    %204 = tpu.reciprocal %203 {approx = true} : vector<1x32xf32> -> vector<1x32xf32>
    %205 = vector.extract_strided_slice %190 {offsets = [0, 64], sizes = [1, 32], strides = [1, 1]} : vector<1x128xf32> to vector<1x32xf32>
    %206 = math.tanh %205 : vector<1x32xf32>
    %207 = vector.extract_strided_slice %190 {offsets = [0, 96], sizes = [1, 32], strides = [1, 1]} : vector<1x128xf32> to vector<1x32xf32>
    %cst_126 = arith.constant 0.000000e+00 : f32
    %208 = vector.broadcast %cst_126 : f32 to vector<1x32xf32>
    %209 = arith.subf %208, %207 : vector<1x32xf32>
    %210 = math.exp %209 : vector<1x32xf32>
    %cst_127 = arith.constant 1.000000e+00 : f32
    %211 = vector.broadcast %cst_127 : f32 to vector<1x32xf32>
    %212 = arith.addf %211, %210 : vector<1x32xf32>
    %213 = tpu.reciprocal %212 {approx = true} : vector<1x32xf32> -> vector<1x32xf32>
    %214 = arith.mulf %204, %185 : vector<1x32xf32>
    %215 = arith.mulf %197, %206 : vector<1x32xf32>
    %216 = arith.addf %214, %215 : vector<1x32xf32>
    %217 = math.tanh %216 : vector<1x32xf32>
    %218 = arith.mulf %213, %217 : vector<1x32xf32>
    %219 = vector.extract_strided_slice %153 {offsets = [2, 0], sizes = [1, 128], strides = [1, 1]} : vector<16x128xf32> to vector<1x128xf32>
    %cst_128 = arith.constant dense<0.000000e+00> : vector<1x128xf32>
    %220 = tpu.matmul %218, %154, %cst_128 {dimension_numbers = #tpu.dot_dimension_numbers<[1], [0], [0], [1], [0, 0, 1, 1], [], []>} : vector<1x32xf32>, vector<32x128xf32>, vector<1x128xf32> -> vector<1x128xf32>
    %221 = arith.addf %219, %220 : vector<1x128xf32>
    %222 = vector.extract_strided_slice %221 {offsets = [0, 0], sizes = [1, 32], strides = [1, 1]} : vector<1x128xf32> to vector<1x32xf32>
    %cst_129 = arith.constant 0.000000e+00 : f32
    %223 = vector.broadcast %cst_129 : f32 to vector<1x32xf32>
    %224 = arith.subf %223, %222 : vector<1x32xf32>
    %225 = math.exp %224 : vector<1x32xf32>
    %cst_130 = arith.constant 1.000000e+00 : f32
    %226 = vector.broadcast %cst_130 : f32 to vector<1x32xf32>
    %227 = arith.addf %226, %225 : vector<1x32xf32>
    %228 = tpu.reciprocal %227 {approx = true} : vector<1x32xf32> -> vector<1x32xf32>
    %229 = vector.extract_strided_slice %221 {offsets = [0, 32], sizes = [1, 32], strides = [1, 1]} : vector<1x128xf32> to vector<1x32xf32>
    %cst_131 = arith.constant 0.000000e+00 : f32
    %230 = vector.broadcast %cst_131 : f32 to vector<1x32xf32>
    %231 = arith.subf %230, %229 : vector<1x32xf32>
    %232 = math.exp %231 : vector<1x32xf32>
    %cst_132 = arith.constant 1.000000e+00 : f32
    %233 = vector.broadcast %cst_132 : f32 to vector<1x32xf32>
    %234 = arith.addf %233, %232 : vector<1x32xf32>
    %235 = tpu.reciprocal %234 {approx = true} : vector<1x32xf32> -> vector<1x32xf32>
    %236 = vector.extract_strided_slice %221 {offsets = [0, 64], sizes = [1, 32], strides = [1, 1]} : vector<1x128xf32> to vector<1x32xf32>
    %237 = math.tanh %236 : vector<1x32xf32>
    %238 = vector.extract_strided_slice %221 {offsets = [0, 96], sizes = [1, 32], strides = [1, 1]} : vector<1x128xf32> to vector<1x32xf32>
    %cst_133 = arith.constant 0.000000e+00 : f32
    %239 = vector.broadcast %cst_133 : f32 to vector<1x32xf32>
    %240 = arith.subf %239, %238 : vector<1x32xf32>
    %241 = math.exp %240 : vector<1x32xf32>
    %cst_134 = arith.constant 1.000000e+00 : f32
    %242 = vector.broadcast %cst_134 : f32 to vector<1x32xf32>
    %243 = arith.addf %242, %241 : vector<1x32xf32>
    %244 = tpu.reciprocal %243 {approx = true} : vector<1x32xf32> -> vector<1x32xf32>
    %245 = arith.mulf %235, %216 : vector<1x32xf32>
    %246 = arith.mulf %228, %237 : vector<1x32xf32>
    %247 = arith.addf %245, %246 : vector<1x32xf32>
    %248 = math.tanh %247 : vector<1x32xf32>
    %249 = arith.mulf %244, %248 : vector<1x32xf32>
    %250 = vector.extract_strided_slice %153 {offsets = [3, 0], sizes = [1, 128], strides = [1, 1]} : vector<16x128xf32> to vector<1x128xf32>
    %cst_135 = arith.constant dense<0.000000e+00> : vector<1x128xf32>
    %251 = tpu.matmul %249, %154, %cst_135 {dimension_numbers = #tpu.dot_dimension_numbers<[1], [0], [0], [1], [0, 0, 1, 1], [], []>} : vector<1x32xf32>, vector<32x128xf32>, vector<1x128xf32> -> vector<1x128xf32>
    %252 = arith.addf %250, %251 : vector<1x128xf32>
    %253 = vector.extract_strided_slice %252 {offsets = [0, 0], sizes = [1, 32], strides = [1, 1]} : vector<1x128xf32> to vector<1x32xf32>
    %cst_136 = arith.constant 0.000000e+00 : f32
    %254 = vector.broadcast %cst_136 : f32 to vector<1x32xf32>
    %255 = arith.subf %254, %253 : vector<1x32xf32>
    %256 = math.exp %255 : vector<1x32xf32>
    %cst_137 = arith.constant 1.000000e+00 : f32
    %257 = vector.broadcast %cst_137 : f32 to vector<1x32xf32>
    %258 = arith.addf %257, %256 : vector<1x32xf32>
    %259 = tpu.reciprocal %258 {approx = true} : vector<1x32xf32> -> vector<1x32xf32>
    %260 = vector.extract_strided_slice %252 {offsets = [0, 32], sizes = [1, 32], strides = [1, 1]} : vector<1x128xf32> to vector<1x32xf32>
    %cst_138 = arith.constant 0.000000e+00 : f32
    %261 = vector.broadcast %cst_138 : f32 to vector<1x32xf32>
    %262 = arith.subf %261, %260 : vector<1x32xf32>
    %263 = math.exp %262 : vector<1x32xf32>
    %cst_139 = arith.constant 1.000000e+00 : f32
    %264 = vector.broadcast %cst_139 : f32 to vector<1x32xf32>
    %265 = arith.addf %264, %263 : vector<1x32xf32>
    %266 = tpu.reciprocal %265 {approx = true} : vector<1x32xf32> -> vector<1x32xf32>
    %267 = vector.extract_strided_slice %252 {offsets = [0, 64], sizes = [1, 32], strides = [1, 1]} : vector<1x128xf32> to vector<1x32xf32>
    %268 = math.tanh %267 : vector<1x32xf32>
    %269 = vector.extract_strided_slice %252 {offsets = [0, 96], sizes = [1, 32], strides = [1, 1]} : vector<1x128xf32> to vector<1x32xf32>
    %cst_140 = arith.constant 0.000000e+00 : f32
    %270 = vector.broadcast %cst_140 : f32 to vector<1x32xf32>
    %271 = arith.subf %270, %269 : vector<1x32xf32>
    %272 = math.exp %271 : vector<1x32xf32>
    %cst_141 = arith.constant 1.000000e+00 : f32
    %273 = vector.broadcast %cst_141 : f32 to vector<1x32xf32>
    %274 = arith.addf %273, %272 : vector<1x32xf32>
    %275 = tpu.reciprocal %274 {approx = true} : vector<1x32xf32> -> vector<1x32xf32>
    %276 = arith.mulf %266, %247 : vector<1x32xf32>
    %277 = arith.mulf %259, %268 : vector<1x32xf32>
    %278 = arith.addf %276, %277 : vector<1x32xf32>
    %279 = math.tanh %278 : vector<1x32xf32>
    %280 = arith.mulf %275, %279 : vector<1x32xf32>
    %281 = vector.extract_strided_slice %153 {offsets = [4, 0], sizes = [1, 128], strides = [1, 1]} : vector<16x128xf32> to vector<1x128xf32>
    %cst_142 = arith.constant dense<0.000000e+00> : vector<1x128xf32>
    %282 = tpu.matmul %280, %154, %cst_142 {dimension_numbers = #tpu.dot_dimension_numbers<[1], [0], [0], [1], [0, 0, 1, 1], [], []>} : vector<1x32xf32>, vector<32x128xf32>, vector<1x128xf32> -> vector<1x128xf32>
    %283 = arith.addf %281, %282 : vector<1x128xf32>
    %284 = vector.extract_strided_slice %283 {offsets = [0, 0], sizes = [1, 32], strides = [1, 1]} : vector<1x128xf32> to vector<1x32xf32>
    %cst_143 = arith.constant 0.000000e+00 : f32
    %285 = vector.broadcast %cst_143 : f32 to vector<1x32xf32>
    %286 = arith.subf %285, %284 : vector<1x32xf32>
    %287 = math.exp %286 : vector<1x32xf32>
    %cst_144 = arith.constant 1.000000e+00 : f32
    %288 = vector.broadcast %cst_144 : f32 to vector<1x32xf32>
    %289 = arith.addf %288, %287 : vector<1x32xf32>
    %290 = tpu.reciprocal %289 {approx = true} : vector<1x32xf32> -> vector<1x32xf32>
    %291 = vector.extract_strided_slice %283 {offsets = [0, 32], sizes = [1, 32], strides = [1, 1]} : vector<1x128xf32> to vector<1x32xf32>
    %cst_145 = arith.constant 0.000000e+00 : f32
    %292 = vector.broadcast %cst_145 : f32 to vector<1x32xf32>
    %293 = arith.subf %292, %291 : vector<1x32xf32>
    %294 = math.exp %293 : vector<1x32xf32>
    %cst_146 = arith.constant 1.000000e+00 : f32
    %295 = vector.broadcast %cst_146 : f32 to vector<1x32xf32>
    %296 = arith.addf %295, %294 : vector<1x32xf32>
    %297 = tpu.reciprocal %296 {approx = true} : vector<1x32xf32> -> vector<1x32xf32>
    %298 = vector.extract_strided_slice %283 {offsets = [0, 64], sizes = [1, 32], strides = [1, 1]} : vector<1x128xf32> to vector<1x32xf32>
    %299 = math.tanh %298 : vector<1x32xf32>
    %300 = vector.extract_strided_slice %283 {offsets = [0, 96], sizes = [1, 32], strides = [1, 1]} : vector<1x128xf32> to vector<1x32xf32>
    %cst_147 = arith.constant 0.000000e+00 : f32
    %301 = vector.broadcast %cst_147 : f32 to vector<1x32xf32>
    %302 = arith.subf %301, %300 : vector<1x32xf32>
    %303 = math.exp %302 : vector<1x32xf32>
    %cst_148 = arith.constant 1.000000e+00 : f32
    %304 = vector.broadcast %cst_148 : f32 to vector<1x32xf32>
    %305 = arith.addf %304, %303 : vector<1x32xf32>
    %306 = tpu.reciprocal %305 {approx = true} : vector<1x32xf32> -> vector<1x32xf32>
    %307 = arith.mulf %297, %278 : vector<1x32xf32>
    %308 = arith.mulf %290, %299 : vector<1x32xf32>
    %309 = arith.addf %307, %308 : vector<1x32xf32>
    %310 = math.tanh %309 : vector<1x32xf32>
    %311 = arith.mulf %306, %310 : vector<1x32xf32>
    %312 = vector.extract_strided_slice %153 {offsets = [5, 0], sizes = [1, 128], strides = [1, 1]} : vector<16x128xf32> to vector<1x128xf32>
    %cst_149 = arith.constant dense<0.000000e+00> : vector<1x128xf32>
    %313 = tpu.matmul %311, %154, %cst_149 {dimension_numbers = #tpu.dot_dimension_numbers<[1], [0], [0], [1], [0, 0, 1, 1], [], []>} : vector<1x32xf32>, vector<32x128xf32>, vector<1x128xf32> -> vector<1x128xf32>
    %314 = arith.addf %312, %313 : vector<1x128xf32>
    %315 = vector.extract_strided_slice %314 {offsets = [0, 0], sizes = [1, 32], strides = [1, 1]} : vector<1x128xf32> to vector<1x32xf32>
    %cst_150 = arith.constant 0.000000e+00 : f32
    %316 = vector.broadcast %cst_150 : f32 to vector<1x32xf32>
    %317 = arith.subf %316, %315 : vector<1x32xf32>
    %318 = math.exp %317 : vector<1x32xf32>
    %cst_151 = arith.constant 1.000000e+00 : f32
    %319 = vector.broadcast %cst_151 : f32 to vector<1x32xf32>
    %320 = arith.addf %319, %318 : vector<1x32xf32>
    %321 = tpu.reciprocal %320 {approx = true} : vector<1x32xf32> -> vector<1x32xf32>
    %322 = vector.extract_strided_slice %314 {offsets = [0, 32], sizes = [1, 32], strides = [1, 1]} : vector<1x128xf32> to vector<1x32xf32>
    %cst_152 = arith.constant 0.000000e+00 : f32
    %323 = vector.broadcast %cst_152 : f32 to vector<1x32xf32>
    %324 = arith.subf %323, %322 : vector<1x32xf32>
    %325 = math.exp %324 : vector<1x32xf32>
    %cst_153 = arith.constant 1.000000e+00 : f32
    %326 = vector.broadcast %cst_153 : f32 to vector<1x32xf32>
    %327 = arith.addf %326, %325 : vector<1x32xf32>
    %328 = tpu.reciprocal %327 {approx = true} : vector<1x32xf32> -> vector<1x32xf32>
    %329 = vector.extract_strided_slice %314 {offsets = [0, 64], sizes = [1, 32], strides = [1, 1]} : vector<1x128xf32> to vector<1x32xf32>
    %330 = math.tanh %329 : vector<1x32xf32>
    %331 = vector.extract_strided_slice %314 {offsets = [0, 96], sizes = [1, 32], strides = [1, 1]} : vector<1x128xf32> to vector<1x32xf32>
    %cst_154 = arith.constant 0.000000e+00 : f32
    %332 = vector.broadcast %cst_154 : f32 to vector<1x32xf32>
    %333 = arith.subf %332, %331 : vector<1x32xf32>
    %334 = math.exp %333 : vector<1x32xf32>
    %cst_155 = arith.constant 1.000000e+00 : f32
    %335 = vector.broadcast %cst_155 : f32 to vector<1x32xf32>
    %336 = arith.addf %335, %334 : vector<1x32xf32>
    %337 = tpu.reciprocal %336 {approx = true} : vector<1x32xf32> -> vector<1x32xf32>
    %338 = arith.mulf %328, %309 : vector<1x32xf32>
    %339 = arith.mulf %321, %330 : vector<1x32xf32>
    %340 = arith.addf %338, %339 : vector<1x32xf32>
    %341 = math.tanh %340 : vector<1x32xf32>
    %342 = arith.mulf %337, %341 : vector<1x32xf32>
    %343 = vector.extract_strided_slice %153 {offsets = [6, 0], sizes = [1, 128], strides = [1, 1]} : vector<16x128xf32> to vector<1x128xf32>
    %cst_156 = arith.constant dense<0.000000e+00> : vector<1x128xf32>
    %344 = tpu.matmul %342, %154, %cst_156 {dimension_numbers = #tpu.dot_dimension_numbers<[1], [0], [0], [1], [0, 0, 1, 1], [], []>} : vector<1x32xf32>, vector<32x128xf32>, vector<1x128xf32> -> vector<1x128xf32>
    %345 = arith.addf %343, %344 : vector<1x128xf32>
    %346 = vector.extract_strided_slice %345 {offsets = [0, 0], sizes = [1, 32], strides = [1, 1]} : vector<1x128xf32> to vector<1x32xf32>
    %cst_157 = arith.constant 0.000000e+00 : f32
    %347 = vector.broadcast %cst_157 : f32 to vector<1x32xf32>
    %348 = arith.subf %347, %346 : vector<1x32xf32>
    %349 = math.exp %348 : vector<1x32xf32>
    %cst_158 = arith.constant 1.000000e+00 : f32
    %350 = vector.broadcast %cst_158 : f32 to vector<1x32xf32>
    %351 = arith.addf %350, %349 : vector<1x32xf32>
    %352 = tpu.reciprocal %351 {approx = true} : vector<1x32xf32> -> vector<1x32xf32>
    %353 = vector.extract_strided_slice %345 {offsets = [0, 32], sizes = [1, 32], strides = [1, 1]} : vector<1x128xf32> to vector<1x32xf32>
    %cst_159 = arith.constant 0.000000e+00 : f32
    %354 = vector.broadcast %cst_159 : f32 to vector<1x32xf32>
    %355 = arith.subf %354, %353 : vector<1x32xf32>
    %356 = math.exp %355 : vector<1x32xf32>
    %cst_160 = arith.constant 1.000000e+00 : f32
    %357 = vector.broadcast %cst_160 : f32 to vector<1x32xf32>
    %358 = arith.addf %357, %356 : vector<1x32xf32>
    %359 = tpu.reciprocal %358 {approx = true} : vector<1x32xf32> -> vector<1x32xf32>
    %360 = vector.extract_strided_slice %345 {offsets = [0, 64], sizes = [1, 32], strides = [1, 1]} : vector<1x128xf32> to vector<1x32xf32>
    %361 = math.tanh %360 : vector<1x32xf32>
    %362 = vector.extract_strided_slice %345 {offsets = [0, 96], sizes = [1, 32], strides = [1, 1]} : vector<1x128xf32> to vector<1x32xf32>
    %cst_161 = arith.constant 0.000000e+00 : f32
    %363 = vector.broadcast %cst_161 : f32 to vector<1x32xf32>
    %364 = arith.subf %363, %362 : vector<1x32xf32>
    %365 = math.exp %364 : vector<1x32xf32>
    %cst_162 = arith.constant 1.000000e+00 : f32
    %366 = vector.broadcast %cst_162 : f32 to vector<1x32xf32>
    %367 = arith.addf %366, %365 : vector<1x32xf32>
    %368 = tpu.reciprocal %367 {approx = true} : vector<1x32xf32> -> vector<1x32xf32>
    %369 = arith.mulf %359, %340 : vector<1x32xf32>
    %370 = arith.mulf %352, %361 : vector<1x32xf32>
    %371 = arith.addf %369, %370 : vector<1x32xf32>
    %372 = math.tanh %371 : vector<1x32xf32>
    %373 = arith.mulf %368, %372 : vector<1x32xf32>
    %374 = vector.extract_strided_slice %153 {offsets = [7, 0], sizes = [1, 128], strides = [1, 1]} : vector<16x128xf32> to vector<1x128xf32>
    %cst_163 = arith.constant dense<0.000000e+00> : vector<1x128xf32>
    %375 = tpu.matmul %373, %154, %cst_163 {dimension_numbers = #tpu.dot_dimension_numbers<[1], [0], [0], [1], [0, 0, 1, 1], [], []>} : vector<1x32xf32>, vector<32x128xf32>, vector<1x128xf32> -> vector<1x128xf32>
    %376 = arith.addf %374, %375 : vector<1x128xf32>
    %377 = vector.extract_strided_slice %376 {offsets = [0, 0], sizes = [1, 32], strides = [1, 1]} : vector<1x128xf32> to vector<1x32xf32>
    %cst_164 = arith.constant 0.000000e+00 : f32
    %378 = vector.broadcast %cst_164 : f32 to vector<1x32xf32>
    %379 = arith.subf %378, %377 : vector<1x32xf32>
    %380 = math.exp %379 : vector<1x32xf32>
    %cst_165 = arith.constant 1.000000e+00 : f32
    %381 = vector.broadcast %cst_165 : f32 to vector<1x32xf32>
    %382 = arith.addf %381, %380 : vector<1x32xf32>
    %383 = tpu.reciprocal %382 {approx = true} : vector<1x32xf32> -> vector<1x32xf32>
    %384 = vector.extract_strided_slice %376 {offsets = [0, 32], sizes = [1, 32], strides = [1, 1]} : vector<1x128xf32> to vector<1x32xf32>
    %cst_166 = arith.constant 0.000000e+00 : f32
    %385 = vector.broadcast %cst_166 : f32 to vector<1x32xf32>
    %386 = arith.subf %385, %384 : vector<1x32xf32>
    %387 = math.exp %386 : vector<1x32xf32>
    %cst_167 = arith.constant 1.000000e+00 : f32
    %388 = vector.broadcast %cst_167 : f32 to vector<1x32xf32>
    %389 = arith.addf %388, %387 : vector<1x32xf32>
    %390 = tpu.reciprocal %389 {approx = true} : vector<1x32xf32> -> vector<1x32xf32>
    %391 = vector.extract_strided_slice %376 {offsets = [0, 64], sizes = [1, 32], strides = [1, 1]} : vector<1x128xf32> to vector<1x32xf32>
    %392 = math.tanh %391 : vector<1x32xf32>
    %393 = vector.extract_strided_slice %376 {offsets = [0, 96], sizes = [1, 32], strides = [1, 1]} : vector<1x128xf32> to vector<1x32xf32>
    %cst_168 = arith.constant 0.000000e+00 : f32
    %394 = vector.broadcast %cst_168 : f32 to vector<1x32xf32>
    %395 = arith.subf %394, %393 : vector<1x32xf32>
    %396 = math.exp %395 : vector<1x32xf32>
    %cst_169 = arith.constant 1.000000e+00 : f32
    %397 = vector.broadcast %cst_169 : f32 to vector<1x32xf32>
    %398 = arith.addf %397, %396 : vector<1x32xf32>
    %399 = tpu.reciprocal %398 {approx = true} : vector<1x32xf32> -> vector<1x32xf32>
    %400 = arith.mulf %390, %371 : vector<1x32xf32>
    %401 = arith.mulf %383, %392 : vector<1x32xf32>
    %402 = arith.addf %400, %401 : vector<1x32xf32>
    %403 = math.tanh %402 : vector<1x32xf32>
    %404 = arith.mulf %399, %403 : vector<1x32xf32>
    %405 = vector.extract_strided_slice %153 {offsets = [8, 0], sizes = [1, 128], strides = [1, 1]} : vector<16x128xf32> to vector<1x128xf32>
    %cst_170 = arith.constant dense<0.000000e+00> : vector<1x128xf32>
    %406 = tpu.matmul %404, %154, %cst_170 {dimension_numbers = #tpu.dot_dimension_numbers<[1], [0], [0], [1], [0, 0, 1, 1], [], []>} : vector<1x32xf32>, vector<32x128xf32>, vector<1x128xf32> -> vector<1x128xf32>
    %407 = arith.addf %405, %406 : vector<1x128xf32>
    %408 = vector.extract_strided_slice %407 {offsets = [0, 0], sizes = [1, 32], strides = [1, 1]} : vector<1x128xf32> to vector<1x32xf32>
    %cst_171 = arith.constant 0.000000e+00 : f32
    %409 = vector.broadcast %cst_171 : f32 to vector<1x32xf32>
    %410 = arith.subf %409, %408 : vector<1x32xf32>
    %411 = math.exp %410 : vector<1x32xf32>
    %cst_172 = arith.constant 1.000000e+00 : f32
    %412 = vector.broadcast %cst_172 : f32 to vector<1x32xf32>
    %413 = arith.addf %412, %411 : vector<1x32xf32>
    %414 = tpu.reciprocal %413 {approx = true} : vector<1x32xf32> -> vector<1x32xf32>
    %415 = vector.extract_strided_slice %407 {offsets = [0, 32], sizes = [1, 32], strides = [1, 1]} : vector<1x128xf32> to vector<1x32xf32>
    %cst_173 = arith.constant 0.000000e+00 : f32
    %416 = vector.broadcast %cst_173 : f32 to vector<1x32xf32>
    %417 = arith.subf %416, %415 : vector<1x32xf32>
    %418 = math.exp %417 : vector<1x32xf32>
    %cst_174 = arith.constant 1.000000e+00 : f32
    %419 = vector.broadcast %cst_174 : f32 to vector<1x32xf32>
    %420 = arith.addf %419, %418 : vector<1x32xf32>
    %421 = tpu.reciprocal %420 {approx = true} : vector<1x32xf32> -> vector<1x32xf32>
    %422 = vector.extract_strided_slice %407 {offsets = [0, 64], sizes = [1, 32], strides = [1, 1]} : vector<1x128xf32> to vector<1x32xf32>
    %423 = math.tanh %422 : vector<1x32xf32>
    %424 = vector.extract_strided_slice %407 {offsets = [0, 96], sizes = [1, 32], strides = [1, 1]} : vector<1x128xf32> to vector<1x32xf32>
    %cst_175 = arith.constant 0.000000e+00 : f32
    %425 = vector.broadcast %cst_175 : f32 to vector<1x32xf32>
    %426 = arith.subf %425, %424 : vector<1x32xf32>
    %427 = math.exp %426 : vector<1x32xf32>
    %cst_176 = arith.constant 1.000000e+00 : f32
    %428 = vector.broadcast %cst_176 : f32 to vector<1x32xf32>
    %429 = arith.addf %428, %427 : vector<1x32xf32>
    %430 = tpu.reciprocal %429 {approx = true} : vector<1x32xf32> -> vector<1x32xf32>
    %431 = arith.mulf %421, %402 : vector<1x32xf32>
    %432 = arith.mulf %414, %423 : vector<1x32xf32>
    %433 = arith.addf %431, %432 : vector<1x32xf32>
    %434 = math.tanh %433 : vector<1x32xf32>
    %435 = arith.mulf %430, %434 : vector<1x32xf32>
    %436 = vector.extract_strided_slice %153 {offsets = [9, 0], sizes = [1, 128], strides = [1, 1]} : vector<16x128xf32> to vector<1x128xf32>
    %cst_177 = arith.constant dense<0.000000e+00> : vector<1x128xf32>
    %437 = tpu.matmul %435, %154, %cst_177 {dimension_numbers = #tpu.dot_dimension_numbers<[1], [0], [0], [1], [0, 0, 1, 1], [], []>} : vector<1x32xf32>, vector<32x128xf32>, vector<1x128xf32> -> vector<1x128xf32>
    %438 = arith.addf %436, %437 : vector<1x128xf32>
    %439 = vector.extract_strided_slice %438 {offsets = [0, 0], sizes = [1, 32], strides = [1, 1]} : vector<1x128xf32> to vector<1x32xf32>
    %cst_178 = arith.constant 0.000000e+00 : f32
    %440 = vector.broadcast %cst_178 : f32 to vector<1x32xf32>
    %441 = arith.subf %440, %439 : vector<1x32xf32>
    %442 = math.exp %441 : vector<1x32xf32>
    %cst_179 = arith.constant 1.000000e+00 : f32
    %443 = vector.broadcast %cst_179 : f32 to vector<1x32xf32>
    %444 = arith.addf %443, %442 : vector<1x32xf32>
    %445 = tpu.reciprocal %444 {approx = true} : vector<1x32xf32> -> vector<1x32xf32>
    %446 = vector.extract_strided_slice %438 {offsets = [0, 32], sizes = [1, 32], strides = [1, 1]} : vector<1x128xf32> to vector<1x32xf32>
    %cst_180 = arith.constant 0.000000e+00 : f32
    %447 = vector.broadcast %cst_180 : f32 to vector<1x32xf32>
    %448 = arith.subf %447, %446 : vector<1x32xf32>
    %449 = math.exp %448 : vector<1x32xf32>
    %cst_181 = arith.constant 1.000000e+00 : f32
    %450 = vector.broadcast %cst_181 : f32 to vector<1x32xf32>
    %451 = arith.addf %450, %449 : vector<1x32xf32>
    %452 = tpu.reciprocal %451 {approx = true} : vector<1x32xf32> -> vector<1x32xf32>
    %453 = vector.extract_strided_slice %438 {offsets = [0, 64], sizes = [1, 32], strides = [1, 1]} : vector<1x128xf32> to vector<1x32xf32>
    %454 = math.tanh %453 : vector<1x32xf32>
    %455 = vector.extract_strided_slice %438 {offsets = [0, 96], sizes = [1, 32], strides = [1, 1]} : vector<1x128xf32> to vector<1x32xf32>
    %cst_182 = arith.constant 0.000000e+00 : f32
    %456 = vector.broadcast %cst_182 : f32 to vector<1x32xf32>
    %457 = arith.subf %456, %455 : vector<1x32xf32>
    %458 = math.exp %457 : vector<1x32xf32>
    %cst_183 = arith.constant 1.000000e+00 : f32
    %459 = vector.broadcast %cst_183 : f32 to vector<1x32xf32>
    %460 = arith.addf %459, %458 : vector<1x32xf32>
    %461 = tpu.reciprocal %460 {approx = true} : vector<1x32xf32> -> vector<1x32xf32>
    %462 = arith.mulf %452, %433 : vector<1x32xf32>
    %463 = arith.mulf %445, %454 : vector<1x32xf32>
    %464 = arith.addf %462, %463 : vector<1x32xf32>
    %465 = math.tanh %464 : vector<1x32xf32>
    %466 = arith.mulf %461, %465 : vector<1x32xf32>
    %467 = vector.extract_strided_slice %153 {offsets = [10, 0], sizes = [1, 128], strides = [1, 1]} : vector<16x128xf32> to vector<1x128xf32>
    %cst_184 = arith.constant dense<0.000000e+00> : vector<1x128xf32>
    %468 = tpu.matmul %466, %154, %cst_184 {dimension_numbers = #tpu.dot_dimension_numbers<[1], [0], [0], [1], [0, 0, 1, 1], [], []>} : vector<1x32xf32>, vector<32x128xf32>, vector<1x128xf32> -> vector<1x128xf32>
    %469 = arith.addf %467, %468 : vector<1x128xf32>
    %470 = vector.extract_strided_slice %469 {offsets = [0, 0], sizes = [1, 32], strides = [1, 1]} : vector<1x128xf32> to vector<1x32xf32>
    %cst_185 = arith.constant 0.000000e+00 : f32
    %471 = vector.broadcast %cst_185 : f32 to vector<1x32xf32>
    %472 = arith.subf %471, %470 : vector<1x32xf32>
    %473 = math.exp %472 : vector<1x32xf32>
    %cst_186 = arith.constant 1.000000e+00 : f32
    %474 = vector.broadcast %cst_186 : f32 to vector<1x32xf32>
    %475 = arith.addf %474, %473 : vector<1x32xf32>
    %476 = tpu.reciprocal %475 {approx = true} : vector<1x32xf32> -> vector<1x32xf32>
    %477 = vector.extract_strided_slice %469 {offsets = [0, 32], sizes = [1, 32], strides = [1, 1]} : vector<1x128xf32> to vector<1x32xf32>
    %cst_187 = arith.constant 0.000000e+00 : f32
    %478 = vector.broadcast %cst_187 : f32 to vector<1x32xf32>
    %479 = arith.subf %478, %477 : vector<1x32xf32>
    %480 = math.exp %479 : vector<1x32xf32>
    %cst_188 = arith.constant 1.000000e+00 : f32
    %481 = vector.broadcast %cst_188 : f32 to vector<1x32xf32>
    %482 = arith.addf %481, %480 : vector<1x32xf32>
    %483 = tpu.reciprocal %482 {approx = true} : vector<1x32xf32> -> vector<1x32xf32>
    %484 = vector.extract_strided_slice %469 {offsets = [0, 64], sizes = [1, 32], strides = [1, 1]} : vector<1x128xf32> to vector<1x32xf32>
    %485 = math.tanh %484 : vector<1x32xf32>
    %486 = vector.extract_strided_slice %469 {offsets = [0, 96], sizes = [1, 32], strides = [1, 1]} : vector<1x128xf32> to vector<1x32xf32>
    %cst_189 = arith.constant 0.000000e+00 : f32
    %487 = vector.broadcast %cst_189 : f32 to vector<1x32xf32>
    %488 = arith.subf %487, %486 : vector<1x32xf32>
    %489 = math.exp %488 : vector<1x32xf32>
    %cst_190 = arith.constant 1.000000e+00 : f32
    %490 = vector.broadcast %cst_190 : f32 to vector<1x32xf32>
    %491 = arith.addf %490, %489 : vector<1x32xf32>
    %492 = tpu.reciprocal %491 {approx = true} : vector<1x32xf32> -> vector<1x32xf32>
    %493 = arith.mulf %483, %464 : vector<1x32xf32>
    %494 = arith.mulf %476, %485 : vector<1x32xf32>
    %495 = arith.addf %493, %494 : vector<1x32xf32>
    %496 = math.tanh %495 : vector<1x32xf32>
    %497 = arith.mulf %492, %496 : vector<1x32xf32>
    %498 = vector.extract_strided_slice %153 {offsets = [11, 0], sizes = [1, 128], strides = [1, 1]} : vector<16x128xf32> to vector<1x128xf32>
    %cst_191 = arith.constant dense<0.000000e+00> : vector<1x128xf32>
    %499 = tpu.matmul %497, %154, %cst_191 {dimension_numbers = #tpu.dot_dimension_numbers<[1], [0], [0], [1], [0, 0, 1, 1], [], []>} : vector<1x32xf32>, vector<32x128xf32>, vector<1x128xf32> -> vector<1x128xf32>
    %500 = arith.addf %498, %499 : vector<1x128xf32>
    %501 = vector.extract_strided_slice %500 {offsets = [0, 0], sizes = [1, 32], strides = [1, 1]} : vector<1x128xf32> to vector<1x32xf32>
    %cst_192 = arith.constant 0.000000e+00 : f32
    %502 = vector.broadcast %cst_192 : f32 to vector<1x32xf32>
    %503 = arith.subf %502, %501 : vector<1x32xf32>
    %504 = math.exp %503 : vector<1x32xf32>
    %cst_193 = arith.constant 1.000000e+00 : f32
    %505 = vector.broadcast %cst_193 : f32 to vector<1x32xf32>
    %506 = arith.addf %505, %504 : vector<1x32xf32>
    %507 = tpu.reciprocal %506 {approx = true} : vector<1x32xf32> -> vector<1x32xf32>
    %508 = vector.extract_strided_slice %500 {offsets = [0, 32], sizes = [1, 32], strides = [1, 1]} : vector<1x128xf32> to vector<1x32xf32>
    %cst_194 = arith.constant 0.000000e+00 : f32
    %509 = vector.broadcast %cst_194 : f32 to vector<1x32xf32>
    %510 = arith.subf %509, %508 : vector<1x32xf32>
    %511 = math.exp %510 : vector<1x32xf32>
    %cst_195 = arith.constant 1.000000e+00 : f32
    %512 = vector.broadcast %cst_195 : f32 to vector<1x32xf32>
    %513 = arith.addf %512, %511 : vector<1x32xf32>
    %514 = tpu.reciprocal %513 {approx = true} : vector<1x32xf32> -> vector<1x32xf32>
    %515 = vector.extract_strided_slice %500 {offsets = [0, 64], sizes = [1, 32], strides = [1, 1]} : vector<1x128xf32> to vector<1x32xf32>
    %516 = math.tanh %515 : vector<1x32xf32>
    %517 = vector.extract_strided_slice %500 {offsets = [0, 96], sizes = [1, 32], strides = [1, 1]} : vector<1x128xf32> to vector<1x32xf32>
    %cst_196 = arith.constant 0.000000e+00 : f32
    %518 = vector.broadcast %cst_196 : f32 to vector<1x32xf32>
    %519 = arith.subf %518, %517 : vector<1x32xf32>
    %520 = math.exp %519 : vector<1x32xf32>
    %cst_197 = arith.constant 1.000000e+00 : f32
    %521 = vector.broadcast %cst_197 : f32 to vector<1x32xf32>
    %522 = arith.addf %521, %520 : vector<1x32xf32>
    %523 = tpu.reciprocal %522 {approx = true} : vector<1x32xf32> -> vector<1x32xf32>
    %524 = arith.mulf %514, %495 : vector<1x32xf32>
    %525 = arith.mulf %507, %516 : vector<1x32xf32>
    %526 = arith.addf %524, %525 : vector<1x32xf32>
    %527 = math.tanh %526 : vector<1x32xf32>
    %528 = arith.mulf %523, %527 : vector<1x32xf32>
    %529 = vector.extract_strided_slice %153 {offsets = [12, 0], sizes = [1, 128], strides = [1, 1]} : vector<16x128xf32> to vector<1x128xf32>
    %cst_198 = arith.constant dense<0.000000e+00> : vector<1x128xf32>
    %530 = tpu.matmul %528, %154, %cst_198 {dimension_numbers = #tpu.dot_dimension_numbers<[1], [0], [0], [1], [0, 0, 1, 1], [], []>} : vector<1x32xf32>, vector<32x128xf32>, vector<1x128xf32> -> vector<1x128xf32>
    %531 = arith.addf %529, %530 : vector<1x128xf32>
    %532 = vector.extract_strided_slice %531 {offsets = [0, 0], sizes = [1, 32], strides = [1, 1]} : vector<1x128xf32> to vector<1x32xf32>
    %cst_199 = arith.constant 0.000000e+00 : f32
    %533 = vector.broadcast %cst_199 : f32 to vector<1x32xf32>
    %534 = arith.subf %533, %532 : vector<1x32xf32>
    %535 = math.exp %534 : vector<1x32xf32>
    %cst_200 = arith.constant 1.000000e+00 : f32
    %536 = vector.broadcast %cst_200 : f32 to vector<1x32xf32>
    %537 = arith.addf %536, %535 : vector<1x32xf32>
    %538 = tpu.reciprocal %537 {approx = true} : vector<1x32xf32> -> vector<1x32xf32>
    %539 = vector.extract_strided_slice %531 {offsets = [0, 32], sizes = [1, 32], strides = [1, 1]} : vector<1x128xf32> to vector<1x32xf32>
    %cst_201 = arith.constant 0.000000e+00 : f32
    %540 = vector.broadcast %cst_201 : f32 to vector<1x32xf32>
    %541 = arith.subf %540, %539 : vector<1x32xf32>
    %542 = math.exp %541 : vector<1x32xf32>
    %cst_202 = arith.constant 1.000000e+00 : f32
    %543 = vector.broadcast %cst_202 : f32 to vector<1x32xf32>
    %544 = arith.addf %543, %542 : vector<1x32xf32>
    %545 = tpu.reciprocal %544 {approx = true} : vector<1x32xf32> -> vector<1x32xf32>
    %546 = vector.extract_strided_slice %531 {offsets = [0, 64], sizes = [1, 32], strides = [1, 1]} : vector<1x128xf32> to vector<1x32xf32>
    %547 = math.tanh %546 : vector<1x32xf32>
    %548 = vector.extract_strided_slice %531 {offsets = [0, 96], sizes = [1, 32], strides = [1, 1]} : vector<1x128xf32> to vector<1x32xf32>
    %cst_203 = arith.constant 0.000000e+00 : f32
    %549 = vector.broadcast %cst_203 : f32 to vector<1x32xf32>
    %550 = arith.subf %549, %548 : vector<1x32xf32>
    %551 = math.exp %550 : vector<1x32xf32>
    %cst_204 = arith.constant 1.000000e+00 : f32
    %552 = vector.broadcast %cst_204 : f32 to vector<1x32xf32>
    %553 = arith.addf %552, %551 : vector<1x32xf32>
    %554 = tpu.reciprocal %553 {approx = true} : vector<1x32xf32> -> vector<1x32xf32>
    %555 = arith.mulf %545, %526 : vector<1x32xf32>
    %556 = arith.mulf %538, %547 : vector<1x32xf32>
    %557 = arith.addf %555, %556 : vector<1x32xf32>
    %558 = math.tanh %557 : vector<1x32xf32>
    %559 = arith.mulf %554, %558 : vector<1x32xf32>
    %560 = vector.extract_strided_slice %153 {offsets = [13, 0], sizes = [1, 128], strides = [1, 1]} : vector<16x128xf32> to vector<1x128xf32>
    %cst_205 = arith.constant dense<0.000000e+00> : vector<1x128xf32>
    %561 = tpu.matmul %559, %154, %cst_205 {dimension_numbers = #tpu.dot_dimension_numbers<[1], [0], [0], [1], [0, 0, 1, 1], [], []>} : vector<1x32xf32>, vector<32x128xf32>, vector<1x128xf32> -> vector<1x128xf32>
    %562 = arith.addf %560, %561 : vector<1x128xf32>
    %563 = vector.extract_strided_slice %562 {offsets = [0, 0], sizes = [1, 32], strides = [1, 1]} : vector<1x128xf32> to vector<1x32xf32>
    %cst_206 = arith.constant 0.000000e+00 : f32
    %564 = vector.broadcast %cst_206 : f32 to vector<1x32xf32>
    %565 = arith.subf %564, %563 : vector<1x32xf32>
    %566 = math.exp %565 : vector<1x32xf32>
    %cst_207 = arith.constant 1.000000e+00 : f32
    %567 = vector.broadcast %cst_207 : f32 to vector<1x32xf32>
    %568 = arith.addf %567, %566 : vector<1x32xf32>
    %569 = tpu.reciprocal %568 {approx = true} : vector<1x32xf32> -> vector<1x32xf32>
    %570 = vector.extract_strided_slice %562 {offsets = [0, 32], sizes = [1, 32], strides = [1, 1]} : vector<1x128xf32> to vector<1x32xf32>
    %cst_208 = arith.constant 0.000000e+00 : f32
    %571 = vector.broadcast %cst_208 : f32 to vector<1x32xf32>
    %572 = arith.subf %571, %570 : vector<1x32xf32>
    %573 = math.exp %572 : vector<1x32xf32>
    %cst_209 = arith.constant 1.000000e+00 : f32
    %574 = vector.broadcast %cst_209 : f32 to vector<1x32xf32>
    %575 = arith.addf %574, %573 : vector<1x32xf32>
    %576 = tpu.reciprocal %575 {approx = true} : vector<1x32xf32> -> vector<1x32xf32>
    %577 = vector.extract_strided_slice %562 {offsets = [0, 64], sizes = [1, 32], strides = [1, 1]} : vector<1x128xf32> to vector<1x32xf32>
    %578 = math.tanh %577 : vector<1x32xf32>
    %579 = vector.extract_strided_slice %562 {offsets = [0, 96], sizes = [1, 32], strides = [1, 1]} : vector<1x128xf32> to vector<1x32xf32>
    %cst_210 = arith.constant 0.000000e+00 : f32
    %580 = vector.broadcast %cst_210 : f32 to vector<1x32xf32>
    %581 = arith.subf %580, %579 : vector<1x32xf32>
    %582 = math.exp %581 : vector<1x32xf32>
    %cst_211 = arith.constant 1.000000e+00 : f32
    %583 = vector.broadcast %cst_211 : f32 to vector<1x32xf32>
    %584 = arith.addf %583, %582 : vector<1x32xf32>
    %585 = tpu.reciprocal %584 {approx = true} : vector<1x32xf32> -> vector<1x32xf32>
    %586 = arith.mulf %576, %557 : vector<1x32xf32>
    %587 = arith.mulf %569, %578 : vector<1x32xf32>
    %588 = arith.addf %586, %587 : vector<1x32xf32>
    %589 = math.tanh %588 : vector<1x32xf32>
    %590 = arith.mulf %585, %589 : vector<1x32xf32>
    %591 = vector.extract_strided_slice %153 {offsets = [14, 0], sizes = [1, 128], strides = [1, 1]} : vector<16x128xf32> to vector<1x128xf32>
    %cst_212 = arith.constant dense<0.000000e+00> : vector<1x128xf32>
    %592 = tpu.matmul %590, %154, %cst_212 {dimension_numbers = #tpu.dot_dimension_numbers<[1], [0], [0], [1], [0, 0, 1, 1], [], []>} : vector<1x32xf32>, vector<32x128xf32>, vector<1x128xf32> -> vector<1x128xf32>
    %593 = arith.addf %591, %592 : vector<1x128xf32>
    %594 = vector.extract_strided_slice %593 {offsets = [0, 0], sizes = [1, 32], strides = [1, 1]} : vector<1x128xf32> to vector<1x32xf32>
    %cst_213 = arith.constant 0.000000e+00 : f32
    %595 = vector.broadcast %cst_213 : f32 to vector<1x32xf32>
    %596 = arith.subf %595, %594 : vector<1x32xf32>
    %597 = math.exp %596 : vector<1x32xf32>
    %cst_214 = arith.constant 1.000000e+00 : f32
    %598 = vector.broadcast %cst_214 : f32 to vector<1x32xf32>
    %599 = arith.addf %598, %597 : vector<1x32xf32>
    %600 = tpu.reciprocal %599 {approx = true} : vector<1x32xf32> -> vector<1x32xf32>
    %601 = vector.extract_strided_slice %593 {offsets = [0, 32], sizes = [1, 32], strides = [1, 1]} : vector<1x128xf32> to vector<1x32xf32>
    %cst_215 = arith.constant 0.000000e+00 : f32
    %602 = vector.broadcast %cst_215 : f32 to vector<1x32xf32>
    %603 = arith.subf %602, %601 : vector<1x32xf32>
    %604 = math.exp %603 : vector<1x32xf32>
    %cst_216 = arith.constant 1.000000e+00 : f32
    %605 = vector.broadcast %cst_216 : f32 to vector<1x32xf32>
    %606 = arith.addf %605, %604 : vector<1x32xf32>
    %607 = tpu.reciprocal %606 {approx = true} : vector<1x32xf32> -> vector<1x32xf32>
    %608 = vector.extract_strided_slice %593 {offsets = [0, 64], sizes = [1, 32], strides = [1, 1]} : vector<1x128xf32> to vector<1x32xf32>
    %609 = math.tanh %608 : vector<1x32xf32>
    %610 = vector.extract_strided_slice %593 {offsets = [0, 96], sizes = [1, 32], strides = [1, 1]} : vector<1x128xf32> to vector<1x32xf32>
    %cst_217 = arith.constant 0.000000e+00 : f32
    %611 = vector.broadcast %cst_217 : f32 to vector<1x32xf32>
    %612 = arith.subf %611, %610 : vector<1x32xf32>
    %613 = math.exp %612 : vector<1x32xf32>
    %cst_218 = arith.constant 1.000000e+00 : f32
    %614 = vector.broadcast %cst_218 : f32 to vector<1x32xf32>
    %615 = arith.addf %614, %613 : vector<1x32xf32>
    %616 = tpu.reciprocal %615 {approx = true} : vector<1x32xf32> -> vector<1x32xf32>
    %617 = arith.mulf %607, %588 : vector<1x32xf32>
    %618 = arith.mulf %600, %609 : vector<1x32xf32>
    %619 = arith.addf %617, %618 : vector<1x32xf32>
    %620 = math.tanh %619 : vector<1x32xf32>
    %621 = arith.mulf %616, %620 : vector<1x32xf32>
    %622 = vector.extract_strided_slice %153 {offsets = [15, 0], sizes = [1, 128], strides = [1, 1]} : vector<16x128xf32> to vector<1x128xf32>
    %cst_219 = arith.constant dense<0.000000e+00> : vector<1x128xf32>
    %623 = tpu.matmul %621, %154, %cst_219 {dimension_numbers = #tpu.dot_dimension_numbers<[1], [0], [0], [1], [0, 0, 1, 1], [], []>} : vector<1x32xf32>, vector<32x128xf32>, vector<1x128xf32> -> vector<1x128xf32>
    %624 = arith.addf %622, %623 : vector<1x128xf32>
    %625 = vector.extract_strided_slice %624 {offsets = [0, 0], sizes = [1, 32], strides = [1, 1]} : vector<1x128xf32> to vector<1x32xf32>
    %cst_220 = arith.constant 0.000000e+00 : f32
    %626 = vector.broadcast %cst_220 : f32 to vector<1x32xf32>
    %627 = arith.subf %626, %625 : vector<1x32xf32>
    %628 = math.exp %627 : vector<1x32xf32>
    %cst_221 = arith.constant 1.000000e+00 : f32
    %629 = vector.broadcast %cst_221 : f32 to vector<1x32xf32>
    %630 = arith.addf %629, %628 : vector<1x32xf32>
    %631 = tpu.reciprocal %630 {approx = true} : vector<1x32xf32> -> vector<1x32xf32>
    %632 = vector.extract_strided_slice %624 {offsets = [0, 32], sizes = [1, 32], strides = [1, 1]} : vector<1x128xf32> to vector<1x32xf32>
    %cst_222 = arith.constant 0.000000e+00 : f32
    %633 = vector.broadcast %cst_222 : f32 to vector<1x32xf32>
    %634 = arith.subf %633, %632 : vector<1x32xf32>
    %635 = math.exp %634 : vector<1x32xf32>
    %cst_223 = arith.constant 1.000000e+00 : f32
    %636 = vector.broadcast %cst_223 : f32 to vector<1x32xf32>
    %637 = arith.addf %636, %635 : vector<1x32xf32>
    %638 = tpu.reciprocal %637 {approx = true} : vector<1x32xf32> -> vector<1x32xf32>
    %639 = vector.extract_strided_slice %624 {offsets = [0, 64], sizes = [1, 32], strides = [1, 1]} : vector<1x128xf32> to vector<1x32xf32>
    %640 = math.tanh %639 : vector<1x32xf32>
    %641 = vector.extract_strided_slice %624 {offsets = [0, 96], sizes = [1, 32], strides = [1, 1]} : vector<1x128xf32> to vector<1x32xf32>
    %cst_224 = arith.constant 0.000000e+00 : f32
    %642 = vector.broadcast %cst_224 : f32 to vector<1x32xf32>
    %643 = arith.subf %642, %641 : vector<1x32xf32>
    %644 = math.exp %643 : vector<1x32xf32>
    %cst_225 = arith.constant 1.000000e+00 : f32
    %645 = vector.broadcast %cst_225 : f32 to vector<1x32xf32>
    %646 = arith.addf %645, %644 : vector<1x32xf32>
    %647 = tpu.reciprocal %646 {approx = true} : vector<1x32xf32> -> vector<1x32xf32>
    %648 = arith.mulf %638, %619 : vector<1x32xf32>
    %649 = arith.mulf %631, %640 : vector<1x32xf32>
    %650 = arith.addf %648, %649 : vector<1x32xf32>
    %651 = math.tanh %650 : vector<1x32xf32>
    %652 = arith.mulf %647, %651 : vector<1x32xf32>
    %653 = vector.extract_strided_slice %148 {offsets = [15, 0], sizes = [1, 128], strides = [1, 1]} : vector<16x128xf32> to vector<1x128xf32>
    %c0_226 = arith.constant 0 : index
    %c0_227 = arith.constant 0 : index
    %654 = vector.load %arg9[%c0_226, %c0_227] : memref<128x128xf32, #tpu.memory_space<vmem>>, vector<128x128xf32>
    %cst_228 = arith.constant dense<0.000000e+00> : vector<1x128xf32>
    %655 = tpu.matmul %653, %654, %cst_228 {dimension_numbers = #tpu.dot_dimension_numbers<[1], [0], [0], [1], [0, 0, 1, 1], [], []>} : vector<1x128xf32>, vector<128x128xf32>, vector<1x128xf32> -> vector<1x128xf32>
    %c0_229 = arith.constant 0 : index
    %c0_230 = arith.constant 0 : index
    %656 = vector.load %arg11[%c0_229, %c0_230] : memref<1x128xf32, #tpu.memory_space<vmem>>, vector<1x128xf32>
    %657 = arith.addf %655, %656 : vector<1x128xf32>
    %658 = vector.extract_strided_slice %657 {offsets = [0, 0], sizes = [1, 32], strides = [1, 1]} : vector<1x128xf32> to vector<1x32xf32>
    %cst_231 = arith.constant 0.000000e+00 : f32
    %659 = vector.broadcast %cst_231 : f32 to vector<1x32xf32>
    %660 = arith.subf %659, %658 : vector<1x32xf32>
    %661 = math.exp %660 : vector<1x32xf32>
    %cst_232 = arith.constant 1.000000e+00 : f32
    %662 = vector.broadcast %cst_232 : f32 to vector<1x32xf32>
    %663 = arith.addf %662, %661 : vector<1x32xf32>
    %664 = tpu.reciprocal %663 {approx = true} : vector<1x32xf32> -> vector<1x32xf32>
    %665 = vector.extract_strided_slice %657 {offsets = [0, 64], sizes = [1, 32], strides = [1, 1]} : vector<1x128xf32> to vector<1x32xf32>
    %666 = math.tanh %665 : vector<1x32xf32>
    %667 = vector.extract_strided_slice %657 {offsets = [0, 96], sizes = [1, 32], strides = [1, 1]} : vector<1x128xf32> to vector<1x32xf32>
    %cst_233 = arith.constant 0.000000e+00 : f32
    %668 = vector.broadcast %cst_233 : f32 to vector<1x32xf32>
    %669 = arith.subf %668, %667 : vector<1x32xf32>
    %670 = math.exp %669 : vector<1x32xf32>
    %cst_234 = arith.constant 1.000000e+00 : f32
    %671 = vector.broadcast %cst_234 : f32 to vector<1x32xf32>
    %672 = arith.addf %671, %670 : vector<1x32xf32>
    %673 = tpu.reciprocal %672 {approx = true} : vector<1x32xf32> -> vector<1x32xf32>
    %674 = arith.mulf %664, %666 : vector<1x32xf32>
    %675 = math.tanh %674 : vector<1x32xf32>
    %676 = arith.mulf %673, %675 : vector<1x32xf32>
    %c0_235 = arith.constant 0 : index
    %c0_236 = arith.constant 0 : index
    %677 = vector.load %arg12[%c0_235, %c0_236] : memref<32x8xf32, #tpu.memory_space<vmem>>, vector<32x8xf32>
    %cst_237 = arith.constant dense<0.000000e+00> : vector<1x8xf32>
    %678 = tpu.matmul %652, %677, %cst_237 {dimension_numbers = #tpu.dot_dimension_numbers<[1], [0], [0], [1], [0, 0, 1, 1], [], []>} : vector<1x32xf32>, vector<32x8xf32>, vector<1x8xf32> -> vector<1x8xf32>
    %c0_238 = arith.constant 0 : index
    %c0_239 = arith.constant 0 : index
    %679 = vector.load %arg13[%c0_238, %c0_239] : memref<32x8xf32, #tpu.memory_space<vmem>>, vector<32x8xf32>
    %cst_240 = arith.constant dense<0.000000e+00> : vector<1x8xf32>
    %680 = tpu.matmul %676, %679, %cst_240 {dimension_numbers = #tpu.dot_dimension_numbers<[1], [0], [0], [1], [0, 0, 1, 1], [], []>} : vector<1x32xf32>, vector<32x8xf32>, vector<1x8xf32> -> vector<1x8xf32>
    %681 = arith.addf %678, %680 : vector<1x8xf32>
    %c0_241 = arith.constant 0 : index
    %c0_242 = arith.constant 0 : index
    %682 = vector.load %arg14[%c0_241, %c0_242] : memref<1x8xf32, #tpu.memory_space<vmem>>, vector<1x8xf32>
    %683 = arith.addf %681, %682 : vector<1x8xf32>
    %c0_243 = arith.constant 0 : index
    %c0_244 = arith.constant 0 : index
    %c0_245 = arith.constant 0 : index
    %684 = vector.load %arg15[%c0_243, %c0_244, %c0_245] : memref<1x1x8xf32, #tpu.memory_space<vmem>>, vector<1x1x8xf32>
    %685 = vector.shape_cast %684 : vector<1x1x8xf32> to vector<1x8xf32>
    %686 = vector.shape_cast %683 : vector<1x8xf32> to vector<1x1x8xf32>
    tpu.vector_store %arg15[%c0_243, %c0_244, %c0_245], %686 {strides = array<i32>} : memref<1x1x8xf32, #tpu.memory_space<vmem>>, vector<1x1x8xf32>,
    return
  }
  func.func @transform_0(%arg0: i32) -> (i32, i32, i32, i32) {
    %c0_i32 = arith.constant 0 : i32
    %c0_i32_0 = arith.constant 0 : i32
    %c0_i32_1 = arith.constant 0 : i32
    %c0_i32_2 = arith.constant 0 : i32
    return %arg0, %c0_i32, %c0_i32_0, %c0_i32_1 : i32, i32, i32, i32
  }
  func.func @transform_1(%arg0: i32) -> (i32, i32) {
    %c0_i32 = arith.constant 0 : i32
    %c0_i32_0 = arith.constant 0 : i32
    %c0_i32_1 = arith.constant 0 : i32
    return %c0_i32, %c0_i32_0 : i32, i32
  }
  func.func @transform_2(%arg0: i32) -> (i32, i32) {
    %c0_i32 = arith.constant 0 : i32
    %c0_i32_0 = arith.constant 0 : i32
    %c0_i32_1 = arith.constant 0 : i32
    return %c0_i32, %c0_i32_0 : i32, i32
  }
  func.func @transform_3(%arg0: i32) -> (i32, i32) {
    %c0_i32 = arith.constant 0 : i32
    %c0_i32_0 = arith.constant 0 : i32
    %c0_i32_1 = arith.constant 0 : i32
    return %c0_i32, %c0_i32_0 : i32, i32
  }
  func.func @transform_4(%arg0: i32) -> (i32, i32) {
    %c0_i32 = arith.constant 0 : i32
    %c0_i32_0 = arith.constant 0 : i32
    %c0_i32_1 = arith.constant 0 : i32
    return %c0_i32, %c0_i32_0 : i32, i32
  }
  func.func @transform_5(%arg0: i32) -> (i32, i32) {
    %c0_i32 = arith.constant 0 : i32
    %c0_i32_0 = arith.constant 0 : i32
    %c0_i32_1 = arith.constant 0 : i32
    return %c0_i32, %c0_i32_0 : i32, i32
  }
  func.func @transform_6(%arg0: i32) -> (i32, i32) {
    %c0_i32 = arith.constant 0 : i32
    %c0_i32_0 = arith.constant 0 : i32
    %c0_i32_1 = arith.constant 0 : i32
    return %c0_i32, %c0_i32_0 : i32, i32
  }
  func.func @transform_7(%arg0: i32) -> (i32, i32) {
    %c0_i32 = arith.constant 0 : i32
    %c0_i32_0 = arith.constant 0 : i32
    %c0_i32_1 = arith.constant 0 : i32
    return %c0_i32, %c0_i32_0 : i32, i32
  }
  func.func @transform_8(%arg0: i32) -> (i32, i32) {
    %c0_i32 = arith.constant 0 : i32
    %c0_i32_0 = arith.constant 0 : i32
    %c0_i32_1 = arith.constant 0 : i32
    return %c0_i32, %c0_i32_0 : i32, i32
  }
  func.func @transform_9(%arg0: i32) -> (i32, i32) {
    %c0_i32 = arith.constant 0 : i32
    %c0_i32_0 = arith.constant 0 : i32
    %c0_i32_1 = arith.constant 0 : i32
    return %c0_i32, %c0_i32_0 : i32, i32
  }
  func.func @transform_10(%arg0: i32) -> (i32, i32) {
    %c0_i32 = arith.constant 0 : i32
    %c0_i32_0 = arith.constant 0 : i32
    %c0_i32_1 = arith.constant 0 : i32
    return %c0_i32, %c0_i32_0 : i32, i32
  }
  func.func @transform_11(%arg0: i32) -> (i32, i32) {
    %c0_i32 = arith.constant 0 : i32
    %c0_i32_0 = arith.constant 0 : i32
    %c0_i32_1 = arith.constant 0 : i32
    return %c0_i32, %c0_i32_0 : i32, i32
  }
  func.func @transform_12(%arg0: i32) -> (i32, i32) {
    %c0_i32 = arith.constant 0 : i32
    %c0_i32_0 = arith.constant 0 : i32
    %c0_i32_1 = arith.constant 0 : i32
    return %c0_i32, %c0_i32_0 : i32, i32
  }
  func.func @transform_13(%arg0: i32) -> (i32, i32) {
    %c0_i32 = arith.constant 0 : i32
    %c0_i32_0 = arith.constant 0 : i32
    %c0_i32_1 = arith.constant 0 : i32
    return %c0_i32, %c0_i32_0 : i32, i32
  }
  func.func @transform_14(%arg0: i32) -> (i32, i32, i32) {
    %c0_i32 = arith.constant 0 : i32
    %c0_i32_0 = arith.constant 0 : i32
    %c0_i32_1 = arith.constant 0 : i32
    return %arg0, %c0_i32, %c0_i32_0 : i32, i32, i32
  }
}

</mosaic_0001>

<llo_original>
// kernel: crnn_forward.1
$region0: #{crnn_forward.1}
  #allocation0 [shape = 'u32[]', space=smem, size = 0x4, offset = 0x4, fixed_abs, tag = 'smem constant byte address 0x4 - core index']
  #allocation1 [shape = 'u32[144,128]{1,0:T(1,128)}', space=vmem, size = 0x12000, scoped, tag = 'internal scratch']
  #allocation2 [shape = 'f32[18,18,4]{2,1,0:T(8,128)}', space=vmem, size = 0x36000, scoped, tag = 'scratch operand']
  #allocation3 [shape = 'f32[10,10,64]{2,1,0:T(8,128)}', space=vmem, size = 0x14000, scoped, tag = 'scratch operand']
  %s0 = inlined_call_operand.vmem [shape: f32[2,16,16,4], index: 0, kind: input, shape index: {}]
  %s1 = inlined_call_operand.vmem [shape: f32[36,64], index: 1, kind: input, shape index: {}]
  %s2 = inlined_call_operand.vmem [shape: f32[1,64], index: 2, kind: input, shape index: {}]
  %s3 = inlined_call_operand.vmem [shape: bf16[576,128], index: 3, kind: input, shape index: {}]
  %s4 = inlined_call_operand.vmem [shape: f32[1,128], index: 4, kind: input, shape index: {}]
  %s5 = inlined_call_operand.vmem [shape: f32[128,128], index: 5, kind: input, shape index: {}]
  %s6 = inlined_call_operand.vmem [shape: f32[32,128], index: 6, kind: input, shape index: {}]
  %s7 = inlined_call_operand.vmem [shape: f32[1,128], index: 7, kind: input, shape index: {}]
  %s8 = inlined_call_operand.vmem [shape: f32[128,128], index: 8, kind: input, shape index: {}]
  %s9 = inlined_call_operand.vmem [shape: f32[32,128], index: 9, kind: input, shape index: {}]
  %s10 = inlined_call_operand.vmem [shape: f32[1,128], index: 10, kind: input, shape index: {}]
  %s11 = inlined_call_operand.vmem [shape: f32[32,8], index: 11, kind: input, shape index: {}]
  %s12 = inlined_call_operand.vmem [shape: f32[32,8], index: 12, kind: input, shape index: {}]
  %s13 = inlined_call_operand.vmem [shape: f32[1,8], index: 13, kind: input, shape index: {}]
  %s14 = inlined_call_operand.hbm [shape: f32[2,1,8], index: 14, kind: output, shape index: {}]
  %s15 = sld [smem:[#allocation0]]
  $region89: #{crnn_forward.1} parent=0
    _
  %s17 = ssub.s32 1, %s15
  %s18 = scalar_select 0, %s17, %s15
  $region1: #{crnn_forward.1} parent=0
    #allocation4 [shape = 'u8[1024]{0}', space=vmem, size = 0x400, scoped, tag = 'output window, operand 0']
    #allocation5 [shape = 's32[2]{0}', space=sflag, size = 0x8, scoped, tag = 'scoped memory for crnn_forward.1']
    %19 = vsyncpa [#allocation5], 0
    %s20 = scalar_lea.sflag [#allocation5], 1
    %21 = vsyncpa %s20, 0
    loop: start=0, step=1, limit=4
    $region2: #{crnn_forward.1} parent=1 // loop_pre_header
      _
    $region3: #{crnn_forward.1} parent=1 // loop_header
      %s23 = sphi 0, %s27
      %p24 = scmp.ge.s32.totalorder %s23, 4
      %s33 = sphi 0, %s35
      %s36 = sphi 0, %s33
      %s37 = sphi 0, %s36
      %s53 = sphi 0, %s37
      %s57 = sphi 0, %s57
      %s59 = sphi 0, %s57
      %s60 = sphi 0, %s59
      %s74 = sphi 0, %s60
      %s78 = sphi 0, %s78
      %s80 = sphi 0, %s78
      %s81 = sphi 0, %s80
      %s95 = sphi 0, %s81
      %s99 = sphi 0, %s99
      %s101 = sphi 0, %s99
      %s102 = sphi 0, %s101
      %s116 = sphi 0, %s102
      %s120 = sphi 0, %s120
      %s122 = sphi 0, %s120
      %s123 = sphi 0, %s122
      %s137 = sphi 0, %s123
      %s141 = sphi 0, %s141
      %s143 = sphi 0, %s141
      %s144 = sphi 0, %s143
      %s158 = sphi 0, %s144
      %s162 = sphi 0, %s162
      %s164 = sphi 0, %s162
      %s165 = sphi 0, %s164
      %s179 = sphi 0, %s165
      %s183 = sphi 0, %s183
      %s185 = sphi 0, %s183
      %s186 = sphi 0, %s185
      %s200 = sphi 0, %s186
      %s204 = sphi 0, %s204
      %s206 = sphi 0, %s204
      %s207 = sphi 0, %s206
      %s221 = sphi 0, %s207
      %s225 = sphi 0, %s225
      %s227 = sphi 0, %s225
      %s228 = sphi 0, %s227
      %s242 = sphi 0, %s228
      %s246 = sphi 0, %s246
      %s248 = sphi 0, %s246
      %s249 = sphi 0, %s248
      %s263 = sphi 0, %s249
      %s267 = sphi 0, %s267
      %s269 = sphi 0, %s267
      %s270 = sphi 0, %s269
      %s284 = sphi 0, %s270
      %s288 = sphi 0, %s288
      %s290 = sphi 0, %s288
      %s291 = sphi 0, %s290
      %s305 = sphi 0, %s291
      %s309 = sphi 0, %s309
      %s311 = sphi 0, %s309
      %s312 = sphi 0, %s311
      %s326 = sphi 0, %s312
      %s332 = sphi 0, %s334
      %s335 = sphi 0, %s332
      %s336 = sphi 0, %s335
      %s352 = sphi 0, %s336
    $region4: #{crnn_forward.1} parent=1 // loop_header_branch
      %26 = sbr.rel (%p24) target = $region8
    $region5: #{crnn_forward.1} parent=1 // loop_body
      %s28 = ssub.s32 %s23, 1
      %s29 = ssub.s32 %s23, 2
      %s30 = sadd.s32 %s23, 1
      %s31 = ssub.s32 %s23, %s30
      %p32 = scmp.eq.s32.totalorder %s31, 0
      %s34 = sadd.s32 %s33, 1
      %s35 = scalar_select %p32, %s33, %s34
      %p38 = pneg %p32
      %p39 = scmp.eq.s32.totalorder %s23, 1
      %p40 = por %p38, %p39
      %p41 = scmp.ne.s32.totalorder %s33, %s36
      %p42 = scmp.eq.s32.totalorder %s23, 0
      %p43 = por %p41, %p42
      %p44 = scmp.ne.s32.totalorder %s33, %s36
      %p45 = scmp.eq.s32.totalorder %s28, 1
      %p46 = por %p44, %p45
      %p47 = scmp.ne.s32.totalorder %s36, %s37
      %p48 = scmp.eq.s32.totalorder %s28, 0
      %p49 = por %p47, %p48
      %p50 = scmp.ne.s32.totalorder %s36, %s37
      %p51 = scmp.eq.s32.totalorder %s29, 1
      %p52 = por %p50, %p51
      %p54 = scmp.ne.s32.totalorder %s37, %s53
      %p55 = scmp.eq.s32.totalorder %s29, 0
      %p56 = por %p54, %p55
      %s58 = sadd.s32 %s57, 1
      %p61 = scmp.eq.s32.totalorder %s23, 1
      %p62 = scmp.ne.s32.totalorder %s57, %s59
      %p63 = scmp.eq.s32.totalorder %s23, 0
      %p64 = por %p62, %p63
      %p65 = scmp.ne.s32.totalorder %s57, %s59
      %p66 = scmp.eq.s32.totalorder %s28, 1
      %p67 = por %p65, %p66
      %p68 = scmp.ne.s32.totalorder %s59, %s60
      %p69 = scmp.eq.s32.totalorder %s28, 0
      %p70 = por %p68, %p69
      %p71 = scmp.ne.s32.totalorder %s59, %s60
      %p72 = scmp.eq.s32.totalorder %s29, 1
      %p73 = por %p71, %p72
      %p75 = scmp.ne.s32.totalorder %s60, %s74
      %p76 = scmp.eq.s32.totalorder %s29, 0
      %p77 = por %p75, %p76
      %s79 = sadd.s32 %s78, 1
      %p82 = scmp.eq.s32.totalorder %s23, 1
      %p83 = scmp.ne.s32.totalorder %s78, %s80
      %p84 = scmp.eq.s32.totalorder %s23, 0
      %p85 = por %p83, %p84
      %p86 = scmp.ne.s32.totalorder %s78, %s80
      %p87 = scmp.eq.s32.totalorder %s28, 1
      %p88 = por %p86, %p87
      %p89 = scmp.ne.s32.totalorder %s80, %s81
      %p90 = scmp.eq.s32.totalorder %s28, 0
      %p91 = por %p89, %p90
      %p92 = scmp.ne.s32.totalorder %s80, %s81
      %p93 = scmp.eq.s32.totalorder %s29, 1
      %p94 = por %p92, %p93
      %p96 = scmp.ne.s32.totalorder %s81, %s95
      %p97 = scmp.eq.s32.totalorder %s29, 0
      %p98 = por %p96, %p97
      %s100 = sadd.s32 %s99, 1
      %p103 = scmp.eq.s32.totalorder %s23, 1
      %p104 = scmp.ne.s32.totalorder %s99, %s101
      %p105 = scmp.eq.s32.totalorder %s23, 0
      %p106 = por %p104, %p105
      %p107 = scmp.ne.s32.totalorder %s99, %s101
      %p108 = scmp.eq.s32.totalorder %s28, 1
      %p109 = por %p107, %p108
      %p110 = scmp.ne.s32.totalorder %s101, %s102
      %p111 = scmp.eq.s32.totalorder %s28, 0
      %p112 = por %p110, %p111
      %p113 = scmp.ne.s32.totalorder %s101, %s102
      %p114 = scmp.eq.s32.totalorder %s29, 1
      %p115 = por %p113, %p114
      %p117 = scmp.ne.s32.totalorder %s102, %s116
      %p118 = scmp.eq.s32.totalorder %s29, 0
      %p119 = por %p117, %p118
      %s121 = sadd.s32 %s120, 1
      %p124 = scmp.eq.s32.totalorder %s23, 1
      %p125 = scmp.ne.s32.totalorder %s120, %s122
      %p126 = scmp.eq.s32.totalorder %s23, 0
      %p127 = por %p125, %p126
      %p128 = scmp.ne.s32.totalorder %s120, %s122
      %p129 = scmp.eq.s32.totalorder %s28, 1
      %p130 = por %p128, %p129
      %p131 = scmp.ne.s32.totalorder %s122, %s123
      %p132 = scmp.eq.s32.totalorder %s28, 0
      %p133 = por %p131, %p132
      %p134 = scmp.ne.s32.totalorder %s122, %s123
      %p135 = scmp.eq.s32.totalorder %s29, 1
      %p136 = por %p134, %p135
      %p138 = scmp.ne.s32.totalorder %s123, %s137
      %p139 = scmp.eq.s32.totalorder %s29, 0
      %p140 = por %p138, %p139
      %s142 = sadd.s32 %s141, 1
      %p145 = scmp.eq.s32.totalorder %s23, 1
      %p146 = scmp.ne.s32.totalorder %s141, %s143
      %p147 = scmp.eq.s32.totalorder %s23, 0
      %p148 = por %p146, %p147
      %p149 = scmp.ne.s32.totalorder %s141, %s143
      %p150 = scmp.eq.s32.totalorder %s28, 1
      %p151 = por %p149, %p150
      %p152 = scmp.ne.s32.totalorder %s143, %s144
      %p153 = scmp.eq.s32.totalorder %s28, 0
      %p154 = por %p152, %p153
      %p155 = scmp.ne.s32.totalorder %s143, %s144
      %p156 = scmp.eq.s32.totalorder %s29, 1
      %p157 = por %p155, %p156
      %p159 = scmp.ne.s32.totalorder %s144, %s158
      %p160 = scmp.eq.s32.totalorder %s29, 0
      %p161 = por %p159, %p160
      %s163 = sadd.s32 %s162, 1
      %p166 = scmp.eq.s32.totalorder %s23, 1
      %p167 = scmp.ne.s32.totalorder %s162, %s164
      %p168 = scmp.eq.s32.totalorder %s23, 0
      %p169 = por %p167, %p168
      %p170 = scmp.ne.s32.totalorder %s162, %s164
      %p171 = scmp.eq.s32.totalorder %s28, 1
      %p172 = por %p170, %p171
      %p173 = scmp.ne.s32.totalorder %s164, %s165
      %p174 = scmp.eq.s32.totalorder %s28, 0
      %p175 = por %p173, %p174
      %p176 = scmp.ne.s32.totalorder %s164, %s165
      %p177 = scmp.eq.s32.totalorder %s29, 1
      %p178 = por %p176, %p177
      %p180 = scmp.ne.s32.totalorder %s165, %s179
      %p181 = scmp.eq.s32.totalorder %s29, 0
      %p182 = por %p180, %p181
      %s184 = sadd.s32 %s183, 1
      %p187 = scmp.eq.s32.totalorder %s23, 1
      %p188 = scmp.ne.s32.totalorder %s183, %s185
      %p189 = scmp.eq.s32.totalorder %s23, 0
      %p190 = por %p188, %p189
      %p191 = scmp.ne.s32.totalorder %s183, %s185
      %p192 = scmp.eq.s32.totalorder %s28, 1
      %p193 = por %p191, %p192
      %p194 = scmp.ne.s32.totalorder %s185, %s186
      %p195 = scmp.eq.s32.totalorder %s28, 0
      %p196 = por %p194, %p195
      %p197 = scmp.ne.s32.totalorder %s185, %s186
      %p198 = scmp.eq.s32.totalorder %s29, 1
      %p199 = por %p197, %p198
      %p201 = scmp.ne.s32.totalorder %s186, %s200
      %p202 = scmp.eq.s32.totalorder %s29, 0
      %p203 = por %p201, %p202
      %s205 = sadd.s32 %s204, 1
      %p208 = scmp.eq.s32.totalorder %s23, 1
      %p209 = scmp.ne.s32.totalorder %s204, %s206
      %p210 = scmp.eq.s32.totalorder %s23, 0
      %p211 = por %p209, %p210
      %p212 = scmp.ne.s32.totalorder %s204, %s206
      %p213 = scmp.eq.s32.totalorder %s28, 1
      %p214 = por %p212, %p213
      %p215 = scmp.ne.s32.totalorder %s206, %s207
      %p216 = scmp.eq.s32.totalorder %s28, 0
      %p217 = por %p215, %p216
      %p218 = scmp.ne.s32.totalorder %s206, %s207
      %p219 = scmp.eq.s32.totalorder %s29, 1
      %p220 = por %p218, %p219
      %p222 = scmp.ne.s32.totalorder %s207, %s221
      %p223 = scmp.eq.s32.totalorder %s29, 0
      %p224 = por %p222, %p223
      %s226 = sadd.s32 %s225, 1
      %p229 = scmp.eq.s32.totalorder %s23, 1
      %p230 = scmp.ne.s32.totalorder %s225, %s227
      %p231 = scmp.eq.s32.totalorder %s23, 0
      %p232 = por %p230, %p231
      %p233 = scmp.ne.s32.totalorder %s225, %s227
      %p234 = scmp.eq.s32.totalorder %s28, 1
      %p235 = por %p233, %p234
      %p236 = scmp.ne.s32.totalorder %s227, %s228
      %p237 = scmp.eq.s32.totalorder %s28, 0
      %p238 = por %p236, %p237
      %p239 = scmp.ne.s32.totalorder %s227, %s228
      %p240 = scmp.eq.s32.totalorder %s29, 1
      %p241 = por %p239, %p240
      %p243 = scmp.ne.s32.totalorder %s228, %s242
      %p244 = scmp.eq.s32.totalorder %s29, 0
      %p245 = por %p243, %p244
      %s247 = sadd.s32 %s246, 1
      %p250 = scmp.eq.s32.totalorder %s23, 1
      %p251 = scmp.ne.s32.totalorder %s246, %s248
      %p252 = scmp.eq.s32.totalorder %s23, 0
      %p253 = por %p251, %p252
      %p254 = scmp.ne.s32.totalorder %s246, %s248
      %p255 = scmp.eq.s32.totalorder %s28, 1
      %p256 = por %p254, %p255
      %p257 = scmp.ne.s32.totalorder %s248, %s249
      %p258 = scmp.eq.s32.totalorder %s28, 0
      %p259 = por %p257, %p258
      %p260 = scmp.ne.s32.totalorder %s248, %s249
      %p261 = scmp.eq.s32.totalorder %s29, 1
      %p262 = por %p260, %p261
      %p264 = scmp.ne.s32.totalorder %s249, %s263
      %p265 = scmp.eq.s32.totalorder %s29, 0
      %p266 = por %p264, %p265
      %s268 = sadd.s32 %s267, 1
      %p271 = scmp.eq.s32.totalorder %s23, 1
      %p272 = scmp.ne.s32.totalorder %s267, %s269
      %p273 = scmp.eq.s32.totalorder %s23, 0
      %p274 = por %p272, %p273
      %p275 = scmp.ne.s32.totalorder %s267, %s269
      %p276 = scmp.eq.s32.totalorder %s28, 1
      %p277 = por %p275, %p276
      %p278 = scmp.ne.s32.totalorder %s269, %s270
      %p279 = scmp.eq.s32.totalorder %s28, 0
      %p280 = por %p278, %p279
      %p281 = scmp.ne.s32.totalorder %s269, %s270
      %p282 = scmp.eq.s32.totalorder %s29, 1
      %p283 = por %p281, %p282
      %p285 = scmp.ne.s32.totalorder %s270, %s284
      %p286 = scmp.eq.s32.totalorder %s29, 0
      %p287 = por %p285, %p286
      %s289 = sadd.s32 %s288, 1
      %p292 = scmp.eq.s32.totalorder %s23, 1
      %p293 = scmp.ne.s32.totalorder %s288, %s290
      %p294 = scmp.eq.s32.totalorder %s23, 0
      %p295 = por %p293, %p294
      %p296 = scmp.ne.s32.totalorder %s288, %s290
      %p297 = scmp.eq.s32.totalorder %s28, 1
      %p298 = por %p296, %p297
      %p299 = scmp.ne.s32.totalorder %s290, %s291
      %p300 = scmp.eq.s32.totalorder %s28, 0
      %p301 = por %p299, %p300
      %p302 = scmp.ne.s32.totalorder %s290, %s291
      %p303 = scmp.eq.s32.totalorder %s29, 1
      %p304 = por %p302, %p303
      %p306 = scmp.ne.s32.totalorder %s291, %s305
      %p307 = scmp.eq.s32.totalorder %s29, 0
      %p308 = por %p306, %p307
      %s310 = sadd.s32 %s309, 1
      %p313 = scmp.eq.s32.totalorder %s23, 1
      %p314 = scmp.ne.s32.totalorder %s309, %s311
      %p315 = scmp.eq.s32.totalorder %s23, 0
      %p316 = por %p314, %p315
      %p317 = scmp.ne.s32.totalorder %s309, %s311
      %p318 = scmp.eq.s32.totalorder %s28, 1
      %p319 = por %p317, %p318
      %p320 = scmp.ne.s32.totalorder %s311, %s312
      %p321 = scmp.eq.s32.totalorder %s28, 0
      %p322 = por %p320, %p321
      %p323 = scmp.ne.s32.totalorder %s311, %s312
      %p324 = scmp.eq.s32.totalorder %s29, 1
      %p325 = por %p323, %p324
      %p327 = scmp.ne.s32.totalorder %s312, %s326
      %p328 = scmp.eq.s32.totalorder %s29, 0
      %p329 = por %p327, %p328
      %s330 = ssub.s32 %s23, %s30
      %p331 = scmp.eq.s32.totalorder %s330, 0
      %s333 = sadd.s32 %s332, 1
      %s334 = scalar_select %p331, %s332, %s333
      %p337 = pneg %p331
      %p338 = scmp.eq.s32.totalorder %s23, 1
      %p339 = por %p337, %p338
      %p340 = scmp.ne.s32.totalorder %s332, %s335
      %p341 = scmp.eq.s32.totalorder %s23, 0
      %p342 = por %p340, %p341
      %p343 = scmp.ne.s32.totalorder %s332, %s335
      %p344 = scmp.eq.s32.totalorder %s28, 1
      %p345 = por %p343, %p344
      %p346 = scmp.ne.s32.totalorder %s335, %s336
      %p347 = scmp.eq.s32.totalorder %s28, 0
      %p348 = por %p346, %p347
      %p349 = scmp.ne.s32.totalorder %s335, %s336
      %p350 = scmp.eq.s32.totalorder %s29, 1
      %p351 = por %p349, %p350
      %p353 = scmp.ne.s32.totalorder %s336, %s352
      %p354 = scmp.eq.s32.totalorder %s29, 0
      %p355 = por %p353, %p354
      %p356 = scmp.le.s32.totalorder 1, %s23
      %p357 = scmp.lt.s32.totalorder %s23, 3
      %p358 = pnand %p356, %p357
      %p359 = pneg %p358
      // Predicated region
      $region9: #{crnn_forward.1} parent=5 // pred_check
        _
      $region10: #{crnn_forward.1} parent=5 // pred_check_branch
        %361 = sbr.rel (%p358) target = $region12
      $region11: #{crnn_forward.1} parent=5 // pred_region
        %s362 = ssub.s32 %s23, 1
        // Predicated region
        $region13: #{crnn_forward.1} parent=11 // pred_check
          %p363 = pneg %p70
        $region14: #{crnn_forward.1} parent=11 // pred_check_branch
          %365 = sbr.rel (%p363) target = $region16
        $region15: #{crnn_forward.1} parent=11 // pred_region
          _
        $region16: #{crnn_forward.1} parent=11 // pred_fallthru
          _
        // Predicated region
        $region17: #{crnn_forward.1} parent=11 // pred_check
          %p366 = pneg %p91
        $region18: #{crnn_forward.1} parent=11 // pred_check_branch
          %368 = sbr.rel (%p366) target = $region20
        $region19: #{crnn_forward.1} parent=11 // pred_region
          _
        $region20: #{crnn_forward.1} parent=11 // pred_fallthru
          _
        // Predicated region
        $region21: #{crnn_forward.1} parent=11 // pred_check
          %p369 = pneg %p112
        $region22: #{crnn_forward.1} parent=11 // pred_check_branch
          %371 = sbr.rel (%p369) target = $region24
        $region23: #{crnn_forward.1} parent=11 // pred_region
          _
        $region24: #{crnn_forward.1} parent=11 // pred_fallthru
          _
        // Predicated region
        $region25: #{crnn_forward.1} parent=11 // pred_check
          %p372 = pneg %p133
        $region26: #{crnn_forward.1} parent=11 // pred_check_branch
          %374 = sbr.rel (%p372) target = $region28
        $region27: #{crnn_forward.1} parent=11 // pred_region
          _
        $region28: #{crnn_forward.1} parent=11 // pred_fallthru
          _
        // Predicated region
        $region29: #{crnn_forward.1} parent=11 // pred_check
          %p375 = pneg %p154
        $region30: #{crnn_forward.1} parent=11 // pred_check_branch
          %377 = sbr.rel (%p375) target = $region32
        $region31: #{crnn_forward.1} parent=11 // pred_region
          _
        $region32: #{crnn_forward.1} parent=11 // pred_fallthru
          _
        // Predicated region
        $region33: #{crnn_forward.1} parent=11 // pred_check
          %p378 = pneg %p175
        $region34: #{crnn_forward.1} parent=11 // pred_check_branch
          %380 = sbr.rel (%p378) target = $region36
        $region35: #{crnn_forward.1} parent=11 // pred_region
          _
        $region36: #{crnn_forward.1} parent=11 // pred_fallthru
          _
        // Predicated region
        $region37: #{crnn_forward.1} parent=11 // pred_check
          %p381 = pneg %p196
        $region38: #{crnn_forward.1} parent=11 // pred_check_branch
          %383 = sbr.rel (%p381) target = $region40
        $region39: #{crnn_forward.1} parent=11 // pred_region
          _
        $region40: #{crnn_forward.1} parent=11 // pred_fallthru
          _
        // Predicated region
        $region41: #{crnn_forward.1} parent=11 // pred_check
          %p384 = pneg %p217
        $region42: #{crnn_forward.1} parent=11 // pred_check_branch
          %386 = sbr.rel (%p384) target = $region44
        $region43: #{crnn_forward.1} parent=11 // pred_region
          _
        $region44: #{crnn_forward.1} parent=11 // pred_fallthru
          _
        // Predicated region
        $region45: #{crnn_forward.1} parent=11 // pred_check
          %p387 = pneg %p238
        $region46: #{crnn_forward.1} parent=11 // pred_check_branch
          %389 = sbr.rel (%p387) target = $region48
        $region47: #{crnn_forward.1} parent=11 // pred_region
          _
        $region48: #{crnn_forward.1} parent=11 // pred_fallthru
          _
        // Predicated region
        $region49: #{crnn_forward.1} parent=11 // pred_check
          %p390 = pneg %p259
        $region50: #{crnn_forward.1} parent=11 // pred_check_branch
          %392 = sbr.rel (%p390) target = $region52
        $region51: #{crnn_forward.1} parent=11 // pred_region
          _
        $region52: #{crnn_forward.1} parent=11 // pred_fallthru
          _
        // Predicated region
        $region53: #{crnn_forward.1} parent=11 // pred_check
          %p393 = pneg %p280
        $region54: #{crnn_forward.1} parent=11 // pred_check_branch
          %395 = sbr.rel (%p393) target = $region56
        $region55: #{crnn_forward.1} parent=11 // pred_region
          _
        $region56: #{crnn_forward.1} parent=11 // pred_fallthru
          _
        // Predicated region
        $region57: #{crnn_forward.1} parent=11 // pred_check
          %p396 = pneg %p301
        $region58: #{crnn_forward.1} parent=11 // pred_check_branch
          %398 = sbr.rel (%p396) target = $region60
        $region59: #{crnn_forward.1} parent=11 // pred_region
          _
        $region60: #{crnn_forward.1} parent=11 // pred_fallthru
          _
        // Predicated region
        $region61: #{crnn_forward.1} parent=11 // pred_check
          %p399 = pneg %p322
        $region62: #{crnn_forward.1} parent=11 // pred_check_branch
          %401 = sbr.rel (%p399) target = $region64
        $region63: #{crnn_forward.1} parent=11 // pred_region
          _
        $region64: #{crnn_forward.1} parent=11 // pred_fallthru
          _
      $region12: #{crnn_forward.1} parent=5 // pred_fallthru
        _
      %p402 = scmp.lt.s32.totalorder %s23, 2
      // Predicated region
      $region65: #{crnn_forward.1} parent=5 // pred_check
        %p403 = pneg %p402
      $region66: #{crnn_forward.1} parent=5 // pred_check_branch
        %405 = sbr.rel (%p403) target = $region68
      $region67: #{crnn_forward.1} parent=5 // pred_region
        // Predicated region
        $region69: #{crnn_forward.1} parent=67 // pred_check
          %p406 = pneg %p43
        $region70: #{crnn_forward.1} parent=67 // pred_check_branch
          %408 = sbr.rel (%p406) target = $region72
        $region71: #{crnn_forward.1} parent=67 // pred_region
          %p409 = scmp.lt.s32.totalorder %s23, 1
          %s410 = scalar_select %p409, %s23, 1
          %s411 = smul.addr %s410, 32
          %s412 = smul.addr %s411, 8
          %s413 = scalar_lea.vmem %s0, %s412
        $region72: #{crnn_forward.1} parent=67 // pred_fallthru
          _
      $region68: #{crnn_forward.1} parent=5 // pred_fallthru
        _
      %p414 = scmp.le.s32.totalorder 1, %s23
      %p415 = scmp.lt.s32.totalorder %s23, 3
      %p416 = pnand %p414, %p415
      %p417 = pneg %p416
      // Predicated region
      $region73: #{crnn_forward.1} parent=5 // pred_check
        _
      $region74: #{crnn_forward.1} parent=5 // pred_check_branch
        %419 = sbr.rel (%p416) target = $region76
      $region75: #{crnn_forward.1} parent=5 // pred_region
        %s420 = ssub.s32 %s23, 1
        %p421 = scmp.lt.s32.totalorder %s28, 1
        %s422 = scalar_select %p421, %s28, 1
        %s423 = smul.addr %s422, 32
        %s424 = smul.addr %s423, 8
        %s425 = scalar_lea.vmem %s0, %s424
        %p426 = pneg %p49
        %p427 = pneg %p46
        %p428 = pneg %p70
        %p429 = pneg %p67
        %p430 = pneg %p91
        %p431 = pneg %p88
        %p432 = pneg %p112
        %p433 = pneg %p109
        %p434 = pneg %p133
        %p435 = pneg %p130
        %p436 = pneg %p154
        %p437 = pneg %p151
        %p438 = pneg %p175
        %p439 = pneg %p172
        %p440 = pneg %p196
        %p441 = pneg %p193
        %p442 = pneg %p217
        %p443 = pneg %p214
        %p444 = pneg %p238
        %p445 = pneg %p235
        %p446 = pneg %p259
        %p447 = pneg %p256
        %p448 = pneg %p280
        %p449 = pneg %p277
        %p450 = pneg %p301
        %p451 = pneg %p298
        %p452 = pneg %p322
        %p453 = pneg %p319
        %p454 = pneg %p348
        %p455 = pneg %p345
        %s456 = sand.u32 %s335, 1
        %s457 = scalar_lea.sflag [#allocation5], %s456
        %s458 = sand.u32 %s335, 1
        %s459 = scalar_lea.vmem [#allocation4], %s458
        %p460 = scmp.lt.s32.totalorder %s28, 1
        %s461 = scalar_select %p460, %s28, 1
        %s462 = smul.addr %s461, 32
        %s463 = smul.addr %s462, 8
        %s464 = scalar_lea.vmem %s0, %s463
        %vm466 = vcmask 31744
        %467 = vst.msk [vmem:[#allocation2] sm:$0xff] %vm466, 0.0
        %468 = vst.msk [vmem:[#allocation2 + $0x8] sm:$0xff] %vm466, 0.0
        %vm469 = vcmask 25600
        %470 = vst.msk [vmem:[#allocation2 + $0x10] sm:$0x3] %vm469, 0.0
        %471 = vst.msk [vmem:[#allocation2 + $0x18] sm:$0xff] %vm466, 0.0
        %472 = vst.msk [vmem:[#allocation2 + $0x20] sm:$0xff] %vm466, 0.0
        %473 = vst.msk [vmem:[#allocation2 + $0x28] sm:$0x3] %vm469, 0.0
        %474 = vst.msk [vmem:[#allocation2 + $0x30] sm:$0xff] %vm466, 0.0
        %475 = vst.msk [vmem:[#allocation2 + $0x38] sm:$0xff] %vm466, 0.0
        %476 = vst.msk [vmem:[#allocation2 + $0x40] sm:$0x3] %vm469, 0.0
        %477 = vst.msk [vmem:[#allocation2 + $0x48] sm:$0xff] %vm466, 0.0
        %478 = vst.msk [vmem:[#allocation2 + $0x50] sm:$0xff] %vm466, 0.0
        %479 = vst.msk [vmem:[#allocation2 + $0x58] sm:$0x3] %vm469, 0.0
        %480 = vst.msk [vmem:[#allocation2 + $0x60] sm:$0xff] %vm466, 0.0
        %481 = vst.msk [vmem:[#allocation2 + $0x68] sm:$0xff] %vm466, 0.0
        %482 = vst.msk [vmem:[#allocation2 + $0x70] sm:$0x3] %vm469, 0.0
        %483 = vst.msk [vmem:[#allocation2 + $0x78] sm:$0xff] %vm466, 0.0
        %484 = vst.msk [vmem:[#allocation2 + $0x80] sm:$0xff] %vm466, 0.0
        %485 = vst.msk [vmem:[#allocation2 + $0x88] sm:$0x3] %vm469, 0.0
        %486 = vst.msk [vmem:[#allocation2 + $0x90] sm:$0xff] %vm466, 0.0
        %487 = vst.msk [vmem:[#allocation2 + $0x98] sm:$0xff] %vm466, 0.0
        %488 = vst.msk [vmem:[#allocation2 + $0xa0] sm:$0x3] %vm469, 0.0
        %489 = vst.msk [vmem:[#allocation2 + $0xa8] sm:$0xff] %vm466, 0.0
        %490 = vst.msk [vmem:[#allocation2 + $0xb0] sm:$0xff] %vm466, 0.0
        %491 = vst.msk [vmem:[#allocation2 + $0xb8] sm:$0x3] %vm469, 0.0
        %492 = vst.msk [vmem:[#allocation2 + $0xc0] sm:$0xff] %vm466, 0.0
        %493 = vst.msk [vmem:[#allocation2 + $0xc8] sm:$0xff] %vm466, 0.0
        %494 = vst.msk [vmem:[#allocation2 + $0xd0] sm:$0x3] %vm469, 0.0
        %495 = vst.msk [vmem:[#allocation2 + $0xd8] sm:$0xff] %vm466, 0.0
        %496 = vst.msk [vmem:[#allocation2 + $0xe0] sm:$0xff] %vm466, 0.0
        %497 = vst.msk [vmem:[#allocation2 + $0xe8] sm:$0x3] %vm469, 0.0
        %498 = vst.msk [vmem:[#allocation2 + $0xf0] sm:$0xff] %vm466, 0.0
        %499 = vst.msk [vmem:[#allocation2 + $0xf8] sm:$0xff] %vm466, 0.0
        %500 = vst.msk [vmem:[#allocation2 + $0x100] sm:$0x3] %vm469, 0.0
        %501 = vst.msk [vmem:[#allocation2 + $0x108] sm:$0xff] %vm466, 0.0
        %502 = vst.msk [vmem:[#allocation2 + $0x110] sm:$0xff] %vm466, 0.0
        %503 = vst.msk [vmem:[#allocation2 + $0x118] sm:$0x3] %vm469, 0.0
        %504 = vst.msk [vmem:[#allocation2 + $0x120] sm:$0xff] %vm466, 0.0
        %505 = vst.msk [vmem:[#allocation2 + $0x128] sm:$0xff] %vm466, 0.0
        %506 = vst.msk [vmem:[#allocation2 + $0x130] sm:$0x3] %vm469, 0.0
        %507 = vst.msk [vmem:[#allocation2 + $0x138] sm:$0xff] %vm466, 0.0
        %508 = vst.msk [vmem:[#allocation2 + $0x140] sm:$0xff] %vm466, 0.0
        %509 = vst.msk [vmem:[#allocation2 + $0x148] sm:$0x3] %vm469, 0.0
        %510 = vst.msk [vmem:[#allocation2 + $0x150] sm:$0xff] %vm466, 0.0
        %511 = vst.msk [vmem:[#allocation2 + $0x158] sm:$0xff] %vm466, 0.0
        %512 = vst.msk [vmem:[#allocation2 + $0x160] sm:$0x3] %vm469, 0.0
        %513 = vst.msk [vmem:[#allocation2 + $0x168] sm:$0xff] %vm466, 0.0
        %514 = vst.msk [vmem:[#allocation2 + $0x170] sm:$0xff] %vm466, 0.0
        %515 = vst.msk [vmem:[#allocation2 + $0x178] sm:$0x3] %vm469, 0.0
        %516 = vst.msk [vmem:[#allocation2 + $0x180] sm:$0xff] %vm466, 0.0
        %517 = vst.msk [vmem:[#allocation2 + $0x188] sm:$0xff] %vm466, 0.0
        %518 = vst.msk [vmem:[#allocation2 + $0x190] sm:$0x3] %vm469, 0.0
        %519 = vst.msk [vmem:[#allocation2 + $0x198] sm:$0xff] %vm466, 0.0
        %520 = vst.msk [vmem:[#allocation2 + $0x1a0] sm:$0xff] %vm466, 0.0
        %521 = vst.msk [vmem:[#allocation2 + $0x1a8] sm:$0x3] %vm469, 0.0
        %v522 = vld [vmem:[%s464] sm:$0xff]
        %v523 = vld [vmem:[%s464 + $0x8] sm:$0xff]
        %v524 = vld [vmem:[%s464 + $0x10] sm:$0xff]
        %v525 = vld [vmem:[%s464 + $0x18] sm:$0xff]
        %v526 = vld [vmem:[%s464 + $0x20] sm:$0xff]
        %v527 = vld [vmem:[%s464 + $0x28] sm:$0xff]
        %v528 = vld [vmem:[%s464 + $0x30] sm:$0xff]
        %v529 = vld [vmem:[%s464 + $0x38] sm:$0xff]
        %v530 = vld [vmem:[%s464 + $0x40] sm:$0xff]
        %v531 = vld [vmem:[%s464 + $0x48] sm:$0xff]
        %v532 = vld [vmem:[%s464 + $0x50] sm:$0xff]
        %v533 = vld [vmem:[%s464 + $0x58] sm:$0xff]
        %v534 = vld [vmem:[%s464 + $0x60] sm:$0xff]
        %v535 = vld [vmem:[%s464 + $0x68] sm:$0xff]
        %v536 = vld [vmem:[%s464 + $0x70] sm:$0xff]
        %v537 = vld [vmem:[%s464 + $0x78] sm:$0xff]
        %v538 = vld [vmem:[%s464 + $0x80] sm:$0xff]
        %v539 = vld [vmem:[%s464 + $0x88] sm:$0xff]
        %v540 = vld [vmem:[%s464 + $0x90] sm:$0xff]
        %v541 = vld [vmem:[%s464 + $0x98] sm:$0xff]
        %v542 = vld [vmem:[%s464 + $0xa0] sm:$0xff]
        %v543 = vld [vmem:[%s464 + $0xa8] sm:$0xff]
        %v544 = vld [vmem:[%s464 + $0xb0] sm:$0xff]
        %v545 = vld [vmem:[%s464 + $0xb8] sm:$0xff]
        %v546 = vld [vmem:[%s464 + $0xc0] sm:$0xff]
        %v547 = vld [vmem:[%s464 + $0xc8] sm:$0xff]
        %v548 = vld [vmem:[%s464 + $0xd0] sm:$0xff]
        %v549 = vld [vmem:[%s464 + $0xd8] sm:$0xff]
        %v550 = vld [vmem:[%s464 + $0xe0] sm:$0xff]
        %v551 = vld [vmem:[%s464 + $0xe8] sm:$0xff]
        %v552 = vld [vmem:[%s464 + $0xf0] sm:$0xff]
        %v553 = vld [vmem:[%s464 + $0xf8] sm:$0xff]
        %s554 = scalar_lea.vmem [#allocation2], 24
        %555 = vst.msk [vmem:[%s554 + $0x1] sm:$0xff] %vm466, %v522
        %556 = vst.msk [vmem:[%s554 + $0x9] sm:$0xff] %vm466, %v523
        %557 = vst.msk [vmem:[%s554 + $0x19] sm:$0xff] %vm466, %v524
        %558 = vst.msk [vmem:[%s554 + $0x21] sm:$0xff] %vm466, %v525
        %559 = vst.msk [vmem:[%s554 + $0x31] sm:$0xff] %vm466, %v526
        %560 = vst.msk [vmem:[%s554 + $0x39] sm:$0xff] %vm466, %v527
        %561 = vst.msk [vmem:[%s554 + $0x49] sm:$0xff] %vm466, %v528
        %562 = vst.msk [vmem:[%s554 + $0x51] sm:$0xff] %vm466, %v529
        %563 = vst.msk [vmem:[%s554 + $0x61] sm:$0xff] %vm466, %v530
        %564 = vst.msk [vmem:[%s554 + $0x69] sm:$0xff] %vm466, %v531
        %565 = vst.msk [vmem:[%s554 + $0x79] sm:$0xff] %vm466, %v532
        %566 = vst.msk [vmem:[%s554 + $0x81] sm:$0xff] %vm466, %v533
        %567 = vst.msk [vmem:[%s554 + $0x91] sm:$0xff] %vm466, %v534
        %568 = vst.msk [vmem:[%s554 + $0x99] sm:$0xff] %vm466, %v535
        %569 = vst.msk [vmem:[%s554 + $0xa9] sm:$0xff] %vm466, %v536
        %570 = vst.msk [vmem:[%s554 + $0xb1] sm:$0xff] %vm466, %v537
        %571 = vst.msk [vmem:[%s554 + $0xc1] sm:$0xff] %vm466, %v538
        %572 = vst.msk [vmem:[%s554 + $0xc9] sm:$0xff] %vm466, %v539
        %573 = vst.msk [vmem:[%s554 + $0xd9] sm:$0xff] %vm466, %v540
        %574 = vst.msk [vmem:[%s554 + $0xe1] sm:$0xff] %vm466, %v541
        %575 = vst.msk [vmem:[%s554 + $0xf1] sm:$0xff] %vm466, %v542
        %576 = vst.msk [vmem:[%s554 + $0xf9] sm:$0xff] %vm466, %v543
        %577 = vst.msk [vmem:[%s554 + $0x109] sm:$0xff] %vm466, %v544
        %578 = vst.msk [vmem:[%s554 + $0x111] sm:$0xff] %vm466, %v545
        %579 = vst.msk [vmem:[%s554 + $0x121] sm:$0xff] %vm466, %v546
        %580 = vst.msk [vmem:[%s554 + $0x129] sm:$0xff] %vm466, %v547
        %581 = vst.msk [vmem:[%s554 + $0x139] sm:$0xff] %vm466, %v548
        %582 = vst.msk [vmem:[%s554 + $0x141] sm:$0xff] %vm466, %v549
        %583 = vst.msk [vmem:[%s554 + $0x151] sm:$0xff] %vm466, %v550
        %584 = vst.msk [vmem:[%s554 + $0x159] sm:$0xff] %vm466, %v551
        %585 = vst.msk [vmem:[%s554 + $0x169] sm:$0xff] %vm466, %v552
        %586 = vst.msk [vmem:[%s554 + $0x171] sm:$0xff] %vm466, %v553
        %v587 = vld [vmem:[#allocation2] sm:$0xff]
        %v588 = vld [vmem:[#allocation2 + $0x8] sm:$0xff]
        %v589 = vld [vmem:[#allocation2 + $0x18] sm:$0xff]
        %v590 = vld [vmem:[#allocation2 + $0x20] sm:$0xff]
        %v591 = vld [vmem:[#allocation2 + $0x30] sm:$0xff]
        %v592 = vld [vmem:[#allocation2 + $0x38] sm:$0xff]
        %v593 = vld [vmem:[#allocation2 + $0x48] sm:$0xff]
        %v594 = vld [vmem:[#allocation2 + $0x50] sm:$0xff]
        %v595 = vld [vmem:[#allocation2 + $0x60] sm:$0xff]
        %v596 = vld [vmem:[#allocation2 + $0x68] sm:$0xff]
        %v597 = vld [vmem:[#allocation2 + $0x78] sm:$0xff]
        %v598 = vld [vmem:[#allocation2 + $0x80] sm:$0xff]
        %v599 = vld [vmem:[#allocation2 + $0x90] sm:$0xff]
        %v600 = vld [vmem:[#allocation2 + $0x98] sm:$0xff]
        %v601 = vld [vmem:[#allocation2 + $0xa8] sm:$0xff]
        %v602 = vld [vmem:[#allocation2 + $0xb0] sm:$0xff]
        %v603 = vld [vmem:[#allocation2 + $0xc0] sm:$0xff]
        %v604 = vld [vmem:[#allocation2 + $0xc8] sm:$0xff]
        %v605 = vld [vmem:[#allocation2 + $0xd8] sm:$0xff]
        %v606 = vld [vmem:[#allocation2 + $0xe0] sm:$0xff]
        %v607 = vld [vmem:[#allocation2 + $0xf0] sm:$0xff]
        %v608 = vld [vmem:[#allocation2 + $0xf8] sm:$0xff]
        %v609 = vld [vmem:[#allocation2 + $0x108] sm:$0xff]
        %v610 = vld [vmem:[#allocation2 + $0x110] sm:$0xff]
        %v611 = vld [vmem:[#allocation2 + $0x120] sm:$0xff]
        %v612 = vld [vmem:[#allocation2 + $0x128] sm:$0xff]
        %v613 = vld [vmem:[#allocation2 + $0x138] sm:$0xff]
        %v614 = vld [vmem:[#allocation2 + $0x140] sm:$0xff]
        %v615 = vld [vmem:[#allocation2 + $0x150] sm:$0xff]
        %v616 = vld [vmem:[#allocation2 + $0x158] sm:$0xff]
        %v617 = vld [vmem:[#allocation2 + $0x168] sm:$0xff]
        %v618 = vld [vmem:[#allocation2 + $0x170] sm:$0xff]
        %v619 = vld [vmem:[#allocation2 + $0x1] sm:$0xff]
        %v620 = vld [vmem:[#allocation2 + $0x9] sm:$0xff]
        %v621 = vld [vmem:[#allocation2 + $0x19] sm:$0xff]
        %v622 = vld [vmem:[#allocation2 + $0x21] sm:$0xff]
        %v623 = vld [vmem:[#allocation2 + $0x31] sm:$0xff]
        %v624 = vld [vmem:[#allocation2 + $0x39] sm:$0xff]
        %v625 = vld [vmem:[#allocation2 + $0x49] sm:$0xff]
        %v626 = vld [vmem:[#allocation2 + $0x51] sm:$0xff]
        %v627 = vld [vmem:[#allocation2 + $0x61] sm:$0xff]
        %v628 = vld [vmem:[#allocation2 + $0x69] sm:$0xff]
        %v629 = vld [vmem:[#allocation2 + $0x79] sm:$0xff]
        %v630 = vld [vmem:[#allocation2 + $0x81] sm:$0xff]
        %v631 = vld [vmem:[#allocation2 + $0x91] sm:$0xff]
        %v632 = vld [vmem:[#allocation2 + $0x99] sm:$0xff]
        %v633 = vld [vmem:[#allocation2 + $0xa9] sm:$0xff]
        %v634 = vld [vmem:[#allocation2 + $0xb1] sm:$0xff]
        %v635 = vld [vmem:[#allocation2 + $0xc1] sm:$0xff]
        %v636 = vld [vmem:[#allocation2 + $0xc9] sm:$0xff]
        %v637 = vld [vmem:[#allocation2 + $0xd9] sm:$0xff]
        %v638 = vld [vmem:[#allocation2 + $0xe1] sm:$0xff]
        %v639 = vld [vmem:[#allocation2 + $0xf1] sm:$0xff]
        %v640 = vld [vmem:[#allocation2 + $0xf9] sm:$0xff]
        %v641 = vld [vmem:[#allocation2 + $0x109] sm:$0xff]
        %v642 = vld [vmem:[#allocation2 + $0x111] sm:$0xff]
        %v643 = vld [vmem:[#allocation2 + $0x121] sm:$0xff]
        %v644 = vld [vmem:[#allocation2 + $0x129] sm:$0xff]
        %v645 = vld [vmem:[#allocation2 + $0x139] sm:$0xff]
        %v646 = vld [vmem:[#allocation2 + $0x141] sm:$0xff]
        %v647 = vld [vmem:[#allocation2 + $0x151] sm:$0xff]
        %v648 = vld [vmem:[#allocation2 + $0x159] sm:$0xff]
        %v649 = vld [vmem:[#allocation2 + $0x169] sm:$0xff]
        %v650 = vld [vmem:[#allocation2 + $0x171] sm:$0xff]
        %v651 = vld [vmem:[#allocation2 + $0x2] sm:$0xff]
        %v652 = vld [vmem:[#allocation2 + $0xa] sm:$0xff]
        %v653 = vld [vmem:[#allocation2 + $0x1a] sm:$0xff]
        %v654 = vld [vmem:[#allocation2 + $0x22] sm:$0xff]
        %v655 = vld [vmem:[#allocation2 + $0x32] sm:$0xff]
        %v656 = vld [vmem:[#allocation2 + $0x3a] sm:$0xff]
        %v657 = vld [vmem:[#allocation2 + $0x4a] sm:$0xff]
        %v658 = vld [vmem:[#allocation2 + $0x52] sm:$0xff]
        %v659 = vld [vmem:[#allocation2 + $0x62] sm:$0xff]
        %v660 = vld [vmem:[#allocation2 + $0x6a] sm:$0xff]
        %v661 = vld [vmem:[#allocation2 + $0x7a] sm:$0xff]
        %v662 = vld [vmem:[#allocation2 + $0x82] sm:$0xff]
        %v663 = vld [vmem:[#allocation2 + $0x92] sm:$0xff]
        %v664 = vld [vmem:[#allocation2 + $0x9a] sm:$0xff]
        %v665 = vld [vmem:[#allocation2 + $0xaa] sm:$0xff]
        %v666 = vld [vmem:[#allocation2 + $0xb2] sm:$0xff]
        %v667 = vld [vmem:[#allocation2 + $0xc2] sm:$0xff]
        %v668 = vld [vmem:[#allocation2 + $0xca] sm:$0xff]
        %v669 = vld [vmem:[#allocation2 + $0xda] sm:$0xff]
        %v670 = vld [vmem:[#allocation2 + $0xe2] sm:$0xff]
        %v671 = vld [vmem:[#allocation2 + $0xf2] sm:$0xff]
        %v672 = vld [vmem:[#allocation2 + $0xfa] sm:$0xff]
        %v673 = vld [vmem:[#allocation2 + $0x10a] sm:$0xff]
        %v674 = vld [vmem:[#allocation2 + $0x112] sm:$0xff]
        %v675 = vld [vmem:[#allocation2 + $0x122] sm:$0xff]
        %v676 = vld [vmem:[#allocation2 + $0x12a] sm:$0xff]
        %v677 = vld [vmem:[#allocation2 + $0x13a] sm:$0xff]
        %v678 = vld [vmem:[#allocation2 + $0x142] sm:$0xff]
        %v679 = vld [vmem:[#allocation2 + $0x152] sm:$0xff]
        %v680 = vld [vmem:[#allocation2 + $0x15a] sm:$0xff]
        %v681 = vld [vmem:[#allocation2 + $0x16a] sm:$0xff]
        %v682 = vld [vmem:[#allocation2 + $0x172] sm:$0xff]
        %v683 = vld [vmem:[%s554] sm:$0xff]
        %v684 = vld [vmem:[%s554 + $0x8] sm:$0xff]
        %v685 = vld [vmem:[%s554 + $0x18] sm:$0xff]
        %v686 = vld [vmem:[%s554 + $0x20] sm:$0xff]
        %v687 = vld [vmem:[%s554 + $0x30] sm:$0xff]
        %v688 = vld [vmem:[%s554 + $0x38] sm:$0xff]
        %v689 = vld [vmem:[%s554 + $0x48] sm:$0xff]
        %v690 = vld [vmem:[%s554 + $0x50] sm:$0xff]
        %v691 = vld [vmem:[%s554 + $0x60] sm:$0xff]
        %v692 = vld [vmem:[%s554 + $0x68] sm:$0xff]
        %v693 = vld [vmem:[%s554 + $0x78] sm:$0xff]
        %v694 = vld [vmem:[%s554 + $0x80] sm:$0xff]
        %v695 = vld [vmem:[%s554 + $0x90] sm:$0xff]
        %v696 = vld [vmem:[%s554 + $0x98] sm:$0xff]
        %v697 = vld [vmem:[%s554 + $0xa8] sm:$0xff]
        %v698 = vld [vmem:[%s554 + $0xb0] sm:$0xff]
        %v699 = vld [vmem:[%s554 + $0xc0] sm:$0xff]
        %v700 = vld [vmem:[%s554 + $0xc8] sm:$0xff]
        %v701 = vld [vmem:[%s554 + $0xd8] sm:$0xff]
        %v702 = vld [vmem:[%s554 + $0xe0] sm:$0xff]
        %v703 = vld [vmem:[%s554 + $0xf0] sm:$0xff]
        %v704 = vld [vmem:[%s554 + $0xf8] sm:$0xff]
        %v705 = vld [vmem:[%s554 + $0x108] sm:$0xff]
        %v706 = vld [vmem:[%s554 + $0x110] sm:$0xff]
        %v707 = vld [vmem:[%s554 + $0x120] sm:$0xff]
        %v708 = vld [vmem:[%s554 + $0x128] sm:$0xff]
        %v709 = vld [vmem:[%s554 + $0x138] sm:$0xff]
        %v710 = vld [vmem:[%s554 + $0x140] sm:$0xff]
        %v711 = vld [vmem:[%s554 + $0x150] sm:$0xff]
        %v712 = vld [vmem:[%s554 + $0x158] sm:$0xff]
        %v713 = vld [vmem:[%s554 + $0x168] sm:$0xff]
        %v714 = vld [vmem:[%s554 + $0x170] sm:$0xff]
        %v715 = vld [vmem:[%s554 + $0x1] sm:$0xff]
        %v716 = vld [vmem:[%s554 + $0x9] sm:$0xff]
        %v717 = vld [vmem:[%s554 + $0x19] sm:$0xff]
        %v718 = vld [vmem:[%s554 + $0x21] sm:$0xff]
        %v719 = vld [vmem:[%s554 + $0x31] sm:$0xff]
        %v720 = vld [vmem:[%s554 + $0x39] sm:$0xff]
        %v721 = vld [vmem:[%s554 + $0x49] sm:$0xff]
        %v722 = vld [vmem:[%s554 + $0x51] sm:$0xff]
        %v723 = vld [vmem:[%s554 + $0x61] sm:$0xff]
        %v724 = vld [vmem:[%s554 + $0x69] sm:$0xff]
        %v725 = vld [vmem:[%s554 + $0x79] sm:$0xff]
        %v726 = vld [vmem:[%s554 + $0x81] sm:$0xff]
        %v727 = vld [vmem:[%s554 + $0x91] sm:$0xff]
        %v728 = vld [vmem:[%s554 + $0x99] sm:$0xff]
        %v729 = vld [vmem:[%s554 + $0xa9] sm:$0xff]
        %v730 = vld [vmem:[%s554 + $0xb1] sm:$0xff]
        %v731 = vld [vmem:[%s554 + $0xc1] sm:$0xff]
        %v732 = vld [vmem:[%s554 + $0xc9] sm:$0xff]
        %v733 = vld [vmem:[%s554 + $0xd9] sm:$0xff]
        %v734 = vld [vmem:[%s554 + $0xe1] sm:$0xff]
        %v735 = vld [vmem:[%s554 + $0xf1] sm:$0xff]
        %v736 = vld [vmem:[%s554 + $0xf9] sm:$0xff]
        %v737 = vld [vmem:[%s554 + $0x109] sm:$0xff]
        %v738 = vld [vmem:[%s554 + $0x111] sm:$0xff]
        %v739 = vld [vmem:[%s554 + $0x121] sm:$0xff]
        %v740 = vld [vmem:[%s554 + $0x129] sm:$0xff]
        %v741 = vld [vmem:[%s554 + $0x139] sm:$0xff]
        %v742 = vld [vmem:[%s554 + $0x141] sm:$0xff]
        %v743 = vld [vmem:[%s554 + $0x151] sm:$0xff]
        %v744 = vld [vmem:[%s554 + $0x159] sm:$0xff]
        %v745 = vld [vmem:[%s554 + $0x169] sm:$0xff]
        %v746 = vld [vmem:[%s554 + $0x171] sm:$0xff]
        %v747 = vld [vmem:[%s554 + $0x2] sm:$0xff]
        %v748 = vld [vmem:[%s554 + $0xa] sm:$0xff]
        %v749 = vld [vmem:[%s554 + $0x1a] sm:$0xff]
        %v750 = vld [vmem:[%s554 + $0x22] sm:$0xff]
        %v751 = vld [vmem:[%s554 + $0x32] sm:$0xff]
        %v752 = vld [vmem:[%s554 + $0x3a] sm:$0xff]
        %v753 = vld [vmem:[%s554 + $0x4a] sm:$0xff]
        %v754 = vld [vmem:[%s554 + $0x52] sm:$0xff]
        %v755 = vld [vmem:[%s554 + $0x62] sm:$0xff]
        %v756 = vld [vmem:[%s554 + $0x6a] sm:$0xff]
        %v757 = vld [vmem:[%s554 + $0x7a] sm:$0xff]
        %v758 = vld [vmem:[%s554 + $0x82] sm:$0xff]
        %v759 = vld [vmem:[%s554 + $0x92] sm:$0xff]
        %v760 = vld [vmem:[%s554 + $0x9a] sm:$0xff]
        %v761 = vld [vmem:[%s554 + $0xaa] sm:$0xff]
        %v762 = vld [vmem:[%s554 + $0xb2] sm:$0xff]
        %v763 = vld [vmem:[%s554 + $0xc2] sm:$0xff]
        %v764 = vld [vmem:[%s554 + $0xca] sm:$0xff]
        %v765 = vld [vmem:[%s554 + $0xda] sm:$0xff]
        %v766 = vld [vmem:[%s554 + $0xe2] sm:$0xff]
        %v767 = vld [vmem:[%s554 + $0xf2] sm:$0xff]
        %v768 = vld [vmem:[%s554 + $0xfa] sm:$0xff]
        %v769 = vld [vmem:[%s554 + $0x10a] sm:$0xff]
        %v770 = vld [vmem:[%s554 + $0x112] sm:$0xff]
        %v771 = vld [vmem:[%s554 + $0x122] sm:$0xff]
        %v772 = vld [vmem:[%s554 + $0x12a] sm:$0xff]
        %v773 = vld [vmem:[%s554 + $0x13a] sm:$0xff]
        %v774 = vld [vmem:[%s554 + $0x142] sm:$0xff]
        %v775 = vld [vmem:[%s554 + $0x152] sm:$0xff]
        %v776 = vld [vmem:[%s554 + $0x15a] sm:$0xff]
        %v777 = vld [vmem:[%s554 + $0x16a] sm:$0xff]
        %v778 = vld [vmem:[%s554 + $0x172] sm:$0xff]
        %s779 = scalar_lea.vmem [#allocation2], 48
        %v780 = vld [vmem:[%s779] sm:$0xff]
        %v781 = vld [vmem:[%s779 + $0x8] sm:$0xff]
        %v782 = vld [vmem:[%s779 + $0x18] sm:$0xff]
        %v783 = vld [vmem:[%s779 + $0x20] sm:$0xff]
        %v784 = vld [vmem:[%s779 + $0x30] sm:$0xff]
        %v785 = vld [vmem:[%s779 + $0x38] sm:$0xff]
        %v786 = vld [vmem:[%s779 + $0x48] sm:$0xff]
        %v787 = vld [vmem:[%s779 + $0x50] sm:$0xff]
        %v788 = vld [vmem:[%s779 + $0x60] sm:$0xff]
        %v789 = vld [vmem:[%s779 + $0x68] sm:$0xff]
        %v790 = vld [vmem:[%s779 + $0x78] sm:$0xff]
        %v791 = vld [vmem:[%s779 + $0x80] sm:$0xff]
        %v792 = vld [vmem:[%s779 + $0x90] sm:$0xff]
        %v793 = vld [vmem:[%s779 + $0x98] sm:$0xff]
        %v794 = vld [vmem:[%s779 + $0xa8] sm:$0xff]
        %v795 = vld [vmem:[%s779 + $0xb0] sm:$0xff]
        %v796 = vld [vmem:[%s779 + $0xc0] sm:$0xff]
        %v797 = vld [vmem:[%s779 + $0xc8] sm:$0xff]
        %v798 = vld [vmem:[%s779 + $0xd8] sm:$0xff]
        %v799 = vld [vmem:[%s779 + $0xe0] sm:$0xff]
        %v800 = vld [vmem:[%s779 + $0xf0] sm:$0xff]
        %v801 = vld [vmem:[%s779 + $0xf8] sm:$0xff]
        %v802 = vld [vmem:[%s779 + $0x108] sm:$0xff]
        %v803 = vld [vmem:[%s779 + $0x110] sm:$0xff]
        %v804 = vld [vmem:[%s779 + $0x120] sm:$0xff]
        %v805 = vld [vmem:[%s779 + $0x128] sm:$0xff]
        %v806 = vld [vmem:[%s779 + $0x138] sm:$0xff]
        %v807 = vld [vmem:[%s779 + $0x140] sm:$0xff]
        %v808 = vld [vmem:[%s779 + $0x150] sm:$0xff]
        %v809 = vld [vmem:[%s779 + $0x158] sm:$0xff]
        %v810 = vld [vmem:[%s779 + $0x168] sm:$0xff]
        %v811 = vld [vmem:[%s779 + $0x170] sm:$0xff]
        %v812 = vld [vmem:[%s779 + $0x1] sm:$0xff]
        %v813 = vld [vmem:[%s779 + $0x9] sm:$0xff]
        %v814 = vld [vmem:[%s779 + $0x19] sm:$0xff]
        %v815 = vld [vmem:[%s779 + $0x21] sm:$0xff]
        %v816 = vld [vmem:[%s779 + $0x31] sm:$0xff]
        %v817 = vld [vmem:[%s779 + $0x39] sm:$0xff]
        %v818 = vld [vmem:[%s779 + $0x49] sm:$0xff]
        %v819 = vld [vmem:[%s779 + $0x51] sm:$0xff]
        %v820 = vld [vmem:[%s779 + $0x61] sm:$0xff]
        %v821 = vld [vmem:[%s779 + $0x69] sm:$0xff]
        %v822 = vld [vmem:[%s779 + $0x79] sm:$0xff]
        %v823 = vld [vmem:[%s779 + $0x81] sm:$0xff]
        %v824 = vld [vmem:[%s779 + $0x91] sm:$0xff]
        %v825 = vld [vmem:[%s779 + $0x99] sm:$0xff]
        %v826 = vld [vmem:[%s779 + $0xa9] sm:$0xff]
        %v827 = vld [vmem:[%s779 + $0xb1] sm:$0xff]
        %v828 = vld [vmem:[%s779 + $0xc1] sm:$0xff]
        %v829 = vld [vmem:[%s779 + $0xc9] sm:$0xff]
        %v830 = vld [vmem:[%s779 + $0xd9] sm:$0xff]
        %v831 = vld [vmem:[%s779 + $0xe1] sm:$0xff]
        %v832 = vld [vmem:[%s779 + $0xf1] sm:$0xff]
        %v833 = vld [vmem:[%s779 + $0xf9] sm:$0xff]
        %v834 = vld [vmem:[%s779 + $0x109] sm:$0xff]
        %v835 = vld [vmem:[%s779 + $0x111] sm:$0xff]
        %v836 = vld [vmem:[%s779 + $0x121] sm:$0xff]
        %v837 = vld [vmem:[%s779 + $0x129] sm:$0xff]
        %v838 = vld [vmem:[%s779 + $0x139] sm:$0xff]
        %v839 = vld [vmem:[%s779 + $0x141] sm:$0xff]
        %v840 = vld [vmem:[%s779 + $0x151] sm:$0xff]
        %v841 = vld [vmem:[%s779 + $0x159] sm:$0xff]
        %v842 = vld [vmem:[%s779 + $0x169] sm:$0xff]
        %v843 = vld [vmem:[%s779 + $0x171] sm:$0xff]
        %v844 = vld [vmem:[%s779 + $0x2] sm:$0xff]
        %v845 = vld [vmem:[%s779 + $0xa] sm:$0xff]
        %v846 = vld [vmem:[%s779 + $0x1a] sm:$0xff]
        %v847 = vld [vmem:[%s779 + $0x22] sm:$0xff]
        %v848 = vld [vmem:[%s779 + $0x32] sm:$0xff]
        %v849 = vld [vmem:[%s779 + $0x3a] sm:$0xff]
        %v850 = vld [vmem:[%s779 + $0x4a] sm:$0xff]
        %v851 = vld [vmem:[%s779 + $0x52] sm:$0xff]
        %v852 = vld [vmem:[%s779 + $0x62] sm:$0xff]
        %v853 = vld [vmem:[%s779 + $0x6a] sm:$0xff]
        %v854 = vld [vmem:[%s779 + $0x7a] sm:$0xff]
        %v855 = vld [vmem:[%s779 + $0x82] sm:$0xff]
        %v856 = vld [vmem:[%s779 + $0x92] sm:$0xff]
        %v857 = vld [vmem:[%s779 + $0x9a] sm:$0xff]
        %v858 = vld [vmem:[%s779 + $0xaa] sm:$0xff]
        %v859 = vld [vmem:[%s779 + $0xb2] sm:$0xff]
        %v860 = vld [vmem:[%s779 + $0xc2] sm:$0xff]
        %v861 = vld [vmem:[%s779 + $0xca] sm:$0xff]
        %v862 = vld [vmem:[%s779 + $0xda] sm:$0xff]
        %v863 = vld [vmem:[%s779 + $0xe2] sm:$0xff]
        %v864 = vld [vmem:[%s779 + $0xf2] sm:$0xff]
        %v865 = vld [vmem:[%s779 + $0xfa] sm:$0xff]
        %v866 = vld [vmem:[%s779 + $0x10a] sm:$0xff]
        %v867 = vld [vmem:[%s779 + $0x112] sm:$0xff]
        %v868 = vld [vmem:[%s779 + $0x122] sm:$0xff]
        %v869 = vld [vmem:[%s779 + $0x12a] sm:$0xff]
        %v870 = vld [vmem:[%s779 + $0x13a] sm:$0xff]
        %v871 = vld [vmem:[%s779 + $0x142] sm:$0xff]
        %v872 = vld [vmem:[%s779 + $0x152] sm:$0xff]
        %v873 = vld [vmem:[%s779 + $0x15a] sm:$0xff]
        %v874 = vld [vmem:[%s779 + $0x16a] sm:$0xff]
        %v875 = vld [vmem:[%s779 + $0x172] sm:$0xff]
        %v876 = vld [vmem:[%s1] sm:$0xf]
        %v877 = vld [vmem:[%s1 + $0x4] sm:$0xf]
        %v879 = vsel %vm466, %v619, 0
        %v882 = vsel %vm466, %v620, 0
        %v885 = vsel %vm466, %v621, 0
        %v888 = vsel %vm466, %v622, 0
        %v891 = vsel %vm466, %v623, 0
        %v894 = vsel %vm466, %v624, 0
        %v897 = vsel %vm466, %v625, 0
        %v900 = vsel %vm466, %v626, 0
        %v903 = vsel %vm466, %v627, 0
        %v906 = vsel %vm466, %v628, 0
        %v909 = vsel %vm466, %v629, 0
        %v912 = vsel %vm466, %v630, 0
        %v915 = vsel %vm466, %v631, 0
        %v918 = vsel %vm466, %v632, 0
        %v921 = vsel %vm466, %v633, 0
        %v924 = vsel %vm466, %v634, 0
        %v927 = vsel %vm466, %v635, 0
        %v930 = vsel %vm466, %v636, 0
        %v933 = vsel %vm466, %v637, 0
        %v936 = vsel %vm466, %v638, 0
        %v939 = vsel %vm466, %v639, 0
        %v942 = vsel %vm466, %v640, 0
        %v945 = vsel %vm466, %v641, 0
        %v948 = vsel %vm466, %v642, 0
        %v951 = vsel %vm466, %v643, 0
        %v954 = vsel %vm466, %v644, 0
        %v957 = vsel %vm466, %v645, 0
        %v960 = vsel %vm466, %v646, 0
        %v963 = vsel %vm466, %v647, 0
        %v966 = vsel %vm466, %v648, 0
        %v969 = vsel %vm466, %v649, 0
        %v972 = vsel %vm466, %v650, 0
        %vm974 = vcmask 1043456
        %v976 = vsel %vm974, %v877, 0
        %978 = vmatprep.subr.mxu0 0.0
        %979 = vmatpush1.msra.mxu0 0.0
        %980 = vmatprep.subr.mxu0 0.0
        %981 = vmatpush1.msra.mxu0 0.0
        %982 = vmatprep.subr.mxu0 0.0
        %983 = vmatpush1.msra.mxu0 0.0
        %984 = vmatprep.subr.mxu0 0.0
        %985 = vmatpush1.msra.mxu0 0.0
        %986 = vmatprep.subr.mxu0 0.0
        %987 = vmatpush1.msra.mxu0 0.0
        %988 = vmatprep.subr.mxu0 0.0
        %989 = vmatpush1.msra.mxu0 0.0
        %990 = vmatprep.subr.mxu0 0.0
        %991 = vmatpush1.msra.mxu0 0.0
        %992 = vmatprep.subr.mxu0 0.0
        %993 = vmatpush1.msra.mxu0 0.0
        %994 = vmatprep.subr.mxu0 0.0
        %995 = vmatpush1.msra.mxu0 0.0
        %996 = vmatprep.subr.mxu0 0.0
        %997 = vmatpush1.msra.mxu0 0.0
        %998 = vmatprep.subr.mxu0 0.0
        %999 = vmatpush1.msra.mxu0 0.0
        %1000 = vmatprep.subr.mxu0 0.0
        %1001 = vmatpush1.msra.mxu0 0.0
        %1002 = vmatprep.subr.mxu0 0.0
        %1003 = vmatpush1.msra.mxu0 0.0
        %1004 = vmatprep.subr.mxu0 0.0
        %1005 = vmatpush1.msra.mxu0 0.0
        %1006 = vmatprep.subr.mxu0 0.0
        %1007 = vmatpush1.msra.mxu0 0.0
        %1008 = vmatprep.subr.mxu0 0.0
        %1009 = vmatpush1.msra.mxu0 %v976
        %1010 = vmatprep.subr.mxu0 0.0
        %1011 = vmatpush2.msra.mxu0 0.0
        %1012 = vmatprep.subr.mxu0 0.0
        %1013 = vmatpush2.msra.mxu0 0.0
        %1014 = vmatprep.subr.mxu0 0.0
        %1015 = vmatpush2.msra.mxu0 0.0
        %1016 = vmatprep.subr.mxu0 0.0
        %1017 = vmatpush2.msra.mxu0 0.0
        %1018 = vmatprep.subr.mxu0 0.0
        %1019 = vmatpush2.msra.mxu0 0.0
        %1020 = vmatprep.subr.mxu0 0.0
        %1021 = vmatpush2.msra.mxu0 0.0
        %1022 = vmatprep.subr.mxu0 0.0
        %1023 = vmatpush2.msra.mxu0 0.0
        %1024 = vmatprep.subr.mxu0 0.0
        %1025 = vmatpush2.msra.mxu0 0.0
        %1026 = vmatprep.subr.mxu0 0.0
        %1027 = vmatpush2.msra.mxu0 0.0
        %1028 = vmatprep.subr.mxu0 0.0
        %1029 = vmatpush2.msra.mxu0 0.0
        %1030 = vmatprep.subr.mxu0 0.0
        %1031 = vmatpush2.msra.mxu0 0.0
        %1032 = vmatprep.subr.mxu0 0.0
        %1033 = vmatpush2.msra.mxu0 0.0
        %1034 = vmatprep.subr.mxu0 0.0
        %1035 = vmatpush2.msra.mxu0 0.0
        %1036 = vmatprep.subr.mxu0 0.0
        %1037 = vmatpush2.msra.mxu0 0.0
        %1038 = vmatprep.subr.mxu0 0.0
        %1039 = vmatpush2.msra.mxu0 0.0
        %1040 = vmatprep.subr.mxu0 0.0
        %1041 = vmatpush2.msra.mxu0 0.0
        %1042 = vmatprep.mubr.f32.mxu0 0.0
        %1043 = vmatmul.mubr.f32.gmra.mxu0 %v879
        %v1044 = vpop.f32.mrf.mxu0
        %v1045 = vadd.f32 0.0, %v1044
        %v1046 = vpop.f32.mrf.mxu0
        %1047 = vmatprep.mubr.f32.mxu0 0.0
        %1048 = vmatmul.mubr.f32.gmra.mxu0 %v882
        %v1049 = vpop.f32.mrf.mxu0
        %v1050 = vadd.f32 0.0, %v1049
        %v1051 = vpop.f32.mrf.mxu0
        %1052 = vmatprep.mubr.f32.mxu0 0.0
        %1053 = vmatmul.mubr.f32.gmra.mxu0 %v885
        %v1054 = vpop.f32.mrf.mxu0
        %v1055 = vadd.f32 0.0, %v1054
        %v1056 = vpop.f32.mrf.mxu0
        %1057 = vmatprep.mubr.f32.mxu0 0.0
        %1058 = vmatmul.mubr.f32.gmra.mxu0 %v888
        %v1059 = vpop.f32.mrf.mxu0
        %v1060 = vadd.f32 0.0, %v1059
        %v1061 = vpop.f32.mrf.mxu0
        %1062 = vmatprep.mubr.f32.mxu0 0.0
        %1063 = vmatmul.mubr.f32.gmra.mxu0 %v891
        %v1064 = vpop.f32.mrf.mxu0
        %v1065 = vadd.f32 0.0, %v1064
        %v1066 = vpop.f32.mrf.mxu0
        %1067 = vmatprep.mubr.f32.mxu0 0.0
        %1068 = vmatmul.mubr.f32.gmra.mxu0 %v894
        %v1069 = vpop.f32.mrf.mxu0
        %v1070 = vadd.f32 0.0, %v1069
        %v1071 = vpop.f32.mrf.mxu0
        %1072 = vmatprep.mubr.f32.mxu0 0.0
        %1073 = vmatmul.mubr.f32.gmra.mxu0 %v897
        %v1074 = vpop.f32.mrf.mxu0
        %v1075 = vadd.f32 0.0, %v1074
        %v1076 = vpop.f32.mrf.mxu0
        %1077 = vmatprep.mubr.f32.mxu0 0.0
        %1078 = vmatmul.mubr.f32.gmra.mxu0 %v900
        %v1079 = vpop.f32.mrf.mxu0
        %v1080 = vadd.f32 0.0, %v1079
        %v1081 = vpop.f32.mrf.mxu0
        %1082 = vmatprep.mubr.f32.mxu0 0.0
        %1083 = vmatmul.mubr.f32.gmra.mxu0 %v903
        %v1084 = vpop.f32.mrf.mxu0
        %v1085 = vadd.f32 0.0, %v1084
        %v1086 = vpop.f32.mrf.mxu0
        %1087 = vmatprep.mubr.f32.mxu0 0.0
        %1088 = vmatmul.mubr.f32.gmra.mxu0 %v906
        %v1089 = vpop.f32.mrf.mxu0
        %v1090 = vadd.f32 0.0, %v1089
        %v1091 = vpop.f32.mrf.mxu0
        %1092 = vmatprep.mubr.f32.mxu0 0.0
        %1093 = vmatmul.mubr.f32.gmra.mxu0 %v909
        %v1094 = vpop.f32.mrf.mxu0
        %v1095 = vadd.f32 0.0, %v1094
        %v1096 = vpop.f32.mrf.mxu0
        %1097 = vmatprep.mubr.f32.mxu0 0.0
        %1098 = vmatmul.mubr.f32.gmra.mxu0 %v912
        %v1099 = vpop.f32.mrf.mxu0
        %v1100 = vadd.f32 0.0, %v1099
        %v1101 = vpop.f32.mrf.mxu0
        %1102 = vmatprep.mubr.f32.mxu0 0.0
        %1103 = vmatmul.mubr.f32.gmra.mxu0 %v915
        %v1104 = vpop.f32.mrf.mxu0
        %v1105 = vadd.f32 0.0, %v1104
        %v1106 = vpop.f32.mrf.mxu0
        %1107 = vmatprep.mubr.f32.mxu0 0.0
        %1108 = vmatmul.mubr.f32.gmra.mxu0 %v918
        %v1109 = vpop.f32.mrf.mxu0
        %v1110 = vadd.f32 0.0, %v1109
        %v1111 = vpop.f32.mrf.mxu0
        %1112 = vmatprep.mubr.f32.mxu0 0.0
        %1113 = vmatmul.mubr.f32.gmra.mxu0 %v921
        %v1114 = vpop.f32.mrf.mxu0
        %v1115 = vadd.f32 0.0, %v1114
        %v1116 = vpop.f32.mrf.mxu0
        %1117 = vmatprep.mubr.f32.mxu0 0.0
        %1118 = vmatmul.mubr.f32.gmra.mxu0 %v924
        %v1119 = vpop.f32.mrf.mxu0
        %v1120 = vadd.f32 0.0, %v1119
        %v1121 = vpop.f32.mrf.mxu0
        %1122 = vmatprep.mubr.f32.mxu0 0.0
        %1123 = vmatmul.mubr.f32.gmra.mxu0 %v927
        %v1124 = vpop.f32.mrf.mxu0
        %v1125 = vadd.f32 0.0, %v1124
        %v1126 = vpop.f32.mrf.mxu0
        %1127 = vmatprep.mubr.f32.mxu0 0.0
        %1128 = vmatmul.mubr.f32.gmra.mxu0 %v930
        %v1129 = vpop.f32.mrf.mxu0
        %v1130 = vadd.f32 0.0, %v1129
        %v1131 = vpop.f32.mrf.mxu0
        %1132 = vmatprep.mubr.f32.mxu0 0.0
        %1133 = vmatmul.mubr.f32.gmra.mxu0 %v933
        %v1134 = vpop.f32.mrf.mxu0
        %v1135 = vadd.f32 0.0, %v1134
        %v1136 = vpop.f32.mrf.mxu0
        %1137 = vmatprep.mubr.f32.mxu0 0.0
        %1138 = vmatmul.mubr.f32.gmra.mxu0 %v936
        %v1139 = vpop.f32.mrf.mxu0
        %v1140 = vadd.f32 0.0, %v1139
        %v1141 = vpop.f32.mrf.mxu0
        %1142 = vmatprep.mubr.f32.mxu0 0.0
        %1143 = vmatmul.mubr.f32.gmra.mxu0 %v939
        %v1144 = vpop.f32.mrf.mxu0
        %v1145 = vadd.f32 0.0, %v1144
        %v1146 = vpop.f32.mrf.mxu0
        %1147 = vmatprep.mubr.f32.mxu0 0.0
        %1148 = vmatmul.mubr.f32.gmra.mxu0 %v942
        %v1149 = vpop.f32.mrf.mxu0
        %v1150 = vadd.f32 0.0, %v1149
        %v1151 = vpop.f32.mrf.mxu0
        %1152 = vmatprep.mubr.f32.mxu0 0.0
        %1153 = vmatmul.mubr.f32.gmra.mxu0 %v945
        %v1154 = vpop.f32.mrf.mxu0
        %v1155 = vadd.f32 0.0, %v1154
        %v1156 = vpop.f32.mrf.mxu0
        %1157 = vmatprep.mubr.f32.mxu0 0.0
        %1158 = vmatmul.mubr.f32.gmra.mxu0 %v948
        %v1159 = vpop.f32.mrf.mxu0
        %v1160 = vadd.f32 0.0, %v1159
        %v1161 = vpop.f32.mrf.mxu0
        %1162 = vmatprep.mubr.f32.mxu0 0.0
        %1163 = vmatmul.mubr.f32.gmra.mxu0 %v951
        %v1164 = vpop.f32.mrf.mxu0
        %v1165 = vadd.f32 0.0, %v1164
        %v1166 = vpop.f32.mrf.mxu0
        %1167 = vmatprep.mubr.f32.mxu0 0.0
        %1168 = vmatmul.mubr.f32.gmra.mxu0 %v954
        %v1169 = vpop.f32.mrf.mxu0
        %v1170 = vadd.f32 0.0, %v1169
        %v1171 = vpop.f32.mrf.mxu0
        %1172 = vmatprep.mubr.f32.mxu0 0.0
        %1173 = vmatmul.mubr.f32.gmra.mxu0 %v957
        %v1174 = vpop.f32.mrf.mxu0
        %v1175 = vadd.f32 0.0, %v1174
        %v1176 = vpop.f32.mrf.mxu0
        %1177 = vmatprep.mubr.f32.mxu0 0.0
        %1178 = vmatmul.mubr.f32.gmra.mxu0 %v960
        %v1179 = vpop.f32.mrf.mxu0
        %v1180 = vadd.f32 0.0, %v1179
        %v1181 = vpop.f32.mrf.mxu0
        %1182 = vmatprep.mubr.f32.mxu0 0.0
        %1183 = vmatmul.mubr.f32.gmra.mxu0 %v963
        %v1184 = vpop.f32.mrf.mxu0
        %v1185 = vadd.f32 0.0, %v1184
        %v1186 = vpop.f32.mrf.mxu0
        %1187 = vmatprep.mubr.f32.mxu0 0.0
        %1188 = vmatmul.mubr.f32.gmra.mxu0 %v966
        %v1189 = vpop.f32.mrf.mxu0
        %v1190 = vadd.f32 0.0, %v1189
        %v1191 = vpop.f32.mrf.mxu0
        %1192 = vmatprep.mubr.f32.mxu0 0.0
        %1193 = vmatmul.mubr.f32.gmra.mxu0 %v969
        %v1194 = vpop.f32.mrf.mxu0
        %v1195 = vadd.f32 0.0, %v1194
        %v1196 = vpop.f32.mrf.mxu0
        %1197 = vmatprep.mubr.f32.mxu0 0.0
        %1198 = vmatmul.mubr.f32.gmra.mxu0 %v972
        %v1199 = vpop.f32.mrf.mxu0
        %v1200 = vadd.f32 0.0, %v1199
        %v1201 = vpop.f32.mrf.mxu0
        %1202 = vdwg.mxu0
        %v1204 = vsel %vm466, %v587, 0
        %v1207 = vsel %vm466, %v588, 0
        %v1210 = vsel %vm466, %v589, 0
        %v1213 = vsel %vm466, %v590, 0
        %v1216 = vsel %vm466, %v591, 0
        %v1219 = vsel %vm466, %v592, 0
        %v1222 = vsel %vm466, %v593, 0
        %v1225 = vsel %vm466, %v594, 0
        %v1228 = vsel %vm466, %v595, 0
        %v1231 = vsel %vm466, %v596, 0
        %v1234 = vsel %vm466, %v597, 0
        %v1237 = vsel %vm466, %v598, 0
        %v1240 = vsel %vm466, %v599, 0
        %v1243 = vsel %vm466, %v600, 0
        %v1246 = vsel %vm466, %v601, 0
        %v1249 = vsel %vm466, %v602, 0
        %v1252 = vsel %vm466, %v603, 0
        %v1255 = vsel %vm466, %v604, 0
        %v1258 = vsel %vm466, %v605, 0
        %v1261 = vsel %vm466, %v606, 0
        %v1264 = vsel %vm466, %v607, 0
        %v1267 = vsel %vm466, %v608, 0
        %v1270 = vsel %vm466, %v609, 0
        %v1273 = vsel %vm466, %v610, 0
        %v1276 = vsel %vm466, %v611, 0
        %v1279 = vsel %vm466, %v612, 0
        %v1282 = vsel %vm466, %v613, 0
        %v1285 = vsel %vm466, %v614, 0
        %v1288 = vsel %vm466, %v615, 0
        %v1291 = vsel %vm466, %v616, 0
        %v1294 = vsel %vm466, %v617, 0
        %v1297 = vsel %vm466, %v618, 0
        %v1300 = vsel %vm974, %v876, 0
        %1302 = vmatprep.subr.mxu0 0.0
        %1303 = vmatpush1.msra.mxu0 0.0
        %1304 = vmatprep.subr.mxu0 0.0
        %1305 = vmatpush1.msra.mxu0 0.0
        %1306 = vmatprep.subr.mxu0 0.0
        %1307 = vmatpush1.msra.mxu0 0.0
        %1308 = vmatprep.subr.mxu0 0.0
        %1309 = vmatpush1.msra.mxu0 0.0
        %1310 = vmatprep.subr.mxu0 0.0
        %1311 = vmatpush1.msra.mxu0 0.0
        %1312 = vmatprep.subr.mxu0 0.0
        %1313 = vmatpush1.msra.mxu0 0.0
        %1314 = vmatprep.subr.mxu0 0.0
        %1315 = vmatpush1.msra.mxu0 0.0
        %1316 = vmatprep.subr.mxu0 0.0
        %1317 = vmatpush1.msra.mxu0 0.0
        %1318 = vmatprep.subr.mxu0 0.0
        %1319 = vmatpush1.msra.mxu0 0.0
        %1320 = vmatprep.subr.mxu0 0.0
        %1321 = vmatpush1.msra.mxu0 0.0
        %1322 = vmatprep.subr.mxu0 0.0
        %1323 = vmatpush1.msra.mxu0 0.0
        %1324 = vmatprep.subr.mxu0 0.0
        %1325 = vmatpush1.msra.mxu0 0.0
        %1326 = vmatprep.subr.mxu0 0.0
        %1327 = vmatpush1.msra.mxu0 0.0
        %1328 = vmatprep.subr.mxu0 0.0
        %1329 = vmatpush1.msra.mxu0 0.0
        %1330 = vmatprep.subr.mxu0 0.0
        %1331 = vmatpush1.msra.mxu0 0.0
        %1332 = vmatprep.subr.mxu0 0.0
        %1333 = vmatpush1.msra.mxu0 %v1300
        %1334 = vmatprep.subr.mxu0 0.0
        %1335 = vmatpush2.msra.mxu0 0.0
        %1336 = vmatprep.subr.mxu0 0.0
        %1337 = vmatpush2.msra.mxu0 0.0
        %1338 = vmatprep.subr.mxu0 0.0
        %1339 = vmatpush2.msra.mxu0 0.0
        %1340 = vmatprep.subr.mxu0 0.0
        %1341 = vmatpush2.msra.mxu0 0.0
        %1342 = vmatprep.subr.mxu0 0.0
        %1343 = vmatpush2.msra.mxu0 0.0
        %1344 = vmatprep.subr.mxu0 0.0
        %1345 = vmatpush2.msra.mxu0 0.0
        %1346 = vmatprep.subr.mxu0 0.0
        %1347 = vmatpush2.msra.mxu0 0.0
        %1348 = vmatprep.subr.mxu0 0.0
        %1349 = vmatpush2.msra.mxu0 0.0
        %1350 = vmatprep.subr.mxu0 0.0
        %1351 = vmatpush2.msra.mxu0 0.0
        %1352 = vmatprep.subr.mxu0 0.0
        %1353 = vmatpush2.msra.mxu0 0.0
        %1354 = vmatprep.subr.mxu0 0.0
        %1355 = vmatpush2.msra.mxu0 0.0
        %1356 = vmatprep.subr.mxu0 0.0
        %1357 = vmatpush2.msra.mxu0 0.0
        %1358 = vmatprep.subr.mxu0 0.0
        %1359 = vmatpush2.msra.mxu0 0.0
        %1360 = vmatprep.subr.mxu0 0.0
        %1361 = vmatpush2.msra.mxu0 0.0
        %1362 = vmatprep.subr.mxu0 0.0
        %1363 = vmatpush2.msra.mxu0 0.0
        %1364 = vmatprep.subr.mxu0 0.0
        %1365 = vmatpush2.msra.mxu0 0.0
        %1366 = vmatprep.mubr.f32.mxu0 0.0
        %1367 = vmatmul.mubr.f32.gmra.mxu0 %v1204
        %v1368 = vpop.f32.mrf.mxu0
        %v1369 = vadd.f32 %v1045, %v1368
        %v1370 = vpop.f32.mrf.mxu0
        %1371 = vmatprep.mubr.f32.mxu0 0.0
        %1372 = vmatmul.mubr.f32.gmra.mxu0 %v1207
        %v1373 = vpop.f32.mrf.mxu0
        %v1374 = vadd.f32 %v1050, %v1373
        %v1375 = vpop.f32.mrf.mxu0
        %1376 = vmatprep.mubr.f32.mxu0 0.0
        %1377 = vmatmul.mubr.f32.gmra.mxu0 %v1210
        %v1378 = vpop.f32.mrf.mxu0
        %v1379 = vadd.f32 %v1055, %v1378
        %v1380 = vpop.f32.mrf.mxu0
        %1381 = vmatprep.mubr.f32.mxu0 0.0
        %1382 = vmatmul.mubr.f32.gmra.mxu0 %v1213
        %v1383 = vpop.f32.mrf.mxu0
        %v1384 = vadd.f32 %v1060, %v1383
        %v1385 = vpop.f32.mrf.mxu0
        %1386 = vmatprep.mubr.f32.mxu0 0.0
        %1387 = vmatmul.mubr.f32.gmra.mxu0 %v1216
        %v1388 = vpop.f32.mrf.mxu0
        %v1389 = vadd.f32 %v1065, %v1388
        %v1390 = vpop.f32.mrf.mxu0
        %1391 = vmatprep.mubr.f32.mxu0 0.0
        %1392 = vmatmul.mubr.f32.gmra.mxu0 %v1219
        %v1393 = vpop.f32.mrf.mxu0
        %v1394 = vadd.f32 %v1070, %v1393
        %v1395 = vpop.f32.mrf.mxu0
        %1396 = vmatprep.mubr.f32.mxu0 0.0
        %1397 = vmatmul.mubr.f32.gmra.mxu0 %v1222
        %v1398 = vpop.f32.mrf.mxu0
        %v1399 = vadd.f32 %v1075, %v1398
        %v1400 = vpop.f32.mrf.mxu0
        %1401 = vmatprep.mubr.f32.mxu0 0.0
        %1402 = vmatmul.mubr.f32.gmra.mxu0 %v1225
        %v1403 = vpop.f32.mrf.mxu0
        %v1404 = vadd.f32 %v1080, %v1403
        %v1405 = vpop.f32.mrf.mxu0
        %1406 = vmatprep.mubr.f32.mxu0 0.0
        %1407 = vmatmul.mubr.f32.gmra.mxu0 %v1228
        %v1408 = vpop.f32.mrf.mxu0
        %v1409 = vadd.f32 %v1085, %v1408
        %v1410 = vpop.f32.mrf.mxu0
        %1411 = vmatprep.mubr.f32.mxu0 0.0
        %1412 = vmatmul.mubr.f32.gmra.mxu0 %v1231
        %v1413 = vpop.f32.mrf.mxu0
        %v1414 = vadd.f32 %v1090, %v1413
        %v1415 = vpop.f32.mrf.mxu0
        %1416 = vmatprep.mubr.f32.mxu0 0.0
        %1417 = vmatmul.mubr.f32.gmra.mxu0 %v1234
        %v1418 = vpop.f32.mrf.mxu0
        %v1419 = vadd.f32 %v1095, %v1418
        %v1420 = vpop.f32.mrf.mxu0
        %1421 = vmatprep.mubr.f32.mxu0 0.0
        %1422 = vmatmul.mubr.f32.gmra.mxu0 %v1237
        %v1423 = vpop.f32.mrf.mxu0
        %v1424 = vadd.f32 %v1100, %v1423
        %v1425 = vpop.f32.mrf.mxu0
        %1426 = vmatprep.mubr.f32.mxu0 0.0
        %1427 = vmatmul.mubr.f32.gmra.mxu0 %v1240
        %v1428 = vpop.f32.mrf.mxu0
        %v1429 = vadd.f32 %v1105, %v1428
        %v1430 = vpop.f32.mrf.mxu0
        %1431 = vmatprep.mubr.f32.mxu0 0.0
        %1432 = vmatmul.mubr.f32.gmra.mxu0 %v1243
        %v1433 = vpop.f32.mrf.mxu0
        %v1434 = vadd.f32 %v1110, %v1433
        %v1435 = vpop.f32.mrf.mxu0
        %1436 = vmatprep.mubr.f32.mxu0 0.0
        %1437 = vmatmul.mubr.f32.gmra.mxu0 %v1246
        %v1438 = vpop.f32.mrf.mxu0
        %v1439 = vadd.f32 %v1115, %v1438
        %v1440 = vpop.f32.mrf.mxu0
        %1441 = vmatprep.mubr.f32.mxu0 0.0
        %1442 = vmatmul.mubr.f32.gmra.mxu0 %v1249
        %v1443 = vpop.f32.mrf.mxu0
        %v1444 = vadd.f32 %v1120, %v1443
        %v1445 = vpop.f32.mrf.mxu0
        %1446 = vmatprep.mubr.f32.mxu0 0.0
        %1447 = vmatmul.mubr.f32.gmra.mxu0 %v1252
        %v1448 = vpop.f32.mrf.mxu0
        %v1449 = vadd.f32 %v1125, %v1448
        %v1450 = vpop.f32.mrf.mxu0
        %1451 = vmatprep.mubr.f32.mxu0 0.0
        %1452 = vmatmul.mubr.f32.gmra.mxu0 %v1255
        %v1453 = vpop.f32.mrf.mxu0
        %v1454 = vadd.f32 %v1130, %v1453
        %v1455 = vpop.f32.mrf.mxu0
        %1456 = vmatprep.mubr.f32.mxu0 0.0
        %1457 = vmatmul.mubr.f32.gmra.mxu0 %v1258
        %v1458 = vpop.f32.mrf.mxu0
        %v1459 = vadd.f32 %v1135, %v1458
        %v1460 = vpop.f32.mrf.mxu0
        %1461 = vmatprep.mubr.f32.mxu0 0.0
        %1462 = vmatmul.mubr.f32.gmra.mxu0 %v1261
        %v1463 = vpop.f32.mrf.mxu0
        %v1464 = vadd.f32 %v1140, %v1463
        %v1465 = vpop.f32.mrf.mxu0
        %1466 = vmatprep.mubr.f32.mxu0 0.0
        %1467 = vmatmul.mubr.f32.gmra.mxu0 %v1264
        %v1468 = vpop.f32.mrf.mxu0
        %v1469 = vadd.f32 %v1145, %v1468
        %v1470 = vpop.f32.mrf.mxu0
        %1471 = vmatprep.mubr.f32.mxu0 0.0
        %1472 = vmatmul.mubr.f32.gmra.mxu0 %v1267
        %v1473 = vpop.f32.mrf.mxu0
        %v1474 = vadd.f32 %v1150, %v1473
        %v1475 = vpop.f32.mrf.mxu0
        %1476 = vmatprep.mubr.f32.mxu0 0.0
        %1477 = vmatmul.mubr.f32.gmra.mxu0 %v1270
        %v1478 = vpop.f32.mrf.mxu0
        %v1479 = vadd.f32 %v1155, %v1478
        %v1480 = vpop.f32.mrf.mxu0
        %1481 = vmatprep.mubr.f32.mxu0 0.0
        %1482 = vmatmul.mubr.f32.gmra.mxu0 %v1273
        %v1483 = vpop.f32.mrf.mxu0
        %v1484 = vadd.f32 %v1160, %v1483
        %v1485 = vpop.f32.mrf.mxu0
        %1486 = vmatprep.mubr.f32.mxu0 0.0
        %1487 = vmatmul.mubr.f32.gmra.mxu0 %v1276
        %v1488 = vpop.f32.mrf.mxu0
        %v1489 = vadd.f32 %v1165, %v1488
        %v1490 = vpop.f32.mrf.mxu0
        %1491 = vmatprep.mubr.f32.mxu0 0.0
        %1492 = vmatmul.mubr.f32.gmra.mxu0 %v1279
        %v1493 = vpop.f32.mrf.mxu0
        %v1494 = vadd.f32 %v1170, %v1493
        %v1495 = vpop.f32.mrf.mxu0
        %1496 = vmatprep.mubr.f32.mxu0 0.0
        %1497 = vmatmul.mubr.f32.gmra.mxu0 %v1282
        %v1498 = vpop.f32.mrf.mxu0
        %v1499 = vadd.f32 %v1175, %v1498
        %v1500 = vpop.f32.mrf.mxu0
        %1501 = vmatprep.mubr.f32.mxu0 0.0
        %1502 = vmatmul.mubr.f32.gmra.mxu0 %v1285
        %v1503 = vpop.f32.mrf.mxu0
        %v1504 = vadd.f32 %v1180, %v1503
        %v1505 = vpop.f32.mrf.mxu0
        %1506 = vmatprep.mubr.f32.mxu0 0.0
        %1507 = vmatmul.mubr.f32.gmra.mxu0 %v1288
        %v1508 = vpop.f32.mrf.mxu0
        %v1509 = vadd.f32 %v1185, %v1508
        %v1510 = vpop.f32.mrf.mxu0
        %1511 = vmatprep.mubr.f32.mxu0 0.0
        %1512 = vmatmul.mubr.f32.gmra.mxu0 %v1291
        %v1513 = vpop.f32.mrf.mxu0
        %v1514 = vadd.f32 %v1190, %v1513
        %v1515 = vpop.f32.mrf.mxu0
        %1516 = vmatprep.mubr.f32.mxu0 0.0
        %1517 = vmatmul.mubr.f32.gmra.mxu0 %v1294
        %v1518 = vpop.f32.mrf.mxu0
        %v1519 = vadd.f32 %v1195, %v1518
        %v1520 = vpop.f32.mrf.mxu0
        %1521 = vmatprep.mubr.f32.mxu0 0.0
        %1522 = vmatmul.mubr.f32.gmra.mxu0 %v1297
        %v1523 = vpop.f32.mrf.mxu0
        %v1524 = vadd.f32 %v1200, %v1523
        %v1525 = vpop.f32.mrf.mxu0
        %1526 = vdwg.mxu0
        %v1527 = vld [vmem:[%s1 + $0x8] sm:$0xf]
        %v1529 = vsel %vm466, %v651, 0
        %v1532 = vsel %vm466, %v652, 0
        %v1535 = vsel %vm466, %v653, 0
        %v1538 = vsel %vm466, %v654, 0
        %v1541 = vsel %vm466, %v655, 0
        %v1544 = vsel %vm466, %v656, 0
        %v1547 = vsel %vm466, %v657, 0
        %v1550 = vsel %vm466, %v658, 0
        %v1553 = vsel %vm466, %v659, 0
        %v1556 = vsel %vm466, %v660, 0
        %v1559 = vsel %vm466, %v661, 0
        %v1562 = vsel %vm466, %v662, 0
        %v1565 = vsel %vm466, %v663, 0
        %v1568 = vsel %vm466, %v664, 0
        %v1571 = vsel %vm466, %v665, 0
        %v1574 = vsel %vm466, %v666, 0
        %v1577 = vsel %vm466, %v667, 0
        %v1580 = vsel %vm466, %v668, 0
        %v1583 = vsel %vm466, %v669, 0
        %v1586 = vsel %vm466, %v670, 0
        %v1589 = vsel %vm466, %v671, 0
        %v1592 = vsel %vm466, %v672, 0
        %v1595 = vsel %vm466, %v673, 0
        %v1598 = vsel %vm466, %v674, 0
        %v1601 = vsel %vm466, %v675, 0
        %v1604 = vsel %vm466, %v676, 0
        %v1607 = vsel %vm466, %v677, 0
        %v1610 = vsel %vm466, %v678, 0
        %v1613 = vsel %vm466, %v679, 0
        %v1616 = vsel %vm466, %v680, 0
        %v1619 = vsel %vm466, %v681, 0
        %v1622 = vsel %vm466, %v682, 0
        %v1625 = vsel %vm974, %v1527, 0
        %1627 = vmatprep.subr.mxu0 0.0
        %1628 = vmatpush1.msra.mxu0 0.0
        %1629 = vmatprep.subr.mxu0 0.0
        %1630 = vmatpush1.msra.mxu0 0.0
        %1631 = vmatprep.subr.mxu0 0.0
        %1632 = vmatpush1.msra.mxu0 0.0
        %1633 = vmatprep.subr.mxu0 0.0
        %1634 = vmatpush1.msra.mxu0 0.0
        %1635 = vmatprep.subr.mxu0 0.0
        %1636 = vmatpush1.msra.mxu0 0.0
        %1637 = vmatprep.subr.mxu0 0.0
        %1638 = vmatpush1.msra.mxu0 0.0
        %1639 = vmatprep.subr.mxu0 0.0
        %1640 = vmatpush1.msra.mxu0 0.0
        %1641 = vmatprep.subr.mxu0 0.0
        %1642 = vmatpush1.msra.mxu0 0.0
        %1643 = vmatprep.subr.mxu0 0.0
        %1644 = vmatpush1.msra.mxu0 0.0
        %1645 = vmatprep.subr.mxu0 0.0
        %1646 = vmatpush1.msra.mxu0 0.0
        %1647 = vmatprep.subr.mxu0 0.0
        %1648 = vmatpush1.msra.mxu0 0.0
        %1649 = vmatprep.subr.mxu0 0.0
        %1650 = vmatpush1.msra.mxu0 0.0
        %1651 = vmatprep.subr.mxu0 0.0
        %1652 = vmatpush1.msra.mxu0 0.0
        %1653 = vmatprep.subr.mxu0 0.0
        %1654 = vmatpush1.msra.mxu0 0.0
        %1655 = vmatprep.subr.mxu0 0.0
        %1656 = vmatpush1.msra.mxu0 0.0
        %1657 = vmatprep.subr.mxu0 0.0
        %1658 = vmatpush1.msra.mxu0 %v1625
        %1659 = vmatprep.subr.mxu0 0.0
        %1660 = vmatpush2.msra.mxu0 0.0
        %1661 = vmatprep.subr.mxu0 0.0
        %1662 = vmatpush2.msra.mxu0 0.0
        %1663 = vmatprep.subr.mxu0 0.0
        %1664 = vmatpush2.msra.mxu0 0.0
        %1665 = vmatprep.subr.mxu0 0.0
        %1666 = vmatpush2.msra.mxu0 0.0
        %1667 = vmatprep.subr.mxu0 0.0
        %1668 = vmatpush2.msra.mxu0 0.0
        %1669 = vmatprep.subr.mxu0 0.0
        %1670 = vmatpush2.msra.mxu0 0.0
        %1671 = vmatprep.subr.mxu0 0.0
        %1672 = vmatpush2.msra.mxu0 0.0
        %1673 = vmatprep.subr.mxu0 0.0
        %1674 = vmatpush2.msra.mxu0 0.0
        %1675 = vmatprep.subr.mxu0 0.0
        %1676 = vmatpush2.msra.mxu0 0.0
        %1677 = vmatprep.subr.mxu0 0.0
        %1678 = vmatpush2.msra.mxu0 0.0
        %1679 = vmatprep.subr.mxu0 0.0
        %1680 = vmatpush2.msra.mxu0 0.0
        %1681 = vmatprep.subr.mxu0 0.0
        %1682 = vmatpush2.msra.mxu0 0.0
        %1683 = vmatprep.subr.mxu0 0.0
        %1684 = vmatpush2.msra.mxu0 0.0
        %1685 = vmatprep.subr.mxu0 0.0
        %1686 = vmatpush2.msra.mxu0 0.0
        %1687 = vmatprep.subr.mxu0 0.0
        %1688 = vmatpush2.msra.mxu0 0.0
        %1689 = vmatprep.subr.mxu0 0.0
        %1690 = vmatpush2.msra.mxu0 0.0
        %1691 = vmatprep.mubr.f32.mxu0 0.0
        %1692 = vmatmul.mubr.f32.gmra.mxu0 %v1529
        %v1693 = vpop.f32.mrf.mxu0
        %v1694 = vadd.f32 0.0, %v1693
        %v1695 = vpop.f32.mrf.mxu0
        %1696 = vmatprep.mubr.f32.mxu0 0.0
        %1697 = vmatmul.mubr.f32.gmra.mxu0 %v1532
        %v1698 = vpop.f32.mrf.mxu0
        %v1699 = vadd.f32 0.0, %v1698
        %v1700 = vpop.f32.mrf.mxu0
        %1701 = vmatprep.mubr.f32.mxu0 0.0
        %1702 = vmatmul.mubr.f32.gmra.mxu0 %v1535
        %v1703 = vpop.f32.mrf.mxu0
        %v1704 = vadd.f32 0.0, %v1703
        %v1705 = vpop.f32.mrf.mxu0
        %1706 = vmatprep.mubr.f32.mxu0 0.0
        %1707 = vmatmul.mubr.f32.gmra.mxu0 %v1538
        %v1708 = vpop.f32.mrf.mxu0
        %v1709 = vadd.f32 0.0, %v1708
        %v1710 = vpop.f32.mrf.mxu0
        %1711 = vmatprep.mubr.f32.mxu0 0.0
        %1712 = vmatmul.mubr.f32.gmra.mxu0 %v1541
        %v1713 = vpop.f32.mrf.mxu0
        %v1714 = vadd.f32 0.0, %v1713
        %v1715 = vpop.f32.mrf.mxu0
        %1716 = vmatprep.mubr.f32.mxu0 0.0
        %1717 = vmatmul.mubr.f32.gmra.mxu0 %v1544
        %v1718 = vpop.f32.mrf.mxu0
        %v1719 = vadd.f32 0.0, %v1718
        %v1720 = vpop.f32.mrf.mxu0
        %1721 = vmatprep.mubr.f32.mxu0 0.0
        %1722 = vmatmul.mubr.f32.gmra.mxu0 %v1547
        %v1723 = vpop.f32.mrf.mxu0
        %v1724 = vadd.f32 0.0, %v1723
        %v1725 = vpop.f32.mrf.mxu0
        %1726 = vmatprep.mubr.f32.mxu0 0.0
        %1727 = vmatmul.mubr.f32.gmra.mxu0 %v1550
        %v1728 = vpop.f32.mrf.mxu0
        %v1729 = vadd.f32 0.0, %v1728
        %v1730 = vpop.f32.mrf.mxu0
        %1731 = vmatprep.mubr.f32.mxu0 0.0
        %1732 = vmatmul.mubr.f32.gmra.mxu0 %v1553
        %v1733 = vpop.f32.mrf.mxu0
        %v1734 = vadd.f32 0.0, %v1733
        %v1735 = vpop.f32.mrf.mxu0
        %1736 = vmatprep.mubr.f32.mxu0 0.0
        %1737 = vmatmul.mubr.f32.gmra.mxu0 %v1556
        %v1738 = vpop.f32.mrf.mxu0
        %v1739 = vadd.f32 0.0, %v1738
        %v1740 = vpop.f32.mrf.mxu0
        %1741 = vmatprep.mubr.f32.mxu0 0.0
        %1742 = vmatmul.mubr.f32.gmra.mxu0 %v1559
        %v1743 = vpop.f32.mrf.mxu0
        %v1744 = vadd.f32 0.0, %v1743
        %v1745 = vpop.f32.mrf.mxu0
        %1746 = vmatprep.mubr.f32.mxu0 0.0
        %1747 = vmatmul.mubr.f32.gmra.mxu0 %v1562
        %v1748 = vpop.f32.mrf.mxu0
        %v1749 = vadd.f32 0.0, %v1748
        %v1750 = vpop.f32.mrf.mxu0
        %1751 = vmatprep.mubr.f32.mxu0 0.0
        %1752 = vmatmul.mubr.f32.gmra.mxu0 %v1565
        %v1753 = vpop.f32.mrf.mxu0
        %v1754 = vadd.f32 0.0, %v1753
        %v1755 = vpop.f32.mrf.mxu0
        %1756 = vmatprep.mubr.f32.mxu0 0.0
        %1757 = vmatmul.mubr.f32.gmra.mxu0 %v1568
        %v1758 = vpop.f32.mrf.mxu0
        %v1759 = vadd.f32 0.0, %v1758
        %v1760 = vpop.f32.mrf.mxu0
        %1761 = vmatprep.mubr.f32.mxu0 0.0
        %1762 = vmatmul.mubr.f32.gmra.mxu0 %v1571
        %v1763 = vpop.f32.mrf.mxu0
        %v1764 = vadd.f32 0.0, %v1763
        %v1765 = vpop.f32.mrf.mxu0
        %1766 = vmatprep.mubr.f32.mxu0 0.0
        %1767 = vmatmul.mubr.f32.gmra.mxu0 %v1574
        %v1768 = vpop.f32.mrf.mxu0
        %v1769 = vadd.f32 0.0, %v1768
        %v1770 = vpop.f32.mrf.mxu0
        %1771 = vmatprep.mubr.f32.mxu0 0.0
        %1772 = vmatmul.mubr.f32.gmra.mxu0 %v1577
        %v1773 = vpop.f32.mrf.mxu0
        %v1774 = vadd.f32 0.0, %v1773
        %v1775 = vpop.f32.mrf.mxu0
        %1776 = vmatprep.mubr.f32.mxu0 0.0
        %1777 = vmatmul.mubr.f32.gmra.mxu0 %v1580
        %v1778 = vpop.f32.mrf.mxu0
        %v1779 = vadd.f32 0.0, %v1778
        %v1780 = vpop.f32.mrf.mxu0
        %1781 = vmatprep.mubr.f32.mxu0 0.0
        %1782 = vmatmul.mubr.f32.gmra.mxu0 %v1583
        %v1783 = vpop.f32.mrf.mxu0
        %v1784 = vadd.f32 0.0, %v1783
        %v1785 = vpop.f32.mrf.mxu0
        %1786 = vmatprep.mubr.f32.mxu0 0.0
        %1787 = vmatmul.mubr.f32.gmra.mxu0 %v1586
        %v1788 = vpop.f32.mrf.mxu0
        %v1789 = vadd.f32 0.0, %v1788
        %v1790 = vpop.f32.mrf.mxu0
        %1791 = vmatprep.mubr.f32.mxu0 0.0
        %1792 = vmatmul.mubr.f32.gmra.mxu0 %v1589
        %v1793 = vpop.f32.mrf.mxu0
        %v1794 = vadd.f32 0.0, %v1793
        %v1795 = vpop.f32.mrf.mxu0
        %1796 = vmatprep.mubr.f32.mxu0 0.0
        %1797 = vmatmul.mubr.f32.gmra.mxu0 %v1592
        %v1798 = vpop.f32.mrf.mxu0
        %v1799 = vadd.f32 0.0, %v1798
        %v1800 = vpop.f32.mrf.mxu0
        %1801 = vmatprep.mubr.f32.mxu0 0.0
        %1802 = vmatmul.mubr.f32.gmra.mxu0 %v1595
        %v1803 = vpop.f32.mrf.mxu0
        %v1804 = vadd.f32 0.0, %v1803
        %v1805 = vpop.f32.mrf.mxu0
        %1806 = vmatprep.mubr.f32.mxu0 0.0
        %1807 = vmatmul.mubr.f32.gmra.mxu0 %v1598
        %v1808 = vpop.f32.mrf.mxu0
        %v1809 = vadd.f32 0.0, %v1808
        %v1810 = vpop.f32.mrf.mxu0
        %1811 = vmatprep.mubr.f32.mxu0 0.0
        %1812 = vmatmul.mubr.f32.gmra.mxu0 %v1601
        %v1813 = vpop.f32.mrf.mxu0
        %v1814 = vadd.f32 0.0, %v1813
        %v1815 = vpop.f32.mrf.mxu0
        %1816 = vmatprep.mubr.f32.mxu0 0.0
        %1817 = vmatmul.mubr.f32.gmra.mxu0 %v1604
        %v1818 = vpop.f32.mrf.mxu0
        %v1819 = vadd.f32 0.0, %v1818
        %v1820 = vpop.f32.mrf.mxu0
        %1821 = vmatprep.mubr.f32.mxu0 0.0
        %1822 = vmatmul.mubr.f32.gmra.mxu0 %v1607
        %v1823 = vpop.f32.mrf.mxu0
        %v1824 = vadd.f32 0.0, %v1823
        %v1825 = vpop.f32.mrf.mxu0
        %1826 = vmatprep.mubr.f32.mxu0 0.0
        %1827 = vmatmul.mubr.f32.gmra.mxu0 %v1610
        %v1828 = vpop.f32.mrf.mxu0
        %v1829 = vadd.f32 0.0, %v1828
        %v1830 = vpop.f32.mrf.mxu0
        %1831 = vmatprep.mubr.f32.mxu0 0.0
        %1832 = vmatmul.mubr.f32.gmra.mxu0 %v1613
        %v1833 = vpop.f32.mrf.mxu0
        %v1834 = vadd.f32 0.0, %v1833
        %v1835 = vpop.f32.mrf.mxu0
        %1836 = vmatprep.mubr.f32.mxu0 0.0
        %1837 = vmatmul.mubr.f32.gmra.mxu0 %v1616
        %v1838 = vpop.f32.mrf.mxu0
        %v1839 = vadd.f32 0.0, %v1838
        %v1840 = vpop.f32.mrf.mxu0
        %1841 = vmatprep.mubr.f32.mxu0 0.0
        %1842 = vmatmul.mubr.f32.gmra.mxu0 %v1619
        %v1843 = vpop.f32.mrf.mxu0
        %v1844 = vadd.f32 0.0, %v1843
        %v1845 = vpop.f32.mrf.mxu0
        %1846 = vmatprep.mubr.f32.mxu0 0.0
        %1847 = vmatmul.mubr.f32.gmra.mxu0 %v1622
        %v1848 = vpop.f32.mrf.mxu0
        %v1849 = vadd.f32 0.0, %v1848
        %v1850 = vpop.f32.mrf.mxu0
        %1851 = vdwg.mxu0
        %v1852 = vadd.f32 %v1369, %v1694
        %v1853 = vadd.f32 %v1374, %v1699
        %v1854 = vadd.f32 %v1379, %v1704
        %v1855 = vadd.f32 %v1384, %v1709
        %v1856 = vadd.f32 %v1389, %v1714
        %v1857 = vadd.f32 %v1394, %v1719
        %v1858 = vadd.f32 %v1399, %v1724
        %v1859 = vadd.f32 %v1404, %v1729
        %v1860 = vadd.f32 %v1409, %v1734
        %v1861 = vadd.f32 %v1414, %v1739
        %v1862 = vadd.f32 %v1419, %v1744
        %v1863 = vadd.f32 %v1424, %v1749
        %v1864 = vadd.f32 %v1429, %v1754
        %v1865 = vadd.f32 %v1434, %v1759
        %v1866 = vadd.f32 %v1439, %v1764
        %v1867 = vadd.f32 %v1444, %v1769
        %v1868 = vadd.f32 %v1449, %v1774
        %v1869 = vadd.f32 %v1454, %v1779
        %v1870 = vadd.f32 %v1459, %v1784
        %v1871 = vadd.f32 %v1464, %v1789
        %v1872 = vadd.f32 %v1469, %v1794
        %v1873 = vadd.f32 %v1474, %v1799
        %v1874 = vadd.f32 %v1479, %v1804
        %v1875 = vadd.f32 %v1484, %v1809
        %v1876 = vadd.f32 %v1489, %v1814
        %v1877 = vadd.f32 %v1494, %v1819
        %v1878 = vadd.f32 %v1499, %v1824
        %v1879 = vadd.f32 %v1504, %v1829
        %v1880 = vadd.f32 %v1509, %v1834
        %v1881 = vadd.f32 %v1514, %v1839
        %v1882 = vadd.f32 %v1519, %v1844
        %v1883 = vadd.f32 %v1524, %v1849
        %v1884 = vld [vmem:[%s1 + $0xc] sm:$0xf]
        %v1886 = vsel %vm466, %v683, 0
        %v1889 = vsel %vm466, %v684, 0
        %v1892 = vsel %vm466, %v685, 0
        %v1895 = vsel %vm466, %v686, 0
        %v1898 = vsel %vm466, %v687, 0
        %v1901 = vsel %vm466, %v688, 0
        %v1904 = vsel %vm466, %v689, 0
        %v1907 = vsel %vm466, %v690, 0
        %v1910 = vsel %vm466, %v691, 0
        %v1913 = vsel %vm466, %v692, 0
        %v1916 = vsel %vm466, %v693, 0
        %v1919 = vsel %vm466, %v694, 0
        %v1922 = vsel %vm466, %v695, 0
        %v1925 = vsel %vm466, %v696, 0
        %v1928 = vsel %vm466, %v697, 0
        %v1931 = vsel %vm466, %v698, 0
        %v1934 = vsel %vm466, %v699, 0
        %v1937 = vsel %vm466, %v700, 0
        %v1940 = vsel %vm466, %v701, 0
        %v1943 = vsel %vm466, %v702, 0
        %v1946 = vsel %vm466, %v703, 0
        %v1949 = vsel %vm466, %v704, 0
        %v1952 = vsel %vm466, %v705, 0
        %v1955 = vsel %vm466, %v706, 0
        %v1958 = vsel %vm466, %v707, 0
        %v1961 = vsel %vm466, %v708, 0
        %v1964 = vsel %vm466, %v709, 0
        %v1967 = vsel %vm466, %v710, 0
        %v1970 = vsel %vm466, %v711, 0
        %v1973 = vsel %vm466, %v712, 0
        %v1976 = vsel %vm466, %v713, 0
        %v1979 = vsel %vm466, %v714, 0
        %v1982 = vsel %vm974, %v1884, 0
        %1984 = vmatprep.subr.mxu0 0.0
        %1985 = vmatpush1.msra.mxu0 0.0
        %1986 = vmatprep.subr.mxu0 0.0
        %1987 = vmatpush1.msra.mxu0 0.0
        %1988 = vmatprep.subr.mxu0 0.0
        %1989 = vmatpush1.msra.mxu0 0.0
        %1990 = vmatprep.subr.mxu0 0.0
        %1991 = vmatpush1.msra.mxu0 0.0
        %1992 = vmatprep.subr.mxu0 0.0
        %1993 = vmatpush1.msra.mxu0 0.0
        %1994 = vmatprep.subr.mxu0 0.0
        %1995 = vmatpush1.msra.mxu0 0.0
        %1996 = vmatprep.subr.mxu0 0.0
        %1997 = vmatpush1.msra.mxu0 0.0
        %1998 = vmatprep.subr.mxu0 0.0
        %1999 = vmatpush1.msra.mxu0 0.0
        %2000 = vmatprep.subr.mxu0 0.0
        %2001 = vmatpush1.msra.mxu0 0.0
        %2002 = vmatprep.subr.mxu0 0.0
        %2003 = vmatpush1.msra.mxu0 0.0
        %2004 = vmatprep.subr.mxu0 0.0
        %2005 = vmatpush1.msra.mxu0 0.0
        %2006 = vmatprep.subr.mxu0 0.0
        %2007 = vmatpush1.msra.mxu0 0.0
        %2008 = vmatprep.subr.mxu0 0.0
        %2009 = vmatpush1.msra.mxu0 0.0
        %2010 = vmatprep.subr.mxu0 0.0
        %2011 = vmatpush1.msra.mxu0 0.0
        %2012 = vmatprep.subr.mxu0 0.0
        %2013 = vmatpush1.msra.mxu0 0.0
        %2014 = vmatprep.subr.mxu0 0.0
        %2015 = vmatpush1.msra.mxu0 %v1982
        %2016 = vmatprep.subr.mxu0 0.0
        %2017 = vmatpush2.msra.mxu0 0.0
        %2018 = vmatprep.subr.mxu0 0.0
        %2019 = vmatpush2.msra.mxu0 0.0
        %2020 = vmatprep.subr.mxu0 0.0
        %2021 = vmatpush2.msra.mxu0 0.0
        %2022 = vmatprep.subr.mxu0 0.0
        %2023 = vmatpush2.msra.mxu0 0.0
        %2024 = vmatprep.subr.mxu0 0.0
        %2025 = vmatpush2.msra.mxu0 0.0
        %2026 = vmatprep.subr.mxu0 0.0
        %2027 = vmatpush2.msra.mxu0 0.0
        %2028 = vmatprep.subr.mxu0 0.0
        %2029 = vmatpush2.msra.mxu0 0.0
        %2030 = vmatprep.subr.mxu0 0.0
        %2031 = vmatpush2.msra.mxu0 0.0
        %2032 = vmatprep.subr.mxu0 0.0
        %2033 = vmatpush2.msra.mxu0 0.0
        %2034 = vmatprep.subr.mxu0 0.0
        %2035 = vmatpush2.msra.mxu0 0.0
        %2036 = vmatprep.subr.mxu0 0.0
        %2037 = vmatpush2.msra.mxu0 0.0
        %2038 = vmatprep.subr.mxu0 0.0
        %2039 = vmatpush2.msra.mxu0 0.0
        %2040 = vmatprep.subr.mxu0 0.0
        %2041 = vmatpush2.msra.mxu0 0.0
        %2042 = vmatprep.subr.mxu0 0.0
        %2043 = vmatpush2.msra.mxu0 0.0
        %2044 = vmatprep.subr.mxu0 0.0
        %2045 = vmatpush2.msra.mxu0 0.0
        %2046 = vmatprep.subr.mxu0 0.0
        %2047 = vmatpush2.msra.mxu0 0.0
        %2048 = vmatprep.mubr.f32.mxu0 0.0
        %2049 = vmatmul.mubr.f32.gmra.mxu0 %v1886
        %v2050 = vpop.f32.mrf.mxu0
        %v2051 = vadd.f32 0.0, %v2050
        %v2052 = vpop.f32.mrf.mxu0
        %2053 = vmatprep.mubr.f32.mxu0 0.0
        %2054 = vmatmul.mubr.f32.gmra.mxu0 %v1889
        %v2055 = vpop.f32.mrf.mxu0
        %v2056 = vadd.f32 0.0, %v2055
        %v2057 = vpop.f32.mrf.mxu0
        %2058 = vmatprep.mubr.f32.mxu0 0.0
        %2059 = vmatmul.mubr.f32.gmra.mxu0 %v1892
        %v2060 = vpop.f32.mrf.mxu0
        %v2061 = vadd.f32 0.0, %v2060
        %v2062 = vpop.f32.mrf.mxu0
        %2063 = vmatprep.mubr.f32.mxu0 0.0
        %2064 = vmatmul.mubr.f32.gmra.mxu0 %v1895
        %v2065 = vpop.f32.mrf.mxu0
        %v2066 = vadd.f32 0.0, %v2065
        %v2067 = vpop.f32.mrf.mxu0
        %2068 = vmatprep.mubr.f32.mxu0 0.0
        %2069 = vmatmul.mubr.f32.gmra.mxu0 %v1898
        %v2070 = vpop.f32.mrf.mxu0
        %v2071 = vadd.f32 0.0, %v2070
        %v2072 = vpop.f32.mrf.mxu0
        %2073 = vmatprep.mubr.f32.mxu0 0.0
        %2074 = vmatmul.mubr.f32.gmra.mxu0 %v1901
        %v2075 = vpop.f32.mrf.mxu0
        %v2076 = vadd.f32 0.0, %v2075
        %v2077 = vpop.f32.mrf.mxu0
        %2078 = vmatprep.mubr.f32.mxu0 0.0
        %2079 = vmatmul.mubr.f32.gmra.mxu0 %v1904
        %v2080 = vpop.f32.mrf.mxu0
        %v2081 = vadd.f32 0.0, %v2080
        %v2082 = vpop.f32.mrf.mxu0
        %2083 = vmatprep.mubr.f32.mxu0 0.0
        %2084 = vmatmul.mubr.f32.gmra.mxu0 %v1907
        %v2085 = vpop.f32.mrf.mxu0
        %v2086 = vadd.f32 0.0, %v2085
        %v2087 = vpop.f32.mrf.mxu0
        %2088 = vmatprep.mubr.f32.mxu0 0.0
        %2089 = vmatmul.mubr.f32.gmra.mxu0 %v1910
        %v2090 = vpop.f32.mrf.mxu0
        %v2091 = vadd.f32 0.0, %v2090
        %v2092 = vpop.f32.mrf.mxu0
        %2093 = vmatprep.mubr.f32.mxu0 0.0
        %2094 = vmatmul.mubr.f32.gmra.mxu0 %v1913
        %v2095 = vpop.f32.mrf.mxu0
        %v2096 = vadd.f32 0.0, %v2095
        %v2097 = vpop.f32.mrf.mxu0
        %2098 = vmatprep.mubr.f32.mxu0 0.0
        %2099 = vmatmul.mubr.f32.gmra.mxu0 %v1916
        %v2100 = vpop.f32.mrf.mxu0
        %v2101 = vadd.f32 0.0, %v2100
        %v2102 = vpop.f32.mrf.mxu0
        %2103 = vmatprep.mubr.f32.mxu0 0.0
        %2104 = vmatmul.mubr.f32.gmra.mxu0 %v1919
        %v2105 = vpop.f32.mrf.mxu0
        %v2106 = vadd.f32 0.0, %v2105
        %v2107 = vpop.f32.mrf.mxu0
        %2108 = vmatprep.mubr.f32.mxu0 0.0
        %2109 = vmatmul.mubr.f32.gmra.mxu0 %v1922
        %v2110 = vpop.f32.mrf.mxu0
        %v2111 = vadd.f32 0.0, %v2110
        %v2112 = vpop.f32.mrf.mxu0
        %2113 = vmatprep.mubr.f32.mxu0 0.0
        %2114 = vmatmul.mubr.f32.gmra.mxu0 %v1925
        %v2115 = vpop.f32.mrf.mxu0
        %v2116 = vadd.f32 0.0, %v2115
        %v2117 = vpop.f32.mrf.mxu0
        %2118 = vmatprep.mubr.f32.mxu0 0.0
        %2119 = vmatmul.mubr.f32.gmra.mxu0 %v1928
        %v2120 = vpop.f32.mrf.mxu0
        %v2121 = vadd.f32 0.0, %v2120
        %v2122 = vpop.f32.mrf.mxu0
        %2123 = vmatprep.mubr.f32.mxu0 0.0
        %2124 = vmatmul.mubr.f32.gmra.mxu0 %v1931
        %v2125 = vpop.f32.mrf.mxu0
        %v2126 = vadd.f32 0.0, %v2125
        %v2127 = vpop.f32.mrf.mxu0
        %2128 = vmatprep.mubr.f32.mxu0 0.0
        %2129 = vmatmul.mubr.f32.gmra.mxu0 %v1934
        %v2130 = vpop.f32.mrf.mxu0
        %v2131 = vadd.f32 0.0, %v2130
        %v2132 = vpop.f32.mrf.mxu0
        %2133 = vmatprep.mubr.f32.mxu0 0.0
        %2134 = vmatmul.mubr.f32.gmra.mxu0 %v1937
        %v2135 = vpop.f32.mrf.mxu0
        %v2136 = vadd.f32 0.0, %v2135
        %v2137 = vpop.f32.mrf.mxu0
        %2138 = vmatprep.mubr.f32.mxu0 0.0
        %2139 = vmatmul.mubr.f32.gmra.mxu0 %v1940
        %v2140 = vpop.f32.mrf.mxu0
        %v2141 = vadd.f32 0.0, %v2140
        %v2142 = vpop.f32.mrf.mxu0
        %2143 = vmatprep.mubr.f32.mxu0 0.0
        %2144 = vmatmul.mubr.f32.gmra.mxu0 %v1943
        %v2145 = vpop.f32.mrf.mxu0
        %v2146 = vadd.f32 0.0, %v2145
        %v2147 = vpop.f32.mrf.mxu0
        %2148 = vmatprep.mubr.f32.mxu0 0.0
        %2149 = vmatmul.mubr.f32.gmra.mxu0 %v1946
        %v2150 = vpop.f32.mrf.mxu0
        %v2151 = vadd.f32 0.0, %v2150
        %v2152 = vpop.f32.mrf.mxu0
        %2153 = vmatprep.mubr.f32.mxu0 0.0
        %2154 = vmatmul.mubr.f32.gmra.mxu0 %v1949
        %v2155 = vpop.f32.mrf.mxu0
        %v2156 = vadd.f32 0.0, %v2155
        %v2157 = vpop.f32.mrf.mxu0
        %2158 = vmatprep.mubr.f32.mxu0 0.0
        %2159 = vmatmul.mubr.f32.gmra.mxu0 %v1952
        %v2160 = vpop.f32.mrf.mxu0
        %v2161 = vadd.f32 0.0, %v2160
        %v2162 = vpop.f32.mrf.mxu0
        %2163 = vmatprep.mubr.f32.mxu0 0.0
        %2164 = vmatmul.mubr.f32.gmra.mxu0 %v1955
        %v2165 = vpop.f32.mrf.mxu0
        %v2166 = vadd.f32 0.0, %v2165
        %v2167 = vpop.f32.mrf.mxu0
        %2168 = vmatprep.mubr.f32.mxu0 0.0
        %2169 = vmatmul.mubr.f32.gmra.mxu0 %v1958
        %v2170 = vpop.f32.mrf.mxu0
        %v2171 = vadd.f32 0.0, %v2170
        %v2172 = vpop.f32.mrf.mxu0
        %2173 = vmatprep.mubr.f32.mxu0 0.0
        %2174 = vmatmul.mubr.f32.gmra.mxu0 %v1961
        %v2175 = vpop.f32.mrf.mxu0
        %v2176 = vadd.f32 0.0, %v2175
        %v2177 = vpop.f32.mrf.mxu0
        %2178 = vmatprep.mubr.f32.mxu0 0.0
        %2179 = vmatmul.mubr.f32.gmra.mxu0 %v1964
        %v2180 = vpop.f32.mrf.mxu0
        %v2181 = vadd.f32 0.0, %v2180
        %v2182 = vpop.f32.mrf.mxu0
        %2183 = vmatprep.mubr.f32.mxu0 0.0
        %2184 = vmatmul.mubr.f32.gmra.mxu0 %v1967
        %v2185 = vpop.f32.mrf.mxu0
        %v2186 = vadd.f32 0.0, %v2185
        %v2187 = vpop.f32.mrf.mxu0
        %2188 = vmatprep.mubr.f32.mxu0 0.0
        %2189 = vmatmul.mubr.f32.gmra.mxu0 %v1970
        %v2190 = vpop.f32.mrf.mxu0
        %v2191 = vadd.f32 0.0, %v2190
        %v2192 = vpop.f32.mrf.mxu0
        %2193 = vmatprep.mubr.f32.mxu0 0.0
        %2194 = vmatmul.mubr.f32.gmra.mxu0 %v1973
        %v2195 = vpop.f32.mrf.mxu0
        %v2196 = vadd.f32 0.0, %v2195
        %v2197 = vpop.f32.mrf.mxu0
        %2198 = vmatprep.mubr.f32.mxu0 0.0
        %2199 = vmatmul.mubr.f32.gmra.mxu0 %v1976
        %v2200 = vpop.f32.mrf.mxu0
        %v2201 = vadd.f32 0.0, %v2200
        %v2202 = vpop.f32.mrf.mxu0
        %2203 = vmatprep.mubr.f32.mxu0 0.0
        %2204 = vmatmul.mubr.f32.gmra.mxu0 %v1979
        %v2205 = vpop.f32.mrf.mxu0
        %v2206 = vadd.f32 0.0, %v2205
        %v2207 = vpop.f32.mrf.mxu0
        %2208 = vdwg.mxu0
        %v2209 = vadd.f32 %v1852, %v2051
        %v2210 = vadd.f32 %v1853, %v2056
        %v2211 = vadd.f32 %v1854, %v2061
        %v2212 = vadd.f32 %v1855, %v2066
        %v2213 = vadd.f32 %v1856, %v2071
        %v2214 = vadd.f32 %v1857, %v2076
        %v2215 = vadd.f32 %v1858, %v2081
        %v2216 = vadd.f32 %v1859, %v2086
        %v2217 = vadd.f32 %v1860, %v2091
        %v2218 = vadd.f32 %v1861, %v2096
        %v2219 = vadd.f32 %v1862, %v2101
        %v2220 = vadd.f32 %v1863, %v2106
        %v2221 = vadd.f32 %v1864, %v2111
        %v2222 = vadd.f32 %v1865, %v2116
        %v2223 = vadd.f32 %v1866, %v2121
        %v2224 = vadd.f32 %v1867, %v2126
        %v2225 = vadd.f32 %v1868, %v2131
        %v2226 = vadd.f32 %v1869, %v2136
        %v2227 = vadd.f32 %v1870, %v2141
        %v2228 = vadd.f32 %v1871, %v2146
        %v2229 = vadd.f32 %v1872, %v2151
        %v2230 = vadd.f32 %v1873, %v2156
        %v2231 = vadd.f32 %v1874, %v2161
        %v2232 = vadd.f32 %v1875, %v2166
        %v2233 = vadd.f32 %v1876, %v2171
        %v2234 = vadd.f32 %v1877, %v2176
        %v2235 = vadd.f32 %v1878, %v2181
        %v2236 = vadd.f32 %v1879, %v2186
        %v2237 = vadd.f32 %v1880, %v2191
        %v2238 = vadd.f32 %v1881, %v2196
        %v2239 = vadd.f32 %v1882, %v2201
        %v2240 = vadd.f32 %v1883, %v2206
        %v2241 = vld [vmem:[%s1 + $0x10] sm:$0xf]
        %v2243 = vsel %vm466, %v715, 0
        %v2246 = vsel %vm466, %v716, 0
        %v2249 = vsel %vm466, %v717, 0
        %v2252 = vsel %vm466, %v718, 0
        %v2255 = vsel %vm466, %v719, 0
        %v2258 = vsel %vm466, %v720, 0
        %v2261 = vsel %vm466, %v721, 0
        %v2264 = vsel %vm466, %v722, 0
        %v2267 = vsel %vm466, %v723, 0
        %v2270 = vsel %vm466, %v724, 0
        %v2273 = vsel %vm466, %v725, 0
        %v2276 = vsel %vm466, %v726, 0
        %v2279 = vsel %vm466, %v727, 0
        %v2282 = vsel %vm466, %v728, 0
        %v2285 = vsel %vm466, %v729, 0
        %v2288 = vsel %vm466, %v730, 0
        %v2291 = vsel %vm466, %v731, 0
        %v2294 = vsel %vm466, %v732, 0
        %v2297 = vsel %vm466, %v733, 0
        %v2300 = vsel %vm466, %v734, 0
        %v2303 = vsel %vm466, %v735, 0
        %v2306 = vsel %vm466, %v736, 0
        %v2309 = vsel %vm466, %v737, 0
        %v2312 = vsel %vm466, %v738, 0
        %v2315 = vsel %vm466, %v739, 0
        %v2318 = vsel %vm466, %v740, 0
        %v2321 = vsel %vm466, %v741, 0
        %v2324 = vsel %vm466, %v742, 0
        %v2327 = vsel %vm466, %v743, 0
        %v2330 = vsel %vm466, %v744, 0
        %v2333 = vsel %vm466, %v745, 0
        %v2336 = vsel %vm466, %v746, 0
        %v2339 = vsel %vm974, %v2241, 0
        %2341 = vmatprep.subr.mxu0 0.0
        %2342 = vmatpush1.msra.mxu0 0.0
        %2343 = vmatprep.subr.mxu0 0.0
        %2344 = vmatpush1.msra.mxu0 0.0
        %2345 = vmatprep.subr.mxu0 0.0
        %2346 = vmatpush1.msra.mxu0 0.0
        %2347 = vmatprep.subr.mxu0 0.0
        %2348 = vmatpush1.msra.mxu0 0.0
        %2349 = vmatprep.subr.mxu0 0.0
        %2350 = vmatpush1.msra.mxu0 0.0
        %2351 = vmatprep.subr.mxu0 0.0
        %2352 = vmatpush1.msra.mxu0 0.0
        %2353 = vmatprep.subr.mxu0 0.0
        %2354 = vmatpush1.msra.mxu0 0.0
        %2355 = vmatprep.subr.mxu0 0.0
        %2356 = vmatpush1.msra.mxu0 0.0
        %2357 = vmatprep.subr.mxu0 0.0
        %2358 = vmatpush1.msra.mxu0 0.0
        %2359 = vmatprep.subr.mxu0 0.0
        %2360 = vmatpush1.msra.mxu0 0.0
        %2361 = vmatprep.subr.mxu0 0.0
        %2362 = vmatpush1.msra.mxu0 0.0
        %2363 = vmatprep.subr.mxu0 0.0
        %2364 = vmatpush1.msra.mxu0 0.0
        %2365 = vmatprep.subr.mxu0 0.0
        %2366 = vmatpush1.msra.mxu0 0.0
        %2367 = vmatprep.subr.mxu0 0.0
        %2368 = vmatpush1.msra.mxu0 0.0
        %2369 = vmatprep.subr.mxu0 0.0
        %2370 = vmatpush1.msra.mxu0 0.0
        %2371 = vmatprep.subr.mxu0 0.0
        %2372 = vmatpush1.msra.mxu0 %v2339
        %2373 = vmatprep.subr.mxu0 0.0
        %2374 = vmatpush2.msra.mxu0 0.0
        %2375 = vmatprep.subr.mxu0 0.0
        %2376 = vmatpush2.msra.mxu0 0.0
        %2377 = vmatprep.subr.mxu0 0.0
        %2378 = vmatpush2.msra.mxu0 0.0
        %2379 = vmatprep.subr.mxu0 0.0
        %2380 = vmatpush2.msra.mxu0 0.0
        %2381 = vmatprep.subr.mxu0 0.0
        %2382 = vmatpush2.msra.mxu0 0.0
        %2383 = vmatprep.subr.mxu0 0.0
        %2384 = vmatpush2.msra.mxu0 0.0
        %2385 = vmatprep.subr.mxu0 0.0
        %2386 = vmatpush2.msra.mxu0 0.0
        %2387 = vmatprep.subr.mxu0 0.0
        %2388 = vmatpush2.msra.mxu0 0.0
        %2389 = vmatprep.subr.mxu0 0.0
        %2390 = vmatpush2.msra.mxu0 0.0
        %2391 = vmatprep.subr.mxu0 0.0
        %2392 = vmatpush2.msra.mxu0 0.0
        %2393 = vmatprep.subr.mxu0 0.0
        %2394 = vmatpush2.msra.mxu0 0.0
        %2395 = vmatprep.subr.mxu0 0.0
        %2396 = vmatpush2.msra.mxu0 0.0
        %2397 = vmatprep.subr.mxu0 0.0
        %2398 = vmatpush2.msra.mxu0 0.0
        %2399 = vmatprep.subr.mxu0 0.0
        %2400 = vmatpush2.msra.mxu0 0.0
        %2401 = vmatprep.subr.mxu0 0.0
        %2402 = vmatpush2.msra.mxu0 0.0
        %2403 = vmatprep.subr.mxu0 0.0
        %2404 = vmatpush2.msra.mxu0 0.0
        %2405 = vmatprep.mubr.f32.mxu0 0.0
        %2406 = vmatmul.mubr.f32.gmra.mxu0 %v2243
        %v2407 = vpop.f32.mrf.mxu0
        %v2408 = vadd.f32 0.0, %v2407
        %v2409 = vpop.f32.mrf.mxu0
        %2410 = vmatprep.mubr.f32.mxu0 0.0
        %2411 = vmatmul.mubr.f32.gmra.mxu0 %v2246
        %v2412 = vpop.f32.mrf.mxu0
        %v2413 = vadd.f32 0.0, %v2412
        %v2414 = vpop.f32.mrf.mxu0
        %2415 = vmatprep.mubr.f32.mxu0 0.0
        %2416 = vmatmul.mubr.f32.gmra.mxu0 %v2249
        %v2417 = vpop.f32.mrf.mxu0
        %v2418 = vadd.f32 0.0, %v2417
        %v2419 = vpop.f32.mrf.mxu0
        %2420 = vmatprep.mubr.f32.mxu0 0.0
        %2421 = vmatmul.mubr.f32.gmra.mxu0 %v2252
        %v2422 = vpop.f32.mrf.mxu0
        %v2423 = vadd.f32 0.0, %v2422
        %v2424 = vpop.f32.mrf.mxu0
        %2425 = vmatprep.mubr.f32.mxu0 0.0
        %2426 = vmatmul.mubr.f32.gmra.mxu0 %v2255
        %v2427 = vpop.f32.mrf.mxu0
        %v2428 = vadd.f32 0.0, %v2427
        %v2429 = vpop.f32.mrf.mxu0
        %2430 = vmatprep.mubr.f32.mxu0 0.0
        %2431 = vmatmul.mubr.f32.gmra.mxu0 %v2258
        %v2432 = vpop.f32.mrf.mxu0
        %v2433 = vadd.f32 0.0, %v2432
        %v2434 = vpop.f32.mrf.mxu0
        %2435 = vmatprep.mubr.f32.mxu0 0.0
        %2436 = vmatmul.mubr.f32.gmra.mxu0 %v2261
        %v2437 = vpop.f32.mrf.mxu0
        %v2438 = vadd.f32 0.0, %v2437
        %v2439 = vpop.f32.mrf.mxu0
        %2440 = vmatprep.mubr.f32.mxu0 0.0
        %2441 = vmatmul.mubr.f32.gmra.mxu0 %v2264
        %v2442 = vpop.f32.mrf.mxu0
        %v2443 = vadd.f32 0.0, %v2442
        %v2444 = vpop.f32.mrf.mxu0
        %2445 = vmatprep.mubr.f32.mxu0 0.0
        %2446 = vmatmul.mubr.f32.gmra.mxu0 %v2267
        %v2447 = vpop.f32.mrf.mxu0
        %v2448 = vadd.f32 0.0, %v2447
        %v2449 = vpop.f32.mrf.mxu0
        %2450 = vmatprep.mubr.f32.mxu0 0.0
        %2451 = vmatmul.mubr.f32.gmra.mxu0 %v2270
        %v2452 = vpop.f32.mrf.mxu0
        %v2453 = vadd.f32 0.0, %v2452
        %v2454 = vpop.f32.mrf.mxu0
        %2455 = vmatprep.mubr.f32.mxu0 0.0
        %2456 = vmatmul.mubr.f32.gmra.mxu0 %v2273
        %v2457 = vpop.f32.mrf.mxu0
        %v2458 = vadd.f32 0.0, %v2457
        %v2459 = vpop.f32.mrf.mxu0
        %2460 = vmatprep.mubr.f32.mxu0 0.0
        %2461 = vmatmul.mubr.f32.gmra.mxu0 %v2276
        %v2462 = vpop.f32.mrf.mxu0
        %v2463 = vadd.f32 0.0, %v2462
        %v2464 = vpop.f32.mrf.mxu0
        %2465 = vmatprep.mubr.f32.mxu0 0.0
        %2466 = vmatmul.mubr.f32.gmra.mxu0 %v2279
        %v2467 = vpop.f32.mrf.mxu0
        %v2468 = vadd.f32 0.0, %v2467
        %v2469 = vpop.f32.mrf.mxu0
        %2470 = vmatprep.mubr.f32.mxu0 0.0
        %2471 = vmatmul.mubr.f32.gmra.mxu0 %v2282
        %v2472 = vpop.f32.mrf.mxu0
        %v2473 = vadd.f32 0.0, %v2472
        %v2474 = vpop.f32.mrf.mxu0
        %2475 = vmatprep.mubr.f32.mxu0 0.0
        %2476 = vmatmul.mubr.f32.gmra.mxu0 %v2285
        %v2477 = vpop.f32.mrf.mxu0
        %v2478 = vadd.f32 0.0, %v2477
        %v2479 = vpop.f32.mrf.mxu0
        %2480 = vmatprep.mubr.f32.mxu0 0.0
        %2481 = vmatmul.mubr.f32.gmra.mxu0 %v2288
        %v2482 = vpop.f32.mrf.mxu0
        %v2483 = vadd.f32 0.0, %v2482
        %v2484 = vpop.f32.mrf.mxu0
        %2485 = vmatprep.mubr.f32.mxu0 0.0
        %2486 = vmatmul.mubr.f32.gmra.mxu0 %v2291
        %v2487 = vpop.f32.mrf.mxu0
        %v2488 = vadd.f32 0.0, %v2487
        %v2489 = vpop.f32.mrf.mxu0
        %2490 = vmatprep.mubr.f32.mxu0 0.0
        %2491 = vmatmul.mubr.f32.gmra.mxu0 %v2294
        %v2492 = vpop.f32.mrf.mxu0
        %v2493 = vadd.f32 0.0, %v2492
        %v2494 = vpop.f32.mrf.mxu0
        %2495 = vmatprep.mubr.f32.mxu0 0.0
        %2496 = vmatmul.mubr.f32.gmra.mxu0 %v2297
        %v2497 = vpop.f32.mrf.mxu0
        %v2498 = vadd.f32 0.0, %v2497
        %v2499 = vpop.f32.mrf.mxu0
        %2500 = vmatprep.mubr.f32.mxu0 0.0
        %2501 = vmatmul.mubr.f32.gmra.mxu0 %v2300
        %v2502 = vpop.f32.mrf.mxu0
        %v2503 = vadd.f32 0.0, %v2502
        %v2504 = vpop.f32.mrf.mxu0
        %2505 = vmatprep.mubr.f32.mxu0 0.0
        %2506 = vmatmul.mubr.f32.gmra.mxu0 %v2303
        %v2507 = vpop.f32.mrf.mxu0
        %v2508 = vadd.f32 0.0, %v2507
        %v2509 = vpop.f32.mrf.mxu0
        %2510 = vmatprep.mubr.f32.mxu0 0.0
        %2511 = vmatmul.mubr.f32.gmra.mxu0 %v2306
        %v2512 = vpop.f32.mrf.mxu0
        %v2513 = vadd.f32 0.0, %v2512
        %v2514 = vpop.f32.mrf.mxu0
        %2515 = vmatprep.mubr.f32.mxu0 0.0
        %2516 = vmatmul.mubr.f32.gmra.mxu0 %v2309
        %v2517 = vpop.f32.mrf.mxu0
        %v2518 = vadd.f32 0.0, %v2517
        %v2519 = vpop.f32.mrf.mxu0
        %2520 = vmatprep.mubr.f32.mxu0 0.0
        %2521 = vmatmul.mubr.f32.gmra.mxu0 %v2312
        %v2522 = vpop.f32.mrf.mxu0
        %v2523 = vadd.f32 0.0, %v2522
        %v2524 = vpop.f32.mrf.mxu0
        %2525 = vmatprep.mubr.f32.mxu0 0.0
        %2526 = vmatmul.mubr.f32.gmra.mxu0 %v2315
        %v2527 = vpop.f32.mrf.mxu0
        %v2528 = vadd.f32 0.0, %v2527
        %v2529 = vpop.f32.mrf.mxu0
        %2530 = vmatprep.mubr.f32.mxu0 0.0
        %2531 = vmatmul.mubr.f32.gmra.mxu0 %v2318
        %v2532 = vpop.f32.mrf.mxu0
        %v2533 = vadd.f32 0.0, %v2532
        %v2534 = vpop.f32.mrf.mxu0
        %2535 = vmatprep.mubr.f32.mxu0 0.0
        %2536 = vmatmul.mubr.f32.gmra.mxu0 %v2321
        %v2537 = vpop.f32.mrf.mxu0
        %v2538 = vadd.f32 0.0, %v2537
        %v2539 = vpop.f32.mrf.mxu0
        %2540 = vmatprep.mubr.f32.mxu0 0.0
        %2541 = vmatmul.mubr.f32.gmra.mxu0 %v2324
        %v2542 = vpop.f32.mrf.mxu0
        %v2543 = vadd.f32 0.0, %v2542
        %v2544 = vpop.f32.mrf.mxu0
        %2545 = vmatprep.mubr.f32.mxu0 0.0
        %2546 = vmatmul.mubr.f32.gmra.mxu0 %v2327
        %v2547 = vpop.f32.mrf.mxu0
        %v2548 = vadd.f32 0.0, %v2547
        %v2549 = vpop.f32.mrf.mxu0
        %2550 = vmatprep.mubr.f32.mxu0 0.0
        %2551 = vmatmul.mubr.f32.gmra.mxu0 %v2330
        %v2552 = vpop.f32.mrf.mxu0
        %v2553 = vadd.f32 0.0, %v2552
        %v2554 = vpop.f32.mrf.mxu0
        %2555 = vmatprep.mubr.f32.mxu0 0.0
        %2556 = vmatmul.mubr.f32.gmra.mxu0 %v2333
        %v2557 = vpop.f32.mrf.mxu0
        %v2558 = vadd.f32 0.0, %v2557
        %v2559 = vpop.f32.mrf.mxu0
        %2560 = vmatprep.mubr.f32.mxu0 0.0
        %2561 = vmatmul.mubr.f32.gmra.mxu0 %v2336
        %v2562 = vpop.f32.mrf.mxu0
        %v2563 = vadd.f32 0.0, %v2562
        %v2564 = vpop.f32.mrf.mxu0
        %2565 = vdwg.mxu0
        %v2566 = vadd.f32 %v2209, %v2408
        %v2567 = vadd.f32 %v2210, %v2413
        %v2568 = vadd.f32 %v2211, %v2418
        %v2569 = vadd.f32 %v2212, %v2423
        %v2570 = vadd.f32 %v2213, %v2428
        %v2571 = vadd.f32 %v2214, %v2433
        %v2572 = vadd.f32 %v2215, %v2438
        %v2573 = vadd.f32 %v2216, %v2443
        %v2574 = vadd.f32 %v2217, %v2448
        %v2575 = vadd.f32 %v2218, %v2453
        %v2576 = vadd.f32 %v2219, %v2458
        %v2577 = vadd.f32 %v2220, %v2463
        %v2578 = vadd.f32 %v2221, %v2468
        %v2579 = vadd.f32 %v2222, %v2473
        %v2580 = vadd.f32 %v2223, %v2478
        %v2581 = vadd.f32 %v2224, %v2483
        %v2582 = vadd.f32 %v2225, %v2488
        %v2583 = vadd.f32 %v2226, %v2493
        %v2584 = vadd.f32 %v2227, %v2498
        %v2585 = vadd.f32 %v2228, %v2503
        %v2586 = vadd.f32 %v2229, %v2508
        %v2587 = vadd.f32 %v2230, %v2513
        %v2588 = vadd.f32 %v2231, %v2518
        %v2589 = vadd.f32 %v2232, %v2523
        %v2590 = vadd.f32 %v2233, %v2528
        %v2591 = vadd.f32 %v2234, %v2533
        %v2592 = vadd.f32 %v2235, %v2538
        %v2593 = vadd.f32 %v2236, %v2543
        %v2594 = vadd.f32 %v2237, %v2548
        %v2595 = vadd.f32 %v2238, %v2553
        %v2596 = vadd.f32 %v2239, %v2558
        %v2597 = vadd.f32 %v2240, %v2563
        %v2598 = vld [vmem:[%s1 + $0x14] sm:$0xf]
        %v2600 = vsel %vm466, %v747, 0
        %v2603 = vsel %vm466, %v748, 0
        %v2606 = vsel %vm466, %v749, 0
        %v2609 = vsel %vm466, %v750, 0
        %v2612 = vsel %vm466, %v751, 0
        %v2615 = vsel %vm466, %v752, 0
        %v2618 = vsel %vm466, %v753, 0
        %v2621 = vsel %vm466, %v754, 0
        %v2624 = vsel %vm466, %v755, 0
        %v2627 = vsel %vm466, %v756, 0
        %v2630 = vsel %vm466, %v757, 0
        %v2633 = vsel %vm466, %v758, 0
        %v2636 = vsel %vm466, %v759, 0
        %v2639 = vsel %vm466, %v760, 0
        %v2642 = vsel %vm466, %v761, 0
        %v2645 = vsel %vm466, %v762, 0
        %v2648 = vsel %vm466, %v763, 0
        %v2651 = vsel %vm466, %v764, 0
        %v2654 = vsel %vm466, %v765, 0
        %v2657 = vsel %vm466, %v766, 0
        %v2660 = vsel %vm466, %v767, 0
        %v2663 = vsel %vm466, %v768, 0
        %v2666 = vsel %vm466, %v769, 0
        %v2669 = vsel %vm466, %v770, 0
        %v2672 = vsel %vm466, %v771, 0
        %v2675 = vsel %vm466, %v772, 0
        %v2678 = vsel %vm466, %v773, 0
        %v2681 = vsel %vm466, %v774, 0
        %v2684 = vsel %vm466, %v775, 0
        %v2687 = vsel %vm466, %v776, 0
        %v2690 = vsel %vm466, %v777, 0
        %v2693 = vsel %vm466, %v778, 0
        %v2696 = vsel %vm974, %v2598, 0
        %2698 = vmatprep.subr.mxu0 0.0
        %2699 = vmatpush1.msra.mxu0 0.0
        %2700 = vmatprep.subr.mxu0 0.0
        %2701 = vmatpush1.msra.mxu0 0.0
        %2702 = vmatprep.subr.mxu0 0.0
        %2703 = vmatpush1.msra.mxu0 0.0
        %2704 = vmatprep.subr.mxu0 0.0
        %2705 = vmatpush1.msra.mxu0 0.0
        %2706 = vmatprep.subr.mxu0 0.0
        %2707 = vmatpush1.msra.mxu0 0.0
        %2708 = vmatprep.subr.mxu0 0.0
        %2709 = vmatpush1.msra.mxu0 0.0
        %2710 = vmatprep.subr.mxu0 0.0
        %2711 = vmatpush1.msra.mxu0 0.0
        %2712 = vmatprep.subr.mxu0 0.0
        %2713 = vmatpush1.msra.mxu0 0.0
        %2714 = vmatprep.subr.mxu0 0.0
        %2715 = vmatpush1.msra.mxu0 0.0
        %2716 = vmatprep.subr.mxu0 0.0
        %2717 = vmatpush1.msra.mxu0 0.0
        %2718 = vmatprep.subr.mxu0 0.0
        %2719 = vmatpush1.msra.mxu0 0.0
        %2720 = vmatprep.subr.mxu0 0.0
        %2721 = vmatpush1.msra.mxu0 0.0
        %2722 = vmatprep.subr.mxu0 0.0
        %2723 = vmatpush1.msra.mxu0 0.0
        %2724 = vmatprep.subr.mxu0 0.0
        %2725 = vmatpush1.msra.mxu0 0.0
        %2726 = vmatprep.subr.mxu0 0.0
        %2727 = vmatpush1.msra.mxu0 0.0
        %2728 = vmatprep.subr.mxu0 0.0
        %2729 = vmatpush1.msra.mxu0 %v2696
        %2730 = vmatprep.subr.mxu0 0.0
        %2731 = vmatpush2.msra.mxu0 0.0
        %2732 = vmatprep.subr.mxu0 0.0
        %2733 = vmatpush2.msra.mxu0 0.0
        %2734 = vmatprep.subr.mxu0 0.0
        %2735 = vmatpush2.msra.mxu0 0.0
        %2736 = vmatprep.subr.mxu0 0.0
        %2737 = vmatpush2.msra.mxu0 0.0
        %2738 = vmatprep.subr.mxu0 0.0
        %2739 = vmatpush2.msra.mxu0 0.0
        %2740 = vmatprep.subr.mxu0 0.0
        %2741 = vmatpush2.msra.mxu0 0.0
        %2742 = vmatprep.subr.mxu0 0.0
        %2743 = vmatpush2.msra.mxu0 0.0
        %2744 = vmatprep.subr.mxu0 0.0
        %2745 = vmatpush2.msra.mxu0 0.0
        %2746 = vmatprep.subr.mxu0 0.0
        %2747 = vmatpush2.msra.mxu0 0.0
        %2748 = vmatprep.subr.mxu0 0.0
        %2749 = vmatpush2.msra.mxu0 0.0
        %2750 = vmatprep.subr.mxu0 0.0
        %2751 = vmatpush2.msra.mxu0 0.0
        %2752 = vmatprep.subr.mxu0 0.0
        %2753 = vmatpush2.msra.mxu0 0.0
        %2754 = vmatprep.subr.mxu0 0.0
        %2755 = vmatpush2.msra.mxu0 0.0
        %2756 = vmatprep.subr.mxu0 0.0
        %2757 = vmatpush2.msra.mxu0 0.0
        %2758 = vmatprep.subr.mxu0 0.0
        %2759 = vmatpush2.msra.mxu0 0.0
        %2760 = vmatprep.subr.mxu0 0.0
        %2761 = vmatpush2.msra.mxu0 0.0
        %2762 = vmatprep.mubr.f32.mxu0 0.0
        %2763 = vmatmul.mubr.f32.gmra.mxu0 %v2600
        %v2764 = vpop.f32.mrf.mxu0
        %v2765 = vadd.f32 0.0, %v2764
        %v2766 = vpop.f32.mrf.mxu0
        %2767 = vmatprep.mubr.f32.mxu0 0.0
        %2768 = vmatmul.mubr.f32.gmra.mxu0 %v2603
        %v2769 = vpop.f32.mrf.mxu0
        %v2770 = vadd.f32 0.0, %v2769
        %v2771 = vpop.f32.mrf.mxu0
        %2772 = vmatprep.mubr.f32.mxu0 0.0
        %2773 = vmatmul.mubr.f32.gmra.mxu0 %v2606
        %v2774 = vpop.f32.mrf.mxu0
        %v2775 = vadd.f32 0.0, %v2774
        %v2776 = vpop.f32.mrf.mxu0
        %2777 = vmatprep.mubr.f32.mxu0 0.0
        %2778 = vmatmul.mubr.f32.gmra.mxu0 %v2609
        %v2779 = vpop.f32.mrf.mxu0
        %v2780 = vadd.f32 0.0, %v2779
        %v2781 = vpop.f32.mrf.mxu0
        %2782 = vmatprep.mubr.f32.mxu0 0.0
        %2783 = vmatmul.mubr.f32.gmra.mxu0 %v2612
        %v2784 = vpop.f32.mrf.mxu0
        %v2785 = vadd.f32 0.0, %v2784
        %v2786 = vpop.f32.mrf.mxu0
        %2787 = vmatprep.mubr.f32.mxu0 0.0
        %2788 = vmatmul.mubr.f32.gmra.mxu0 %v2615
        %v2789 = vpop.f32.mrf.mxu0
        %v2790 = vadd.f32 0.0, %v2789
        %v2791 = vpop.f32.mrf.mxu0
        %2792 = vmatprep.mubr.f32.mxu0 0.0
        %2793 = vmatmul.mubr.f32.gmra.mxu0 %v2618
        %v2794 = vpop.f32.mrf.mxu0
        %v2795 = vadd.f32 0.0, %v2794
        %v2796 = vpop.f32.mrf.mxu0
        %2797 = vmatprep.mubr.f32.mxu0 0.0
        %2798 = vmatmul.mubr.f32.gmra.mxu0 %v2621
        %v2799 = vpop.f32.mrf.mxu0
        %v2800 = vadd.f32 0.0, %v2799
        %v2801 = vpop.f32.mrf.mxu0
        %2802 = vmatprep.mubr.f32.mxu0 0.0
        %2803 = vmatmul.mubr.f32.gmra.mxu0 %v2624
        %v2804 = vpop.f32.mrf.mxu0
        %v2805 = vadd.f32 0.0, %v2804
        %v2806 = vpop.f32.mrf.mxu0
        %2807 = vmatprep.mubr.f32.mxu0 0.0
        %2808 = vmatmul.mubr.f32.gmra.mxu0 %v2627
        %v2809 = vpop.f32.mrf.mxu0
        %v2810 = vadd.f32 0.0, %v2809
        %v2811 = vpop.f32.mrf.mxu0
        %2812 = vmatprep.mubr.f32.mxu0 0.0
        %2813 = vmatmul.mubr.f32.gmra.mxu0 %v2630
        %v2814 = vpop.f32.mrf.mxu0
        %v2815 = vadd.f32 0.0, %v2814
        %v2816 = vpop.f32.mrf.mxu0
        %2817 = vmatprep.mubr.f32.mxu0 0.0
        %2818 = vmatmul.mubr.f32.gmra.mxu0 %v2633
        %v2819 = vpop.f32.mrf.mxu0
        %v2820 = vadd.f32 0.0, %v2819
        %v2821 = vpop.f32.mrf.mxu0
        %2822 = vmatprep.mubr.f32.mxu0 0.0
        %2823 = vmatmul.mubr.f32.gmra.mxu0 %v2636
        %v2824 = vpop.f32.mrf.mxu0
        %v2825 = vadd.f32 0.0, %v2824
        %v2826 = vpop.f32.mrf.mxu0
        %2827 = vmatprep.mubr.f32.mxu0 0.0
        %2828 = vmatmul.mubr.f32.gmra.mxu0 %v2639
        %v2829 = vpop.f32.mrf.mxu0
        %v2830 = vadd.f32 0.0, %v2829
        %v2831 = vpop.f32.mrf.mxu0
        %2832 = vmatprep.mubr.f32.mxu0 0.0
        %2833 = vmatmul.mubr.f32.gmra.mxu0 %v2642
        %v2834 = vpop.f32.mrf.mxu0
        %v2835 = vadd.f32 0.0, %v2834
        %v2836 = vpop.f32.mrf.mxu0
        %2837 = vmatprep.mubr.f32.mxu0 0.0
        %2838 = vmatmul.mubr.f32.gmra.mxu0 %v2645
        %v2839 = vpop.f32.mrf.mxu0
        %v2840 = vadd.f32 0.0, %v2839
        %v2841 = vpop.f32.mrf.mxu0
        %2842 = vmatprep.mubr.f32.mxu0 0.0
        %2843 = vmatmul.mubr.f32.gmra.mxu0 %v2648
        %v2844 = vpop.f32.mrf.mxu0
        %v2845 = vadd.f32 0.0, %v2844
        %v2846 = vpop.f32.mrf.mxu0
        %2847 = vmatprep.mubr.f32.mxu0 0.0
        %2848 = vmatmul.mubr.f32.gmra.mxu0 %v2651
        %v2849 = vpop.f32.mrf.mxu0
        %v2850 = vadd.f32 0.0, %v2849
        %v2851 = vpop.f32.mrf.mxu0
        %2852 = vmatprep.mubr.f32.mxu0 0.0
        %2853 = vmatmul.mubr.f32.gmra.mxu0 %v2654
        %v2854 = vpop.f32.mrf.mxu0
        %v2855 = vadd.f32 0.0, %v2854
        %v2856 = vpop.f32.mrf.mxu0
        %2857 = vmatprep.mubr.f32.mxu0 0.0
        %2858 = vmatmul.mubr.f32.gmra.mxu0 %v2657
        %v2859 = vpop.f32.mrf.mxu0
        %v2860 = vadd.f32 0.0, %v2859
        %v2861 = vpop.f32.mrf.mxu0
        %2862 = vmatprep.mubr.f32.mxu0 0.0
        %2863 = vmatmul.mubr.f32.gmra.mxu0 %v2660
        %v2864 = vpop.f32.mrf.mxu0
        %v2865 = vadd.f32 0.0, %v2864
        %v2866 = vpop.f32.mrf.mxu0
        %2867 = vmatprep.mubr.f32.mxu0 0.0
        %2868 = vmatmul.mubr.f32.gmra.mxu0 %v2663
        %v2869 = vpop.f32.mrf.mxu0
        %v2870 = vadd.f32 0.0, %v2869
        %v2871 = vpop.f32.mrf.mxu0
        %2872 = vmatprep.mubr.f32.mxu0 0.0
        %2873 = vmatmul.mubr.f32.gmra.mxu0 %v2666
        %v2874 = vpop.f32.mrf.mxu0
        %v2875 = vadd.f32 0.0, %v2874
        %v2876 = vpop.f32.mrf.mxu0
        %2877 = vmatprep.mubr.f32.mxu0 0.0
        %2878 = vmatmul.mubr.f32.gmra.mxu0 %v2669
        %v2879 = vpop.f32.mrf.mxu0
        %v2880 = vadd.f32 0.0, %v2879
        %v2881 = vpop.f32.mrf.mxu0
        %2882 = vmatprep.mubr.f32.mxu0 0.0
        %2883 = vmatmul.mubr.f32.gmra.mxu0 %v2672
        %v2884 = vpop.f32.mrf.mxu0
        %v2885 = vadd.f32 0.0, %v2884
        %v2886 = vpop.f32.mrf.mxu0
        %2887 = vmatprep.mubr.f32.mxu0 0.0
        %2888 = vmatmul.mubr.f32.gmra.mxu0 %v2675
        %v2889 = vpop.f32.mrf.mxu0
        %v2890 = vadd.f32 0.0, %v2889
        %v2891 = vpop.f32.mrf.mxu0
        %2892 = vmatprep.mubr.f32.mxu0 0.0
        %2893 = vmatmul.mubr.f32.gmra.mxu0 %v2678
        %v2894 = vpop.f32.mrf.mxu0
        %v2895 = vadd.f32 0.0, %v2894
        %v2896 = vpop.f32.mrf.mxu0
        %2897 = vmatprep.mubr.f32.mxu0 0.0
        %2898 = vmatmul.mubr.f32.gmra.mxu0 %v2681
        %v2899 = vpop.f32.mrf.mxu0
        %v2900 = vadd.f32 0.0, %v2899
        %v2901 = vpop.f32.mrf.mxu0
        %2902 = vmatprep.mubr.f32.mxu0 0.0
        %2903 = vmatmul.mubr.f32.gmra.mxu0 %v2684
        %v2904 = vpop.f32.mrf.mxu0
        %v2905 = vadd.f32 0.0, %v2904
        %v2906 = vpop.f32.mrf.mxu0
        %2907 = vmatprep.mubr.f32.mxu0 0.0
        %2908 = vmatmul.mubr.f32.gmra.mxu0 %v2687
        %v2909 = vpop.f32.mrf.mxu0
        %v2910 = vadd.f32 0.0, %v2909
        %v2911 = vpop.f32.mrf.mxu0
        %2912 = vmatprep.mubr.f32.mxu0 0.0
        %2913 = vmatmul.mubr.f32.gmra.mxu0 %v2690
        %v2914 = vpop.f32.mrf.mxu0
        %v2915 = vadd.f32 0.0, %v2914
        %v2916 = vpop.f32.mrf.mxu0
        %2917 = vmatprep.mubr.f32.mxu0 0.0
        %2918 = vmatmul.mubr.f32.gmra.mxu0 %v2693
        %v2919 = vpop.f32.mrf.mxu0
        %v2920 = vadd.f32 0.0, %v2919
        %v2921 = vpop.f32.mrf.mxu0
        %2922 = vdwg.mxu0
        %v2923 = vadd.f32 %v2566, %v2765
        %v2924 = vadd.f32 %v2567, %v2770
        %v2925 = vadd.f32 %v2568, %v2775
        %v2926 = vadd.f32 %v2569, %v2780
        %v2927 = vadd.f32 %v2570, %v2785
        %v2928 = vadd.f32 %v2571, %v2790
        %v2929 = vadd.f32 %v2572, %v2795
        %v2930 = vadd.f32 %v2573, %v2800
        %v2931 = vadd.f32 %v2574, %v2805
        %v2932 = vadd.f32 %v2575, %v2810
        %v2933 = vadd.f32 %v2576, %v2815
        %v2934 = vadd.f32 %v2577, %v2820
        %v2935 = vadd.f32 %v2578, %v2825
        %v2936 = vadd.f32 %v2579, %v2830
        %v2937 = vadd.f32 %v2580, %v2835
        %v2938 = vadd.f32 %v2581, %v2840
        %v2939 = vadd.f32 %v2582, %v2845
        %v2940 = vadd.f32 %v2583, %v2850
        %v2941 = vadd.f32 %v2584, %v2855
        %v2942 = vadd.f32 %v2585, %v2860
        %v2943 = vadd.f32 %v2586, %v2865
        %v2944 = vadd.f32 %v2587, %v2870
        %v2945 = vadd.f32 %v2588, %v2875
        %v2946 = vadd.f32 %v2589, %v2880
        %v2947 = vadd.f32 %v2590, %v2885
        %v2948 = vadd.f32 %v2591, %v2890
        %v2949 = vadd.f32 %v2592, %v2895
        %v2950 = vadd.f32 %v2593, %v2900
        %v2951 = vadd.f32 %v2594, %v2905
        %v2952 = vadd.f32 %v2595, %v2910
        %v2953 = vadd.f32 %v2596, %v2915
        %v2954 = vadd.f32 %v2597, %v2920
        %v2955 = vld [vmem:[%s1 + $0x18] sm:$0xf]
        %v2957 = vsel %vm466, %v780, 0
        %v2960 = vsel %vm466, %v781, 0
        %v2963 = vsel %vm466, %v782, 0
        %v2966 = vsel %vm466, %v783, 0
        %v2969 = vsel %vm466, %v784, 0
        %v2972 = vsel %vm466, %v785, 0
        %v2975 = vsel %vm466, %v786, 0
        %v2978 = vsel %vm466, %v787, 0
        %v2981 = vsel %vm466, %v788, 0
        %v2984 = vsel %vm466, %v789, 0
        %v2987 = vsel %vm466, %v790, 0
        %v2990 = vsel %vm466, %v791, 0
        %v2993 = vsel %vm466, %v792, 0
        %v2996 = vsel %vm466, %v793, 0
        %v2999 = vsel %vm466, %v794, 0
        %v3002 = vsel %vm466, %v795, 0
        %v3005 = vsel %vm466, %v796, 0
        %v3008 = vsel %vm466, %v797, 0
        %v3011 = vsel %vm466, %v798, 0
        %v3014 = vsel %vm466, %v799, 0
        %v3017 = vsel %vm466, %v800, 0
        %v3020 = vsel %vm466, %v801, 0
        %v3023 = vsel %vm466, %v802, 0
        %v3026 = vsel %vm466, %v803, 0
        %v3029 = vsel %vm466, %v804, 0
        %v3032 = vsel %vm466, %v805, 0
        %v3035 = vsel %vm466, %v806, 0
        %v3038 = vsel %vm466, %v807, 0
        %v3041 = vsel %vm466, %v808, 0
        %v3044 = vsel %vm466, %v809, 0
        %v3047 = vsel %vm466, %v810, 0
        %v3050 = vsel %vm466, %v811, 0
        %v3053 = vsel %vm974, %v2955, 0
        %3055 = vmatprep.subr.mxu0 0.0
        %3056 = vmatpush1.msra.mxu0 0.0
        %3057 = vmatprep.subr.mxu0 0.0
        %3058 = vmatpush1.msra.mxu0 0.0
        %3059 = vmatprep.subr.mxu0 0.0
        %3060 = vmatpush1.msra.mxu0 0.0
        %3061 = vmatprep.subr.mxu0 0.0
        %3062 = vmatpush1.msra.mxu0 0.0
        %3063 = vmatprep.subr.mxu0 0.0
        %3064 = vmatpush1.msra.mxu0 0.0
        %3065 = vmatprep.subr.mxu0 0.0
        %3066 = vmatpush1.msra.mxu0 0.0
        %3067 = vmatprep.subr.mxu0 0.0
        %3068 = vmatpush1.msra.mxu0 0.0
        %3069 = vmatprep.subr.mxu0 0.0
        %3070 = vmatpush1.msra.mxu0 0.0
        %3071 = vmatprep.subr.mxu0 0.0
        %3072 = vmatpush1.msra.mxu0 0.0
        %3073 = vmatprep.subr.mxu0 0.0
        %3074 = vmatpush1.msra.mxu0 0.0
        %3075 = vmatprep.subr.mxu0 0.0
        %3076 = vmatpush1.msra.mxu0 0.0
        %3077 = vmatprep.subr.mxu0 0.0
        %3078 = vmatpush1.msra.mxu0 0.0
        %3079 = vmatprep.subr.mxu0 0.0
        %3080 = vmatpush1.msra.mxu0 0.0
        %3081 = vmatprep.subr.mxu0 0.0
        %3082 = vmatpush1.msra.mxu0 0.0
        %3083 = vmatprep.subr.mxu0 0.0
        %3084 = vmatpush1.msra.mxu0 0.0
        %3085 = vmatprep.subr.mxu0 0.0
        %3086 = vmatpush1.msra.mxu0 %v3053
        %3087 = vmatprep.subr.mxu0 0.0
        %3088 = vmatpush2.msra.mxu0 0.0
        %3089 = vmatprep.subr.mxu0 0.0
        %3090 = vmatpush2.msra.mxu0 0.0
        %3091 = vmatprep.subr.mxu0 0.0
        %3092 = vmatpush2.msra.mxu0 0.0
        %3093 = vmatprep.subr.mxu0 0.0
        %3094 = vmatpush2.msra.mxu0 0.0
        %3095 = vmatprep.subr.mxu0 0.0
        %3096 = vmatpush2.msra.mxu0 0.0
        %3097 = vmatprep.subr.mxu0 0.0
        %3098 = vmatpush2.msra.mxu0 0.0
        %3099 = vmatprep.subr.mxu0 0.0
        %3100 = vmatpush2.msra.mxu0 0.0
        %3101 = vmatprep.subr.mxu0 0.0
        %3102 = vmatpush2.msra.mxu0 0.0
        %3103 = vmatprep.subr.mxu0 0.0
        %3104 = vmatpush2.msra.mxu0 0.0
        %3105 = vmatprep.subr.mxu0 0.0
        %3106 = vmatpush2.msra.mxu0 0.0
        %3107 = vmatprep.subr.mxu0 0.0
        %3108 = vmatpush2.msra.mxu0 0.0
        %3109 = vmatprep.subr.mxu0 0.0
        %3110 = vmatpush2.msra.mxu0 0.0
        %3111 = vmatprep.subr.mxu0 0.0
        %3112 = vmatpush2.msra.mxu0 0.0
        %3113 = vmatprep.subr.mxu0 0.0
        %3114 = vmatpush2.msra.mxu0 0.0
        %3115 = vmatprep.subr.mxu0 0.0
        %3116 = vmatpush2.msra.mxu0 0.0
        %3117 = vmatprep.subr.mxu0 0.0
        %3118 = vmatpush2.msra.mxu0 0.0
        %3119 = vmatprep.mubr.f32.mxu0 0.0
        %3120 = vmatmul.mubr.f32.gmra.mxu0 %v2957
        %v3121 = vpop.f32.mrf.mxu0
        %v3122 = vadd.f32 0.0, %v3121
        %v3123 = vpop.f32.mrf.mxu0
        %3124 = vmatprep.mubr.f32.mxu0 0.0
        %3125 = vmatmul.mubr.f32.gmra.mxu0 %v2960
        %v3126 = vpop.f32.mrf.mxu0
        %v3127 = vadd.f32 0.0, %v3126
        %v3128 = vpop.f32.mrf.mxu0
        %3129 = vmatprep.mubr.f32.mxu0 0.0
        %3130 = vmatmul.mubr.f32.gmra.mxu0 %v2963
        %v3131 = vpop.f32.mrf.mxu0
        %v3132 = vadd.f32 0.0, %v3131
        %v3133 = vpop.f32.mrf.mxu0
        %3134 = vmatprep.mubr.f32.mxu0 0.0
        %3135 = vmatmul.mubr.f32.gmra.mxu0 %v2966
        %v3136 = vpop.f32.mrf.mxu0
        %v3137 = vadd.f32 0.0, %v3136
        %v3138 = vpop.f32.mrf.mxu0
        %3139 = vmatprep.mubr.f32.mxu0 0.0
        %3140 = vmatmul.mubr.f32.gmra.mxu0 %v2969
        %v3141 = vpop.f32.mrf.mxu0
        %v3142 = vadd.f32 0.0, %v3141
        %v3143 = vpop.f32.mrf.mxu0
        %3144 = vmatprep.mubr.f32.mxu0 0.0
        %3145 = vmatmul.mubr.f32.gmra.mxu0 %v2972
        %v3146 = vpop.f32.mrf.mxu0
        %v3147 = vadd.f32 0.0, %v3146
        %v3148 = vpop.f32.mrf.mxu0
        %3149 = vmatprep.mubr.f32.mxu0 0.0
        %3150 = vmatmul.mubr.f32.gmra.mxu0 %v2975
        %v3151 = vpop.f32.mrf.mxu0
        %v3152 = vadd.f32 0.0, %v3151
        %v3153 = vpop.f32.mrf.mxu0
        %3154 = vmatprep.mubr.f32.mxu0 0.0
        %3155 = vmatmul.mubr.f32.gmra.mxu0 %v2978
        %v3156 = vpop.f32.mrf.mxu0
        %v3157 = vadd.f32 0.0, %v3156
        %v3158 = vpop.f32.mrf.mxu0
        %3159 = vmatprep.mubr.f32.mxu0 0.0
        %3160 = vmatmul.mubr.f32.gmra.mxu0 %v2981
        %v3161 = vpop.f32.mrf.mxu0
        %v3162 = vadd.f32 0.0, %v3161
        %v3163 = vpop.f32.mrf.mxu0
        %3164 = vmatprep.mubr.f32.mxu0 0.0
        %3165 = vmatmul.mubr.f32.gmra.mxu0 %v2984
        %v3166 = vpop.f32.mrf.mxu0
        %v3167 = vadd.f32 0.0, %v3166
        %v3168 = vpop.f32.mrf.mxu0
        %3169 = vmatprep.mubr.f32.mxu0 0.0
        %3170 = vmatmul.mubr.f32.gmra.mxu0 %v2987
        %v3171 = vpop.f32.mrf.mxu0
        %v3172 = vadd.f32 0.0, %v3171
        %v3173 = vpop.f32.mrf.mxu0
        %3174 = vmatprep.mubr.f32.mxu0 0.0
        %3175 = vmatmul.mubr.f32.gmra.mxu0 %v2990
        %v3176 = vpop.f32.mrf.mxu0
        %v3177 = vadd.f32 0.0, %v3176
        %v3178 = vpop.f32.mrf.mxu0
        %3179 = vmatprep.mubr.f32.mxu0 0.0
        %3180 = vmatmul.mubr.f32.gmra.mxu0 %v2993
        %v3181 = vpop.f32.mrf.mxu0
        %v3182 = vadd.f32 0.0, %v3181
        %v3183 = vpop.f32.mrf.mxu0
        %3184 = vmatprep.mubr.f32.mxu0 0.0
        %3185 = vmatmul.mubr.f32.gmra.mxu0 %v2996
        %v3186 = vpop.f32.mrf.mxu0
        %v3187 = vadd.f32 0.0, %v3186
        %v3188 = vpop.f32.mrf.mxu0
        %3189 = vmatprep.mubr.f32.mxu0 0.0
        %3190 = vmatmul.mubr.f32.gmra.mxu0 %v2999
        %v3191 = vpop.f32.mrf.mxu0
        %v3192 = vadd.f32 0.0, %v3191
        %v3193 = vpop.f32.mrf.mxu0
        %3194 = vmatprep.mubr.f32.mxu0 0.0
        %3195 = vmatmul.mubr.f32.gmra.mxu0 %v3002
        %v3196 = vpop.f32.mrf.mxu0
        %v3197 = vadd.f32 0.0, %v3196
        %v3198 = vpop.f32.mrf.mxu0
        %3199 = vmatprep.mubr.f32.mxu0 0.0
        %3200 = vmatmul.mubr.f32.gmra.mxu0 %v3005
        %v3201 = vpop.f32.mrf.mxu0
        %v3202 = vadd.f32 0.0, %v3201
        %v3203 = vpop.f32.mrf.mxu0
        %3204 = vmatprep.mubr.f32.mxu0 0.0
        %3205 = vmatmul.mubr.f32.gmra.mxu0 %v3008
        %v3206 = vpop.f32.mrf.mxu0
        %v3207 = vadd.f32 0.0, %v3206
        %v3208 = vpop.f32.mrf.mxu0
        %3209 = vmatprep.mubr.f32.mxu0 0.0
        %3210 = vmatmul.mubr.f32.gmra.mxu0 %v3011
        %v3211 = vpop.f32.mrf.mxu0
        %v3212 = vadd.f32 0.0, %v3211
        %v3213 = vpop.f32.mrf.mxu0
        %3214 = vmatprep.mubr.f32.mxu0 0.0
        %3215 = vmatmul.mubr.f32.gmra.mxu0 %v3014
        %v3216 = vpop.f32.mrf.mxu0
        %v3217 = vadd.f32 0.0, %v3216
        %v3218 = vpop.f32.mrf.mxu0
        %3219 = vmatprep.mubr.f32.mxu0 0.0
        %3220 = vmatmul.mubr.f32.gmra.mxu0 %v3017
        %v3221 = vpop.f32.mrf.mxu0
        %v3222 = vadd.f32 0.0, %v3221
        %v3223 = vpop.f32.mrf.mxu0
        %3224 = vmatprep.mubr.f32.mxu0 0.0
        %3225 = vmatmul.mubr.f32.gmra.mxu0 %v3020
        %v3226 = vpop.f32.mrf.mxu0
        %v3227 = vadd.f32 0.0, %v3226
        %v3228 = vpop.f32.mrf.mxu0
        %3229 = vmatprep.mubr.f32.mxu0 0.0
        %3230 = vmatmul.mubr.f32.gmra.mxu0 %v3023
        %v3231 = vpop.f32.mrf.mxu0
        %v3232 = vadd.f32 0.0, %v3231
        %v3233 = vpop.f32.mrf.mxu0
        %3234 = vmatprep.mubr.f32.mxu0 0.0
        %3235 = vmatmul.mubr.f32.gmra.mxu0 %v3026
        %v3236 = vpop.f32.mrf.mxu0
        %v3237 = vadd.f32 0.0, %v3236
        %v3238 = vpop.f32.mrf.mxu0
        %3239 = vmatprep.mubr.f32.mxu0 0.0
        %3240 = vmatmul.mubr.f32.gmra.mxu0 %v3029
        %v3241 = vpop.f32.mrf.mxu0
        %v3242 = vadd.f32 0.0, %v3241
        %v3243 = vpop.f32.mrf.mxu0
        %3244 = vmatprep.mubr.f32.mxu0 0.0
        %3245 = vmatmul.mubr.f32.gmra.mxu0 %v3032
        %v3246 = vpop.f32.mrf.mxu0
        %v3247 = vadd.f32 0.0, %v3246
        %v3248 = vpop.f32.mrf.mxu0
        %3249 = vmatprep.mubr.f32.mxu0 0.0
        %3250 = vmatmul.mubr.f32.gmra.mxu0 %v3035
        %v3251 = vpop.f32.mrf.mxu0
        %v3252 = vadd.f32 0.0, %v3251
        %v3253 = vpop.f32.mrf.mxu0
        %3254 = vmatprep.mubr.f32.mxu0 0.0
        %3255 = vmatmul.mubr.f32.gmra.mxu0 %v3038
        %v3256 = vpop.f32.mrf.mxu0
        %v3257 = vadd.f32 0.0, %v3256
        %v3258 = vpop.f32.mrf.mxu0
        %3259 = vmatprep.mubr.f32.mxu0 0.0
        %3260 = vmatmul.mubr.f32.gmra.mxu0 %v3041
        %v3261 = vpop.f32.mrf.mxu0
        %v3262 = vadd.f32 0.0, %v3261
        %v3263 = vpop.f32.mrf.mxu0
        %3264 = vmatprep.mubr.f32.mxu0 0.0
        %3265 = vmatmul.mubr.f32.gmra.mxu0 %v3044
        %v3266 = vpop.f32.mrf.mxu0
        %v3267 = vadd.f32 0.0, %v3266
        %v3268 = vpop.f32.mrf.mxu0
        %3269 = vmatprep.mubr.f32.mxu0 0.0
        %3270 = vmatmul.mubr.f32.gmra.mxu0 %v3047
        %v3271 = vpop.f32.mrf.mxu0
        %v3272 = vadd.f32 0.0, %v3271
        %v3273 = vpop.f32.mrf.mxu0
        %3274 = vmatprep.mubr.f32.mxu0 0.0
        %3275 = vmatmul.mubr.f32.gmra.mxu0 %v3050
        %v3276 = vpop.f32.mrf.mxu0
        %v3277 = vadd.f32 0.0, %v3276
        %v3278 = vpop.f32.mrf.mxu0
        %3279 = vdwg.mxu0
        %v3280 = vadd.f32 %v2923, %v3122
        %v3281 = vadd.f32 %v2924, %v3127
        %v3282 = vadd.f32 %v2925, %v3132
        %v3283 = vadd.f32 %v2926, %v3137
        %v3284 = vadd.f32 %v2927, %v3142
        %v3285 = vadd.f32 %v2928, %v3147
        %v3286 = vadd.f32 %v2929, %v3152
        %v3287 = vadd.f32 %v2930, %v3157
        %v3288 = vadd.f32 %v2931, %v3162
        %v3289 = vadd.f32 %v2932, %v3167
        %v3290 = vadd.f32 %v2933, %v3172
        %v3291 = vadd.f32 %v2934, %v3177
        %v3292 = vadd.f32 %v2935, %v3182
        %v3293 = vadd.f32 %v2936, %v3187
        %v3294 = vadd.f32 %v2937, %v3192
        %v3295 = vadd.f32 %v2938, %v3197
        %v3296 = vadd.f32 %v2939, %v3202
        %v3297 = vadd.f32 %v2940, %v3207
        %v3298 = vadd.f32 %v2941, %v3212
        %v3299 = vadd.f32 %v2942, %v3217
        %v3300 = vadd.f32 %v2943, %v3222
        %v3301 = vadd.f32 %v2944, %v3227
        %v3302 = vadd.f32 %v2945, %v3232
        %v3303 = vadd.f32 %v2946, %v3237
        %v3304 = vadd.f32 %v2947, %v3242
        %v3305 = vadd.f32 %v2948, %v3247
        %v3306 = vadd.f32 %v2949, %v3252
        %v3307 = vadd.f32 %v2950, %v3257
        %v3308 = vadd.f32 %v2951, %v3262
        %v3309 = vadd.f32 %v2952, %v3267
        %v3310 = vadd.f32 %v2953, %v3272
        %v3311 = vadd.f32 %v2954, %v3277
        %v3312 = vld [vmem:[%s1 + $0x1c] sm:$0xf]
        %v3314 = vsel %vm466, %v812, 0
        %v3317 = vsel %vm466, %v813, 0
        %v3320 = vsel %vm466, %v814, 0
        %v3323 = vsel %vm466, %v815, 0
        %v3326 = vsel %vm466, %v816, 0
        %v3329 = vsel %vm466, %v817, 0
        %v3332 = vsel %vm466, %v818, 0
        %v3335 = vsel %vm466, %v819, 0
        %v3338 = vsel %vm466, %v820, 0
        %v3341 = vsel %vm466, %v821, 0
        %v3344 = vsel %vm466, %v822, 0
        %v3347 = vsel %vm466, %v823, 0
        %v3350 = vsel %vm466, %v824, 0
        %v3353 = vsel %vm466, %v825, 0
        %v3356 = vsel %vm466, %v826, 0
        %v3359 = vsel %vm466, %v827, 0
        %v3362 = vsel %vm466, %v828, 0
        %v3365 = vsel %vm466, %v829, 0
        %v3368 = vsel %vm466, %v830, 0
        %v3371 = vsel %vm466, %v831, 0
        %v3374 = vsel %vm466, %v832, 0
        %v3377 = vsel %vm466, %v833, 0
        %v3380 = vsel %vm466, %v834, 0
        %v3383 = vsel %vm466, %v835, 0
        %v3386 = vsel %vm466, %v836, 0
        %v3389 = vsel %vm466, %v837, 0
        %v3392 = vsel %vm466, %v838, 0
        %v3395 = vsel %vm466, %v839, 0
        %v3398 = vsel %vm466, %v840, 0
        %v3401 = vsel %vm466, %v841, 0
        %v3404 = vsel %vm466, %v842, 0
        %v3407 = vsel %vm466, %v843, 0
        %v3410 = vsel %vm974, %v3312, 0
        %3412 = vmatprep.subr.mxu0 0.0
        %3413 = vmatpush1.msra.mxu0 0.0
        %3414 = vmatprep.subr.mxu0 0.0
        %3415 = vmatpush1.msra.mxu0 0.0
        %3416 = vmatprep.subr.mxu0 0.0
        %3417 = vmatpush1.msra.mxu0 0.0
        %3418 = vmatprep.subr.mxu0 0.0
        %3419 = vmatpush1.msra.mxu0 0.0
        %3420 = vmatprep.subr.mxu0 0.0
        %3421 = vmatpush1.msra.mxu0 0.0
        %3422 = vmatprep.subr.mxu0 0.0
        %3423 = vmatpush1.msra.mxu0 0.0
        %3424 = vmatprep.subr.mxu0 0.0
        %3425 = vmatpush1.msra.mxu0 0.0
        %3426 = vmatprep.subr.mxu0 0.0
        %3427 = vmatpush1.msra.mxu0 0.0
        %3428 = vmatprep.subr.mxu0 0.0
        %3429 = vmatpush1.msra.mxu0 0.0
        %3430 = vmatprep.subr.mxu0 0.0
        %3431 = vmatpush1.msra.mxu0 0.0
        %3432 = vmatprep.subr.mxu0 0.0
        %3433 = vmatpush1.msra.mxu0 0.0
        %3434 = vmatprep.subr.mxu0 0.0
        %3435 = vmatpush1.msra.mxu0 0.0
        %3436 = vmatprep.subr.mxu0 0.0
        %3437 = vmatpush1.msra.mxu0 0.0
        %3438 = vmatprep.subr.mxu0 0.0
        %3439 = vmatpush1.msra.mxu0 0.0
        %3440 = vmatprep.subr.mxu0 0.0
        %3441 = vmatpush1.msra.mxu0 0.0
        %3442 = vmatprep.subr.mxu0 0.0
        %3443 = vmatpush1.msra.mxu0 %v3410
        %3444 = vmatprep.subr.mxu0 0.0
        %3445 = vmatpush2.msra.mxu0 0.0
        %3446 = vmatprep.subr.mxu0 0.0
        %3447 = vmatpush2.msra.mxu0 0.0
        %3448 = vmatprep.subr.mxu0 0.0
        %3449 = vmatpush2.msra.mxu0 0.0
        %3450 = vmatprep.subr.mxu0 0.0
        %3451 = vmatpush2.msra.mxu0 0.0
        %3452 = vmatprep.subr.mxu0 0.0
        %3453 = vmatpush2.msra.mxu0 0.0
        %3454 = vmatprep.subr.mxu0 0.0
        %3455 = vmatpush2.msra.mxu0 0.0
        %3456 = vmatprep.subr.mxu0 0.0
        %3457 = vmatpush2.msra.mxu0 0.0
        %3458 = vmatprep.subr.mxu0 0.0
        %3459 = vmatpush2.msra.mxu0 0.0
        %3460 = vmatprep.subr.mxu0 0.0
        %3461 = vmatpush2.msra.mxu0 0.0
        %3462 = vmatprep.subr.mxu0 0.0
        %3463 = vmatpush2.msra.mxu0 0.0
        %3464 = vmatprep.subr.mxu0 0.0
        %3465 = vmatpush2.msra.mxu0 0.0
        %3466 = vmatprep.subr.mxu0 0.0
        %3467 = vmatpush2.msra.mxu0 0.0
        %3468 = vmatprep.subr.mxu0 0.0
        %3469 = vmatpush2.msra.mxu0 0.0
        %3470 = vmatprep.subr.mxu0 0.0
        %3471 = vmatpush2.msra.mxu0 0.0
        %3472 = vmatprep.subr.mxu0 0.0
        %3473 = vmatpush2.msra.mxu0 0.0
        %3474 = vmatprep.subr.mxu0 0.0
        %3475 = vmatpush2.msra.mxu0 0.0
        %3476 = vmatprep.mubr.f32.mxu0 0.0
        %3477 = vmatmul.mubr.f32.gmra.mxu0 %v3314
        %v3478 = vpop.f32.mrf.mxu0
        %v3479 = vadd.f32 0.0, %v3478
        %v3480 = vpop.f32.mrf.mxu0
        %3481 = vmatprep.mubr.f32.mxu0 0.0
        %3482 = vmatmul.mubr.f32.gmra.mxu0 %v3317
        %v3483 = vpop.f32.mrf.mxu0
        %v3484 = vadd.f32 0.0, %v3483
        %v3485 = vpop.f32.mrf.mxu0
        %3486 = vmatprep.mubr.f32.mxu0 0.0
        %3487 = vmatmul.mubr.f32.gmra.mxu0 %v3320
        %v3488 = vpop.f32.mrf.mxu0
        %v3489 = vadd.f32 0.0, %v3488
        %v3490 = vpop.f32.mrf.mxu0
        %3491 = vmatprep.mubr.f32.mxu0 0.0
        %3492 = vmatmul.mubr.f32.gmra.mxu0 %v3323
        %v3493 = vpop.f32.mrf.mxu0
        %v3494 = vadd.f32 0.0, %v3493
        %v3495 = vpop.f32.mrf.mxu0
        %3496 = vmatprep.mubr.f32.mxu0 0.0
        %3497 = vmatmul.mubr.f32.gmra.mxu0 %v3326
        %v3498 = vpop.f32.mrf.mxu0
        %v3499 = vadd.f32 0.0, %v3498
        %v3500 = vpop.f32.mrf.mxu0
        %3501 = vmatprep.mubr.f32.mxu0 0.0
        %3502 = vmatmul.mubr.f32.gmra.mxu0 %v3329
        %v3503 = vpop.f32.mrf.mxu0
        %v3504 = vadd.f32 0.0, %v3503
        %v3505 = vpop.f32.mrf.mxu0
        %3506 = vmatprep.mubr.f32.mxu0 0.0
        %3507 = vmatmul.mubr.f32.gmra.mxu0 %v3332
        %v3508 = vpop.f32.mrf.mxu0
        %v3509 = vadd.f32 0.0, %v3508
        %v3510 = vpop.f32.mrf.mxu0
        %3511 = vmatprep.mubr.f32.mxu0 0.0
        %3512 = vmatmul.mubr.f32.gmra.mxu0 %v3335
        %v3513 = vpop.f32.mrf.mxu0
        %v3514 = vadd.f32 0.0, %v3513
        %v3515 = vpop.f32.mrf.mxu0
        %3516 = vmatprep.mubr.f32.mxu0 0.0
        %3517 = vmatmul.mubr.f32.gmra.mxu0 %v3338
        %v3518 = vpop.f32.mrf.mxu0
        %v3519 = vadd.f32 0.0, %v3518
        %v3520 = vpop.f32.mrf.mxu0
        %3521 = vmatprep.mubr.f32.mxu0 0.0
        %3522 = vmatmul.mubr.f32.gmra.mxu0 %v3341
        %v3523 = vpop.f32.mrf.mxu0
        %v3524 = vadd.f32 0.0, %v3523
        %v3525 = vpop.f32.mrf.mxu0
        %3526 = vmatprep.mubr.f32.mxu0 0.0
        %3527 = vmatmul.mubr.f32.gmra.mxu0 %v3344
        %v3528 = vpop.f32.mrf.mxu0
        %v3529 = vadd.f32 0.0, %v3528
        %v3530 = vpop.f32.mrf.mxu0
        %3531 = vmatprep.mubr.f32.mxu0 0.0
        %3532 = vmatmul.mubr.f32.gmra.mxu0 %v3347
        %v3533 = vpop.f32.mrf.mxu0
        %v3534 = vadd.f32 0.0, %v3533
        %v3535 = vpop.f32.mrf.mxu0
        %3536 = vmatprep.mubr.f32.mxu0 0.0
        %3537 = vmatmul.mubr.f32.gmra.mxu0 %v3350
        %v3538 = vpop.f32.mrf.mxu0
        %v3539 = vadd.f32 0.0, %v3538
        %v3540 = vpop.f32.mrf.mxu0
        %3541 = vmatprep.mubr.f32.mxu0 0.0
        %3542 = vmatmul.mubr.f32.gmra.mxu0 %v3353
        %v3543 = vpop.f32.mrf.mxu0
        %v3544 = vadd.f32 0.0, %v3543
        %v3545 = vpop.f32.mrf.mxu0
        %3546 = vmatprep.mubr.f32.mxu0 0.0
        %3547 = vmatmul.mubr.f32.gmra.mxu0 %v3356
        %v3548 = vpop.f32.mrf.mxu0
        %v3549 = vadd.f32 0.0, %v3548
        %v3550 = vpop.f32.mrf.mxu0
        %3551 = vmatprep.mubr.f32.mxu0 0.0
        %3552 = vmatmul.mubr.f32.gmra.mxu0 %v3359
        %v3553 = vpop.f32.mrf.mxu0
        %v3554 = vadd.f32 0.0, %v3553
        %v3555 = vpop.f32.mrf.mxu0
        %3556 = vmatprep.mubr.f32.mxu0 0.0
        %3557 = vmatmul.mubr.f32.gmra.mxu0 %v3362
        %v3558 = vpop.f32.mrf.mxu0
        %v3559 = vadd.f32 0.0, %v3558
        %v3560 = vpop.f32.mrf.mxu0
        %3561 = vmatprep.mubr.f32.mxu0 0.0
        %3562 = vmatmul.mubr.f32.gmra.mxu0 %v3365
        %v3563 = vpop.f32.mrf.mxu0
        %v3564 = vadd.f32 0.0, %v3563
        %v3565 = vpop.f32.mrf.mxu0
        %3566 = vmatprep.mubr.f32.mxu0 0.0
        %3567 = vmatmul.mubr.f32.gmra.mxu0 %v3368
        %v3568 = vpop.f32.mrf.mxu0
        %v3569 = vadd.f32 0.0, %v3568
        %v3570 = vpop.f32.mrf.mxu0
        %3571 = vmatprep.mubr.f32.mxu0 0.0
        %3572 = vmatmul.mubr.f32.gmra.mxu0 %v3371
        %v3573 = vpop.f32.mrf.mxu0
        %v3574 = vadd.f32 0.0, %v3573
        %v3575 = vpop.f32.mrf.mxu0
        %3576 = vmatprep.mubr.f32.mxu0 0.0
        %3577 = vmatmul.mubr.f32.gmra.mxu0 %v3374
        %v3578 = vpop.f32.mrf.mxu0
        %v3579 = vadd.f32 0.0, %v3578
        %v3580 = vpop.f32.mrf.mxu0
        %3581 = vmatprep.mubr.f32.mxu0 0.0
        %3582 = vmatmul.mubr.f32.gmra.mxu0 %v3377
        %v3583 = vpop.f32.mrf.mxu0
        %v3584 = vadd.f32 0.0, %v3583
        %v3585 = vpop.f32.mrf.mxu0
        %3586 = vmatprep.mubr.f32.mxu0 0.0
        %3587 = vmatmul.mubr.f32.gmra.mxu0 %v3380
        %v3588 = vpop.f32.mrf.mxu0
        %v3589 = vadd.f32 0.0, %v3588
        %v3590 = vpop.f32.mrf.mxu0
        %3591 = vmatprep.mubr.f32.mxu0 0.0
        %3592 = vmatmul.mubr.f32.gmra.mxu0 %v3383
        %v3593 = vpop.f32.mrf.mxu0
        %v3594 = vadd.f32 0.0, %v3593
        %v3595 = vpop.f32.mrf.mxu0
        %3596 = vmatprep.mubr.f32.mxu0 0.0
        %3597 = vmatmul.mubr.f32.gmra.mxu0 %v3386
        %v3598 = vpop.f32.mrf.mxu0
        %v3599 = vadd.f32 0.0, %v3598
        %v3600 = vpop.f32.mrf.mxu0
        %3601 = vmatprep.mubr.f32.mxu0 0.0
        %3602 = vmatmul.mubr.f32.gmra.mxu0 %v3389
        %v3603 = vpop.f32.mrf.mxu0
        %v3604 = vadd.f32 0.0, %v3603
        %v3605 = vpop.f32.mrf.mxu0
        %3606 = vmatprep.mubr.f32.mxu0 0.0
        %3607 = vmatmul.mubr.f32.gmra.mxu0 %v3392
        %v3608 = vpop.f32.mrf.mxu0
        %v3609 = vadd.f32 0.0, %v3608
        %v3610 = vpop.f32.mrf.mxu0
        %3611 = vmatprep.mubr.f32.mxu0 0.0
        %3612 = vmatmul.mubr.f32.gmra.mxu0 %v3395
        %v3613 = vpop.f32.mrf.mxu0
        %v3614 = vadd.f32 0.0, %v3613
        %v3615 = vpop.f32.mrf.mxu0
        %3616 = vmatprep.mubr.f32.mxu0 0.0
        %3617 = vmatmul.mubr.f32.gmra.mxu0 %v3398
        %v3618 = vpop.f32.mrf.mxu0
        %v3619 = vadd.f32 0.0, %v3618
        %v3620 = vpop.f32.mrf.mxu0
        %3621 = vmatprep.mubr.f32.mxu0 0.0
        %3622 = vmatmul.mubr.f32.gmra.mxu0 %v3401
        %v3623 = vpop.f32.mrf.mxu0
        %v3624 = vadd.f32 0.0, %v3623
        %v3625 = vpop.f32.mrf.mxu0
        %3626 = vmatprep.mubr.f32.mxu0 0.0
        %3627 = vmatmul.mubr.f32.gmra.mxu0 %v3404
        %v3628 = vpop.f32.mrf.mxu0
        %v3629 = vadd.f32 0.0, %v3628
        %v3630 = vpop.f32.mrf.mxu0
        %3631 = vmatprep.mubr.f32.mxu0 0.0
        %3632 = vmatmul.mubr.f32.gmra.mxu0 %v3407
        %v3633 = vpop.f32.mrf.mxu0
        %v3634 = vadd.f32 0.0, %v3633
        %v3635 = vpop.f32.mrf.mxu0
        %3636 = vdwg.mxu0
        %v3637 = vadd.f32 %v3280, %v3479
        %v3638 = vadd.f32 %v3281, %v3484
        %v3639 = vadd.f32 %v3282, %v3489
        %v3640 = vadd.f32 %v3283, %v3494
        %v3641 = vadd.f32 %v3284, %v3499
        %v3642 = vadd.f32 %v3285, %v3504
        %v3643 = vadd.f32 %v3286, %v3509
        %v3644 = vadd.f32 %v3287, %v3514
        %v3645 = vadd.f32 %v3288, %v3519
        %v3646 = vadd.f32 %v3289, %v3524
        %v3647 = vadd.f32 %v3290, %v3529
        %v3648 = vadd.f32 %v3291, %v3534
        %v3649 = vadd.f32 %v3292, %v3539
        %v3650 = vadd.f32 %v3293, %v3544
        %v3651 = vadd.f32 %v3294, %v3549
        %v3652 = vadd.f32 %v3295, %v3554
        %v3653 = vadd.f32 %v3296, %v3559
        %v3654 = vadd.f32 %v3297, %v3564
        %v3655 = vadd.f32 %v3298, %v3569
        %v3656 = vadd.f32 %v3299, %v3574
        %v3657 = vadd.f32 %v3300, %v3579
        %v3658 = vadd.f32 %v3301, %v3584
        %v3659 = vadd.f32 %v3302, %v3589
        %v3660 = vadd.f32 %v3303, %v3594
        %v3661 = vadd.f32 %v3304, %v3599
        %v3662 = vadd.f32 %v3305, %v3604
        %v3663 = vadd.f32 %v3306, %v3609
        %v3664 = vadd.f32 %v3307, %v3614
        %v3665 = vadd.f32 %v3308, %v3619
        %v3666 = vadd.f32 %v3309, %v3624
        %v3667 = vadd.f32 %v3310, %v3629
        %v3668 = vadd.f32 %v3311, %v3634
        %v3669 = vld [vmem:[%s1 + $0x20] sm:$0xf]
        %v3671 = vsel %vm466, %v844, 0
        %v3674 = vsel %vm466, %v845, 0
        %v3677 = vsel %vm466, %v846, 0
        %v3680 = vsel %vm466, %v847, 0
        %v3683 = vsel %vm466, %v848, 0
        %v3686 = vsel %vm466, %v849, 0
        %v3689 = vsel %vm466, %v850, 0
        %v3692 = vsel %vm466, %v851, 0
        %v3695 = vsel %vm466, %v852, 0
        %v3698 = vsel %vm466, %v853, 0
        %v3701 = vsel %vm466, %v854, 0
        %v3704 = vsel %vm466, %v855, 0
        %v3707 = vsel %vm466, %v856, 0
        %v3710 = vsel %vm466, %v857, 0
        %v3713 = vsel %vm466, %v858, 0
        %v3716 = vsel %vm466, %v859, 0
        %v3719 = vsel %vm466, %v860, 0
        %v3722 = vsel %vm466, %v861, 0
        %v3725 = vsel %vm466, %v862, 0
        %v3728 = vsel %vm466, %v863, 0
        %v3731 = vsel %vm466, %v864, 0
        %v3734 = vsel %vm466, %v865, 0
        %v3737 = vsel %vm466, %v866, 0
        %v3740 = vsel %vm466, %v867, 0
        %v3743 = vsel %vm466, %v868, 0
        %v3746 = vsel %vm466, %v869, 0
        %v3749 = vsel %vm466, %v870, 0
        %v3752 = vsel %vm466, %v871, 0
        %v3755 = vsel %vm466, %v872, 0
        %v3758 = vsel %vm466, %v873, 0
        %v3761 = vsel %vm466, %v874, 0
        %v3764 = vsel %vm466, %v875, 0
        %v3767 = vsel %vm974, %v3669, 0
        %3769 = vmatprep.subr.mxu0 0.0
        %3770 = vmatpush1.msra.mxu0 0.0
        %3771 = vmatprep.subr.mxu0 0.0
        %3772 = vmatpush1.msra.mxu0 0.0
        %3773 = vmatprep.subr.mxu0 0.0
        %3774 = vmatpush1.msra.mxu0 0.0
        %3775 = vmatprep.subr.mxu0 0.0
        %3776 = vmatpush1.msra.mxu0 0.0
        %3777 = vmatprep.subr.mxu0 0.0
        %3778 = vmatpush1.msra.mxu0 0.0
        %3779 = vmatprep.subr.mxu0 0.0
        %3780 = vmatpush1.msra.mxu0 0.0
        %3781 = vmatprep.subr.mxu0 0.0
        %3782 = vmatpush1.msra.mxu0 0.0
        %3783 = vmatprep.subr.mxu0 0.0
        %3784 = vmatpush1.msra.mxu0 0.0
        %3785 = vmatprep.subr.mxu0 0.0
        %3786 = vmatpush1.msra.mxu0 0.0
        %3787 = vmatprep.subr.mxu0 0.0
        %3788 = vmatpush1.msra.mxu0 0.0
        %3789 = vmatprep.subr.mxu0 0.0
        %3790 = vmatpush1.msra.mxu0 0.0
        %3791 = vmatprep.subr.mxu0 0.0
        %3792 = vmatpush1.msra.mxu0 0.0
        %3793 = vmatprep.subr.mxu0 0.0
        %3794 = vmatpush1.msra.mxu0 0.0
        %3795 = vmatprep.subr.mxu0 0.0
        %3796 = vmatpush1.msra.mxu0 0.0
        %3797 = vmatprep.subr.mxu0 0.0
        %3798 = vmatpush1.msra.mxu0 0.0
        %3799 = vmatprep.subr.mxu0 0.0
        %3800 = vmatpush1.msra.mxu0 %v3767
        %3801 = vmatprep.subr.mxu0 0.0
        %3802 = vmatpush2.msra.mxu0 0.0
        %3803 = vmatprep.subr.mxu0 0.0
        %3804 = vmatpush2.msra.mxu0 0.0
        %3805 = vmatprep.subr.mxu0 0.0
        %3806 = vmatpush2.msra.mxu0 0.0
        %3807 = vmatprep.subr.mxu0 0.0
        %3808 = vmatpush2.msra.mxu0 0.0
        %3809 = vmatprep.subr.mxu0 0.0
        %3810 = vmatpush2.msra.mxu0 0.0
        %3811 = vmatprep.subr.mxu0 0.0
        %3812 = vmatpush2.msra.mxu0 0.0
        %3813 = vmatprep.subr.mxu0 0.0
        %3814 = vmatpush2.msra.mxu0 0.0
        %3815 = vmatprep.subr.mxu0 0.0
        %3816 = vmatpush2.msra.mxu0 0.0
        %3817 = vmatprep.subr.mxu0 0.0
        %3818 = vmatpush2.msra.mxu0 0.0
        %3819 = vmatprep.subr.mxu0 0.0
        %3820 = vmatpush2.msra.mxu0 0.0
        %3821 = vmatprep.subr.mxu0 0.0
        %3822 = vmatpush2.msra.mxu0 0.0
        %3823 = vmatprep.subr.mxu0 0.0
        %3824 = vmatpush2.msra.mxu0 0.0
        %3825 = vmatprep.subr.mxu0 0.0
        %3826 = vmatpush2.msra.mxu0 0.0
        %3827 = vmatprep.subr.mxu0 0.0
        %3828 = vmatpush2.msra.mxu0 0.0
        %3829 = vmatprep.subr.mxu0 0.0
        %3830 = vmatpush2.msra.mxu0 0.0
        %3831 = vmatprep.subr.mxu0 0.0
        %3832 = vmatpush2.msra.mxu0 0.0
        %3833 = vmatprep.mubr.f32.mxu0 0.0
        %3834 = vmatmul.mubr.f32.gmra.mxu0 %v3671
        %v3835 = vpop.f32.mrf.mxu0
        %v3836 = vadd.f32 0.0, %v3835
        %v3837 = vpop.f32.mrf.mxu0
        %3838 = vmatprep.mubr.f32.mxu0 0.0
        %3839 = vmatmul.mubr.f32.gmra.mxu0 %v3674
        %v3840 = vpop.f32.mrf.mxu0
        %v3841 = vadd.f32 0.0, %v3840
        %v3842 = vpop.f32.mrf.mxu0
        %3843 = vmatprep.mubr.f32.mxu0 0.0
        %3844 = vmatmul.mubr.f32.gmra.mxu0 %v3677
        %v3845 = vpop.f32.mrf.mxu0
        %v3846 = vadd.f32 0.0, %v3845
        %v3847 = vpop.f32.mrf.mxu0
        %3848 = vmatprep.mubr.f32.mxu0 0.0
        %3849 = vmatmul.mubr.f32.gmra.mxu0 %v3680
        %v3850 = vpop.f32.mrf.mxu0
        %v3851 = vadd.f32 0.0, %v3850
        %v3852 = vpop.f32.mrf.mxu0
        %3853 = vmatprep.mubr.f32.mxu0 0.0
        %3854 = vmatmul.mubr.f32.gmra.mxu0 %v3683
        %v3855 = vpop.f32.mrf.mxu0
        %v3856 = vadd.f32 0.0, %v3855
        %v3857 = vpop.f32.mrf.mxu0
        %3858 = vmatprep.mubr.f32.mxu0 0.0
        %3859 = vmatmul.mubr.f32.gmra.mxu0 %v3686
        %v3860 = vpop.f32.mrf.mxu0
        %v3861 = vadd.f32 0.0, %v3860
        %v3862 = vpop.f32.mrf.mxu0
        %3863 = vmatprep.mubr.f32.mxu0 0.0
        %3864 = vmatmul.mubr.f32.gmra.mxu0 %v3689
        %v3865 = vpop.f32.mrf.mxu0
        %v3866 = vadd.f32 0.0, %v3865
        %v3867 = vpop.f32.mrf.mxu0
        %3868 = vmatprep.mubr.f32.mxu0 0.0
        %3869 = vmatmul.mubr.f32.gmra.mxu0 %v3692
        %v3870 = vpop.f32.mrf.mxu0
        %v3871 = vadd.f32 0.0, %v3870
        %v3872 = vpop.f32.mrf.mxu0
        %3873 = vmatprep.mubr.f32.mxu0 0.0
        %3874 = vmatmul.mubr.f32.gmra.mxu0 %v3695
        %v3875 = vpop.f32.mrf.mxu0
        %v3876 = vadd.f32 0.0, %v3875
        %v3877 = vpop.f32.mrf.mxu0
        %3878 = vmatprep.mubr.f32.mxu0 0.0
        %3879 = vmatmul.mubr.f32.gmra.mxu0 %v3698
        %v3880 = vpop.f32.mrf.mxu0
        %v3881 = vadd.f32 0.0, %v3880
        %v3882 = vpop.f32.mrf.mxu0
        %3883 = vmatprep.mubr.f32.mxu0 0.0
        %3884 = vmatmul.mubr.f32.gmra.mxu0 %v3701
        %v3885 = vpop.f32.mrf.mxu0
        %v3886 = vadd.f32 0.0, %v3885
        %v3887 = vpop.f32.mrf.mxu0
        %3888 = vmatprep.mubr.f32.mxu0 0.0
        %3889 = vmatmul.mubr.f32.gmra.mxu0 %v3704
        %v3890 = vpop.f32.mrf.mxu0
        %v3891 = vadd.f32 0.0, %v3890
        %v3892 = vpop.f32.mrf.mxu0
        %3893 = vmatprep.mubr.f32.mxu0 0.0
        %3894 = vmatmul.mubr.f32.gmra.mxu0 %v3707
        %v3895 = vpop.f32.mrf.mxu0
        %v3896 = vadd.f32 0.0, %v3895
        %v3897 = vpop.f32.mrf.mxu0
        %3898 = vmatprep.mubr.f32.mxu0 0.0
        %3899 = vmatmul.mubr.f32.gmra.mxu0 %v3710
        %v3900 = vpop.f32.mrf.mxu0
        %v3901 = vadd.f32 0.0, %v3900
        %v3902 = vpop.f32.mrf.mxu0
        %3903 = vmatprep.mubr.f32.mxu0 0.0
        %3904 = vmatmul.mubr.f32.gmra.mxu0 %v3713
        %v3905 = vpop.f32.mrf.mxu0
        %v3906 = vadd.f32 0.0, %v3905
        %v3907 = vpop.f32.mrf.mxu0
        %3908 = vmatprep.mubr.f32.mxu0 0.0
        %3909 = vmatmul.mubr.f32.gmra.mxu0 %v3716
        %v3910 = vpop.f32.mrf.mxu0
        %v3911 = vadd.f32 0.0, %v3910
        %v3912 = vpop.f32.mrf.mxu0
        %3913 = vmatprep.mubr.f32.mxu0 0.0
        %3914 = vmatmul.mubr.f32.gmra.mxu0 %v3719
        %v3915 = vpop.f32.mrf.mxu0
        %v3916 = vadd.f32 0.0, %v3915
        %v3917 = vpop.f32.mrf.mxu0
        %3918 = vmatprep.mubr.f32.mxu0 0.0
        %3919 = vmatmul.mubr.f32.gmra.mxu0 %v3722
        %v3920 = vpop.f32.mrf.mxu0
        %v3921 = vadd.f32 0.0, %v3920
        %v3922 = vpop.f32.mrf.mxu0
        %3923 = vmatprep.mubr.f32.mxu0 0.0
        %3924 = vmatmul.mubr.f32.gmra.mxu0 %v3725
        %v3925 = vpop.f32.mrf.mxu0
        %v3926 = vadd.f32 0.0, %v3925
        %v3927 = vpop.f32.mrf.mxu0
        %3928 = vmatprep.mubr.f32.mxu0 0.0
        %3929 = vmatmul.mubr.f32.gmra.mxu0 %v3728
        %v3930 = vpop.f32.mrf.mxu0
        %v3931 = vadd.f32 0.0, %v3930
        %v3932 = vpop.f32.mrf.mxu0
        %3933 = vmatprep.mubr.f32.mxu0 0.0
        %3934 = vmatmul.mubr.f32.gmra.mxu0 %v3731
        %v3935 = vpop.f32.mrf.mxu0
        %v3936 = vadd.f32 0.0, %v3935
        %v3937 = vpop.f32.mrf.mxu0
        %3938 = vmatprep.mubr.f32.mxu0 0.0
        %3939 = vmatmul.mubr.f32.gmra.mxu0 %v3734
        %v3940 = vpop.f32.mrf.mxu0
        %v3941 = vadd.f32 0.0, %v3940
        %v3942 = vpop.f32.mrf.mxu0
        %3943 = vmatprep.mubr.f32.mxu0 0.0
        %3944 = vmatmul.mubr.f32.gmra.mxu0 %v3737
        %v3945 = vpop.f32.mrf.mxu0
        %v3946 = vadd.f32 0.0, %v3945
        %v3947 = vpop.f32.mrf.mxu0
        %3948 = vmatprep.mubr.f32.mxu0 0.0
        %3949 = vmatmul.mubr.f32.gmra.mxu0 %v3740
        %v3950 = vpop.f32.mrf.mxu0
        %v3951 = vadd.f32 0.0, %v3950
        %v3952 = vpop.f32.mrf.mxu0
        %3953 = vmatprep.mubr.f32.mxu0 0.0
        %3954 = vmatmul.mubr.f32.gmra.mxu0 %v3743
        %v3955 = vpop.f32.mrf.mxu0
        %v3956 = vadd.f32 0.0, %v3955
        %v3957 = vpop.f32.mrf.mxu0
        %3958 = vmatprep.mubr.f32.mxu0 0.0
        %3959 = vmatmul.mubr.f32.gmra.mxu0 %v3746
        %v3960 = vpop.f32.mrf.mxu0
        %v3961 = vadd.f32 0.0, %v3960
        %v3962 = vpop.f32.mrf.mxu0
        %3963 = vmatprep.mubr.f32.mxu0 0.0
        %3964 = vmatmul.mubr.f32.gmra.mxu0 %v3749
        %v3965 = vpop.f32.mrf.mxu0
        %v3966 = vadd.f32 0.0, %v3965
        %v3967 = vpop.f32.mrf.mxu0
        %3968 = vmatprep.mubr.f32.mxu0 0.0
        %3969 = vmatmul.mubr.f32.gmra.mxu0 %v3752
        %v3970 = vpop.f32.mrf.mxu0
        %v3971 = vadd.f32 0.0, %v3970
        %v3972 = vpop.f32.mrf.mxu0
        %3973 = vmatprep.mubr.f32.mxu0 0.0
        %3974 = vmatmul.mubr.f32.gmra.mxu0 %v3755
        %v3975 = vpop.f32.mrf.mxu0
        %v3976 = vadd.f32 0.0, %v3975
        %v3977 = vpop.f32.mrf.mxu0
        %3978 = vmatprep.mubr.f32.mxu0 0.0
        %3979 = vmatmul.mubr.f32.gmra.mxu0 %v3758
        %v3980 = vpop.f32.mrf.mxu0
        %v3981 = vadd.f32 0.0, %v3980
        %v3982 = vpop.f32.mrf.mxu0
        %3983 = vmatprep.mubr.f32.mxu0 0.0
        %3984 = vmatmul.mubr.f32.gmra.mxu0 %v3761
        %v3985 = vpop.f32.mrf.mxu0
        %v3986 = vadd.f32 0.0, %v3985
        %v3987 = vpop.f32.mrf.mxu0
        %3988 = vmatprep.mubr.f32.mxu0 0.0
        %3989 = vmatmul.mubr.f32.gmra.mxu0 %v3764
        %v3990 = vpop.f32.mrf.mxu0
        %v3991 = vadd.f32 0.0, %v3990
        %v3992 = vpop.f32.mrf.mxu0
        %3993 = vdwg.mxu0
        %v3994 = vadd.f32 %v3637, %v3836
        %v3995 = vadd.f32 %v3638, %v3841
        %v3996 = vadd.f32 %v3639, %v3846
        %v3997 = vadd.f32 %v3640, %v3851
        %v3998 = vadd.f32 %v3641, %v3856
        %v3999 = vadd.f32 %v3642, %v3861
        %v4000 = vadd.f32 %v3643, %v3866
        %v4001 = vadd.f32 %v3644, %v3871
        %v4002 = vadd.f32 %v3645, %v3876
        %v4003 = vadd.f32 %v3646, %v3881
        %v4004 = vadd.f32 %v3647, %v3886
        %v4005 = vadd.f32 %v3648, %v3891
        %v4006 = vadd.f32 %v3649, %v3896
        %v4007 = vadd.f32 %v3650, %v3901
        %v4008 = vadd.f32 %v3651, %v3906
        %v4009 = vadd.f32 %v3652, %v3911
        %v4010 = vadd.f32 %v3653, %v3916
        %v4011 = vadd.f32 %v3654, %v3921
        %v4012 = vadd.f32 %v3655, %v3926
        %v4013 = vadd.f32 %v3656, %v3931
        %v4014 = vadd.f32 %v3657, %v3936
        %v4015 = vadd.f32 %v3658, %v3941
        %v4016 = vadd.f32 %v3659, %v3946
        %v4017 = vadd.f32 %v3660, %v3951
        %v4018 = vadd.f32 %v3661, %v3956
        %v4019 = vadd.f32 %v3662, %v3961
        %v4020 = vadd.f32 %v3663, %v3966
        %v4021 = vadd.f32 %v3664, %v3971
        %v4022 = vadd.f32 %v3665, %v3976
        %v4023 = vadd.f32 %v3666, %v3981
        %v4024 = vadd.f32 %v3667, %v3986
        %v4025 = vadd.f32 %v3668, %v3991
        %v4026 = vld [vmem:[%s2] sm:$0x1]
        %v4028 = vlaneseq
        %v4029 = vshrl.u32 %v4028, 7
        %v4030 = vsub.s32 0, %v4029
        %v4031 = vrot.slane %v4026, %v4030
        %v4033 = vadd.f32 %v3994, %v4031
        %v4034 = vadd.f32 %v3995, %v4031
        %v4035 = vadd.f32 %v3996, %v4031
        %v4036 = vadd.f32 %v3997, %v4031
        %v4037 = vadd.f32 %v3998, %v4031
        %v4038 = vadd.f32 %v3999, %v4031
        %v4039 = vadd.f32 %v4000, %v4031
        %v4040 = vadd.f32 %v4001, %v4031
        %v4041 = vadd.f32 %v4002, %v4031
        %v4042 = vadd.f32 %v4003, %v4031
        %v4043 = vadd.f32 %v4004, %v4031
        %v4044 = vadd.f32 %v4005, %v4031
        %v4045 = vadd.f32 %v4006, %v4031
        %v4046 = vadd.f32 %v4007, %v4031
        %v4047 = vadd.f32 %v4008, %v4031
        %v4048 = vadd.f32 %v4009, %v4031
        %v4049 = vadd.f32 %v4010, %v4031
        %v4050 = vadd.f32 %v4011, %v4031
        %v4051 = vadd.f32 %v4012, %v4031
        %v4052 = vadd.f32 %v4013, %v4031
        %v4053 = vadd.f32 %v4014, %v4031
        %v4054 = vadd.f32 %v4015, %v4031
        %v4055 = vadd.f32 %v4016, %v4031
        %v4056 = vadd.f32 %v4017, %v4031
        %v4057 = vadd.f32 %v4018, %v4031
        %v4058 = vadd.f32 %v4019, %v4031
        %v4059 = vadd.f32 %v4020, %v4031
        %v4060 = vadd.f32 %v4021, %v4031
        %v4061 = vadd.f32 %v4022, %v4031
        %v4062 = vadd.f32 %v4023, %v4031
        %v4063 = vadd.f32 %v4024, %v4031
        %v4064 = vadd.f32 %v4025, %v4031
        %v4065 = vmax.f32 %v4033, 0.0
        %v4066 = vmax.f32 %v4034, 0.0
        %v4067 = vmax.f32 %v4035, 0.0
        %v4068 = vmax.f32 %v4036, 0.0
        %v4069 = vmax.f32 %v4037, 0.0
        %v4070 = vmax.f32 %v4038, 0.0
        %v4071 = vmax.f32 %v4039, 0.0
        %v4072 = vmax.f32 %v4040, 0.0
        %v4073 = vmax.f32 %v4041, 0.0
        %v4074 = vmax.f32 %v4042, 0.0
        %v4075 = vmax.f32 %v4043, 0.0
        %v4076 = vmax.f32 %v4044, 0.0
        %v4077 = vmax.f32 %v4045, 0.0
        %v4078 = vmax.f32 %v4046, 0.0
        %v4079 = vmax.f32 %v4047, 0.0
        %v4080 = vmax.f32 %v4048, 0.0
        %v4081 = vmax.f32 %v4049, 0.0
        %v4082 = vmax.f32 %v4050, 0.0
        %v4083 = vmax.f32 %v4051, 0.0
        %v4084 = vmax.f32 %v4052, 0.0
        %v4085 = vmax.f32 %v4053, 0.0
        %v4086 = vmax.f32 %v4054, 0.0
        %v4087 = vmax.f32 %v4055, 0.0
        %v4088 = vmax.f32 %v4056, 0.0
        %v4089 = vmax.f32 %v4057, 0.0
        %v4090 = vmax.f32 %v4058, 0.0
        %v4091 = vmax.f32 %v4059, 0.0
        %v4092 = vmax.f32 %v4060, 0.0
        %v4093 = vmax.f32 %v4061, 0.0
        %v4094 = vmax.f32 %v4062, 0.0
        %v4095 = vmax.f32 %v4063, 0.0
        %v4096 = vmax.f32 %v4064, 0.0
        %v4097 = vmax.f32 %v4065, %v4067
        %v4098 = vmax.f32 %v4066, %v4068
        %v4099 = vmax.f32 %v4069, %v4071
        %v4100 = vmax.f32 %v4070, %v4072
        %v4101 = vmax.f32 %v4073, %v4075
        %v4102 = vmax.f32 %v4074, %v4076
        %v4103 = vmax.f32 %v4077, %v4079
        %v4104 = vmax.f32 %v4078, %v4080
        %v4105 = vmax.f32 %v4081, %v4083
        %v4106 = vmax.f32 %v4082, %v4084
        %v4107 = vmax.f32 %v4085, %v4087
        %v4108 = vmax.f32 %v4086, %v4088
        %v4109 = vmax.f32 %v4089, %v4091
        %v4110 = vmax.f32 %v4090, %v4092
        %v4111 = vmax.f32 %v4093, %v4095
        %v4112 = vmax.f32 %v4094, %v4096
        %v4113 = vlaneseq
        %v4114 = vshrl.u32 %v4113, 7
        %v4115 = vadd.s32 %v4114, 8
        %v4116 = vadd.s32 %v4114, 16
        %v4117 = vadd.s32 %v4114, 24
        %v4118 = vadd.s32 %v4114, 32
        %v4119 = vadd.s32 %v4114, 40
        %v4120 = vadd.s32 %v4114, 48
        %v4121 = vadd.s32 %v4114, 56
        %v4122 = vadd.s32 %v4114, 64
        %v4123 = vadd.s32 %v4114, 72
        %v4124 = vadd.s32 %v4114, 80
        %v4125 = vadd.s32 %v4114, 88
        %v4126 = vadd.s32 %v4114, 96
        %v4127 = vadd.s32 %v4114, 104
        %v4128 = vadd.s32 %v4114, 112
        %v4129 = vadd.s32 %v4114, 120
        %v4130 = vlaneseq
        %v4131 = vand.u32 %v4130, 127
        %vm4132 = vcmp.lt.s32.totalorder %v4114, 64
        %vm4133 = vcmp.lt.s32.totalorder %v4115, 64
        %vm4134 = vcmp.lt.s32.totalorder %v4116, 64
        %vm4135 = vcmp.lt.s32.totalorder %v4117, 64
        %vm4136 = vcmp.lt.s32.totalorder %v4118, 64
        %vm4137 = vcmp.lt.s32.totalorder %v4119, 64
        %vm4138 = vcmp.lt.s32.totalorder %v4120, 64
        %vm4139 = vcmp.lt.s32.totalorder %v4121, 64
        %vm4140 = vcmp.lt.s32.totalorder %v4122, 64
        %vm4141 = vcmp.lt.s32.totalorder %v4123, 64
        %vm4142 = vcmp.lt.s32.totalorder %v4124, 64
        %vm4143 = vcmp.lt.s32.totalorder %v4125, 64
        %vm4144 = vcmp.lt.s32.totalorder %v4126, 64
        %vm4145 = vcmp.lt.s32.totalorder %v4127, 64
        %vm4146 = vcmp.lt.s32.totalorder %v4128, 64
        %vm4147 = vcmp.lt.s32.totalorder %v4129, 64
        %v4148 = vmul.u32 %v4114, 2
        %v4149 = vmul.u32 %v4115, 2
        %v4150 = vmul.u32 %v4116, 2
        %v4151 = vmul.u32 %v4117, 2
        %v4152 = vmul.u32 %v4118, 2
        %v4153 = vmul.u32 %v4119, 2
        %v4154 = vmul.u32 %v4120, 2
        %v4155 = vmul.u32 %v4121, 2
        %v4156 = vmul.u32 %v4122, 2
        %v4157 = vmul.u32 %v4123, 2
        %v4158 = vmul.u32 %v4124, 2
        %v4159 = vmul.u32 %v4125, 2
        %v4160 = vmul.u32 %v4126, 2
        %v4161 = vmul.u32 %v4127, 2
        %v4162 = vmul.u32 %v4128, 2
        %v4163 = vmul.u32 %v4129, 2
        %v4164 = vsub.s32 %v4114, 64
        %v4165 = vsub.s32 %v4115, 64
        %v4166 = vsub.s32 %v4116, 64
        %v4167 = vsub.s32 %v4117, 64
        %v4168 = vsub.s32 %v4118, 64
        %v4169 = vsub.s32 %v4119, 64
        %v4170 = vsub.s32 %v4120, 64
        %v4171 = vsub.s32 %v4121, 64
        %v4172 = vsub.s32 %v4123, 64
        %v4173 = vsub.s32 %v4124, 64
        %v4174 = vsub.s32 %v4125, 64
        %v4175 = vsub.s32 %v4126, 64
        %v4176 = vsub.s32 %v4127, 64
        %v4177 = vsub.s32 %v4128, 64
        %v4178 = vsub.s32 %v4129, 64
        %v4179 = vmul.u32 %v4164, 2
        %v4180 = vmul.u32 %v4165, 2
        %v4181 = vmul.u32 %v4166, 2
        %v4182 = vmul.u32 %v4167, 2
        %v4183 = vmul.u32 %v4168, 2
        %v4184 = vmul.u32 %v4169, 2
        %v4185 = vmul.u32 %v4170, 2
        %v4186 = vmul.u32 %v4171, 2
        %v4187 = vmul.u32 %v4172, 2
        %v4188 = vmul.u32 %v4173, 2
        %v4189 = vmul.u32 %v4174, 2
        %v4190 = vmul.u32 %v4175, 2
        %v4191 = vmul.u32 %v4176, 2
        %v4192 = vmul.u32 %v4177, 2
        %v4193 = vmul.u32 %v4178, 2
        %v4194 = vadd.s32 %v4179, 1
        %v4195 = vadd.s32 %v4180, 1
        %v4196 = vadd.s32 %v4181, 1
        %v4197 = vadd.s32 %v4182, 1
        %v4198 = vadd.s32 %v4183, 1
        %v4199 = vadd.s32 %v4184, 1
        %v4200 = vadd.s32 %v4185, 1
        %v4201 = vadd.s32 %v4186, 1
        %v4202 = vadd.s32 %v4148, 1
        %v4203 = vadd.s32 %v4187, 1
        %v4204 = vadd.s32 %v4188, 1
        %v4205 = vadd.s32 %v4189, 1
        %v4206 = vadd.s32 %v4190, 1
        %v4207 = vadd.s32 %v4191, 1
        %v4208 = vadd.s32 %v4192, 1
        %v4209 = vadd.s32 %v4193, 1
        %v4210 = vsel %vm4132, %v4148, %v4194
        %v4211 = vsel %vm4133, %v4149, %v4195
        %v4212 = vsel %vm4134, %v4150, %v4196
        %v4213 = vsel %vm4135, %v4151, %v4197
        %v4214 = vsel %vm4136, %v4152, %v4198
        %v4215 = vsel %vm4137, %v4153, %v4199
        %v4216 = vsel %vm4138, %v4154, %v4200
        %v4217 = vsel %vm4139, %v4155, %v4201
        %v4218 = vsel %vm4140, %v4156, %v4202
        %v4219 = vsel %vm4141, %v4157, %v4203
        %v4220 = vsel %vm4142, %v4158, %v4204
        %v4221 = vsel %vm4143, %v4159, %v4205
        %v4222 = vsel %vm4144, %v4160, %v4206
        %v4223 = vsel %vm4145, %v4161, %v4207
        %v4224 = vsel %vm4146, %v4162, %v4208
        %v4225 = vsel %vm4147, %v4163, %v4209
        %vm4226 = vcmp.eq.s32.totalorder %v4131, %v4210
        %vm4227 = vcmp.eq.s32.totalorder %v4131, %v4211
        %vm4228 = vcmp.eq.s32.totalorder %v4131, %v4212
        %vm4229 = vcmp.eq.s32.totalorder %v4131, %v4213
        %vm4230 = vcmp.eq.s32.totalorder %v4131, %v4214
        %vm4231 = vcmp.eq.s32.totalorder %v4131, %v4215
        %vm4232 = vcmp.eq.s32.totalorder %v4131, %v4216
        %vm4233 = vcmp.eq.s32.totalorder %v4131, %v4217
        %vm4234 = vcmp.eq.s32.totalorder %v4131, %v4218
        %vm4235 = vcmp.eq.s32.totalorder %v4131, %v4219
        %vm4236 = vcmp.eq.s32.totalorder %v4131, %v4220
        %vm4237 = vcmp.eq.s32.totalorder %v4131, %v4221
        %vm4238 = vcmp.eq.s32.totalorder %v4131, %v4222
        %vm4239 = vcmp.eq.s32.totalorder %v4131, %v4223
        %vm4240 = vcmp.eq.s32.totalorder %v4131, %v4224
        %vm4241 = vcmp.eq.s32.totalorder %v4131, %v4225
        %v4242 = vsel %vm4226, 1, 0
        %v4243 = vsel %vm4227, 1, 0
        %v4244 = vsel %vm4228, 1, 0
        %v4245 = vsel %vm4229, 1, 0
        %v4246 = vsel %vm4230, 1, 0
        %v4247 = vsel %vm4231, 1, 0
        %v4248 = vsel %vm4232, 1, 0
        %v4249 = vsel %vm4233, 1, 0
        %v4250 = vsel %vm4234, 1, 0
        %v4251 = vsel %vm4235, 1, 0
        %v4252 = vsel %vm4236, 1, 0
        %v4253 = vsel %vm4237, 1, 0
        %v4254 = vsel %vm4238, 1, 0
        %v4255 = vsel %vm4239, 1, 0
        %v4256 = vsel %vm4240, 1, 0
        %v4257 = vsel %vm4241, 1, 0
        %v4258 = vcvt.s32.f32 %v4242
        %v4259 = vcvt.s32.f32 %v4243
        %v4260 = vcvt.s32.f32 %v4244
        %v4261 = vcvt.s32.f32 %v4245
        %v4262 = vcvt.s32.f32 %v4246
        %v4263 = vcvt.s32.f32 %v4247
        %v4264 = vcvt.s32.f32 %v4248
        %v4265 = vcvt.s32.f32 %v4249
        %v4266 = vcvt.s32.f32 %v4250
        %v4267 = vcvt.s32.f32 %v4251
        %v4268 = vcvt.s32.f32 %v4252
        %v4269 = vcvt.s32.f32 %v4253
        %v4270 = vcvt.s32.f32 %v4254
        %v4271 = vcvt.s32.f32 %v4255
        %v4272 = vcvt.s32.f32 %v4256
        %v4273 = vcvt.s32.f32 %v4257
        %4274 = vmatprep.subr.mxu0 0.0
        %4275 = vmatpush1.msra.mxu0 %v4112
        %4276 = vmatprep.subr.mxu0 0.0
        %4277 = vmatpush1.msra.mxu0 %v4111
        %4278 = vmatprep.subr.mxu0 0.0
        %4279 = vmatpush1.msra.mxu0 %v4110
        %4280 = vmatprep.subr.mxu0 0.0
        %4281 = vmatpush1.msra.mxu0 %v4109
        %4282 = vmatprep.subr.mxu0 0.0
        %4283 = vmatpush1.msra.mxu0 %v4108
        %4284 = vmatprep.subr.mxu0 0.0
        %4285 = vmatpush1.msra.mxu0 %v4107
        %4286 = vmatprep.subr.mxu0 0.0
        %4287 = vmatpush1.msra.mxu0 %v4106
        %4288 = vmatprep.subr.mxu0 0.0
        %4289 = vmatpush1.msra.mxu0 %v4105
        %4290 = vmatprep.subr.mxu0 0.0
        %4291 = vmatpush1.msra.mxu0 %v4104
        %4292 = vmatprep.subr.mxu0 0.0
        %4293 = vmatpush1.msra.mxu0 %v4103
        %4294 = vmatprep.subr.mxu0 0.0
        %4295 = vmatpush1.msra.mxu0 %v4102
        %4296 = vmatprep.subr.mxu0 0.0
        %4297 = vmatpush1.msra.mxu0 %v4101
        %4298 = vmatprep.subr.mxu0 0.0
        %4299 = vmatpush1.msra.mxu0 %v4100
        %4300 = vmatprep.subr.mxu0 0.0
        %4301 = vmatpush1.msra.mxu0 %v4099
        %4302 = vmatprep.subr.mxu0 0.0
        %4303 = vmatpush1.msra.mxu0 %v4098
        %4304 = vmatprep.subr.mxu0 0.0
        %4305 = vmatpush1.msra.mxu0 %v4097
        %4306 = vmatprep.subr.mxu0 0.0
        %4307 = vmatpush2.msra.mxu0 0.0
        %4308 = vmatprep.subr.mxu0 0.0
        %4309 = vmatpush2.msra.mxu0 0.0
        %4310 = vmatprep.subr.mxu0 0.0
        %4311 = vmatpush2.msra.mxu0 0.0
        %4312 = vmatprep.subr.mxu0 0.0
        %4313 = vmatpush2.msra.mxu0 0.0
        %4314 = vmatprep.subr.mxu0 0.0
        %4315 = vmatpush2.msra.mxu0 0.0
        %4316 = vmatprep.subr.mxu0 0.0
        %4317 = vmatpush2.msra.mxu0 0.0
        %4318 = vmatprep.subr.mxu0 0.0
        %4319 = vmatpush2.msra.mxu0 0.0
        %4320 = vmatprep.subr.mxu0 0.0
        %4321 = vmatpush2.msra.mxu0 0.0
        %4322 = vmatprep.subr.mxu0 0.0
        %4323 = vmatpush2.msra.mxu0 0.0
        %4324 = vmatprep.subr.mxu0 0.0
        %4325 = vmatpush2.msra.mxu0 0.0
        %4326 = vmatprep.subr.mxu0 0.0
        %4327 = vmatpush2.msra.mxu0 0.0
        %4328 = vmatprep.subr.mxu0 0.0
        %4329 = vmatpush2.msra.mxu0 0.0
        %4330 = vmatprep.subr.mxu0 0.0
        %4331 = vmatpush2.msra.mxu0 0.0
        %4332 = vmatprep.subr.mxu0 0.0
        %4333 = vmatpush2.msra.mxu0 0.0
        %4334 = vmatprep.subr.mxu0 0.0
        %4335 = vmatpush2.msra.mxu0 0.0
        %4336 = vmatprep.subr.mxu0 0.0
        %4337 = vmatpush2.msra.mxu0 0.0
        %4338 = vmatprep.mubr.f32.mxu0 0.0
        %4339 = vmatmul.mubr.f32.gmra.mxu0 %v4258
        %v4340 = vpop.f32.mrf.mxu0
        %v4341 = vadd.f32 0.0, %v4340
        %v4342 = vpop.f32.mrf.mxu0
        %4343 = vmatprep.mubr.f32.mxu0 0.0
        %4344 = vmatmul.mubr.f32.gmra.mxu0 %v4259
        %v4345 = vpop.f32.mrf.mxu0
        %v4346 = vadd.f32 0.0, %v4345
        %v4347 = vpop.f32.mrf.mxu0
        %4348 = vmatprep.mubr.f32.mxu0 0.0
        %4349 = vmatmul.mubr.f32.gmra.mxu0 %v4260
        %v4350 = vpop.f32.mrf.mxu0
        %v4351 = vadd.f32 0.0, %v4350
        %v4352 = vpop.f32.mrf.mxu0
        %4353 = vmatprep.mubr.f32.mxu0 0.0
        %4354 = vmatmul.mubr.f32.gmra.mxu0 %v4261
        %v4355 = vpop.f32.mrf.mxu0
        %v4356 = vadd.f32 0.0, %v4355
        %v4357 = vpop.f32.mrf.mxu0
        %4358 = vmatprep.mubr.f32.mxu0 0.0
        %4359 = vmatmul.mubr.f32.gmra.mxu0 %v4262
        %v4360 = vpop.f32.mrf.mxu0
        %v4361 = vadd.f32 0.0, %v4360
        %v4362 = vpop.f32.mrf.mxu0
        %4363 = vmatprep.mubr.f32.mxu0 0.0
        %4364 = vmatmul.mubr.f32.gmra.mxu0 %v4263
        %v4365 = vpop.f32.mrf.mxu0
        %v4366 = vadd.f32 0.0, %v4365
        %v4367 = vpop.f32.mrf.mxu0
        %4368 = vmatprep.mubr.f32.mxu0 0.0
        %4369 = vmatmul.mubr.f32.gmra.mxu0 %v4264
        %v4370 = vpop.f32.mrf.mxu0
        %v4371 = vadd.f32 0.0, %v4370
        %v4372 = vpop.f32.mrf.mxu0
        %4373 = vmatprep.mubr.f32.mxu0 0.0
        %4374 = vmatmul.mubr.f32.gmra.mxu0 %v4265
        %v4375 = vpop.f32.mrf.mxu0
        %v4376 = vadd.f32 0.0, %v4375
        %v4377 = vpop.f32.mrf.mxu0
        %4378 = vmatprep.mubr.f32.mxu0 0.0
        %4379 = vmatmul.mubr.f32.gmra.mxu0 %v4266
        %v4380 = vpop.f32.mrf.mxu0
        %v4381 = vadd.f32 0.0, %v4380
        %v4382 = vpop.f32.mrf.mxu0
        %4383 = vmatprep.mubr.f32.mxu0 0.0
        %4384 = vmatmul.mubr.f32.gmra.mxu0 %v4267
        %v4385 = vpop.f32.mrf.mxu0
        %v4386 = vadd.f32 0.0, %v4385
        %v4387 = vpop.f32.mrf.mxu0
        %4388 = vmatprep.mubr.f32.mxu0 0.0
        %4389 = vmatmul.mubr.f32.gmra.mxu0 %v4268
        %v4390 = vpop.f32.mrf.mxu0
        %v4391 = vadd.f32 0.0, %v4390
        %v4392 = vpop.f32.mrf.mxu0
        %4393 = vmatprep.mubr.f32.mxu0 0.0
        %4394 = vmatmul.mubr.f32.gmra.mxu0 %v4269
        %v4395 = vpop.f32.mrf.mxu0
        %v4396 = vadd.f32 0.0, %v4395
        %v4397 = vpop.f32.mrf.mxu0
        %4398 = vmatprep.mubr.f32.mxu0 0.0
        %4399 = vmatmul.mubr.f32.gmra.mxu0 %v4270
        %v4400 = vpop.f32.mrf.mxu0
        %v4401 = vadd.f32 0.0, %v4400
        %v4402 = vpop.f32.mrf.mxu0
        %4403 = vmatprep.mubr.f32.mxu0 0.0
        %4404 = vmatmul.mubr.f32.gmra.mxu0 %v4271
        %v4405 = vpop.f32.mrf.mxu0
        %v4406 = vadd.f32 0.0, %v4405
        %v4407 = vpop.f32.mrf.mxu0
        %4408 = vmatprep.mubr.f32.mxu0 0.0
        %4409 = vmatmul.mubr.f32.gmra.mxu0 %v4272
        %v4410 = vpop.f32.mrf.mxu0
        %v4411 = vadd.f32 0.0, %v4410
        %v4412 = vpop.f32.mrf.mxu0
        %4413 = vmatprep.mubr.f32.mxu0 0.0
        %4414 = vmatmul.mubr.f32.gmra.mxu0 %v4273
        %v4415 = vpop.f32.mrf.mxu0
        %v4416 = vadd.f32 0.0, %v4415
        %v4417 = vpop.f32.mrf.mxu0
        %4418 = vdwg.mxu0
        %v4419 = vmax.f32 %v4341, %v4381
        %v4420 = vmax.f32 %v4346, %v4386
        %v4421 = vmax.f32 %v4351, %v4391
        %v4422 = vmax.f32 %v4356, %v4396
        %v4423 = vmax.f32 %v4361, %v4401
        %v4424 = vmax.f32 %v4366, %v4406
        %v4425 = vmax.f32 %v4371, %v4411
        %v4426 = vmax.f32 %v4376, %v4416
        %vm4427 = vcmask 523264
        %4428 = vst.msk [vmem:[#allocation3] sm:$0xff] %vm4427, 0.0
        %vm4429 = vcmask 517120
        %4430 = vst.msk [vmem:[#allocation3 + $0x8] sm:$0x3] %vm4429, 0.0
        %4431 = vst.msk [vmem:[#allocation3 + $0x10] sm:$0xff] %vm4427, 0.0
        %4432 = vst.msk [vmem:[#allocation3 + $0x18] sm:$0x3] %vm4429, 0.0
        %4433 = vst.msk [vmem:[#allocation3 + $0x20] sm:$0xff] %vm4427, 0.0
        %4434 = vst.msk [vmem:[#allocation3 + $0x28] sm:$0x3] %vm4429, 0.0
        %4435 = vst.msk [vmem:[#allocation3 + $0x30] sm:$0xff] %vm4427, 0.0
        %4436 = vst.msk [vmem:[#allocation3 + $0x38] sm:$0x3] %vm4429, 0.0
        %4437 = vst.msk [vmem:[#allocation3 + $0x40] sm:$0xff] %vm4427, 0.0
        %4438 = vst.msk [vmem:[#allocation3 + $0x48] sm:$0x3] %vm4429, 0.0
        %4439 = vst.msk [vmem:[#allocation3 + $0x50] sm:$0xff] %vm4427, 0.0
        %4440 = vst.msk [vmem:[#allocation3 + $0x58] sm:$0x3] %vm4429, 0.0
        %4441 = vst.msk [vmem:[#allocation3 + $0x60] sm:$0xff] %vm4427, 0.0
        %4442 = vst.msk [vmem:[#allocation3 + $0x68] sm:$0x3] %vm4429, 0.0
        %4443 = vst.msk [vmem:[#allocation3 + $0x70] sm:$0xff] %vm4427, 0.0
        %4444 = vst.msk [vmem:[#allocation3 + $0x78] sm:$0x3] %vm4429, 0.0
        %4445 = vst.msk [vmem:[#allocation3 + $0x80] sm:$0xff] %vm4427, 0.0
        %4446 = vst.msk [vmem:[#allocation3 + $0x88] sm:$0x3] %vm4429, 0.0
        %4447 = vst.msk [vmem:[#allocation3 + $0x90] sm:$0xff] %vm4427, 0.0
        %4448 = vst.msk [vmem:[#allocation3 + $0x98] sm:$0x3] %vm4429, 0.0
        %s4449 = scalar_lea.vmem [#allocation3], 16
        %4450 = vst.msk [vmem:[%s4449 + $0x1] sm:$0xff] %vm4427, %v4419
        %4451 = vst.msk [vmem:[%s4449 + $0x11] sm:$0xff] %vm4427, %v4420
        %4452 = vst.msk [vmem:[%s4449 + $0x21] sm:$0xff] %vm4427, %v4421
        %4453 = vst.msk [vmem:[%s4449 + $0x31] sm:$0xff] %vm4427, %v4422
        %4454 = vst.msk [vmem:[%s4449 + $0x41] sm:$0xff] %vm4427, %v4423
        %4455 = vst.msk [vmem:[%s4449 + $0x51] sm:$0xff] %vm4427, %v4424
        %4456 = vst.msk [vmem:[%s4449 + $0x61] sm:$0xff] %vm4427, %v4425
        %4457 = vst.msk [vmem:[%s4449 + $0x71] sm:$0xff] %vm4427, %v4426
        %v4458 = vld [vmem:[#allocation3] sm:$0xff]
        %v4459 = vld [vmem:[#allocation3 + $0x10] sm:$0xff]
        %v4460 = vld [vmem:[#allocation3 + $0x20] sm:$0xff]
        %v4461 = vld [vmem:[#allocation3 + $0x30] sm:$0xff]
        %v4462 = vld [vmem:[#allocation3 + $0x40] sm:$0xff]
        %v4463 = vld [vmem:[#allocation3 + $0x50] sm:$0xff]
        %v4464 = vld [vmem:[#allocation3 + $0x60] sm:$0xff]
        %v4465 = vld [vmem:[#allocation3 + $0x70] sm:$0xff]
        %v4466 = vpack.c.bf16 %v4459, %v4458
        %v4467 = vpack.c.bf16 %v4461, %v4460
        %v4468 = vpack.c.bf16 %v4463, %v4462
        %v4469 = vpack.c.bf16 %v4465, %v4464
        %v4470 = vld [vmem:[#allocation3 + $0x1] sm:$0xff]
        %v4471 = vld [vmem:[#allocation3 + $0x11] sm:$0xff]
        %v4472 = vld [vmem:[#allocation3 + $0x21] sm:$0xff]
        %v4473 = vld [vmem:[#allocation3 + $0x31] sm:$0xff]
        %v4474 = vld [vmem:[#allocation3 + $0x41] sm:$0xff]
        %v4475 = vld [vmem:[#allocation3 + $0x51] sm:$0xff]
        %v4476 = vld [vmem:[#allocation3 + $0x61] sm:$0xff]
        %v4477 = vld [vmem:[#allocation3 + $0x71] sm:$0xff]
        %v4478 = vpack.c.bf16 %v4471, %v4470
        %v4479 = vpack.c.bf16 %v4473, %v4472
        %v4480 = vpack.c.bf16 %v4475, %v4474
        %v4481 = vpack.c.bf16 %v4477, %v4476
        %v4482 = vld [vmem:[#allocation3 + $0x2] sm:$0xff]
        %v4483 = vld [vmem:[#allocation3 + $0x12] sm:$0xff]
        %v4484 = vld [vmem:[#allocation3 + $0x22] sm:$0xff]
        %v4485 = vld [vmem:[#allocation3 + $0x32] sm:$0xff]
        %v4486 = vld [vmem:[#allocation3 + $0x42] sm:$0xff]
        %v4487 = vld [vmem:[#allocation3 + $0x52] sm:$0xff]
        %v4488 = vld [vmem:[#allocation3 + $0x62] sm:$0xff]
        %v4489 = vld [vmem:[#allocation3 + $0x72] sm:$0xff]
        %v4490 = vpack.c.bf16 %v4483, %v4482
        %v4491 = vpack.c.bf16 %v4485, %v4484
        %v4492 = vpack.c.bf16 %v4487, %v4486
        %v4493 = vpack.c.bf16 %v4489, %v4488
        %v4494 = vld [vmem:[%s4449] sm:$0xff]
        %v4495 = vld [vmem:[%s4449 + $0x10] sm:$0xff]
        %v4496 = vld [vmem:[%s4449 + $0x20] sm:$0xff]
        %v4497 = vld [vmem:[%s4449 + $0x30] sm:$0xff]
        %v4498 = vld [vmem:[%s4449 + $0x40] sm:$0xff]
        %v4499 = vld [vmem:[%s4449 + $0x50] sm:$0xff]
        %v4500 = vld [vmem:[%s4449 + $0x60] sm:$0xff]
        %v4501 = vld [vmem:[%s4449 + $0x70] sm:$0xff]
        %v4502 = vpack.c.bf16 %v4495, %v4494
        %v4503 = vpack.c.bf16 %v4497, %v4496
        %v4504 = vpack.c.bf16 %v4499, %v4498
        %v4505 = vpack.c.bf16 %v4501, %v4500
        %v4506 = vld [vmem:[%s4449 + $0x1] sm:$0xff]
        %v4507 = vld [vmem:[%s4449 + $0x11] sm:$0xff]
        %v4508 = vld [vmem:[%s4449 + $0x21] sm:$0xff]
        %v4509 = vld [vmem:[%s4449 + $0x31] sm:$0xff]
        %v4510 = vld [vmem:[%s4449 + $0x41] sm:$0xff]
        %v4511 = vld [vmem:[%s4449 + $0x51] sm:$0xff]
        %v4512 = vld [vmem:[%s4449 + $0x61] sm:$0xff]
        %v4513 = vld [vmem:[%s4449 + $0x71] sm:$0xff]
        %v4514 = vpack.c.bf16 %v4507, %v4506
        %v4515 = vpack.c.bf16 %v4509, %v4508
        %v4516 = vpack.c.bf16 %v4511, %v4510
        %v4517 = vpack.c.bf16 %v4513, %v4512
        %v4518 = vld [vmem:[%s4449 + $0x2] sm:$0xff]
        %v4519 = vld [vmem:[%s4449 + $0x12] sm:$0xff]
        %v4520 = vld [vmem:[%s4449 + $0x22] sm:$0xff]
        %v4521 = vld [vmem:[%s4449 + $0x32] sm:$0xff]
        %v4522 = vld [vmem:[%s4449 + $0x42] sm:$0xff]
        %v4523 = vld [vmem:[%s4449 + $0x52] sm:$0xff]
        %v4524 = vld [vmem:[%s4449 + $0x62] sm:$0xff]
        %v4525 = vld [vmem:[%s4449 + $0x72] sm:$0xff]
        %v4526 = vpack.c.bf16 %v4519, %v4518
        %v4527 = vpack.c.bf16 %v4521, %v4520
        %v4528 = vpack.c.bf16 %v4523, %v4522
        %v4529 = vpack.c.bf16 %v4525, %v4524
        %s4530 = scalar_lea.vmem [#allocation3], 32
        %v4531 = vld [vmem:[%s4530] sm:$0xff]
        %v4532 = vld [vmem:[%s4530 + $0x10] sm:$0xff]
        %v4533 = vld [vmem:[%s4530 + $0x20] sm:$0xff]
        %v4534 = vld [vmem:[%s4530 + $0x30] sm:$0xff]
        %v4535 = vld [vmem:[%s4530 + $0x40] sm:$0xff]
        %v4536 = vld [vmem:[%s4530 + $0x50] sm:$0xff]
        %v4537 = vld [vmem:[%s4530 + $0x60] sm:$0xff]
        %v4538 = vld [vmem:[%s4530 + $0x70] sm:$0xff]
        %v4539 = vpack.c.bf16 %v4532, %v4531
        %v4540 = vpack.c.bf16 %v4534, %v4533
        %v4541 = vpack.c.bf16 %v4536, %v4535
        %v4542 = vpack.c.bf16 %v4538, %v4537
        %v4543 = vld [vmem:[%s4530 + $0x1] sm:$0xff]
        %v4544 = vld [vmem:[%s4530 + $0x11] sm:$0xff]
        %v4545 = vld [vmem:[%s4530 + $0x21] sm:$0xff]
        %v4546 = vld [vmem:[%s4530 + $0x31] sm:$0xff]
        %v4547 = vld [vmem:[%s4530 + $0x41] sm:$0xff]
        %v4548 = vld [vmem:[%s4530 + $0x51] sm:$0xff]
        %v4549 = vld [vmem:[%s4530 + $0x61] sm:$0xff]
        %v4550 = vld [vmem:[%s4530 + $0x71] sm:$0xff]
        %v4551 = vpack.c.bf16 %v4544, %v4543
        %v4552 = vpack.c.bf16 %v4546, %v4545
        %v4553 = vpack.c.bf16 %v4548, %v4547
        %v4554 = vpack.c.bf16 %v4550, %v4549
        %v4555 = vld [vmem:[%s4530 + $0x2] sm:$0xff]
        %v4556 = vld [vmem:[%s4530 + $0x12] sm:$0xff]
        %v4557 = vld [vmem:[%s4530 + $0x22] sm:$0xff]
        %v4558 = vld [vmem:[%s4530 + $0x32] sm:$0xff]
        %v4559 = vld [vmem:[%s4530 + $0x42] sm:$0xff]
        %v4560 = vld [vmem:[%s4530 + $0x52] sm:$0xff]
        %v4561 = vld [vmem:[%s4530 + $0x62] sm:$0xff]
        %v4562 = vld [vmem:[%s4530 + $0x72] sm:$0xff]
        %v4563 = vpack.c.bf16 %v4556, %v4555
        %v4564 = vpack.c.bf16 %v4558, %v4557
        %v4565 = vpack.c.bf16 %v4560, %v4559
        %v4566 = vpack.c.bf16 %v4562, %v4561
        %4571 = vrot.lane.b32.xlu0 %v4478, 64
        %v4572 = vpop.permute.xlu0 %4571
        %4573 = vrot.lane.b32.xlu0 %v4479, 64
        %v4574 = vpop.permute.xlu0 %4573
        %4575 = vrot.lane.b32.xlu0 %v4480, 64
        %v4576 = vpop.permute.xlu0 %4575
        %4577 = vrot.lane.b32.xlu0 %v4481, 64
        %v4578 = vpop.permute.xlu0 %4577
        %4583 = vrot.lane.b32.xlu0 %v4502, 64
        %v4584 = vpop.permute.xlu0 %4583
        %4585 = vrot.lane.b32.xlu0 %v4503, 64
        %v4586 = vpop.permute.xlu0 %4585
        %4587 = vrot.lane.b32.xlu0 %v4504, 64
        %v4588 = vpop.permute.xlu0 %4587
        %4589 = vrot.lane.b32.xlu0 %v4505, 64
        %v4590 = vpop.permute.xlu0 %4589
        %4595 = vrot.lane.b32.xlu0 %v4526, 64
        %v4596 = vpop.permute.xlu0 %4595
        %4597 = vrot.lane.b32.xlu0 %v4527, 64
        %v4598 = vpop.permute.xlu0 %4597
        %4599 = vrot.lane.b32.xlu0 %v4528, 64
        %v4600 = vpop.permute.xlu0 %4599
        %4601 = vrot.lane.b32.xlu0 %v4529, 64
        %v4602 = vpop.permute.xlu0 %4601
        %4607 = vrot.lane.b32.xlu0 %v4551, 64
        %v4608 = vpop.permute.xlu0 %4607
        %4609 = vrot.lane.b32.xlu0 %v4552, 64
        %v4610 = vpop.permute.xlu0 %4609
        %4611 = vrot.lane.b32.xlu0 %v4553, 64
        %v4612 = vpop.permute.xlu0 %4611
        %4613 = vrot.lane.b32.xlu0 %v4554, 64
        %v4614 = vpop.permute.xlu0 %4613
        %v4617 = vsel %vm4427, %v4466, %v4572
        %v4621 = vsel %vm4427, %v4467, %v4574
        %v4625 = vsel %vm4427, %v4468, %v4576
        %v4629 = vsel %vm4427, %v4469, %v4578
        %v4633 = vsel %vm4427, %v4490, %v4584
        %v4637 = vsel %vm4427, %v4491, %v4586
        %v4641 = vsel %vm4427, %v4492, %v4588
        %v4645 = vsel %vm4427, %v4493, %v4590
        %v4649 = vsel %vm4427, %v4514, %v4596
        %v4653 = vsel %vm4427, %v4515, %v4598
        %v4657 = vsel %vm4427, %v4516, %v4600
        %v4661 = vsel %vm4427, %v4517, %v4602
        %v4665 = vsel %vm4427, %v4539, %v4608
        %v4669 = vsel %vm4427, %v4540, %v4610
        %v4673 = vsel %vm4427, %v4541, %v4612
        %v4677 = vsel %vm4427, %v4542, %v4614
        %v4679 = vld [vmem:[%s3] sm:$0xf]
        %v4680 = vld [vmem:[%s3 + $0x4] sm:$0xf]
        %v4681 = vld [vmem:[%s3 + $0x8] sm:$0xf]
        %v4682 = vld [vmem:[%s3 + $0xc] sm:$0xf]
        %v4683 = vld [vmem:[%s3 + $0x10] sm:$0xf]
        %v4684 = vld [vmem:[%s3 + $0x14] sm:$0xf]
        %v4685 = vld [vmem:[%s3 + $0x18] sm:$0xf]
        %v4686 = vld [vmem:[%s3 + $0x1c] sm:$0xf]
        %v4687 = vld [vmem:[%s3 + $0x20] sm:$0xf]
        %v4688 = vld [vmem:[%s3 + $0x24] sm:$0xf]
        %v4689 = vld [vmem:[%s3 + $0x28] sm:$0xf]
        %v4690 = vld [vmem:[%s3 + $0x2c] sm:$0xf]
        %v4691 = vld [vmem:[%s3 + $0x30] sm:$0xf]
        %v4692 = vld [vmem:[%s3 + $0x34] sm:$0xf]
        %v4693 = vld [vmem:[%s3 + $0x38] sm:$0xf]
        %v4694 = vld [vmem:[%s3 + $0x3c] sm:$0xf]
        %v4695 = vld [vmem:[%s3 + $0x40] sm:$0xf]
        %v4696 = vld [vmem:[%s3 + $0x44] sm:$0xf]
        %v4697 = vld [vmem:[%s3 + $0x48] sm:$0xf]
        %v4698 = vld [vmem:[%s3 + $0x4c] sm:$0xf]
        %v4699 = vld [vmem:[%s3 + $0x50] sm:$0xf]
        %v4700 = vld [vmem:[%s3 + $0x54] sm:$0xf]
        %v4701 = vld [vmem:[%s3 + $0x58] sm:$0xf]
        %v4702 = vld [vmem:[%s3 + $0x5c] sm:$0xf]
        %v4703 = vld [vmem:[%s3 + $0x60] sm:$0xf]
        %v4704 = vld [vmem:[%s3 + $0x64] sm:$0xf]
        %v4705 = vld [vmem:[%s3 + $0x68] sm:$0xf]
        %v4706 = vld [vmem:[%s3 + $0x6c] sm:$0xf]
        %v4707 = vld [vmem:[%s3 + $0x70] sm:$0xf]
        %v4708 = vld [vmem:[%s3 + $0x74] sm:$0xf]
        %v4709 = vld [vmem:[%s3 + $0x78] sm:$0xf]
        %v4710 = vld [vmem:[%s3 + $0x7c] sm:$0xf]
        %v4711 = vld [vmem:[%s3 + $0x80] sm:$0xf]
        %v4712 = vld [vmem:[%s3 + $0x84] sm:$0xf]
        %v4713 = vld [vmem:[%s3 + $0x88] sm:$0xf]
        %v4714 = vld [vmem:[%s3 + $0x8c] sm:$0xf]
        %v4715 = vld [vmem:[%s3 + $0x90] sm:$0xf]
        %v4716 = vld [vmem:[%s3 + $0x94] sm:$0xf]
        %v4717 = vld [vmem:[%s3 + $0x98] sm:$0xf]
        %v4718 = vld [vmem:[%s3 + $0x9c] sm:$0xf]
        %v4719 = vld [vmem:[%s3 + $0xa0] sm:$0xf]
        %v4720 = vld [vmem:[%s3 + $0xa4] sm:$0xf]
        %v4721 = vld [vmem:[%s3 + $0xa8] sm:$0xf]
        %v4722 = vld [vmem:[%s3 + $0xac] sm:$0xf]
        %v4723 = vld [vmem:[%s3 + $0xb0] sm:$0xf]
        %v4724 = vld [vmem:[%s3 + $0xb4] sm:$0xf]
        %v4725 = vld [vmem:[%s3 + $0xb8] sm:$0xf]
        %v4726 = vld [vmem:[%s3 + $0xbc] sm:$0xf]
        %v4727 = vld [vmem:[%s3 + $0xc0] sm:$0xf]
        %v4728 = vld [vmem:[%s3 + $0xc4] sm:$0xf]
        %v4729 = vld [vmem:[%s3 + $0xc8] sm:$0xf]
        %v4730 = vld [vmem:[%s3 + $0xcc] sm:$0xf]
        %v4731 = vld [vmem:[%s3 + $0xd0] sm:$0xf]
        %v4732 = vld [vmem:[%s3 + $0xd4] sm:$0xf]
        %v4733 = vld [vmem:[%s3 + $0xd8] sm:$0xf]
        %v4734 = vld [vmem:[%s3 + $0xdc] sm:$0xf]
        %v4735 = vld [vmem:[%s3 + $0xe0] sm:$0xf]
        %v4736 = vld [vmem:[%s3 + $0xe4] sm:$0xf]
        %v4737 = vld [vmem:[%s3 + $0xe8] sm:$0xf]
        %v4738 = vld [vmem:[%s3 + $0xec] sm:$0xf]
        %v4739 = vld [vmem:[%s3 + $0xf0] sm:$0xf]
        %v4740 = vld [vmem:[%s3 + $0xf4] sm:$0xf]
        %v4741 = vld [vmem:[%s3 + $0xf8] sm:$0xf]
        %v4742 = vld [vmem:[%s3 + $0xfc] sm:$0xf]
        %v4743 = vld [vmem:[%s3 + $0x100] sm:$0xf]
        %v4744 = vld [vmem:[%s3 + $0x104] sm:$0xf]
        %v4745 = vld [vmem:[%s3 + $0x108] sm:$0xf]
        %v4746 = vld [vmem:[%s3 + $0x10c] sm:$0xf]
        %v4747 = vld [vmem:[%s3 + $0x110] sm:$0xf]
        %v4748 = vld [vmem:[%s3 + $0x114] sm:$0xf]
        %v4749 = vld [vmem:[%s3 + $0x118] sm:$0xf]
        %v4750 = vld [vmem:[%s3 + $0x11c] sm:$0xf]
        %v4751 = vld [vmem:[%s4] sm:$0x1]
        %v4753 = vlaneseq
        %v4754 = vshrl.u32 %v4753, 7
        %v4755 = vsub.s32 0, %v4754
        %v4756 = vrot.slane %v4751, %v4755
        %v4830 = vunpack.c.l.b16 %v4679
        %v4831 = vunpack.c.l.b16 %v4680
        %v4832 = vunpack.c.l.b16 %v4681
        %v4833 = vunpack.c.l.b16 %v4682
        %v4834 = vunpack.c.l.b16 %v4683
        %v4835 = vunpack.c.l.b16 %v4684
        %v4836 = vunpack.c.l.b16 %v4685
        %v4837 = vunpack.c.l.b16 %v4686
        %v4838 = vunpack.c.l.b16 %v4687
        %v4839 = vunpack.c.l.b16 %v4688
        %v4840 = vunpack.c.l.b16 %v4689
        %v4841 = vunpack.c.l.b16 %v4690
        %v4842 = vunpack.c.l.b16 %v4691
        %v4843 = vunpack.c.l.b16 %v4692
        %v4844 = vunpack.c.l.b16 %v4693
        %v4845 = vunpack.c.l.b16 %v4694
        %v4846 = vunpack.c.l.b16 %v4695
        %v4847 = vunpack.c.l.b16 %v4696
        %v4848 = vunpack.c.l.b16 %v4697
        %v4849 = vunpack.c.l.b16 %v4698
        %v4850 = vunpack.c.l.b16 %v4699
        %v4851 = vunpack.c.l.b16 %v4700
        %v4852 = vunpack.c.l.b16 %v4701
        %v4853 = vunpack.c.l.b16 %v4702
        %v4854 = vunpack.c.l.b16 %v4703
        %v4855 = vunpack.c.l.b16 %v4704
        %v4856 = vunpack.c.l.b16 %v4705
        %v4857 = vunpack.c.l.b16 %v4706
        %v4858 = vunpack.c.l.b16 %v4707
        %v4859 = vunpack.c.l.b16 %v4708
        %v4860 = vunpack.c.l.b16 %v4709
        %v4861 = vunpack.c.l.b16 %v4710
        %v4862 = vunpack.c.l.b16 %v4711
        %v4863 = vunpack.c.l.b16 %v4712
        %v4864 = vunpack.c.l.b16 %v4713
        %v4865 = vunpack.c.l.b16 %v4714
        %v4866 = vunpack.c.l.b16 %v4715
        %v4867 = vunpack.c.l.b16 %v4716
        %v4868 = vunpack.c.l.b16 %v4717
        %v4869 = vunpack.c.l.b16 %v4718
        %v4870 = vunpack.c.l.b16 %v4719
        %v4871 = vunpack.c.l.b16 %v4720
        %v4872 = vunpack.c.l.b16 %v4721
        %v4873 = vunpack.c.l.b16 %v4722
        %v4874 = vunpack.c.l.b16 %v4723
        %v4875 = vunpack.c.l.b16 %v4724
        %v4876 = vunpack.c.l.b16 %v4725
        %v4877 = vunpack.c.l.b16 %v4726
        %v4878 = vunpack.c.l.b16 %v4727
        %v4879 = vunpack.c.l.b16 %v4728
        %v4880 = vunpack.c.l.b16 %v4729
        %v4881 = vunpack.c.l.b16 %v4730
        %v4882 = vunpack.c.l.b16 %v4731
        %v4883 = vunpack.c.l.b16 %v4732
        %v4884 = vunpack.c.l.b16 %v4733
        %v4885 = vunpack.c.l.b16 %v4734
        %v4886 = vunpack.c.l.b16 %v4735
        %v4887 = vunpack.c.l.b16 %v4736
        %v4888 = vunpack.c.l.b16 %v4737
        %v4889 = vunpack.c.l.b16 %v4738
        %v4890 = vunpack.c.l.b16 %v4739
        %v4891 = vunpack.c.l.b16 %v4740
        %v4892 = vunpack.c.l.b16 %v4741
        %v4893 = vunpack.c.l.b16 %v4742
        %v4894 = vunpack.c.l.b16 %v4743
        %v4895 = vunpack.c.l.b16 %v4744
        %v4896 = vunpack.c.l.b16 %v4745
        %v4897 = vunpack.c.l.b16 %v4746
        %v4898 = vunpack.c.l.b16 %v4747
        %v4899 = vunpack.c.l.b16 %v4748
        %v4900 = vunpack.c.l.b16 %v4749
        %v4901 = vunpack.c.l.b16 %v4750
        %v4902 = vpack.c.b16 %v4831, %v4830
        %v4903 = vpack.c.b16 %v4833, %v4832
        %v4904 = vpack.c.b16 %v4835, %v4834
        %v4905 = vpack.c.b16 %v4837, %v4836
        %v4906 = vpack.c.b16 %v4839, %v4838
        %v4907 = vpack.c.b16 %v4841, %v4840
        %v4908 = vpack.c.b16 %v4843, %v4842
        %v4909 = vpack.c.b16 %v4845, %v4844
        %v4910 = vpack.c.b16 %v4847, %v4846
        %v4911 = vpack.c.b16 %v4849, %v4848
        %v4912 = vpack.c.b16 %v4851, %v4850
        %v4913 = vpack.c.b16 %v4853, %v4852
        %v4914 = vpack.c.b16 %v4855, %v4854
        %v4915 = vpack.c.b16 %v4857, %v4856
        %v4916 = vpack.c.b16 %v4859, %v4858
        %v4917 = vpack.c.b16 %v4861, %v4860
        %v4918 = vpack.c.b16 %v4863, %v4862
        %v4919 = vpack.c.b16 %v4865, %v4864
        %v4920 = vpack.c.b16 %v4867, %v4866
        %v4921 = vpack.c.b16 %v4869, %v4868
        %v4922 = vpack.c.b16 %v4871, %v4870
        %v4923 = vpack.c.b16 %v4873, %v4872
        %v4924 = vpack.c.b16 %v4875, %v4874
        %v4925 = vpack.c.b16 %v4877, %v4876
        %v4926 = vpack.c.b16 %v4879, %v4878
        %v4927 = vpack.c.b16 %v4881, %v4880
        %v4928 = vpack.c.b16 %v4883, %v4882
        %v4929 = vpack.c.b16 %v4885, %v4884
        %v4930 = vpack.c.b16 %v4887, %v4886
        %v4931 = vpack.c.b16 %v4889, %v4888
        %v4932 = vpack.c.b16 %v4891, %v4890
        %v4933 = vpack.c.b16 %v4893, %v4892
        %v4934 = vpack.c.b16 %v4895, %v4894
        %v4935 = vpack.c.b16 %v4897, %v4896
        %v4936 = vpack.c.b16 %v4899, %v4898
        %v4937 = vpack.c.b16 %v4901, %v4900
        %v4975 = vsel %vm4427, %v4563, 0
        %v4978 = vsel %vm4427, %v4564, 0
        %v4981 = vsel %vm4427, %v4565, 0
        %v4984 = vsel %vm4427, %v4566, 0
        %4986 = vmatprep.subr.bf16.mxu0 0
        %4987 = vmatpush1.bf16.msra.mxu0 %v4909
        %4988 = vmatprep.subr.bf16.mxu0 0
        %4989 = vmatpush1.bf16.msra.mxu0 %v4908
        %4990 = vmatprep.subr.bf16.mxu0 0
        %4991 = vmatpush1.bf16.msra.mxu0 %v4907
        %4992 = vmatprep.subr.bf16.mxu0 0
        %4993 = vmatpush1.bf16.msra.mxu0 %v4906
        %4994 = vmatprep.subr.bf16.mxu0 0
        %4995 = vmatpush1.bf16.msra.mxu0 %v4905
        %4996 = vmatprep.subr.bf16.mxu0 0
        %4997 = vmatpush1.bf16.msra.mxu0 %v4904
        %4998 = vmatprep.subr.bf16.mxu0 0
        %4999 = vmatpush1.bf16.msra.mxu0 %v4903
        %5000 = vmatprep.subr.bf16.mxu0 0
        %5001 = vmatpush1.bf16.msra.mxu0 %v4902
        %5002 = vmatprep.subr.bf16.mxu0 0
        %5003 = vmatpush2.bf16.msra.mxu0 %v4917
        %5004 = vmatprep.subr.bf16.mxu0 0
        %5005 = vmatpush2.bf16.msra.mxu0 %v4916
        %5006 = vmatprep.subr.bf16.mxu0 0
        %5007 = vmatpush2.bf16.msra.mxu0 %v4915
        %5008 = vmatprep.subr.bf16.mxu0 0
        %5009 = vmatpush2.bf16.msra.mxu0 %v4914
        %5010 = vmatprep.subr.bf16.mxu0 0
        %5011 = vmatpush2.bf16.msra.mxu0 %v4913
        %5012 = vmatprep.subr.bf16.mxu0 0
        %5013 = vmatpush2.bf16.msra.mxu0 %v4912
        %5014 = vmatprep.subr.bf16.mxu0 0
        %5015 = vmatpush2.bf16.msra.mxu0 %v4911
        %5016 = vmatprep.subr.bf16.mxu0 0
        %5017 = vmatpush2.bf16.msra.mxu0 %v4910
        %5018 = vmatprep.mubr.bf16.mxu0 %v4633
        %5019 = vmatmul.mubr.bf16.gmra.mxu0 %v4617
        %v5020 = vpop.f32.mrf.mxu0
        %v5021 = vadd.f32 %v4756, %v5020
        %v5022 = vpop.f32.mrf.mxu0
        %v5023 = vpop.f32.mrf.mxu0
        %v5024 = vadd.f32 %v4756, %v5023
        %v5025 = vpop.f32.mrf.mxu0
        %5026 = vmatprep.mubr.bf16.mxu0 %v4637
        %5027 = vmatmul.mubr.bf16.gmra.mxu0 %v4621
        %v5028 = vpop.f32.mrf.mxu0
        %v5029 = vadd.f32 %v4756, %v5028
        %v5030 = vpop.f32.mrf.mxu0
        %v5031 = vpop.f32.mrf.mxu0
        %v5032 = vadd.f32 %v4756, %v5031
        %v5033 = vpop.f32.mrf.mxu0
        %5034 = vmatprep.mubr.bf16.mxu0 %v4641
        %5035 = vmatmul.mubr.bf16.gmra.mxu0 %v4625
        %v5036 = vpop.f32.mrf.mxu0
        %v5037 = vadd.f32 %v4756, %v5036
        %v5038 = vpop.f32.mrf.mxu0
        %v5039 = vpop.f32.mrf.mxu0
        %v5040 = vadd.f32 %v4756, %v5039
        %v5041 = vpop.f32.mrf.mxu0
        %5042 = vmatprep.mubr.bf16.mxu0 %v4645
        %5043 = vmatmul.mubr.bf16.gmra.mxu0 %v4629
        %v5044 = vpop.f32.mrf.mxu0
        %v5045 = vadd.f32 %v4756, %v5044
        %v5046 = vpop.f32.mrf.mxu0
        %v5047 = vpop.f32.mrf.mxu0
        %v5048 = vadd.f32 %v4756, %v5047
        %v5049 = vpop.f32.mrf.mxu0
        %5050 = vdwg.mxu0
        %5051 = vmatprep.subr.bf16.mxu0 0
        %5052 = vmatpush1.bf16.msra.mxu0 %v4925
        %5053 = vmatprep.subr.bf16.mxu0 0
        %5054 = vmatpush1.bf16.msra.mxu0 %v4924
        %5055 = vmatprep.subr.bf16.mxu0 0
        %5056 = vmatpush1.bf16.msra.mxu0 %v4923
        %5057 = vmatprep.subr.bf16.mxu0 0
        %5058 = vmatpush1.bf16.msra.mxu0 %v4922
        %5059 = vmatprep.subr.bf16.mxu0 0
        %5060 = vmatpush1.bf16.msra.mxu0 %v4921
        %5061 = vmatprep.subr.bf16.mxu0 0
        %5062 = vmatpush1.bf16.msra.mxu0 %v4920
        %5063 = vmatprep.subr.bf16.mxu0 0
        %5064 = vmatpush1.bf16.msra.mxu0 %v4919
        %5065 = vmatprep.subr.bf16.mxu0 0
        %5066 = vmatpush1.bf16.msra.mxu0 %v4918
        %5067 = vmatprep.subr.bf16.mxu0 0
        %5068 = vmatpush2.bf16.msra.mxu0 %v4933
        %5069 = vmatprep.subr.bf16.mxu0 0
        %5070 = vmatpush2.bf16.msra.mxu0 %v4932
        %5071 = vmatprep.subr.bf16.mxu0 0
        %5072 = vmatpush2.bf16.msra.mxu0 %v4931
        %5073 = vmatprep.subr.bf16.mxu0 0
        %5074 = vmatpush2.bf16.msra.mxu0 %v4930
        %5075 = vmatprep.subr.bf16.mxu0 0
        %5076 = vmatpush2.bf16.msra.mxu0 %v4929
        %5077 = vmatprep.subr.bf16.mxu0 0
        %5078 = vmatpush2.bf16.msra.mxu0 %v4928
        %5079 = vmatprep.subr.bf16.mxu0 0
        %5080 = vmatpush2.bf16.msra.mxu0 %v4927
        %5081 = vmatprep.subr.bf16.mxu0 0
        %5082 = vmatpush2.bf16.msra.mxu0 %v4926
        %5083 = vmatprep.mubr.bf16.mxu0 %v4665
        %5084 = vmatmul.mubr.bf16.gmra.mxu0 %v4649
        %v5085 = vpop.f32.mrf.mxu0
        %v5086 = vadd.f32 %v5021, %v5085
        %v5087 = vpop.f32.mrf.mxu0
        %v5088 = vpop.f32.mrf.mxu0
        %v5089 = vadd.f32 %v5024, %v5088
        %v5090 = vpop.f32.mrf.mxu0
        %5091 = vmatprep.mubr.bf16.mxu0 %v4669
        %5092 = vmatmul.mubr.bf16.gmra.mxu0 %v4653
        %v5093 = vpop.f32.mrf.mxu0
        %v5094 = vadd.f32 %v5029, %v5093
        %v5095 = vpop.f32.mrf.mxu0
        %v5096 = vpop.f32.mrf.mxu0
        %v5097 = vadd.f32 %v5032, %v5096
        %v5098 = vpop.f32.mrf.mxu0
        %5099 = vmatprep.mubr.bf16.mxu0 %v4673
        %5100 = vmatmul.mubr.bf16.gmra.mxu0 %v4657
        %v5101 = vpop.f32.mrf.mxu0
        %v5102 = vadd.f32 %v5037, %v5101
        %v5103 = vpop.f32.mrf.mxu0
        %v5104 = vpop.f32.mrf.mxu0
        %v5105 = vadd.f32 %v5040, %v5104
        %v5106 = vpop.f32.mrf.mxu0
        %5107 = vmatprep.mubr.bf16.mxu0 %v4677
        %5108 = vmatmul.mubr.bf16.gmra.mxu0 %v4661
        %v5109 = vpop.f32.mrf.mxu0
        %v5110 = vadd.f32 %v5045, %v5109
        %v5111 = vpop.f32.mrf.mxu0
        %v5112 = vpop.f32.mrf.mxu0
        %v5113 = vadd.f32 %v5048, %v5112
        %v5114 = vpop.f32.mrf.mxu0
        %5115 = vdwg.mxu0
        %5116 = vmatprep.subr.bf16.mxu0 0
        %5117 = vmatpush1.bf16.msra.mxu0 0
        %5118 = vmatprep.subr.bf16.mxu0 0
        %5119 = vmatpush1.bf16.msra.mxu0 0
        %5120 = vmatprep.subr.bf16.mxu0 0
        %5121 = vmatpush1.bf16.msra.mxu0 0
        %5122 = vmatprep.subr.bf16.mxu0 0
        %5123 = vmatpush1.bf16.msra.mxu0 0
        %5124 = vmatprep.subr.bf16.mxu0 0
        %5125 = vmatpush1.bf16.msra.mxu0 %v4937
        %5126 = vmatprep.subr.bf16.mxu0 0
        %5127 = vmatpush1.bf16.msra.mxu0 %v4936
        %5128 = vmatprep.subr.bf16.mxu0 0
        %5129 = vmatpush1.bf16.msra.mxu0 %v4935
        %5130 = vmatprep.subr.bf16.mxu0 0
        %5131 = vmatpush1.bf16.msra.mxu0 %v4934
        %5132 = vmatprep.subr.bf16.mxu0 0
        %5133 = vmatpush2.bf16.msra.mxu0 0
        %5134 = vmatprep.subr.bf16.mxu0 0
        %5135 = vmatpush2.bf16.msra.mxu0 0
        %5136 = vmatprep.subr.bf16.mxu0 0
        %5137 = vmatpush2.bf16.msra.mxu0 0
        %5138 = vmatprep.subr.bf16.mxu0 0
        %5139 = vmatpush2.bf16.msra.mxu0 0
        %5140 = vmatprep.subr.bf16.mxu0 0
        %5141 = vmatpush2.bf16.msra.mxu0 0
        %5142 = vmatprep.subr.bf16.mxu0 0
        %5143 = vmatpush2.bf16.msra.mxu0 0
        %5144 = vmatprep.subr.bf16.mxu0 0
        %5145 = vmatpush2.bf16.msra.mxu0 0
        %5146 = vmatprep.subr.bf16.mxu0 0
        %5147 = vmatpush2.bf16.msra.mxu0 0
        %5148 = vmatprep.mubr.bf16.mxu0 0
        %5149 = vmatmul.mubr.bf16.gmra.mxu0 %v4975
        %v5150 = vpop.f32.mrf.mxu0
        %v5151 = vadd.f32 %v5086, %v5150
        %v5152 = vpop.f32.mrf.mxu0
        %v5153 = vpop.f32.mrf.mxu0
        %v5154 = vadd.f32 %v5089, %v5153
        %v5155 = vpop.f32.mrf.mxu0
        %5156 = vmatprep.mubr.bf16.mxu0 0
        %5157 = vmatmul.mubr.bf16.gmra.mxu0 %v4978
        %v5158 = vpop.f32.mrf.mxu0
        %v5159 = vadd.f32 %v5094, %v5158
        %v5160 = vpop.f32.mrf.mxu0
        %v5161 = vpop.f32.mrf.mxu0
        %v5162 = vadd.f32 %v5097, %v5161
        %v5163 = vpop.f32.mrf.mxu0
        %5164 = vmatprep.mubr.bf16.mxu0 0
        %5165 = vmatmul.mubr.bf16.gmra.mxu0 %v4981
        %v5166 = vpop.f32.mrf.mxu0
        %v5167 = vadd.f32 %v5102, %v5166
        %v5168 = vpop.f32.mrf.mxu0
        %v5169 = vpop.f32.mrf.mxu0
        %v5170 = vadd.f32 %v5105, %v5169
        %v5171 = vpop.f32.mrf.mxu0
        %5172 = vmatprep.mubr.bf16.mxu0 0
        %5173 = vmatmul.mubr.bf16.gmra.mxu0 %v4984
        %v5174 = vpop.f32.mrf.mxu0
        %v5175 = vadd.f32 %v5110, %v5174
        %v5176 = vpop.f32.mrf.mxu0
        %v5177 = vpop.f32.mrf.mxu0
        %v5178 = vadd.f32 %v5113, %v5177
        %v5179 = vpop.f32.mrf.mxu0
        %5180 = vdwg.mxu0
        %v5181 = vmax.f32 %v5151, 0.0
        %v5182 = vmax.f32 %v5154, 0.0
        %v5183 = vmax.f32 %v5159, 0.0
        %v5184 = vmax.f32 %v5162, 0.0
        %v5185 = vmax.f32 %v5167, 0.0
        %v5186 = vmax.f32 %v5170, 0.0
        %v5187 = vmax.f32 %v5175, 0.0
        %v5188 = vmax.f32 %v5178, 0.0
        %v5189 = vmax.f32 %v5181, %v5182
        %v5190 = vmax.f32 %v5183, %v5184
        %v5191 = vmax.f32 %v5185, %v5186
        %v5192 = vmax.f32 %v5187, %v5188
        %vm5193 = vcmp.lt.s32.totalorder %v4114, 16
        %vm5194 = vcmp.lt.s32.totalorder %v4115, 16
        %vm5195 = vcmp.lt.s32.totalorder %v4116, 16
        %vm5196 = vcmp.lt.s32.totalorder %v4117, 16
        %v5197 = vsub.s32 %v4114, 16
        %v5198 = vsub.s32 %v4115, 16
        %v5199 = vsub.s32 %v4117, 16
        %v5200 = vmul.u32 %v5197, 2
        %v5201 = vmul.u32 %v5198, 2
        %v5202 = vmul.u32 %v5199, 2
        %v5203 = vadd.s32 %v5200, 1
        %v5204 = vadd.s32 %v5201, 1
        %v5205 = vadd.s32 %v5202, 1
        %v5206 = vsel %vm5193, %v4148, %v5203
        %v5207 = vsel %vm5194, %v4149, %v5204
        %v5208 = vsel %vm5195, %v4150, %v4202
        %v5209 = vsel %vm5196, %v4151, %v5205
        %vm5210 = vcmp.eq.s32.totalorder %v4131, %v5206
        %vm5211 = vcmp.eq.s32.totalorder %v4131, %v5207
        %vm5212 = vcmp.eq.s32.totalorder %v4131, %v5208
        %vm5213 = vcmp.eq.s32.totalorder %v4131, %v5209
        %v5214 = vsel %vm5210, 1, 0
        %v5215 = vsel %vm5211, 1, 0
        %v5216 = vsel %vm5212, 1, 0
        %v5217 = vsel %vm5213, 1, 0
        %v5218 = vcvt.s32.f32 %v5214
        %v5219 = vcvt.s32.f32 %v5215
        %v5220 = vcvt.s32.f32 %v5216
        %v5221 = vcvt.s32.f32 %v5217
        %vm5222 = vcmask 261120
        %v5224 = vsel %vm5222, %v5218, 0
        %v5227 = vsel %vm5222, %v5219, 0
        %v5230 = vsel %vm5222, %v5220, 0
        %v5233 = vsel %vm5222, %v5221, 0
        %5235 = vmatprep.subr.mxu0 0.0
        %5236 = vmatpush1.msra.mxu0 0.0
        %5237 = vmatprep.subr.mxu0 0.0
        %5238 = vmatpush1.msra.mxu0 0.0
        %5239 = vmatprep.subr.mxu0 0.0
        %5240 = vmatpush1.msra.mxu0 0.0
        %5241 = vmatprep.subr.mxu0 0.0
        %5242 = vmatpush1.msra.mxu0 0.0
        %5243 = vmatprep.subr.mxu0 0.0
        %5244 = vmatpush1.msra.mxu0 0.0
        %5245 = vmatprep.subr.mxu0 0.0
        %5246 = vmatpush1.msra.mxu0 0.0
        %5247 = vmatprep.subr.mxu0 0.0
        %5248 = vmatpush1.msra.mxu0 0.0
        %5249 = vmatprep.subr.mxu0 0.0
        %5250 = vmatpush1.msra.mxu0 0.0
        %5251 = vmatprep.subr.mxu0 0.0
        %5252 = vmatpush1.msra.mxu0 0.0
        %5253 = vmatprep.subr.mxu0 0.0
        %5254 = vmatpush1.msra.mxu0 0.0
        %5255 = vmatprep.subr.mxu0 0.0
        %5256 = vmatpush1.msra.mxu0 0.0
        %5257 = vmatprep.subr.mxu0 0.0
        %5258 = vmatpush1.msra.mxu0 0.0
        %5259 = vmatprep.subr.mxu0 0.0
        %5260 = vmatpush1.msra.mxu0 %v5192
        %5261 = vmatprep.subr.mxu0 0.0
        %5262 = vmatpush1.msra.mxu0 %v5191
        %5263 = vmatprep.subr.mxu0 0.0
        %5264 = vmatpush1.msra.mxu0 %v5190
        %5265 = vmatprep.subr.mxu0 0.0
        %5266 = vmatpush1.msra.mxu0 %v5189
        %5267 = vmatprep.subr.mxu0 0.0
        %5268 = vmatpush2.msra.mxu0 0.0
        %5269 = vmatprep.subr.mxu0 0.0
        %5270 = vmatpush2.msra.mxu0 0.0
        %5271 = vmatprep.subr.mxu0 0.0
        %5272 = vmatpush2.msra.mxu0 0.0
        %5273 = vmatprep.subr.mxu0 0.0
        %5274 = vmatpush2.msra.mxu0 0.0
        %5275 = vmatprep.subr.mxu0 0.0
        %5276 = vmatpush2.msra.mxu0 0.0
        %5277 = vmatprep.subr.mxu0 0.0
        %5278 = vmatpush2.msra.mxu0 0.0
        %5279 = vmatprep.subr.mxu0 0.0
        %5280 = vmatpush2.msra.mxu0 0.0
        %5281 = vmatprep.subr.mxu0 0.0
        %5282 = vmatpush2.msra.mxu0 0.0
        %5283 = vmatprep.subr.mxu0 0.0
        %5284 = vmatpush2.msra.mxu0 0.0
        %5285 = vmatprep.subr.mxu0 0.0
        %5286 = vmatpush2.msra.mxu0 0.0
        %5287 = vmatprep.subr.mxu0 0.0
        %5288 = vmatpush2.msra.mxu0 0.0
        %5289 = vmatprep.subr.mxu0 0.0
        %5290 = vmatpush2.msra.mxu0 0.0
        %5291 = vmatprep.subr.mxu0 0.0
        %5292 = vmatpush2.msra.mxu0 0.0
        %5293 = vmatprep.subr.mxu0 0.0
        %5294 = vmatpush2.msra.mxu0 0.0
        %5295 = vmatprep.subr.mxu0 0.0
        %5296 = vmatpush2.msra.mxu0 0.0
        %5297 = vmatprep.subr.mxu0 0.0
        %5298 = vmatpush2.msra.mxu0 0.0
        %5299 = vmatprep.mubr.f32.mxu0 0.0
        %5300 = vmatmul.mubr.f32.gmra.mxu0 %v5224
        %v5301 = vpop.f32.mrf.mxu0
        %v5302 = vadd.f32 0.0, %v5301
        %v5303 = vpop.f32.mrf.mxu0
        %5304 = vmatprep.mubr.f32.mxu0 0.0
        %5305 = vmatmul.mubr.f32.gmra.mxu0 %v5227
        %v5306 = vpop.f32.mrf.mxu0
        %v5307 = vadd.f32 0.0, %v5306
        %v5308 = vpop.f32.mrf.mxu0
        %5309 = vmatprep.mubr.f32.mxu0 0.0
        %5310 = vmatmul.mubr.f32.gmra.mxu0 %v5230
        %v5311 = vpop.f32.mrf.mxu0
        %v5312 = vadd.f32 0.0, %v5311
        %v5313 = vpop.f32.mrf.mxu0
        %5314 = vmatprep.mubr.f32.mxu0 0.0
        %5315 = vmatmul.mubr.f32.gmra.mxu0 %v5233
        %v5316 = vpop.f32.mrf.mxu0
        %v5317 = vadd.f32 0.0, %v5316
        %v5318 = vpop.f32.mrf.mxu0
        %5319 = vdwg.mxu0
        %v5320 = vmax.f32 %v5302, %v5312
        %v5321 = vmax.f32 %v5307, %v5317
        %v5322 = vld [vmem:[%s5] sm:$0xff]
        %v5323 = vld [vmem:[%s5 + $0x8] sm:$0xff]
        %v5324 = vld [vmem:[%s5 + $0x10] sm:$0xff]
        %v5325 = vld [vmem:[%s5 + $0x18] sm:$0xff]
        %v5326 = vld [vmem:[%s5 + $0x20] sm:$0xff]
        %v5327 = vld [vmem:[%s5 + $0x28] sm:$0xff]
        %v5328 = vld [vmem:[%s5 + $0x30] sm:$0xff]
        %v5329 = vld [vmem:[%s5 + $0x38] sm:$0xff]
        %v5330 = vld [vmem:[%s5 + $0x40] sm:$0xff]
        %v5331 = vld [vmem:[%s5 + $0x48] sm:$0xff]
        %v5332 = vld [vmem:[%s5 + $0x50] sm:$0xff]
        %v5333 = vld [vmem:[%s5 + $0x58] sm:$0xff]
        %v5334 = vld [vmem:[%s5 + $0x60] sm:$0xff]
        %v5335 = vld [vmem:[%s5 + $0x68] sm:$0xff]
        %v5336 = vld [vmem:[%s5 + $0x70] sm:$0xff]
        %v5337 = vld [vmem:[%s5 + $0x78] sm:$0xff]
        %v5338 = vld [vmem:[%s7] sm:$0x1]
        %v5340 = vlaneseq
        %v5341 = vshrl.u32 %v5340, 7
        %v5342 = vsub.s32 0, %v5341
        %v5343 = vrot.slane %v5338, %v5342
        %5345 = vmatprep.subr.mxu0 0.0
        %5346 = vmatpush1.msra.mxu0 %v5337
        %5347 = vmatprep.subr.mxu0 0.0
        %5348 = vmatpush1.msra.mxu0 %v5336
        %5349 = vmatprep.subr.mxu0 0.0
        %5350 = vmatpush1.msra.mxu0 %v5335
        %5351 = vmatprep.subr.mxu0 0.0
        %5352 = vmatpush1.msra.mxu0 %v5334
        %5353 = vmatprep.subr.mxu0 0.0
        %5354 = vmatpush1.msra.mxu0 %v5333
        %5355 = vmatprep.subr.mxu0 0.0
        %5356 = vmatpush1.msra.mxu0 %v5332
        %5357 = vmatprep.subr.mxu0 0.0
        %5358 = vmatpush1.msra.mxu0 %v5331
        %5359 = vmatprep.subr.mxu0 0.0
        %5360 = vmatpush1.msra.mxu0 %v5330
        %5361 = vmatprep.subr.mxu0 0.0
        %5362 = vmatpush1.msra.mxu0 %v5329
        %5363 = vmatprep.subr.mxu0 0.0
        %5364 = vmatpush1.msra.mxu0 %v5328
        %5365 = vmatprep.subr.mxu0 0.0
        %5366 = vmatpush1.msra.mxu0 %v5327
        %5367 = vmatprep.subr.mxu0 0.0
        %5368 = vmatpush1.msra.mxu0 %v5326
        %5369 = vmatprep.subr.mxu0 0.0
        %5370 = vmatpush1.msra.mxu0 %v5325
        %5371 = vmatprep.subr.mxu0 0.0
        %5372 = vmatpush1.msra.mxu0 %v5324
        %5373 = vmatprep.subr.mxu0 0.0
        %5374 = vmatpush1.msra.mxu0 %v5323
        %5375 = vmatprep.subr.mxu0 0.0
        %5376 = vmatpush1.msra.mxu0 %v5322
        %5377 = vmatprep.subr.mxu0 0.0
        %5378 = vmatpush2.msra.mxu0 0.0
        %5379 = vmatprep.subr.mxu0 0.0
        %5380 = vmatpush2.msra.mxu0 0.0
        %5381 = vmatprep.subr.mxu0 0.0
        %5382 = vmatpush2.msra.mxu0 0.0
        %5383 = vmatprep.subr.mxu0 0.0
        %5384 = vmatpush2.msra.mxu0 0.0
        %5385 = vmatprep.subr.mxu0 0.0
        %5386 = vmatpush2.msra.mxu0 0.0
        %5387 = vmatprep.subr.mxu0 0.0
        %5388 = vmatpush2.msra.mxu0 0.0
        %5389 = vmatprep.subr.mxu0 0.0
        %5390 = vmatpush2.msra.mxu0 0.0
        %5391 = vmatprep.subr.mxu0 0.0
        %5392 = vmatpush2.msra.mxu0 0.0
        %5393 = vmatprep.subr.mxu0 0.0
        %5394 = vmatpush2.msra.mxu0 0.0
        %5395 = vmatprep.subr.mxu0 0.0
        %5396 = vmatpush2.msra.mxu0 0.0
        %5397 = vmatprep.subr.mxu0 0.0
        %5398 = vmatpush2.msra.mxu0 0.0
        %5399 = vmatprep.subr.mxu0 0.0
        %5400 = vmatpush2.msra.mxu0 0.0
        %5401 = vmatprep.subr.mxu0 0.0
        %5402 = vmatpush2.msra.mxu0 0.0
        %5403 = vmatprep.subr.mxu0 0.0
        %5404 = vmatpush2.msra.mxu0 0.0
        %5405 = vmatprep.subr.mxu0 0.0
        %5406 = vmatpush2.msra.mxu0 0.0
        %5407 = vmatprep.subr.mxu0 0.0
        %5408 = vmatpush2.msra.mxu0 0.0
        %5409 = vmatprep.mubr.f32.mxu0 0.0
        %5410 = vmatmul.mubr.f32.gmra.mxu0 %v5320
        %v5411 = vpop.f32.mrf.mxu0
        %v5412 = vadd.f32 %v5343, %v5411
        %v5413 = vpop.f32.mrf.mxu0
        %5414 = vmatprep.mubr.f32.mxu0 0.0
        %5415 = vmatmul.mubr.f32.gmra.mxu0 %v5321
        %v5416 = vpop.f32.mrf.mxu0
        %v5417 = vadd.f32 %v5343, %v5416
        %v5418 = vpop.f32.mrf.mxu0
        %5419 = vdwg.mxu0
        %v5420 = vld [vmem:[%s6] sm:$0xff]
        %v5421 = vld [vmem:[%s6 + $0x8] sm:$0xff]
        %v5422 = vld [vmem:[%s6 + $0x10] sm:$0xff]
        %v5423 = vld [vmem:[%s6 + $0x18] sm:$0xff]
        %v5425 = vsel %vm5222, 0.0, 0
        %5427 = vmatprep.subr.mxu0 0.0
        %5428 = vmatpush1.msra.mxu0 0.0
        %5429 = vmatprep.subr.mxu0 0.0
        %5430 = vmatpush1.msra.mxu0 0.0
        %5431 = vmatprep.subr.mxu0 0.0
        %5432 = vmatpush1.msra.mxu0 0.0
        %5433 = vmatprep.subr.mxu0 0.0
        %5434 = vmatpush1.msra.mxu0 0.0
        %5435 = vmatprep.subr.mxu0 0.0
        %5436 = vmatpush1.msra.mxu0 0.0
        %5437 = vmatprep.subr.mxu0 0.0
        %5438 = vmatpush1.msra.mxu0 0.0
        %5439 = vmatprep.subr.mxu0 0.0
        %5440 = vmatpush1.msra.mxu0 0.0
        %5441 = vmatprep.subr.mxu0 0.0
        %5442 = vmatpush1.msra.mxu0 0.0
        %5443 = vmatprep.subr.mxu0 0.0
        %5444 = vmatpush1.msra.mxu0 0.0
        %5445 = vmatprep.subr.mxu0 0.0
        %5446 = vmatpush1.msra.mxu0 0.0
        %5447 = vmatprep.subr.mxu0 0.0
        %5448 = vmatpush1.msra.mxu0 0.0
        %5449 = vmatprep.subr.mxu0 0.0
        %5450 = vmatpush1.msra.mxu0 0.0
        %5451 = vmatprep.subr.mxu0 0.0
        %5452 = vmatpush1.msra.mxu0 %v5423
        %5453 = vmatprep.subr.mxu0 0.0
        %5454 = vmatpush1.msra.mxu0 %v5422
        %5455 = vmatprep.subr.mxu0 0.0
        %5456 = vmatpush1.msra.mxu0 %v5421
        %5457 = vmatprep.subr.mxu0 0.0
        %5458 = vmatpush1.msra.mxu0 %v5420
        %5459 = vmatprep.subr.mxu0 0.0
        %5460 = vmatpush2.msra.mxu0 0.0
        %5461 = vmatprep.subr.mxu0 0.0
        %5462 = vmatpush2.msra.mxu0 0.0
        %5463 = vmatprep.subr.mxu0 0.0
        %5464 = vmatpush2.msra.mxu0 0.0
        %5465 = vmatprep.subr.mxu0 0.0
        %5466 = vmatpush2.msra.mxu0 0.0
        %5467 = vmatprep.subr.mxu0 0.0
        %5468 = vmatpush2.msra.mxu0 0.0
        %5469 = vmatprep.subr.mxu0 0.0
        %5470 = vmatpush2.msra.mxu0 0.0
        %5471 = vmatprep.subr.mxu0 0.0
        %5472 = vmatpush2.msra.mxu0 0.0
        %5473 = vmatprep.subr.mxu0 0.0
        %5474 = vmatpush2.msra.mxu0 0.0
        %5475 = vmatprep.subr.mxu0 0.0
        %5476 = vmatpush2.msra.mxu0 0.0
        %5477 = vmatprep.subr.mxu0 0.0
        %5478 = vmatpush2.msra.mxu0 0.0
        %5479 = vmatprep.subr.mxu0 0.0
        %5480 = vmatpush2.msra.mxu0 0.0
        %5481 = vmatprep.subr.mxu0 0.0
        %5482 = vmatpush2.msra.mxu0 0.0
        %5483 = vmatprep.subr.mxu0 0.0
        %5484 = vmatpush2.msra.mxu0 0.0
        %5485 = vmatprep.subr.mxu0 0.0
        %5486 = vmatpush2.msra.mxu0 0.0
        %5487 = vmatprep.subr.mxu0 0.0
        %5488 = vmatpush2.msra.mxu0 0.0
        %5489 = vmatprep.subr.mxu0 0.0
        %5490 = vmatpush2.msra.mxu0 0.0
        %5491 = vmatprep.mubr.f32.mxu0 0.0
        %5492 = vmatmul.mubr.f32.gmra.mxu0 %v5425
        %v5493 = vpop.f32.mrf.mxu0
        %v5494 = vadd.f32 0.0, %v5493
        %v5495 = vpop.f32.mrf.mxu0
        %5496 = vdwg.mxu0
        %v5497 = vadd.f32 %v5412, %v5494
        %v5498 = vsub.f32 0.0, %v5497
        %v5499 = vmul.f32 %v5498, 1.442695
        %v5500 = vpow.pop %v5499
        %v5501 = vadd.f32 %v5500, 1.0
        %v5502 = vrcp.pop %v5501
        %v5503 = vtanh.pop %v5497
        %v5504 = vmul.f32 %v5502, 0.0
        %5506 = vrot.lane.b32.xlu0 %v5503, 64
        %v5507 = vpop.permute.xlu0 %5506
        %v5509 = vmul.f32 %v5502, %v5507
        %5511 = vrot.lane.b32.xlu0 %v5509, 32
        %v5512 = vpop.permute.xlu0 %5511
        %v5514 = vadd.f32 %v5504, %v5512
        %v5515 = vtanh.pop %v5514
        %5517 = vrot.lane.b32.xlu0 %v5515, 64
        %v5518 = vpop.permute.xlu0 %5517
        %v5520 = vmul.f32 %v5502, %v5518
        %5522 = vrot.lane.b32.xlu0 %v5520, 32
        %v5523 = vpop.permute.xlu0 %5522
        %v5524 = vsel %vm5222, %v5523, 0
        %5526 = vmatprep.subr.mxu0 0.0
        %5527 = vmatpush1.msra.mxu0 0.0
        %5528 = vmatprep.subr.mxu0 0.0
        %5529 = vmatpush1.msra.mxu0 0.0
        %5530 = vmatprep.subr.mxu0 0.0
        %5531 = vmatpush1.msra.mxu0 0.0
        %5532 = vmatprep.subr.mxu0 0.0
        %5533 = vmatpush1.msra.mxu0 0.0
        %5534 = vmatprep.subr.mxu0 0.0
        %5535 = vmatpush1.msra.mxu0 0.0
        %5536 = vmatprep.subr.mxu0 0.0
        %5537 = vmatpush1.msra.mxu0 0.0
        %5538 = vmatprep.subr.mxu0 0.0
        %5539 = vmatpush1.msra.mxu0 0.0
        %5540 = vmatprep.subr.mxu0 0.0
        %5541 = vmatpush1.msra.mxu0 0.0
        %5542 = vmatprep.subr.mxu0 0.0
        %5543 = vmatpush1.msra.mxu0 0.0
        %5544 = vmatprep.subr.mxu0 0.0
        %5545 = vmatpush1.msra.mxu0 0.0
        %5546 = vmatprep.subr.mxu0 0.0
        %5547 = vmatpush1.msra.mxu0 0.0
        %5548 = vmatprep.subr.mxu0 0.0
        %5549 = vmatpush1.msra.mxu0 0.0
        %5550 = vmatprep.subr.mxu0 0.0
        %5551 = vmatpush1.msra.mxu0 %v5423
        %5552 = vmatprep.subr.mxu0 0.0
        %5553 = vmatpush1.msra.mxu0 %v5422
        %5554 = vmatprep.subr.mxu0 0.0
        %5555 = vmatpush1.msra.mxu0 %v5421
        %5556 = vmatprep.subr.mxu0 0.0
        %5557 = vmatpush1.msra.mxu0 %v5420
        %5558 = vmatprep.subr.mxu0 0.0
        %5559 = vmatpush2.msra.mxu0 0.0
        %5560 = vmatprep.subr.mxu0 0.0
        %5561 = vmatpush2.msra.mxu0 0.0
        %5562 = vmatprep.subr.mxu0 0.0
        %5563 = vmatpush2.msra.mxu0 0.0
        %5564 = vmatprep.subr.mxu0 0.0
        %5565 = vmatpush2.msra.mxu0 0.0
        %5566 = vmatprep.subr.mxu0 0.0
        %5567 = vmatpush2.msra.mxu0 0.0
        %5568 = vmatprep.subr.mxu0 0.0
        %5569 = vmatpush2.msra.mxu0 0.0
        %5570 = vmatprep.subr.mxu0 0.0
        %5571 = vmatpush2.msra.mxu0 0.0
        %5572 = vmatprep.subr.mxu0 0.0
        %5573 = vmatpush2.msra.mxu0 0.0
        %5574 = vmatprep.subr.mxu0 0.0
        %5575 = vmatpush2.msra.mxu0 0.0
        %5576 = vmatprep.subr.mxu0 0.0
        %5577 = vmatpush2.msra.mxu0 0.0
        %5578 = vmatprep.subr.mxu0 0.0
        %5579 = vmatpush2.msra.mxu0 0.0
        %5580 = vmatprep.subr.mxu0 0.0
        %5581 = vmatpush2.msra.mxu0 0.0
        %5582 = vmatprep.subr.mxu0 0.0
        %5583 = vmatpush2.msra.mxu0 0.0
        %5584 = vmatprep.subr.mxu0 0.0
        %5585 = vmatpush2.msra.mxu0 0.0
        %5586 = vmatprep.subr.mxu0 0.0
        %5587 = vmatpush2.msra.mxu0 0.0
        %5588 = vmatprep.subr.mxu0 0.0
        %5589 = vmatpush2.msra.mxu0 0.0
        %5590 = vmatprep.mubr.f32.mxu0 0.0
        %5591 = vmatmul.mubr.f32.gmra.mxu0 %v5524
        %v5592 = vpop.f32.mrf.mxu0
        %v5593 = vadd.f32 0.0, %v5592
        %v5594 = vpop.f32.mrf.mxu0
        %5595 = vdwg.mxu0
        %v5597 = vrot.slane %v5593, 7
        %v5599 = vadd.f32 %v5412, %v5597
        %v5600 = vsub.f32 0.0, %v5599
        %v5601 = vmul.f32 %v5600, 1.442695
        %v5602 = vpow.pop %v5601
        %v5603 = vadd.f32 %v5602, 1.0
        %v5604 = vrcp.pop %v5603
        %v5605 = vtanh.pop %v5599
        %v5607 = vrot.slane %v5514, 7
        %v5609 = vmul.f32 %v5604, %v5607
        %5611 = vrot.lane.b32.xlu0 %v5605, 64
        %v5612 = vpop.permute.xlu0 %5611
        %v5614 = vmul.f32 %v5604, %v5612
        %5616 = vrot.lane.b32.xlu0 %v5614, 32
        %v5617 = vpop.permute.xlu0 %5616
        %v5619 = vadd.f32 %v5609, %v5617
        %v5620 = vtanh.pop %v5619
        %5622 = vrot.lane.b32.xlu0 %v5620, 64
        %v5623 = vpop.permute.xlu0 %5622
        %v5625 = vmul.f32 %v5604, %v5623
        %v5627 = vrot.slane %v5625, 1
        %5628 = vrot.lane.b32.xlu0 %v5627, 32
        %v5629 = vpop.permute.xlu0 %5628
        %v5630 = vsel %vm5222, %v5629, 0
        %5632 = vmatprep.subr.mxu0 0.0
        %5633 = vmatpush1.msra.mxu0 0.0
        %5634 = vmatprep.subr.mxu0 0.0
        %5635 = vmatpush1.msra.mxu0 0.0
        %5636 = vmatprep.subr.mxu0 0.0
        %5637 = vmatpush1.msra.mxu0 0.0
        %5638 = vmatprep.subr.mxu0 0.0
        %5639 = vmatpush1.msra.mxu0 0.0
        %5640 = vmatprep.subr.mxu0 0.0
        %5641 = vmatpush1.msra.mxu0 0.0
        %5642 = vmatprep.subr.mxu0 0.0
        %5643 = vmatpush1.msra.mxu0 0.0
        %5644 = vmatprep.subr.mxu0 0.0
        %5645 = vmatpush1.msra.mxu0 0.0
        %5646 = vmatprep.subr.mxu0 0.0
        %5647 = vmatpush1.msra.mxu0 0.0
        %5648 = vmatprep.subr.mxu0 0.0
        %5649 = vmatpush1.msra.mxu0 0.0
        %5650 = vmatprep.subr.mxu0 0.0
        %5651 = vmatpush1.msra.mxu0 0.0
        %5652 = vmatprep.subr.mxu0 0.0
        %5653 = vmatpush1.msra.mxu0 0.0
        %5654 = vmatprep.subr.mxu0 0.0
        %5655 = vmatpush1.msra.mxu0 0.0
        %5656 = vmatprep.subr.mxu0 0.0
        %5657 = vmatpush1.msra.mxu0 %v5423
        %5658 = vmatprep.subr.mxu0 0.0
        %5659 = vmatpush1.msra.mxu0 %v5422
        %5660 = vmatprep.subr.mxu0 0.0
        %5661 = vmatpush1.msra.mxu0 %v5421
        %5662 = vmatprep.subr.mxu0 0.0
        %5663 = vmatpush1.msra.mxu0 %v5420
        %5664 = vmatprep.subr.mxu0 0.0
        %5665 = vmatpush2.msra.mxu0 0.0
        %5666 = vmatprep.subr.mxu0 0.0
        %5667 = vmatpush2.msra.mxu0 0.0
        %5668 = vmatprep.subr.mxu0 0.0
        %5669 = vmatpush2.msra.mxu0 0.0
        %5670 = vmatprep.subr.mxu0 0.0
        %5671 = vmatpush2.msra.mxu0 0.0
        %5672 = vmatprep.subr.mxu0 0.0
        %5673 = vmatpush2.msra.mxu0 0.0
        %5674 = vmatprep.subr.mxu0 0.0
        %5675 = vmatpush2.msra.mxu0 0.0
        %5676 = vmatprep.subr.mxu0 0.0
        %5677 = vmatpush2.msra.mxu0 0.0
        %5678 = vmatprep.subr.mxu0 0.0
        %5679 = vmatpush2.msra.mxu0 0.0
        %5680 = vmatprep.subr.mxu0 0.0
        %5681 = vmatpush2.msra.mxu0 0.0
        %5682 = vmatprep.subr.mxu0 0.0
        %5683 = vmatpush2.msra.mxu0 0.0
        %5684 = vmatprep.subr.mxu0 0.0
        %5685 = vmatpush2.msra.mxu0 0.0
        %5686 = vmatprep.subr.mxu0 0.0
        %5687 = vmatpush2.msra.mxu0 0.0
        %5688 = vmatprep.subr.mxu0 0.0
        %5689 = vmatpush2.msra.mxu0 0.0
        %5690 = vmatprep.subr.mxu0 0.0
        %5691 = vmatpush2.msra.mxu0 0.0
        %5692 = vmatprep.subr.mxu0 0.0
        %5693 = vmatpush2.msra.mxu0 0.0
        %5694 = vmatprep.subr.mxu0 0.0
        %5695 = vmatpush2.msra.mxu0 0.0
        %5696 = vmatprep.mubr.f32.mxu0 0.0
        %5697 = vmatmul.mubr.f32.gmra.mxu0 %v5630
        %v5698 = vpop.f32.mrf.mxu0
        %v5699 = vadd.f32 0.0, %v5698
        %v5700 = vpop.f32.mrf.mxu0
        %5701 = vdwg.mxu0
        %v5703 = vrot.slane %v5699, 6
        %v5705 = vadd.f32 %v5412, %v5703
        %v5706 = vsub.f32 0.0, %v5705
        %v5707 = vmul.f32 %v5706, 1.442695
        %v5708 = vpow.pop %v5707
        %v5709 = vadd.f32 %v5708, 1.0
        %v5710 = vrcp.pop %v5709
        %v5711 = vtanh.pop %v5705
        %v5713 = vrot.slane %v5619, 7
        %v5715 = vmul.f32 %v5710, %v5713
        %5717 = vrot.lane.b32.xlu0 %v5711, 64
        %v5718 = vpop.permute.xlu0 %5717
        %v5720 = vmul.f32 %v5710, %v5718
        %5722 = vrot.lane.b32.xlu0 %v5720, 32
        %v5723 = vpop.permute.xlu0 %5722
        %v5725 = vadd.f32 %v5715, %v5723
        %v5726 = vtanh.pop %v5725
        %5728 = vrot.lane.b32.xlu0 %v5726, 64
        %v5729 = vpop.permute.xlu0 %5728
        %v5731 = vmul.f32 %v5710, %v5729
        %v5733 = vrot.slane %v5731, 2
        %5734 = vrot.lane.b32.xlu0 %v5733, 32
        %v5735 = vpop.permute.xlu0 %5734
        %v5736 = vsel %vm5222, %v5735, 0
        %5738 = vmatprep.subr.mxu0 0.0
        %5739 = vmatpush1.msra.mxu0 0.0
        %5740 = vmatprep.subr.mxu0 0.0
        %5741 = vmatpush1.msra.mxu0 0.0
        %5742 = vmatprep.subr.mxu0 0.0
        %5743 = vmatpush1.msra.mxu0 0.0
        %5744 = vmatprep.subr.mxu0 0.0
        %5745 = vmatpush1.msra.mxu0 0.0
        %5746 = vmatprep.subr.mxu0 0.0
        %5747 = vmatpush1.msra.mxu0 0.0
        %5748 = vmatprep.subr.mxu0 0.0
        %5749 = vmatpush1.msra.mxu0 0.0
        %5750 = vmatprep.subr.mxu0 0.0
        %5751 = vmatpush1.msra.mxu0 0.0
        %5752 = vmatprep.subr.mxu0 0.0
        %5753 = vmatpush1.msra.mxu0 0.0
        %5754 = vmatprep.subr.mxu0 0.0
        %5755 = vmatpush1.msra.mxu0 0.0
        %5756 = vmatprep.subr.mxu0 0.0
        %5757 = vmatpush1.msra.mxu0 0.0
        %5758 = vmatprep.subr.mxu0 0.0
        %5759 = vmatpush1.msra.mxu0 0.0
        %5760 = vmatprep.subr.mxu0 0.0
        %5761 = vmatpush1.msra.mxu0 0.0
        %5762 = vmatprep.subr.mxu0 0.0
        %5763 = vmatpush1.msra.mxu0 %v5423
        %5764 = vmatprep.subr.mxu0 0.0
        %5765 = vmatpush1.msra.mxu0 %v5422
        %5766 = vmatprep.subr.mxu0 0.0
        %5767 = vmatpush1.msra.mxu0 %v5421
        %5768 = vmatprep.subr.mxu0 0.0
        %5769 = vmatpush1.msra.mxu0 %v5420
        %5770 = vmatprep.subr.mxu0 0.0
        %5771 = vmatpush2.msra.mxu0 0.0
        %5772 = vmatprep.subr.mxu0 0.0
        %5773 = vmatpush2.msra.mxu0 0.0
        %5774 = vmatprep.subr.mxu0 0.0
        %5775 = vmatpush2.msra.mxu0 0.0
        %5776 = vmatprep.subr.mxu0 0.0
        %5777 = vmatpush2.msra.mxu0 0.0
        %5778 = vmatprep.subr.mxu0 0.0
        %5779 = vmatpush2.msra.mxu0 0.0
        %5780 = vmatprep.subr.mxu0 0.0
        %5781 = vmatpush2.msra.mxu0 0.0
        %5782 = vmatprep.subr.mxu0 0.0
        %5783 = vmatpush2.msra.mxu0 0.0
        %5784 = vmatprep.subr.mxu0 0.0
        %5785 = vmatpush2.msra.mxu0 0.0
        %5786 = vmatprep.subr.mxu0 0.0
        %5787 = vmatpush2.msra.mxu0 0.0
        %5788 = vmatprep.subr.mxu0 0.0
        %5789 = vmatpush2.msra.mxu0 0.0
        %5790 = vmatprep.subr.mxu0 0.0
        %5791 = vmatpush2.msra.mxu0 0.0
        %5792 = vmatprep.subr.mxu0 0.0
        %5793 = vmatpush2.msra.mxu0 0.0
        %5794 = vmatprep.subr.mxu0 0.0
        %5795 = vmatpush2.msra.mxu0 0.0
        %5796 = vmatprep.subr.mxu0 0.0
        %5797 = vmatpush2.msra.mxu0 0.0
        %5798 = vmatprep.subr.mxu0 0.0
        %5799 = vmatpush2.msra.mxu0 0.0
        %5800 = vmatprep.subr.mxu0 0.0
        %5801 = vmatpush2.msra.mxu0 0.0
        %5802 = vmatprep.mubr.f32.mxu0 0.0
        %5803 = vmatmul.mubr.f32.gmra.mxu0 %v5736
        %v5804 = vpop.f32.mrf.mxu0
        %v5805 = vadd.f32 0.0, %v5804
        %v5806 = vpop.f32.mrf.mxu0
        %5807 = vdwg.mxu0
        %v5809 = vrot.slane %v5805, 5
        %v5811 = vadd.f32 %v5412, %v5809
        %v5812 = vsub.f32 0.0, %v5811
        %v5813 = vmul.f32 %v5812, 1.442695
        %v5814 = vpow.pop %v5813
        %v5815 = vadd.f32 %v5814, 1.0
        %v5816 = vrcp.pop %v5815
        %v5817 = vtanh.pop %v5811
        %v5819 = vrot.slane %v5725, 7
        %v5821 = vmul.f32 %v5816, %v5819
        %5823 = vrot.lane.b32.xlu0 %v5817, 64
        %v5824 = vpop.permute.xlu0 %5823
        %v5826 = vmul.f32 %v5816, %v5824
        %5828 = vrot.lane.b32.xlu0 %v5826, 32
        %v5829 = vpop.permute.xlu0 %5828
        %v5831 = vadd.f32 %v5821, %v5829
        %v5832 = vtanh.pop %v5831
        %5834 = vrot.lane.b32.xlu0 %v5832, 64
        %v5835 = vpop.permute.xlu0 %5834
        %v5837 = vmul.f32 %v5816, %v5835
        %v5839 = vrot.slane %v5837, 3
        %5840 = vrot.lane.b32.xlu0 %v5839, 32
        %v5841 = vpop.permute.xlu0 %5840
        %v5842 = vsel %vm5222, %v5841, 0
        %5844 = vmatprep.subr.mxu0 0.0
        %5845 = vmatpush1.msra.mxu0 0.0
        %5846 = vmatprep.subr.mxu0 0.0
        %5847 = vmatpush1.msra.mxu0 0.0
        %5848 = vmatprep.subr.mxu0 0.0
        %5849 = vmatpush1.msra.mxu0 0.0
        %5850 = vmatprep.subr.mxu0 0.0
        %5851 = vmatpush1.msra.mxu0 0.0
        %5852 = vmatprep.subr.mxu0 0.0
        %5853 = vmatpush1.msra.mxu0 0.0
        %5854 = vmatprep.subr.mxu0 0.0
        %5855 = vmatpush1.msra.mxu0 0.0
        %5856 = vmatprep.subr.mxu0 0.0
        %5857 = vmatpush1.msra.mxu0 0.0
        %5858 = vmatprep.subr.mxu0 0.0
        %5859 = vmatpush1.msra.mxu0 0.0
        %5860 = vmatprep.subr.mxu0 0.0
        %5861 = vmatpush1.msra.mxu0 0.0
        %5862 = vmatprep.subr.mxu0 0.0
        %5863 = vmatpush1.msra.mxu0 0.0
        %5864 = vmatprep.subr.mxu0 0.0
        %5865 = vmatpush1.msra.mxu0 0.0
        %5866 = vmatprep.subr.mxu0 0.0
        %5867 = vmatpush1.msra.mxu0 0.0
        %5868 = vmatprep.subr.mxu0 0.0
        %5869 = vmatpush1.msra.mxu0 %v5423
        %5870 = vmatprep.subr.mxu0 0.0
        %5871 = vmatpush1.msra.mxu0 %v5422
        %5872 = vmatprep.subr.mxu0 0.0
        %5873 = vmatpush1.msra.mxu0 %v5421
        %5874 = vmatprep.subr.mxu0 0.0
        %5875 = vmatpush1.msra.mxu0 %v5420
        %5876 = vmatprep.subr.mxu0 0.0
        %5877 = vmatpush2.msra.mxu0 0.0
        %5878 = vmatprep.subr.mxu0 0.0
        %5879 = vmatpush2.msra.mxu0 0.0
        %5880 = vmatprep.subr.mxu0 0.0
        %5881 = vmatpush2.msra.mxu0 0.0
        %5882 = vmatprep.subr.mxu0 0.0
        %5883 = vmatpush2.msra.mxu0 0.0
        %5884 = vmatprep.subr.mxu0 0.0
        %5885 = vmatpush2.msra.mxu0 0.0
        %5886 = vmatprep.subr.mxu0 0.0
        %5887 = vmatpush2.msra.mxu0 0.0
        %5888 = vmatprep.subr.mxu0 0.0
        %5889 = vmatpush2.msra.mxu0 0.0
        %5890 = vmatprep.subr.mxu0 0.0
        %5891 = vmatpush2.msra.mxu0 0.0
        %5892 = vmatprep.subr.mxu0 0.0
        %5893 = vmatpush2.msra.mxu0 0.0
        %5894 = vmatprep.subr.mxu0 0.0
        %5895 = vmatpush2.msra.mxu0 0.0
        %5896 = vmatprep.subr.mxu0 0.0
        %5897 = vmatpush2.msra.mxu0 0.0
        %5898 = vmatprep.subr.mxu0 0.0
        %5899 = vmatpush2.msra.mxu0 0.0
        %5900 = vmatprep.subr.mxu0 0.0
        %5901 = vmatpush2.msra.mxu0 0.0
        %5902 = vmatprep.subr.mxu0 0.0
        %5903 = vmatpush2.msra.mxu0 0.0
        %5904 = vmatprep.subr.mxu0 0.0
        %5905 = vmatpush2.msra.mxu0 0.0
        %5906 = vmatprep.subr.mxu0 0.0
        %5907 = vmatpush2.msra.mxu0 0.0
        %5908 = vmatprep.mubr.f32.mxu0 0.0
        %5909 = vmatmul.mubr.f32.gmra.mxu0 %v5842
        %v5910 = vpop.f32.mrf.mxu0
        %v5911 = vadd.f32 0.0, %v5910
        %v5912 = vpop.f32.mrf.mxu0
        %5913 = vdwg.mxu0
        %v5915 = vrot.slane %v5911, 4
        %v5917 = vadd.f32 %v5412, %v5915
        %v5918 = vsub.f32 0.0, %v5917
        %v5919 = vmul.f32 %v5918, 1.442695
        %v5920 = vpow.pop %v5919
        %v5921 = vadd.f32 %v5920, 1.0
        %v5922 = vrcp.pop %v5921
        %v5923 = vtanh.pop %v5917
        %v5925 = vrot.slane %v5831, 7
        %v5927 = vmul.f32 %v5922, %v5925
        %5929 = vrot.lane.b32.xlu0 %v5923, 64
        %v5930 = vpop.permute.xlu0 %5929
        %v5932 = vmul.f32 %v5922, %v5930
        %5934 = vrot.lane.b32.xlu0 %v5932, 32
        %v5935 = vpop.permute.xlu0 %5934
        %v5937 = vadd.f32 %v5927, %v5935
        %v5938 = vtanh.pop %v5937
        %5940 = vrot.lane.b32.xlu0 %v5938, 64
        %v5941 = vpop.permute.xlu0 %5940
        %v5943 = vmul.f32 %v5922, %v5941
        %v5945 = vrot.slane %v5943, 4
        %5946 = vrot.lane.b32.xlu0 %v5945, 32
        %v5947 = vpop.permute.xlu0 %5946
        %v5948 = vsel %vm5222, %v5947, 0
        %5950 = vmatprep.subr.mxu0 0.0
        %5951 = vmatpush1.msra.mxu0 0.0
        %5952 = vmatprep.subr.mxu0 0.0
        %5953 = vmatpush1.msra.mxu0 0.0
        %5954 = vmatprep.subr.mxu0 0.0
        %5955 = vmatpush1.msra.mxu0 0.0
        %5956 = vmatprep.subr.mxu0 0.0
        %5957 = vmatpush1.msra.mxu0 0.0
        %5958 = vmatprep.subr.mxu0 0.0
        %5959 = vmatpush1.msra.mxu0 0.0
        %5960 = vmatprep.subr.mxu0 0.0
        %5961 = vmatpush1.msra.mxu0 0.0
        %5962 = vmatprep.subr.mxu0 0.0
        %5963 = vmatpush1.msra.mxu0 0.0
        %5964 = vmatprep.subr.mxu0 0.0
        %5965 = vmatpush1.msra.mxu0 0.0
        %5966 = vmatprep.subr.mxu0 0.0
        %5967 = vmatpush1.msra.mxu0 0.0
        %5968 = vmatprep.subr.mxu0 0.0
        %5969 = vmatpush1.msra.mxu0 0.0
        %5970 = vmatprep.subr.mxu0 0.0
        %5971 = vmatpush1.msra.mxu0 0.0
        %5972 = vmatprep.subr.mxu0 0.0
        %5973 = vmatpush1.msra.mxu0 0.0
        %5974 = vmatprep.subr.mxu0 0.0
        %5975 = vmatpush1.msra.mxu0 %v5423
        %5976 = vmatprep.subr.mxu0 0.0
        %5977 = vmatpush1.msra.mxu0 %v5422
        %5978 = vmatprep.subr.mxu0 0.0
        %5979 = vmatpush1.msra.mxu0 %v5421
        %5980 = vmatprep.subr.mxu0 0.0
        %5981 = vmatpush1.msra.mxu0 %v5420
        %5982 = vmatprep.subr.mxu0 0.0
        %5983 = vmatpush2.msra.mxu0 0.0
        %5984 = vmatprep.subr.mxu0 0.0
        %5985 = vmatpush2.msra.mxu0 0.0
        %5986 = vmatprep.subr.mxu0 0.0
        %5987 = vmatpush2.msra.mxu0 0.0
        %5988 = vmatprep.subr.mxu0 0.0
        %5989 = vmatpush2.msra.mxu0 0.0
        %5990 = vmatprep.subr.mxu0 0.0
        %5991 = vmatpush2.msra.mxu0 0.0
        %5992 = vmatprep.subr.mxu0 0.0
        %5993 = vmatpush2.msra.mxu0 0.0
        %5994 = vmatprep.subr.mxu0 0.0
        %5995 = vmatpush2.msra.mxu0 0.0
        %5996 = vmatprep.subr.mxu0 0.0
        %5997 = vmatpush2.msra.mxu0 0.0
        %5998 = vmatprep.subr.mxu0 0.0
        %5999 = vmatpush2.msra.mxu0 0.0
        %6000 = vmatprep.subr.mxu0 0.0
        %6001 = vmatpush2.msra.mxu0 0.0
        %6002 = vmatprep.subr.mxu0 0.0
        %6003 = vmatpush2.msra.mxu0 0.0
        %6004 = vmatprep.subr.mxu0 0.0
        %6005 = vmatpush2.msra.mxu0 0.0
        %6006 = vmatprep.subr.mxu0 0.0
        %6007 = vmatpush2.msra.mxu0 0.0
        %6008 = vmatprep.subr.mxu0 0.0
        %6009 = vmatpush2.msra.mxu0 0.0
        %6010 = vmatprep.subr.mxu0 0.0
        %6011 = vmatpush2.msra.mxu0 0.0
        %6012 = vmatprep.subr.mxu0 0.0
        %6013 = vmatpush2.msra.mxu0 0.0
        %6014 = vmatprep.mubr.f32.mxu0 0.0
        %6015 = vmatmul.mubr.f32.gmra.mxu0 %v5948
        %v6016 = vpop.f32.mrf.mxu0
        %v6017 = vadd.f32 0.0, %v6016
        %v6018 = vpop.f32.mrf.mxu0
        %6019 = vdwg.mxu0
        %v6021 = vrot.slane %v6017, 3
        %v6023 = vadd.f32 %v5412, %v6021
        %v6024 = vsub.f32 0.0, %v6023
        %v6025 = vmul.f32 %v6024, 1.442695
        %v6026 = vpow.pop %v6025
        %v6027 = vadd.f32 %v6026, 1.0
        %v6028 = vrcp.pop %v6027
        %v6029 = vtanh.pop %v6023
        %v6031 = vrot.slane %v5937, 7
        %v6033 = vmul.f32 %v6028, %v6031
        %6035 = vrot.lane.b32.xlu0 %v6029, 64
        %v6036 = vpop.permute.xlu0 %6035
        %v6038 = vmul.f32 %v6028, %v6036
        %6040 = vrot.lane.b32.xlu0 %v6038, 32
        %v6041 = vpop.permute.xlu0 %6040
        %v6043 = vadd.f32 %v6033, %v6041
        %v6044 = vtanh.pop %v6043
        %6046 = vrot.lane.b32.xlu0 %v6044, 64
        %v6047 = vpop.permute.xlu0 %6046
        %v6049 = vmul.f32 %v6028, %v6047
        %v6051 = vrot.slane %v6049, 5
        %6052 = vrot.lane.b32.xlu0 %v6051, 32
        %v6053 = vpop.permute.xlu0 %6052
        %v6054 = vsel %vm5222, %v6053, 0
        %6056 = vmatprep.subr.mxu0 0.0
        %6057 = vmatpush1.msra.mxu0 0.0
        %6058 = vmatprep.subr.mxu0 0.0
        %6059 = vmatpush1.msra.mxu0 0.0
        %6060 = vmatprep.subr.mxu0 0.0
        %6061 = vmatpush1.msra.mxu0 0.0
        %6062 = vmatprep.subr.mxu0 0.0
        %6063 = vmatpush1.msra.mxu0 0.0
        %6064 = vmatprep.subr.mxu0 0.0
        %6065 = vmatpush1.msra.mxu0 0.0
        %6066 = vmatprep.subr.mxu0 0.0
        %6067 = vmatpush1.msra.mxu0 0.0
        %6068 = vmatprep.subr.mxu0 0.0
        %6069 = vmatpush1.msra.mxu0 0.0
        %6070 = vmatprep.subr.mxu0 0.0
        %6071 = vmatpush1.msra.mxu0 0.0
        %6072 = vmatprep.subr.mxu0 0.0
        %6073 = vmatpush1.msra.mxu0 0.0
        %6074 = vmatprep.subr.mxu0 0.0
        %6075 = vmatpush1.msra.mxu0 0.0
        %6076 = vmatprep.subr.mxu0 0.0
        %6077 = vmatpush1.msra.mxu0 0.0
        %6078 = vmatprep.subr.mxu0 0.0
        %6079 = vmatpush1.msra.mxu0 0.0
        %6080 = vmatprep.subr.mxu0 0.0
        %6081 = vmatpush1.msra.mxu0 %v5423
        %6082 = vmatprep.subr.mxu0 0.0
        %6083 = vmatpush1.msra.mxu0 %v5422
        %6084 = vmatprep.subr.mxu0 0.0
        %6085 = vmatpush1.msra.mxu0 %v5421
        %6086 = vmatprep.subr.mxu0 0.0
        %6087 = vmatpush1.msra.mxu0 %v5420
        %6088 = vmatprep.subr.mxu0 0.0
        %6089 = vmatpush2.msra.mxu0 0.0
        %6090 = vmatprep.subr.mxu0 0.0
        %6091 = vmatpush2.msra.mxu0 0.0
        %6092 = vmatprep.subr.mxu0 0.0
        %6093 = vmatpush2.msra.mxu0 0.0
        %6094 = vmatprep.subr.mxu0 0.0
        %6095 = vmatpush2.msra.mxu0 0.0
        %6096 = vmatprep.subr.mxu0 0.0
        %6097 = vmatpush2.msra.mxu0 0.0
        %6098 = vmatprep.subr.mxu0 0.0
        %6099 = vmatpush2.msra.mxu0 0.0
        %6100 = vmatprep.subr.mxu0 0.0
        %6101 = vmatpush2.msra.mxu0 0.0
        %6102 = vmatprep.subr.mxu0 0.0
        %6103 = vmatpush2.msra.mxu0 0.0
        %6104 = vmatprep.subr.mxu0 0.0
        %6105 = vmatpush2.msra.mxu0 0.0
        %6106 = vmatprep.subr.mxu0 0.0
        %6107 = vmatpush2.msra.mxu0 0.0
        %6108 = vmatprep.subr.mxu0 0.0
        %6109 = vmatpush2.msra.mxu0 0.0
        %6110 = vmatprep.subr.mxu0 0.0
        %6111 = vmatpush2.msra.mxu0 0.0
        %6112 = vmatprep.subr.mxu0 0.0
        %6113 = vmatpush2.msra.mxu0 0.0
        %6114 = vmatprep.subr.mxu0 0.0
        %6115 = vmatpush2.msra.mxu0 0.0
        %6116 = vmatprep.subr.mxu0 0.0
        %6117 = vmatpush2.msra.mxu0 0.0
        %6118 = vmatprep.subr.mxu0 0.0
        %6119 = vmatpush2.msra.mxu0 0.0
        %6120 = vmatprep.mubr.f32.mxu0 0.0
        %6121 = vmatmul.mubr.f32.gmra.mxu0 %v6054
        %v6122 = vpop.f32.mrf.mxu0
        %v6123 = vadd.f32 0.0, %v6122
        %v6124 = vpop.f32.mrf.mxu0
        %6125 = vdwg.mxu0
        %v6127 = vrot.slane %v6123, 2
        %v6129 = vadd.f32 %v5412, %v6127
        %v6130 = vsub.f32 0.0, %v6129
        %v6131 = vmul.f32 %v6130, 1.442695
        %v6132 = vpow.pop %v6131
        %v6133 = vadd.f32 %v6132, 1.0
        %v6134 = vrcp.pop %v6133
        %v6135 = vtanh.pop %v6129
        %v6137 = vrot.slane %v6043, 7
        %v6139 = vmul.f32 %v6134, %v6137
        %6141 = vrot.lane.b32.xlu0 %v6135, 64
        %v6142 = vpop.permute.xlu0 %6141
        %v6144 = vmul.f32 %v6134, %v6142
        %6146 = vrot.lane.b32.xlu0 %v6144, 32
        %v6147 = vpop.permute.xlu0 %6146
        %v6149 = vadd.f32 %v6139, %v6147
        %v6150 = vtanh.pop %v6149
        %6152 = vrot.lane.b32.xlu0 %v6150, 64
        %v6153 = vpop.permute.xlu0 %6152
        %v6155 = vmul.f32 %v6134, %v6153
        %v6157 = vrot.slane %v6155, 6
        %6158 = vrot.lane.b32.xlu0 %v6157, 32
        %v6159 = vpop.permute.xlu0 %6158
        %v6160 = vsel %vm5222, %v6159, 0
        %6162 = vmatprep.subr.mxu0 0.0
        %6163 = vmatpush1.msra.mxu0 0.0
        %6164 = vmatprep.subr.mxu0 0.0
        %6165 = vmatpush1.msra.mxu0 0.0
        %6166 = vmatprep.subr.mxu0 0.0
        %6167 = vmatpush1.msra.mxu0 0.0
        %6168 = vmatprep.subr.mxu0 0.0
        %6169 = vmatpush1.msra.mxu0 0.0
        %6170 = vmatprep.subr.mxu0 0.0
        %6171 = vmatpush1.msra.mxu0 0.0
        %6172 = vmatprep.subr.mxu0 0.0
        %6173 = vmatpush1.msra.mxu0 0.0
        %6174 = vmatprep.subr.mxu0 0.0
        %6175 = vmatpush1.msra.mxu0 0.0
        %6176 = vmatprep.subr.mxu0 0.0
        %6177 = vmatpush1.msra.mxu0 0.0
        %6178 = vmatprep.subr.mxu0 0.0
        %6179 = vmatpush1.msra.mxu0 0.0
        %6180 = vmatprep.subr.mxu0 0.0
        %6181 = vmatpush1.msra.mxu0 0.0
        %6182 = vmatprep.subr.mxu0 0.0
        %6183 = vmatpush1.msra.mxu0 0.0
        %6184 = vmatprep.subr.mxu0 0.0
        %6185 = vmatpush1.msra.mxu0 0.0
        %6186 = vmatprep.subr.mxu0 0.0
        %6187 = vmatpush1.msra.mxu0 %v5423
        %6188 = vmatprep.subr.mxu0 0.0
        %6189 = vmatpush1.msra.mxu0 %v5422
        %6190 = vmatprep.subr.mxu0 0.0
        %6191 = vmatpush1.msra.mxu0 %v5421
        %6192 = vmatprep.subr.mxu0 0.0
        %6193 = vmatpush1.msra.mxu0 %v5420
        %6194 = vmatprep.subr.mxu0 0.0
        %6195 = vmatpush2.msra.mxu0 0.0
        %6196 = vmatprep.subr.mxu0 0.0
        %6197 = vmatpush2.msra.mxu0 0.0
        %6198 = vmatprep.subr.mxu0 0.0
        %6199 = vmatpush2.msra.mxu0 0.0
        %6200 = vmatprep.subr.mxu0 0.0
        %6201 = vmatpush2.msra.mxu0 0.0
        %6202 = vmatprep.subr.mxu0 0.0
        %6203 = vmatpush2.msra.mxu0 0.0
        %6204 = vmatprep.subr.mxu0 0.0
        %6205 = vmatpush2.msra.mxu0 0.0
        %6206 = vmatprep.subr.mxu0 0.0
        %6207 = vmatpush2.msra.mxu0 0.0
        %6208 = vmatprep.subr.mxu0 0.0
        %6209 = vmatpush2.msra.mxu0 0.0
        %6210 = vmatprep.subr.mxu0 0.0
        %6211 = vmatpush2.msra.mxu0 0.0
        %6212 = vmatprep.subr.mxu0 0.0
        %6213 = vmatpush2.msra.mxu0 0.0
        %6214 = vmatprep.subr.mxu0 0.0
        %6215 = vmatpush2.msra.mxu0 0.0
        %6216 = vmatprep.subr.mxu0 0.0
        %6217 = vmatpush2.msra.mxu0 0.0
        %6218 = vmatprep.subr.mxu0 0.0
        %6219 = vmatpush2.msra.mxu0 0.0
        %6220 = vmatprep.subr.mxu0 0.0
        %6221 = vmatpush2.msra.mxu0 0.0
        %6222 = vmatprep.subr.mxu0 0.0
        %6223 = vmatpush2.msra.mxu0 0.0
        %6224 = vmatprep.subr.mxu0 0.0
        %6225 = vmatpush2.msra.mxu0 0.0
        %6226 = vmatprep.mubr.f32.mxu0 0.0
        %6227 = vmatmul.mubr.f32.gmra.mxu0 %v6160
        %v6228 = vpop.f32.mrf.mxu0
        %v6229 = vadd.f32 0.0, %v6228
        %v6230 = vpop.f32.mrf.mxu0
        %6231 = vdwg.mxu0
        %v6233 = vrot.slane %v6229, 1
        %v6235 = vadd.f32 %v5412, %v6233
        %v6236 = vsub.f32 0.0, %v6235
        %v6237 = vmul.f32 %v6236, 1.442695
        %v6238 = vpow.pop %v6237
        %v6239 = vadd.f32 %v6238, 1.0
        %v6240 = vrcp.pop %v6239
        %v6241 = vtanh.pop %v6235
        %v6243 = vrot.slane %v6149, 7
        %v6245 = vmul.f32 %v6240, %v6243
        %6247 = vrot.lane.b32.xlu0 %v6241, 64
        %v6248 = vpop.permute.xlu0 %6247
        %v6250 = vmul.f32 %v6240, %v6248
        %6252 = vrot.lane.b32.xlu0 %v6250, 32
        %v6253 = vpop.permute.xlu0 %6252
        %v6255 = vadd.f32 %v6245, %v6253
        %v6256 = vtanh.pop %v6255
        %6258 = vrot.lane.b32.xlu0 %v6256, 64
        %v6259 = vpop.permute.xlu0 %6258
        %v6261 = vmul.f32 %v6240, %v6259
        %v6263 = vrot.slane %v6261, 7
        %6264 = vrot.lane.b32.xlu0 %v6263, 32
        %v6265 = vpop.permute.xlu0 %6264
        %v6266 = vsel %vm5222, %v6265, 0
        %6268 = vmatprep.subr.mxu0 0.0
        %6269 = vmatpush1.msra.mxu0 0.0
        %6270 = vmatprep.subr.mxu0 0.0
        %6271 = vmatpush1.msra.mxu0 0.0
        %6272 = vmatprep.subr.mxu0 0.0
        %6273 = vmatpush1.msra.mxu0 0.0
        %6274 = vmatprep.subr.mxu0 0.0
        %6275 = vmatpush1.msra.mxu0 0.0
        %6276 = vmatprep.subr.mxu0 0.0
        %6277 = vmatpush1.msra.mxu0 0.0
        %6278 = vmatprep.subr.mxu0 0.0
        %6279 = vmatpush1.msra.mxu0 0.0
        %6280 = vmatprep.subr.mxu0 0.0
        %6281 = vmatpush1.msra.mxu0 0.0
        %6282 = vmatprep.subr.mxu0 0.0
        %6283 = vmatpush1.msra.mxu0 0.0
        %6284 = vmatprep.subr.mxu0 0.0
        %6285 = vmatpush1.msra.mxu0 0.0
        %6286 = vmatprep.subr.mxu0 0.0
        %6287 = vmatpush1.msra.mxu0 0.0
        %6288 = vmatprep.subr.mxu0 0.0
        %6289 = vmatpush1.msra.mxu0 0.0
        %6290 = vmatprep.subr.mxu0 0.0
        %6291 = vmatpush1.msra.mxu0 0.0
        %6292 = vmatprep.subr.mxu0 0.0
        %6293 = vmatpush1.msra.mxu0 %v5423
        %6294 = vmatprep.subr.mxu0 0.0
        %6295 = vmatpush1.msra.mxu0 %v5422
        %6296 = vmatprep.subr.mxu0 0.0
        %6297 = vmatpush1.msra.mxu0 %v5421
        %6298 = vmatprep.subr.mxu0 0.0
        %6299 = vmatpush1.msra.mxu0 %v5420
        %6300 = vmatprep.subr.mxu0 0.0
        %6301 = vmatpush2.msra.mxu0 0.0
        %6302 = vmatprep.subr.mxu0 0.0
        %6303 = vmatpush2.msra.mxu0 0.0
        %6304 = vmatprep.subr.mxu0 0.0
        %6305 = vmatpush2.msra.mxu0 0.0
        %6306 = vmatprep.subr.mxu0 0.0
        %6307 = vmatpush2.msra.mxu0 0.0
        %6308 = vmatprep.subr.mxu0 0.0
        %6309 = vmatpush2.msra.mxu0 0.0
        %6310 = vmatprep.subr.mxu0 0.0
        %6311 = vmatpush2.msra.mxu0 0.0
        %6312 = vmatprep.subr.mxu0 0.0
        %6313 = vmatpush2.msra.mxu0 0.0
        %6314 = vmatprep.subr.mxu0 0.0
        %6315 = vmatpush2.msra.mxu0 0.0
        %6316 = vmatprep.subr.mxu0 0.0
        %6317 = vmatpush2.msra.mxu0 0.0
        %6318 = vmatprep.subr.mxu0 0.0
        %6319 = vmatpush2.msra.mxu0 0.0
        %6320 = vmatprep.subr.mxu0 0.0
        %6321 = vmatpush2.msra.mxu0 0.0
        %6322 = vmatprep.subr.mxu0 0.0
        %6323 = vmatpush2.msra.mxu0 0.0
        %6324 = vmatprep.subr.mxu0 0.0
        %6325 = vmatpush2.msra.mxu0 0.0
        %6326 = vmatprep.subr.mxu0 0.0
        %6327 = vmatpush2.msra.mxu0 0.0
        %6328 = vmatprep.subr.mxu0 0.0
        %6329 = vmatpush2.msra.mxu0 0.0
        %6330 = vmatprep.subr.mxu0 0.0
        %6331 = vmatpush2.msra.mxu0 0.0
        %6332 = vmatprep.mubr.f32.mxu0 0.0
        %6333 = vmatmul.mubr.f32.gmra.mxu0 %v6266
        %v6334 = vpop.f32.mrf.mxu0
        %v6335 = vadd.f32 0.0, %v6334
        %v6336 = vpop.f32.mrf.mxu0
        %6337 = vdwg.mxu0
        %v6338 = vadd.f32 %v5417, %v6335
        %v6339 = vsub.f32 0.0, %v6338
        %v6340 = vmul.f32 %v6339, 1.442695
        %v6341 = vpow.pop %v6340
        %v6342 = vadd.f32 %v6341, 1.0
        %v6343 = vrcp.pop %v6342
        %v6344 = vtanh.pop %v6338
        %v6346 = vrot.slane %v6255, 7
        %v6348 = vmul.f32 %v6343, %v6346
        %6350 = vrot.lane.b32.xlu0 %v6344, 64
        %v6351 = vpop.permute.xlu0 %6350
        %v6353 = vmul.f32 %v6343, %v6351
        %6355 = vrot.lane.b32.xlu0 %v6353, 32
        %v6356 = vpop.permute.xlu0 %6355
        %v6358 = vadd.f32 %v6348, %v6356
        %v6359 = vtanh.pop %v6358
        %6361 = vrot.lane.b32.xlu0 %v6359, 64
        %v6362 = vpop.permute.xlu0 %6361
        %v6364 = vmul.f32 %v6343, %v6362
        %6366 = vrot.lane.b32.xlu0 %v6364, 32
        %v6367 = vpop.permute.xlu0 %6366
        %v6368 = vsel %vm5222, %v6367, 0
        %6370 = vmatprep.subr.mxu0 0.0
        %6371 = vmatpush1.msra.mxu0 0.0
        %6372 = vmatprep.subr.mxu0 0.0
        %6373 = vmatpush1.msra.mxu0 0.0
        %6374 = vmatprep.subr.mxu0 0.0
        %6375 = vmatpush1.msra.mxu0 0.0
        %6376 = vmatprep.subr.mxu0 0.0
        %6377 = vmatpush1.msra.mxu0 0.0
        %6378 = vmatprep.subr.mxu0 0.0
        %6379 = vmatpush1.msra.mxu0 0.0
        %6380 = vmatprep.subr.mxu0 0.0
        %6381 = vmatpush1.msra.mxu0 0.0
        %6382 = vmatprep.subr.mxu0 0.0
        %6383 = vmatpush1.msra.mxu0 0.0
        %6384 = vmatprep.subr.mxu0 0.0
        %6385 = vmatpush1.msra.mxu0 0.0
        %6386 = vmatprep.subr.mxu0 0.0
        %6387 = vmatpush1.msra.mxu0 0.0
        %6388 = vmatprep.subr.mxu0 0.0
        %6389 = vmatpush1.msra.mxu0 0.0
        %6390 = vmatprep.subr.mxu0 0.0
        %6391 = vmatpush1.msra.mxu0 0.0
        %6392 = vmatprep.subr.mxu0 0.0
        %6393 = vmatpush1.msra.mxu0 0.0
        %6394 = vmatprep.subr.mxu0 0.0
        %6395 = vmatpush1.msra.mxu0 %v5423
        %6396 = vmatprep.subr.mxu0 0.0
        %6397 = vmatpush1.msra.mxu0 %v5422
        %6398 = vmatprep.subr.mxu0 0.0
        %6399 = vmatpush1.msra.mxu0 %v5421
        %6400 = vmatprep.subr.mxu0 0.0
        %6401 = vmatpush1.msra.mxu0 %v5420
        %6402 = vmatprep.subr.mxu0 0.0
        %6403 = vmatpush2.msra.mxu0 0.0
        %6404 = vmatprep.subr.mxu0 0.0
        %6405 = vmatpush2.msra.mxu0 0.0
        %6406 = vmatprep.subr.mxu0 0.0
        %6407 = vmatpush2.msra.mxu0 0.0
        %6408 = vmatprep.subr.mxu0 0.0
        %6409 = vmatpush2.msra.mxu0 0.0
        %6410 = vmatprep.subr.mxu0 0.0
        %6411 = vmatpush2.msra.mxu0 0.0
        %6412 = vmatprep.subr.mxu0 0.0
        %6413 = vmatpush2.msra.mxu0 0.0
        %6414 = vmatprep.subr.mxu0 0.0
        %6415 = vmatpush2.msra.mxu0 0.0
        %6416 = vmatprep.subr.mxu0 0.0
        %6417 = vmatpush2.msra.mxu0 0.0
        %6418 = vmatprep.subr.mxu0 0.0
        %6419 = vmatpush2.msra.mxu0 0.0
        %6420 = vmatprep.subr.mxu0 0.0
        %6421 = vmatpush2.msra.mxu0 0.0
        %6422 = vmatprep.subr.mxu0 0.0
        %6423 = vmatpush2.msra.mxu0 0.0
        %6424 = vmatprep.subr.mxu0 0.0
        %6425 = vmatpush2.msra.mxu0 0.0
        %6426 = vmatprep.subr.mxu0 0.0
        %6427 = vmatpush2.msra.mxu0 0.0
        %6428 = vmatprep.subr.mxu0 0.0
        %6429 = vmatpush2.msra.mxu0 0.0
        %6430 = vmatprep.subr.mxu0 0.0
        %6431 = vmatpush2.msra.mxu0 0.0
        %6432 = vmatprep.subr.mxu0 0.0
        %6433 = vmatpush2.msra.mxu0 0.0
        %6434 = vmatprep.mubr.f32.mxu0 0.0
        %6435 = vmatmul.mubr.f32.gmra.mxu0 %v6368
        %v6436 = vpop.f32.mrf.mxu0
        %v6437 = vadd.f32 0.0, %v6436
        %v6438 = vpop.f32.mrf.mxu0
        %6439 = vdwg.mxu0
        %v6441 = vrot.slane %v6437, 7
        %v6443 = vadd.f32 %v5417, %v6441
        %v6444 = vsub.f32 0.0, %v6443
        %v6445 = vmul.f32 %v6444, 1.442695
        %v6446 = vpow.pop %v6445
        %v6447 = vadd.f32 %v6446, 1.0
        %v6448 = vrcp.pop %v6447
        %v6449 = vtanh.pop %v6443
        %v6451 = vrot.slane %v6358, 7
        %v6453 = vmul.f32 %v6448, %v6451
        %6455 = vrot.lane.b32.xlu0 %v6449, 64
        %v6456 = vpop.permute.xlu0 %6455
        %v6458 = vmul.f32 %v6448, %v6456
        %6460 = vrot.lane.b32.xlu0 %v6458, 32
        %v6461 = vpop.permute.xlu0 %6460
        %v6463 = vadd.f32 %v6453, %v6461
        %v6464 = vtanh.pop %v6463
        %6466 = vrot.lane.b32.xlu0 %v6464, 64
        %v6467 = vpop.permute.xlu0 %6466
        %v6469 = vmul.f32 %v6448, %v6467
        %v6471 = vrot.slane %v6469, 1
        %6472 = vrot.lane.b32.xlu0 %v6471, 32
        %v6473 = vpop.permute.xlu0 %6472
        %v6474 = vsel %vm5222, %v6473, 0
        %6476 = vmatprep.subr.mxu0 0.0
        %6477 = vmatpush1.msra.mxu0 0.0
        %6478 = vmatprep.subr.mxu0 0.0
        %6479 = vmatpush1.msra.mxu0 0.0
        %6480 = vmatprep.subr.mxu0 0.0
        %6481 = vmatpush1.msra.mxu0 0.0
        %6482 = vmatprep.subr.mxu0 0.0
        %6483 = vmatpush1.msra.mxu0 0.0
        %6484 = vmatprep.subr.mxu0 0.0
        %6485 = vmatpush1.msra.mxu0 0.0
        %6486 = vmatprep.subr.mxu0 0.0
        %6487 = vmatpush1.msra.mxu0 0.0
        %6488 = vmatprep.subr.mxu0 0.0
        %6489 = vmatpush1.msra.mxu0 0.0
        %6490 = vmatprep.subr.mxu0 0.0
        %6491 = vmatpush1.msra.mxu0 0.0
        %6492 = vmatprep.subr.mxu0 0.0
        %6493 = vmatpush1.msra.mxu0 0.0
        %6494 = vmatprep.subr.mxu0 0.0
        %6495 = vmatpush1.msra.mxu0 0.0
        %6496 = vmatprep.subr.mxu0 0.0
        %6497 = vmatpush1.msra.mxu0 0.0
        %6498 = vmatprep.subr.mxu0 0.0
        %6499 = vmatpush1.msra.mxu0 0.0
        %6500 = vmatprep.subr.mxu0 0.0
        %6501 = vmatpush1.msra.mxu0 %v5423
        %6502 = vmatprep.subr.mxu0 0.0
        %6503 = vmatpush1.msra.mxu0 %v5422
        %6504 = vmatprep.subr.mxu0 0.0
        %6505 = vmatpush1.msra.mxu0 %v5421
        %6506 = vmatprep.subr.mxu0 0.0
        %6507 = vmatpush1.msra.mxu0 %v5420
        %6508 = vmatprep.subr.mxu0 0.0
        %6509 = vmatpush2.msra.mxu0 0.0
        %6510 = vmatprep.subr.mxu0 0.0
        %6511 = vmatpush2.msra.mxu0 0.0
        %6512 = vmatprep.subr.mxu0 0.0
        %6513 = vmatpush2.msra.mxu0 0.0
        %6514 = vmatprep.subr.mxu0 0.0
        %6515 = vmatpush2.msra.mxu0 0.0
        %6516 = vmatprep.subr.mxu0 0.0
        %6517 = vmatpush2.msra.mxu0 0.0
        %6518 = vmatprep.subr.mxu0 0.0
        %6519 = vmatpush2.msra.mxu0 0.0
        %6520 = vmatprep.subr.mxu0 0.0
        %6521 = vmatpush2.msra.mxu0 0.0
        %6522 = vmatprep.subr.mxu0 0.0
        %6523 = vmatpush2.msra.mxu0 0.0
        %6524 = vmatprep.subr.mxu0 0.0
        %6525 = vmatpush2.msra.mxu0 0.0
        %6526 = vmatprep.subr.mxu0 0.0
        %6527 = vmatpush2.msra.mxu0 0.0
        %6528 = vmatprep.subr.mxu0 0.0
        %6529 = vmatpush2.msra.mxu0 0.0
        %6530 = vmatprep.subr.mxu0 0.0
        %6531 = vmatpush2.msra.mxu0 0.0
        %6532 = vmatprep.subr.mxu0 0.0
        %6533 = vmatpush2.msra.mxu0 0.0
        %6534 = vmatprep.subr.mxu0 0.0
        %6535 = vmatpush2.msra.mxu0 0.0
        %6536 = vmatprep.subr.mxu0 0.0
        %6537 = vmatpush2.msra.mxu0 0.0
        %6538 = vmatprep.subr.mxu0 0.0
        %6539 = vmatpush2.msra.mxu0 0.0
        %6540 = vmatprep.mubr.f32.mxu0 0.0
        %6541 = vmatmul.mubr.f32.gmra.mxu0 %v6474
        %v6542 = vpop.f32.mrf.mxu0
        %v6543 = vadd.f32 0.0, %v6542
        %v6544 = vpop.f32.mrf.mxu0
        %6545 = vdwg.mxu0
        %v6547 = vrot.slane %v6543, 6
        %v6549 = vadd.f32 %v5417, %v6547
        %v6550 = vsub.f32 0.0, %v6549
        %v6551 = vmul.f32 %v6550, 1.442695
        %v6552 = vpow.pop %v6551
        %v6553 = vadd.f32 %v6552, 1.0
        %v6554 = vrcp.pop %v6553
        %v6555 = vtanh.pop %v6549
        %v6557 = vrot.slane %v6463, 7
        %v6559 = vmul.f32 %v6554, %v6557
        %6561 = vrot.lane.b32.xlu0 %v6555, 64
        %v6562 = vpop.permute.xlu0 %6561
        %v6564 = vmul.f32 %v6554, %v6562
        %6566 = vrot.lane.b32.xlu0 %v6564, 32
        %v6567 = vpop.permute.xlu0 %6566
        %v6569 = vadd.f32 %v6559, %v6567
        %v6570 = vtanh.pop %v6569
        %6572 = vrot.lane.b32.xlu0 %v6570, 64
        %v6573 = vpop.permute.xlu0 %6572
        %v6575 = vmul.f32 %v6554, %v6573
        %v6577 = vrot.slane %v6575, 2
        %6578 = vrot.lane.b32.xlu0 %v6577, 32
        %v6579 = vpop.permute.xlu0 %6578
        %v6580 = vsel %vm5222, %v6579, 0
        %6582 = vmatprep.subr.mxu0 0.0
        %6583 = vmatpush1.msra.mxu0 0.0
        %6584 = vmatprep.subr.mxu0 0.0
        %6585 = vmatpush1.msra.mxu0 0.0
        %6586 = vmatprep.subr.mxu0 0.0
        %6587 = vmatpush1.msra.mxu0 0.0
        %6588 = vmatprep.subr.mxu0 0.0
        %6589 = vmatpush1.msra.mxu0 0.0
        %6590 = vmatprep.subr.mxu0 0.0
        %6591 = vmatpush1.msra.mxu0 0.0
        %6592 = vmatprep.subr.mxu0 0.0
        %6593 = vmatpush1.msra.mxu0 0.0
        %6594 = vmatprep.subr.mxu0 0.0
        %6595 = vmatpush1.msra.mxu0 0.0
        %6596 = vmatprep.subr.mxu0 0.0
        %6597 = vmatpush1.msra.mxu0 0.0
        %6598 = vmatprep.subr.mxu0 0.0
        %6599 = vmatpush1.msra.mxu0 0.0
        %6600 = vmatprep.subr.mxu0 0.0
        %6601 = vmatpush1.msra.mxu0 0.0
        %6602 = vmatprep.subr.mxu0 0.0
        %6603 = vmatpush1.msra.mxu0 0.0
        %6604 = vmatprep.subr.mxu0 0.0
        %6605 = vmatpush1.msra.mxu0 0.0
        %6606 = vmatprep.subr.mxu0 0.0
        %6607 = vmatpush1.msra.mxu0 %v5423
        %6608 = vmatprep.subr.mxu0 0.0
        %6609 = vmatpush1.msra.mxu0 %v5422
        %6610 = vmatprep.subr.mxu0 0.0
        %6611 = vmatpush1.msra.mxu0 %v5421
        %6612 = vmatprep.subr.mxu0 0.0
        %6613 = vmatpush1.msra.mxu0 %v5420
        %6614 = vmatprep.subr.mxu0 0.0
        %6615 = vmatpush2.msra.mxu0 0.0
        %6616 = vmatprep.subr.mxu0 0.0
        %6617 = vmatpush2.msra.mxu0 0.0
        %6618 = vmatprep.subr.mxu0 0.0
        %6619 = vmatpush2.msra.mxu0 0.0
        %6620 = vmatprep.subr.mxu0 0.0
        %6621 = vmatpush2.msra.mxu0 0.0
        %6622 = vmatprep.subr.mxu0 0.0
        %6623 = vmatpush2.msra.mxu0 0.0
        %6624 = vmatprep.subr.mxu0 0.0
        %6625 = vmatpush2.msra.mxu0 0.0
        %6626 = vmatprep.subr.mxu0 0.0
        %6627 = vmatpush2.msra.mxu0 0.0
        %6628 = vmatprep.subr.mxu0 0.0
        %6629 = vmatpush2.msra.mxu0 0.0
        %6630 = vmatprep.subr.mxu0 0.0
        %6631 = vmatpush2.msra.mxu0 0.0
        %6632 = vmatprep.subr.mxu0 0.0
        %6633 = vmatpush2.msra.mxu0 0.0
        %6634 = vmatprep.subr.mxu0 0.0
        %6635 = vmatpush2.msra.mxu0 0.0
        %6636 = vmatprep.subr.mxu0 0.0
        %6637 = vmatpush2.msra.mxu0 0.0
        %6638 = vmatprep.subr.mxu0 0.0
        %6639 = vmatpush2.msra.mxu0 0.0
        %6640 = vmatprep.subr.mxu0 0.0
        %6641 = vmatpush2.msra.mxu0 0.0
        %6642 = vmatprep.subr.mxu0 0.0
        %6643 = vmatpush2.msra.mxu0 0.0
        %6644 = vmatprep.subr.mxu0 0.0
        %6645 = vmatpush2.msra.mxu0 0.0
        %6646 = vmatprep.mubr.f32.mxu0 0.0
        %6647 = vmatmul.mubr.f32.gmra.mxu0 %v6580
        %v6648 = vpop.f32.mrf.mxu0
        %v6649 = vadd.f32 0.0, %v6648
        %v6650 = vpop.f32.mrf.mxu0
        %6651 = vdwg.mxu0
        %v6653 = vrot.slane %v6649, 5
        %v6655 = vadd.f32 %v5417, %v6653
        %v6656 = vsub.f32 0.0, %v6655
        %v6657 = vmul.f32 %v6656, 1.442695
        %v6658 = vpow.pop %v6657
        %v6659 = vadd.f32 %v6658, 1.0
        %v6660 = vrcp.pop %v6659
        %v6661 = vtanh.pop %v6655
        %v6663 = vrot.slane %v6569, 7
        %v6665 = vmul.f32 %v6660, %v6663
        %6667 = vrot.lane.b32.xlu0 %v6661, 64
        %v6668 = vpop.permute.xlu0 %6667
        %v6670 = vmul.f32 %v6660, %v6668
        %6672 = vrot.lane.b32.xlu0 %v6670, 32
        %v6673 = vpop.permute.xlu0 %6672
        %v6675 = vadd.f32 %v6665, %v6673
        %v6676 = vtanh.pop %v6675
        %6678 = vrot.lane.b32.xlu0 %v6676, 64
        %v6679 = vpop.permute.xlu0 %6678
        %v6681 = vmul.f32 %v6660, %v6679
        %v6683 = vrot.slane %v6681, 3
        %6684 = vrot.lane.b32.xlu0 %v6683, 32
        %v6685 = vpop.permute.xlu0 %6684
        %v6686 = vsel %vm5222, %v6685, 0
        %6688 = vmatprep.subr.mxu0 0.0
        %6689 = vmatpush1.msra.mxu0 0.0
        %6690 = vmatprep.subr.mxu0 0.0
        %6691 = vmatpush1.msra.mxu0 0.0
        %6692 = vmatprep.subr.mxu0 0.0
        %6693 = vmatpush1.msra.mxu0 0.0
        %6694 = vmatprep.subr.mxu0 0.0
        %6695 = vmatpush1.msra.mxu0 0.0
        %6696 = vmatprep.subr.mxu0 0.0
        %6697 = vmatpush1.msra.mxu0 0.0
        %6698 = vmatprep.subr.mxu0 0.0
        %6699 = vmatpush1.msra.mxu0 0.0
        %6700 = vmatprep.subr.mxu0 0.0
        %6701 = vmatpush1.msra.mxu0 0.0
        %6702 = vmatprep.subr.mxu0 0.0
        %6703 = vmatpush1.msra.mxu0 0.0
        %6704 = vmatprep.subr.mxu0 0.0
        %6705 = vmatpush1.msra.mxu0 0.0
        %6706 = vmatprep.subr.mxu0 0.0
        %6707 = vmatpush1.msra.mxu0 0.0
        %6708 = vmatprep.subr.mxu0 0.0
        %6709 = vmatpush1.msra.mxu0 0.0
        %6710 = vmatprep.subr.mxu0 0.0
        %6711 = vmatpush1.msra.mxu0 0.0
        %6712 = vmatprep.subr.mxu0 0.0
        %6713 = vmatpush1.msra.mxu0 %v5423
        %6714 = vmatprep.subr.mxu0 0.0
        %6715 = vmatpush1.msra.mxu0 %v5422
        %6716 = vmatprep.subr.mxu0 0.0
        %6717 = vmatpush1.msra.mxu0 %v5421
        %6718 = vmatprep.subr.mxu0 0.0
        %6719 = vmatpush1.msra.mxu0 %v5420
        %6720 = vmatprep.subr.mxu0 0.0
        %6721 = vmatpush2.msra.mxu0 0.0
        %6722 = vmatprep.subr.mxu0 0.0
        %6723 = vmatpush2.msra.mxu0 0.0
        %6724 = vmatprep.subr.mxu0 0.0
        %6725 = vmatpush2.msra.mxu0 0.0
        %6726 = vmatprep.subr.mxu0 0.0
        %6727 = vmatpush2.msra.mxu0 0.0
        %6728 = vmatprep.subr.mxu0 0.0
        %6729 = vmatpush2.msra.mxu0 0.0
        %6730 = vmatprep.subr.mxu0 0.0
        %6731 = vmatpush2.msra.mxu0 0.0
        %6732 = vmatprep.subr.mxu0 0.0
        %6733 = vmatpush2.msra.mxu0 0.0
        %6734 = vmatprep.subr.mxu0 0.0
        %6735 = vmatpush2.msra.mxu0 0.0
        %6736 = vmatprep.subr.mxu0 0.0
        %6737 = vmatpush2.msra.mxu0 0.0
        %6738 = vmatprep.subr.mxu0 0.0
        %6739 = vmatpush2.msra.mxu0 0.0
        %6740 = vmatprep.subr.mxu0 0.0
        %6741 = vmatpush2.msra.mxu0 0.0
        %6742 = vmatprep.subr.mxu0 0.0
        %6743 = vmatpush2.msra.mxu0 0.0
        %6744 = vmatprep.subr.mxu0 0.0
        %6745 = vmatpush2.msra.mxu0 0.0
        %6746 = vmatprep.subr.mxu0 0.0
        %6747 = vmatpush2.msra.mxu0 0.0
        %6748 = vmatprep.subr.mxu0 0.0
        %6749 = vmatpush2.msra.mxu0 0.0
        %6750 = vmatprep.subr.mxu0 0.0
        %6751 = vmatpush2.msra.mxu0 0.0
        %6752 = vmatprep.mubr.f32.mxu0 0.0
        %6753 = vmatmul.mubr.f32.gmra.mxu0 %v6686
        %v6754 = vpop.f32.mrf.mxu0
        %v6755 = vadd.f32 0.0, %v6754
        %v6756 = vpop.f32.mrf.mxu0
        %6757 = vdwg.mxu0
        %v6759 = vrot.slane %v6755, 4
        %v6761 = vadd.f32 %v5417, %v6759
        %v6762 = vsub.f32 0.0, %v6761
        %v6763 = vmul.f32 %v6762, 1.442695
        %v6764 = vpow.pop %v6763
        %v6765 = vadd.f32 %v6764, 1.0
        %v6766 = vrcp.pop %v6765
        %v6767 = vtanh.pop %v6761
        %v6769 = vrot.slane %v6675, 7
        %v6771 = vmul.f32 %v6766, %v6769
        %6773 = vrot.lane.b32.xlu0 %v6767, 64
        %v6774 = vpop.permute.xlu0 %6773
        %v6776 = vmul.f32 %v6766, %v6774
        %6778 = vrot.lane.b32.xlu0 %v6776, 32
        %v6779 = vpop.permute.xlu0 %6778
        %v6781 = vadd.f32 %v6771, %v6779
        %v6782 = vtanh.pop %v6781
        %6784 = vrot.lane.b32.xlu0 %v6782, 64
        %v6785 = vpop.permute.xlu0 %6784
        %v6787 = vmul.f32 %v6766, %v6785
        %v6789 = vrot.slane %v6787, 4
        %6790 = vrot.lane.b32.xlu0 %v6789, 32
        %v6791 = vpop.permute.xlu0 %6790
        %v6792 = vsel %vm5222, %v6791, 0
        %6794 = vmatprep.subr.mxu0 0.0
        %6795 = vmatpush1.msra.mxu0 0.0
        %6796 = vmatprep.subr.mxu0 0.0
        %6797 = vmatpush1.msra.mxu0 0.0
        %6798 = vmatprep.subr.mxu0 0.0
        %6799 = vmatpush1.msra.mxu0 0.0
        %6800 = vmatprep.subr.mxu0 0.0
        %6801 = vmatpush1.msra.mxu0 0.0
        %6802 = vmatprep.subr.mxu0 0.0
        %6803 = vmatpush1.msra.mxu0 0.0
        %6804 = vmatprep.subr.mxu0 0.0
        %6805 = vmatpush1.msra.mxu0 0.0
        %6806 = vmatprep.subr.mxu0 0.0
        %6807 = vmatpush1.msra.mxu0 0.0
        %6808 = vmatprep.subr.mxu0 0.0
        %6809 = vmatpush1.msra.mxu0 0.0
        %6810 = vmatprep.subr.mxu0 0.0
        %6811 = vmatpush1.msra.mxu0 0.0
        %6812 = vmatprep.subr.mxu0 0.0
        %6813 = vmatpush1.msra.mxu0 0.0
        %6814 = vmatprep.subr.mxu0 0.0
        %6815 = vmatpush1.msra.mxu0 0.0
        %6816 = vmatprep.subr.mxu0 0.0
        %6817 = vmatpush1.msra.mxu0 0.0
        %6818 = vmatprep.subr.mxu0 0.0
        %6819 = vmatpush1.msra.mxu0 %v5423
        %6820 = vmatprep.subr.mxu0 0.0
        %6821 = vmatpush1.msra.mxu0 %v5422
        %6822 = vmatprep.subr.mxu0 0.0
        %6823 = vmatpush1.msra.mxu0 %v5421
        %6824 = vmatprep.subr.mxu0 0.0
        %6825 = vmatpush1.msra.mxu0 %v5420
        %6826 = vmatprep.subr.mxu0 0.0
        %6827 = vmatpush2.msra.mxu0 0.0
        %6828 = vmatprep.subr.mxu0 0.0
        %6829 = vmatpush2.msra.mxu0 0.0
        %6830 = vmatprep.subr.mxu0 0.0
        %6831 = vmatpush2.msra.mxu0 0.0
        %6832 = vmatprep.subr.mxu0 0.0
        %6833 = vmatpush2.msra.mxu0 0.0
        %6834 = vmatprep.subr.mxu0 0.0
        %6835 = vmatpush2.msra.mxu0 0.0
        %6836 = vmatprep.subr.mxu0 0.0
        %6837 = vmatpush2.msra.mxu0 0.0
        %6838 = vmatprep.subr.mxu0 0.0
        %6839 = vmatpush2.msra.mxu0 0.0
        %6840 = vmatprep.subr.mxu0 0.0
        %6841 = vmatpush2.msra.mxu0 0.0
        %6842 = vmatprep.subr.mxu0 0.0
        %6843 = vmatpush2.msra.mxu0 0.0
        %6844 = vmatprep.subr.mxu0 0.0
        %6845 = vmatpush2.msra.mxu0 0.0
        %6846 = vmatprep.subr.mxu0 0.0
        %6847 = vmatpush2.msra.mxu0 0.0
        %6848 = vmatprep.subr.mxu0 0.0
        %6849 = vmatpush2.msra.mxu0 0.0
        %6850 = vmatprep.subr.mxu0 0.0
        %6851 = vmatpush2.msra.mxu0 0.0
        %6852 = vmatprep.subr.mxu0 0.0
        %6853 = vmatpush2.msra.mxu0 0.0
        %6854 = vmatprep.subr.mxu0 0.0
        %6855 = vmatpush2.msra.mxu0 0.0
        %6856 = vmatprep.subr.mxu0 0.0
        %6857 = vmatpush2.msra.mxu0 0.0
        %6858 = vmatprep.mubr.f32.mxu0 0.0
        %6859 = vmatmul.mubr.f32.gmra.mxu0 %v6792
        %v6860 = vpop.f32.mrf.mxu0
        %v6861 = vadd.f32 0.0, %v6860
        %v6862 = vpop.f32.mrf.mxu0
        %6863 = vdwg.mxu0
        %v6865 = vrot.slane %v6861, 3
        %v6867 = vadd.f32 %v5417, %v6865
        %v6868 = vsub.f32 0.0, %v6867
        %v6869 = vmul.f32 %v6868, 1.442695
        %v6870 = vpow.pop %v6869
        %v6871 = vadd.f32 %v6870, 1.0
        %v6872 = vrcp.pop %v6871
        %v6873 = vtanh.pop %v6867
        %v6875 = vrot.slane %v6781, 7
        %v6877 = vmul.f32 %v6872, %v6875
        %6879 = vrot.lane.b32.xlu0 %v6873, 64
        %v6880 = vpop.permute.xlu0 %6879
        %v6882 = vmul.f32 %v6872, %v6880
        %6884 = vrot.lane.b32.xlu0 %v6882, 32
        %v6885 = vpop.permute.xlu0 %6884
        %v6887 = vadd.f32 %v6877, %v6885
        %v6888 = vtanh.pop %v6887
        %6890 = vrot.lane.b32.xlu0 %v6888, 64
        %v6891 = vpop.permute.xlu0 %6890
        %v6893 = vmul.f32 %v6872, %v6891
        %v6895 = vrot.slane %v6893, 5
        %6896 = vrot.lane.b32.xlu0 %v6895, 32
        %v6897 = vpop.permute.xlu0 %6896
        %v6898 = vsel %vm5222, %v6897, 0
        %6900 = vmatprep.subr.mxu0 0.0
        %6901 = vmatpush1.msra.mxu0 0.0
        %6902 = vmatprep.subr.mxu0 0.0
        %6903 = vmatpush1.msra.mxu0 0.0
        %6904 = vmatprep.subr.mxu0 0.0
        %6905 = vmatpush1.msra.mxu0 0.0
        %6906 = vmatprep.subr.mxu0 0.0
        %6907 = vmatpush1.msra.mxu0 0.0
        %6908 = vmatprep.subr.mxu0 0.0
        %6909 = vmatpush1.msra.mxu0 0.0
        %6910 = vmatprep.subr.mxu0 0.0
        %6911 = vmatpush1.msra.mxu0 0.0
        %6912 = vmatprep.subr.mxu0 0.0
        %6913 = vmatpush1.msra.mxu0 0.0
        %6914 = vmatprep.subr.mxu0 0.0
        %6915 = vmatpush1.msra.mxu0 0.0
        %6916 = vmatprep.subr.mxu0 0.0
        %6917 = vmatpush1.msra.mxu0 0.0
        %6918 = vmatprep.subr.mxu0 0.0
        %6919 = vmatpush1.msra.mxu0 0.0
        %6920 = vmatprep.subr.mxu0 0.0
        %6921 = vmatpush1.msra.mxu0 0.0
        %6922 = vmatprep.subr.mxu0 0.0
        %6923 = vmatpush1.msra.mxu0 0.0
        %6924 = vmatprep.subr.mxu0 0.0
        %6925 = vmatpush1.msra.mxu0 %v5423
        %6926 = vmatprep.subr.mxu0 0.0
        %6927 = vmatpush1.msra.mxu0 %v5422
        %6928 = vmatprep.subr.mxu0 0.0
        %6929 = vmatpush1.msra.mxu0 %v5421
        %6930 = vmatprep.subr.mxu0 0.0
        %6931 = vmatpush1.msra.mxu0 %v5420
        %6932 = vmatprep.subr.mxu0 0.0
        %6933 = vmatpush2.msra.mxu0 0.0
        %6934 = vmatprep.subr.mxu0 0.0
        %6935 = vmatpush2.msra.mxu0 0.0
        %6936 = vmatprep.subr.mxu0 0.0
        %6937 = vmatpush2.msra.mxu0 0.0
        %6938 = vmatprep.subr.mxu0 0.0
        %6939 = vmatpush2.msra.mxu0 0.0
        %6940 = vmatprep.subr.mxu0 0.0
        %6941 = vmatpush2.msra.mxu0 0.0
        %6942 = vmatprep.subr.mxu0 0.0
        %6943 = vmatpush2.msra.mxu0 0.0
        %6944 = vmatprep.subr.mxu0 0.0
        %6945 = vmatpush2.msra.mxu0 0.0
        %6946 = vmatprep.subr.mxu0 0.0
        %6947 = vmatpush2.msra.mxu0 0.0
        %6948 = vmatprep.subr.mxu0 0.0
        %6949 = vmatpush2.msra.mxu0 0.0
        %6950 = vmatprep.subr.mxu0 0.0
        %6951 = vmatpush2.msra.mxu0 0.0
        %6952 = vmatprep.subr.mxu0 0.0
        %6953 = vmatpush2.msra.mxu0 0.0
        %6954 = vmatprep.subr.mxu0 0.0
        %6955 = vmatpush2.msra.mxu0 0.0
        %6956 = vmatprep.subr.mxu0 0.0
        %6957 = vmatpush2.msra.mxu0 0.0
        %6958 = vmatprep.subr.mxu0 0.0
        %6959 = vmatpush2.msra.mxu0 0.0
        %6960 = vmatprep.subr.mxu0 0.0
        %6961 = vmatpush2.msra.mxu0 0.0
        %6962 = vmatprep.subr.mxu0 0.0
        %6963 = vmatpush2.msra.mxu0 0.0
        %6964 = vmatprep.mubr.f32.mxu0 0.0
        %6965 = vmatmul.mubr.f32.gmra.mxu0 %v6898
        %v6966 = vpop.f32.mrf.mxu0
        %v6967 = vadd.f32 0.0, %v6966
        %v6968 = vpop.f32.mrf.mxu0
        %6969 = vdwg.mxu0
        %v6971 = vrot.slane %v6967, 2
        %v6973 = vadd.f32 %v5417, %v6971
        %v6974 = vsub.f32 0.0, %v6973
        %v6975 = vmul.f32 %v6974, 1.442695
        %v6976 = vpow.pop %v6975
        %v6977 = vadd.f32 %v6976, 1.0
        %v6978 = vrcp.pop %v6977
        %v6979 = vtanh.pop %v6973
        %v6981 = vrot.slane %v6887, 7
        %v6983 = vmul.f32 %v6978, %v6981
        %6985 = vrot.lane.b32.xlu0 %v6979, 64
        %v6986 = vpop.permute.xlu0 %6985
        %v6988 = vmul.f32 %v6978, %v6986
        %6990 = vrot.lane.b32.xlu0 %v6988, 32
        %v6991 = vpop.permute.xlu0 %6990
        %v6993 = vadd.f32 %v6983, %v6991
        %v6994 = vtanh.pop %v6993
        %6996 = vrot.lane.b32.xlu0 %v6994, 64
        %v6997 = vpop.permute.xlu0 %6996
        %v6999 = vmul.f32 %v6978, %v6997
        %v7001 = vrot.slane %v6999, 6
        %7002 = vrot.lane.b32.xlu0 %v7001, 32
        %v7003 = vpop.permute.xlu0 %7002
        %v7004 = vsel %vm5222, %v7003, 0
        %7006 = vmatprep.subr.mxu0 0.0
        %7007 = vmatpush1.msra.mxu0 0.0
        %7008 = vmatprep.subr.mxu0 0.0
        %7009 = vmatpush1.msra.mxu0 0.0
        %7010 = vmatprep.subr.mxu0 0.0
        %7011 = vmatpush1.msra.mxu0 0.0
        %7012 = vmatprep.subr.mxu0 0.0
        %7013 = vmatpush1.msra.mxu0 0.0
        %7014 = vmatprep.subr.mxu0 0.0
        %7015 = vmatpush1.msra.mxu0 0.0
        %7016 = vmatprep.subr.mxu0 0.0
        %7017 = vmatpush1.msra.mxu0 0.0
        %7018 = vmatprep.subr.mxu0 0.0
        %7019 = vmatpush1.msra.mxu0 0.0
        %7020 = vmatprep.subr.mxu0 0.0
        %7021 = vmatpush1.msra.mxu0 0.0
        %7022 = vmatprep.subr.mxu0 0.0
        %7023 = vmatpush1.msra.mxu0 0.0
        %7024 = vmatprep.subr.mxu0 0.0
        %7025 = vmatpush1.msra.mxu0 0.0
        %7026 = vmatprep.subr.mxu0 0.0
        %7027 = vmatpush1.msra.mxu0 0.0
        %7028 = vmatprep.subr.mxu0 0.0
        %7029 = vmatpush1.msra.mxu0 0.0
        %7030 = vmatprep.subr.mxu0 0.0
        %7031 = vmatpush1.msra.mxu0 %v5423
        %7032 = vmatprep.subr.mxu0 0.0
        %7033 = vmatpush1.msra.mxu0 %v5422
        %7034 = vmatprep.subr.mxu0 0.0
        %7035 = vmatpush1.msra.mxu0 %v5421
        %7036 = vmatprep.subr.mxu0 0.0
        %7037 = vmatpush1.msra.mxu0 %v5420
        %7038 = vmatprep.subr.mxu0 0.0
        %7039 = vmatpush2.msra.mxu0 0.0
        %7040 = vmatprep.subr.mxu0 0.0
        %7041 = vmatpush2.msra.mxu0 0.0
        %7042 = vmatprep.subr.mxu0 0.0
        %7043 = vmatpush2.msra.mxu0 0.0
        %7044 = vmatprep.subr.mxu0 0.0
        %7045 = vmatpush2.msra.mxu0 0.0
        %7046 = vmatprep.subr.mxu0 0.0
        %7047 = vmatpush2.msra.mxu0 0.0
        %7048 = vmatprep.subr.mxu0 0.0
        %7049 = vmatpush2.msra.mxu0 0.0
        %7050 = vmatprep.subr.mxu0 0.0
        %7051 = vmatpush2.msra.mxu0 0.0
        %7052 = vmatprep.subr.mxu0 0.0
        %7053 = vmatpush2.msra.mxu0 0.0
        %7054 = vmatprep.subr.mxu0 0.0
        %7055 = vmatpush2.msra.mxu0 0.0
        %7056 = vmatprep.subr.mxu0 0.0
        %7057 = vmatpush2.msra.mxu0 0.0
        %7058 = vmatprep.subr.mxu0 0.0
        %7059 = vmatpush2.msra.mxu0 0.0
        %7060 = vmatprep.subr.mxu0 0.0
        %7061 = vmatpush2.msra.mxu0 0.0
        %7062 = vmatprep.subr.mxu0 0.0
        %7063 = vmatpush2.msra.mxu0 0.0
        %7064 = vmatprep.subr.mxu0 0.0
        %7065 = vmatpush2.msra.mxu0 0.0
        %7066 = vmatprep.subr.mxu0 0.0
        %7067 = vmatpush2.msra.mxu0 0.0
        %7068 = vmatprep.subr.mxu0 0.0
        %7069 = vmatpush2.msra.mxu0 0.0
        %7070 = vmatprep.mubr.f32.mxu0 0.0
        %7071 = vmatmul.mubr.f32.gmra.mxu0 %v7004
        %v7072 = vpop.f32.mrf.mxu0
        %v7073 = vadd.f32 0.0, %v7072
        %v7074 = vpop.f32.mrf.mxu0
        %7075 = vdwg.mxu0
        %v7077 = vrot.slane %v7073, 1
        %v7079 = vadd.f32 %v5417, %v7077
        %v7080 = vsub.f32 0.0, %v7079
        %v7081 = vmul.f32 %v7080, 1.442695
        %v7082 = vpow.pop %v7081
        %v7083 = vadd.f32 %v7082, 1.0
        %v7084 = vrcp.pop %v7083
        %v7085 = vtanh.pop %v7079
        %v7087 = vrot.slane %v6993, 7
        %v7089 = vmul.f32 %v7084, %v7087
        %7091 = vrot.lane.b32.xlu0 %v7085, 64
        %v7092 = vpop.permute.xlu0 %7091
        %v7094 = vmul.f32 %v7084, %v7092
        %7096 = vrot.lane.b32.xlu0 %v7094, 32
        %v7097 = vpop.permute.xlu0 %7096
        %v7099 = vadd.f32 %v7089, %v7097
        %v7100 = vtanh.pop %v7099
        %7102 = vrot.lane.b32.xlu0 %v7100, 64
        %v7103 = vpop.permute.xlu0 %7102
        %v7105 = vmul.f32 %v7084, %v7103
        %v7106 = vld [vmem:[%s8] sm:$0xff]
        %v7107 = vld [vmem:[%s8 + $0x8] sm:$0xff]
        %v7108 = vld [vmem:[%s8 + $0x10] sm:$0xff]
        %v7109 = vld [vmem:[%s8 + $0x18] sm:$0xff]
        %v7110 = vld [vmem:[%s8 + $0x20] sm:$0xff]
        %v7111 = vld [vmem:[%s8 + $0x28] sm:$0xff]
        %v7112 = vld [vmem:[%s8 + $0x30] sm:$0xff]
        %v7113 = vld [vmem:[%s8 + $0x38] sm:$0xff]
        %v7114 = vld [vmem:[%s8 + $0x40] sm:$0xff]
        %v7115 = vld [vmem:[%s8 + $0x48] sm:$0xff]
        %v7116 = vld [vmem:[%s8 + $0x50] sm:$0xff]
        %v7117 = vld [vmem:[%s8 + $0x58] sm:$0xff]
        %v7118 = vld [vmem:[%s8 + $0x60] sm:$0xff]
        %v7119 = vld [vmem:[%s8 + $0x68] sm:$0xff]
        %v7120 = vld [vmem:[%s8 + $0x70] sm:$0xff]
        %v7121 = vld [vmem:[%s8 + $0x78] sm:$0xff]
        %v7122 = vld [vmem:[%s10] sm:$0x1]
        %v7124 = vrot.slane %v5321, 7
        %7126 = vmatprep.subr.mxu0 0.0
        %7127 = vmatpush1.msra.mxu0 %v7121
        %7128 = vmatprep.subr.mxu0 0.0
        %7129 = vmatpush1.msra.mxu0 %v7120
        %7130 = vmatprep.subr.mxu0 0.0
        %7131 = vmatpush1.msra.mxu0 %v7119
        %7132 = vmatprep.subr.mxu0 0.0
        %7133 = vmatpush1.msra.mxu0 %v7118
        %7134 = vmatprep.subr.mxu0 0.0
        %7135 = vmatpush1.msra.mxu0 %v7117
        %7136 = vmatprep.subr.mxu0 0.0
        %7137 = vmatpush1.msra.mxu0 %v7116
        %7138 = vmatprep.subr.mxu0 0.0
        %7139 = vmatpush1.msra.mxu0 %v7115
        %7140 = vmatprep.subr.mxu0 0.0
        %7141 = vmatpush1.msra.mxu0 %v7114
        %7142 = vmatprep.subr.mxu0 0.0
        %7143 = vmatpush1.msra.mxu0 %v7113
        %7144 = vmatprep.subr.mxu0 0.0
        %7145 = vmatpush1.msra.mxu0 %v7112
        %7146 = vmatprep.subr.mxu0 0.0
        %7147 = vmatpush1.msra.mxu0 %v7111
        %7148 = vmatprep.subr.mxu0 0.0
        %7149 = vmatpush1.msra.mxu0 %v7110
        %7150 = vmatprep.subr.mxu0 0.0
        %7151 = vmatpush1.msra.mxu0 %v7109
        %7152 = vmatprep.subr.mxu0 0.0
        %7153 = vmatpush1.msra.mxu0 %v7108
        %7154 = vmatprep.subr.mxu0 0.0
        %7155 = vmatpush1.msra.mxu0 %v7107
        %7156 = vmatprep.subr.mxu0 0.0
        %7157 = vmatpush1.msra.mxu0 %v7106
        %7158 = vmatprep.subr.mxu0 0.0
        %7159 = vmatpush2.msra.mxu0 0.0
        %7160 = vmatprep.subr.mxu0 0.0
        %7161 = vmatpush2.msra.mxu0 0.0
        %7162 = vmatprep.subr.mxu0 0.0
        %7163 = vmatpush2.msra.mxu0 0.0
        %7164 = vmatprep.subr.mxu0 0.0
        %7165 = vmatpush2.msra.mxu0 0.0
        %7166 = vmatprep.subr.mxu0 0.0
        %7167 = vmatpush2.msra.mxu0 0.0
        %7168 = vmatprep.subr.mxu0 0.0
        %7169 = vmatpush2.msra.mxu0 0.0
        %7170 = vmatprep.subr.mxu0 0.0
        %7171 = vmatpush2.msra.mxu0 0.0
        %7172 = vmatprep.subr.mxu0 0.0
        %7173 = vmatpush2.msra.mxu0 0.0
        %7174 = vmatprep.subr.mxu0 0.0
        %7175 = vmatpush2.msra.mxu0 0.0
        %7176 = vmatprep.subr.mxu0 0.0
        %7177 = vmatpush2.msra.mxu0 0.0
        %7178 = vmatprep.subr.mxu0 0.0
        %7179 = vmatpush2.msra.mxu0 0.0
        %7180 = vmatprep.subr.mxu0 0.0
        %7181 = vmatpush2.msra.mxu0 0.0
        %7182 = vmatprep.subr.mxu0 0.0
        %7183 = vmatpush2.msra.mxu0 0.0
        %7184 = vmatprep.subr.mxu0 0.0
        %7185 = vmatpush2.msra.mxu0 0.0
        %7186 = vmatprep.subr.mxu0 0.0
        %7187 = vmatpush2.msra.mxu0 0.0
        %7188 = vmatprep.subr.mxu0 0.0
        %7189 = vmatpush2.msra.mxu0 0.0
        %7190 = vmatprep.mubr.f32.mxu0 0.0
        %7191 = vmatmul.mubr.f32.gmra.mxu0 %v7124
        %v7192 = vpop.f32.mrf.mxu0
        %v7193 = vadd.f32 %v7122, %v7192
        %v7194 = vpop.f32.mrf.mxu0
        %7195 = vdwg.mxu0
        %v7196 = vsub.f32 0.0, %v7193
        %v7197 = vmul.f32 %v7196, 1.442695
        %v7198 = vpow.pop %v7197
        %v7199 = vadd.f32 %v7198, 1.0
        %v7200 = vrcp.pop %v7199
        %v7201 = vtanh.pop %v7193
        %7203 = vrot.lane.b32.xlu0 %v7201, 64
        %v7204 = vpop.permute.xlu0 %7203
        %v7206 = vmul.f32 %v7200, %v7204
        %v7207 = vtanh.pop %v7206
        %7209 = vrot.lane.b32.xlu0 %v7207, 96
        %v7210 = vpop.permute.xlu0 %7209
        %v7212 = vmul.f32 %v7200, %v7210
        %v7213 = vld [vmem:[%s11] sm:$0xff]
        %v7214 = vld [vmem:[%s11 + $0x8] sm:$0xff]
        %v7215 = vld [vmem:[%s11 + $0x10] sm:$0xff]
        %v7216 = vld [vmem:[%s11 + $0x18] sm:$0xff]
        %v7217 = vld [vmem:[%s12] sm:$0xff]
        %v7218 = vld [vmem:[%s12 + $0x8] sm:$0xff]
        %v7219 = vld [vmem:[%s12 + $0x10] sm:$0xff]
        %v7220 = vld [vmem:[%s12 + $0x18] sm:$0xff]
        %7222 = vrot.lane.b32.xlu0 %v7212, 32
        %v7223 = vpop.permute.xlu0 %7222
        %v7224 = vsel %vm5222, %v7223, 0
        %7226 = vmatprep.subr.mxu0 0.0
        %7227 = vmatpush1.msra.mxu0 0.0
        %7228 = vmatprep.subr.mxu0 0.0
        %7229 = vmatpush1.msra.mxu0 0.0
        %7230 = vmatprep.subr.mxu0 0.0
        %7231 = vmatpush1.msra.mxu0 0.0
        %7232 = vmatprep.subr.mxu0 0.0
        %7233 = vmatpush1.msra.mxu0 0.0
        %7234 = vmatprep.subr.mxu0 0.0
        %7235 = vmatpush1.msra.mxu0 0.0
        %7236 = vmatprep.subr.mxu0 0.0
        %7237 = vmatpush1.msra.mxu0 0.0
        %7238 = vmatprep.subr.mxu0 0.0
        %7239 = vmatpush1.msra.mxu0 0.0
        %7240 = vmatprep.subr.mxu0 0.0
        %7241 = vmatpush1.msra.mxu0 0.0
        %7242 = vmatprep.subr.mxu0 0.0
        %7243 = vmatpush1.msra.mxu0 0.0
        %7244 = vmatprep.subr.mxu0 0.0
        %7245 = vmatpush1.msra.mxu0 0.0
        %7246 = vmatprep.subr.mxu0 0.0
        %7247 = vmatpush1.msra.mxu0 0.0
        %7248 = vmatprep.subr.mxu0 0.0
        %7249 = vmatpush1.msra.mxu0 0.0
        %7250 = vmatprep.subr.mxu0 0.0
        %7251 = vmatpush1.msra.mxu0 %v7220
        %7252 = vmatprep.subr.mxu0 0.0
        %7253 = vmatpush1.msra.mxu0 %v7219
        %7254 = vmatprep.subr.mxu0 0.0
        %7255 = vmatpush1.msra.mxu0 %v7218
        %7256 = vmatprep.subr.mxu0 0.0
        %7257 = vmatpush1.msra.mxu0 %v7217
        %7258 = vmatprep.subr.mxu0 0.0
        %7259 = vmatpush2.msra.mxu0 0.0
        %7260 = vmatprep.subr.mxu0 0.0
        %7261 = vmatpush2.msra.mxu0 0.0
        %7262 = vmatprep.subr.mxu0 0.0
        %7263 = vmatpush2.msra.mxu0 0.0
        %7264 = vmatprep.subr.mxu0 0.0
        %7265 = vmatpush2.msra.mxu0 0.0
        %7266 = vmatprep.subr.mxu0 0.0
        %7267 = vmatpush2.msra.mxu0 0.0
        %7268 = vmatprep.subr.mxu0 0.0
        %7269 = vmatpush2.msra.mxu0 0.0
        %7270 = vmatprep.subr.mxu0 0.0
        %7271 = vmatpush2.msra.mxu0 0.0
        %7272 = vmatprep.subr.mxu0 0.0
        %7273 = vmatpush2.msra.mxu0 0.0
        %7274 = vmatprep.subr.mxu0 0.0
        %7275 = vmatpush2.msra.mxu0 0.0
        %7276 = vmatprep.subr.mxu0 0.0
        %7277 = vmatpush2.msra.mxu0 0.0
        %7278 = vmatprep.subr.mxu0 0.0
        %7279 = vmatpush2.msra.mxu0 0.0
        %7280 = vmatprep.subr.mxu0 0.0
        %7281 = vmatpush2.msra.mxu0 0.0
        %7282 = vmatprep.subr.mxu0 0.0
        %7283 = vmatpush2.msra.mxu0 0.0
        %7284 = vmatprep.subr.mxu0 0.0
        %7285 = vmatpush2.msra.mxu0 0.0
        %7286 = vmatprep.subr.mxu0 0.0
        %7287 = vmatpush2.msra.mxu0 0.0
        %7288 = vmatprep.subr.mxu0 0.0
        %7289 = vmatpush2.msra.mxu0 0.0
        %7290 = vmatprep.mubr.f32.mxu0 0.0
        %7291 = vmatmul.mubr.f32.gmra.mxu0 %v7224
        %v7292 = vpop.f32.mrf.mxu0
        %v7293 = vadd.f32 0.0, %v7292
        %v7294 = vpop.f32.mrf.mxu0
        %7295 = vdwg.mxu0
        %v7297 = vrot.slane %v7105, 7
        %7298 = vrot.lane.b32.xlu0 %v7297, 32
        %v7299 = vpop.permute.xlu0 %7298
        %v7300 = vsel %vm5222, %v7299, 0
        %7302 = vmatprep.subr.mxu0 0.0
        %7303 = vmatpush1.msra.mxu0 0.0
        %7304 = vmatprep.subr.mxu0 0.0
        %7305 = vmatpush1.msra.mxu0 0.0
        %7306 = vmatprep.subr.mxu0 0.0
        %7307 = vmatpush1.msra.mxu0 0.0
        %7308 = vmatprep.subr.mxu0 0.0
        %7309 = vmatpush1.msra.mxu0 0.0
        %7310 = vmatprep.subr.mxu0 0.0
        %7311 = vmatpush1.msra.mxu0 0.0
        %7312 = vmatprep.subr.mxu0 0.0
        %7313 = vmatpush1.msra.mxu0 0.0
        %7314 = vmatprep.subr.mxu0 0.0
        %7315 = vmatpush1.msra.mxu0 0.0
        %7316 = vmatprep.subr.mxu0 0.0
        %7317 = vmatpush1.msra.mxu0 0.0
        %7318 = vmatprep.subr.mxu0 0.0
        %7319 = vmatpush1.msra.mxu0 0.0
        %7320 = vmatprep.subr.mxu0 0.0
        %7321 = vmatpush1.msra.mxu0 0.0
        %7322 = vmatprep.subr.mxu0 0.0
        %7323 = vmatpush1.msra.mxu0 0.0
        %7324 = vmatprep.subr.mxu0 0.0
        %7325 = vmatpush1.msra.mxu0 0.0
        %7326 = vmatprep.subr.mxu0 0.0
        %7327 = vmatpush1.msra.mxu0 %v7216
        %7328 = vmatprep.subr.mxu0 0.0
        %7329 = vmatpush1.msra.mxu0 %v7215
        %7330 = vmatprep.subr.mxu0 0.0
        %7331 = vmatpush1.msra.mxu0 %v7214
        %7332 = vmatprep.subr.mxu0 0.0
        %7333 = vmatpush1.msra.mxu0 %v7213
        %7334 = vmatprep.subr.mxu0 0.0
        %7335 = vmatpush2.msra.mxu0 0.0
        %7336 = vmatprep.subr.mxu0 0.0
        %7337 = vmatpush2.msra.mxu0 0.0
        %7338 = vmatprep.subr.mxu0 0.0
        %7339 = vmatpush2.msra.mxu0 0.0
        %7340 = vmatprep.subr.mxu0 0.0
        %7341 = vmatpush2.msra.mxu0 0.0
        %7342 = vmatprep.subr.mxu0 0.0
        %7343 = vmatpush2.msra.mxu0 0.0
        %7344 = vmatprep.subr.mxu0 0.0
        %7345 = vmatpush2.msra.mxu0 0.0
        %7346 = vmatprep.subr.mxu0 0.0
        %7347 = vmatpush2.msra.mxu0 0.0
        %7348 = vmatprep.subr.mxu0 0.0
        %7349 = vmatpush2.msra.mxu0 0.0
        %7350 = vmatprep.subr.mxu0 0.0
        %7351 = vmatpush2.msra.mxu0 0.0
        %7352 = vmatprep.subr.mxu0 0.0
        %7353 = vmatpush2.msra.mxu0 0.0
        %7354 = vmatprep.subr.mxu0 0.0
        %7355 = vmatpush2.msra.mxu0 0.0
        %7356 = vmatprep.subr.mxu0 0.0
        %7357 = vmatpush2.msra.mxu0 0.0
        %7358 = vmatprep.subr.mxu0 0.0
        %7359 = vmatpush2.msra.mxu0 0.0
        %7360 = vmatprep.subr.mxu0 0.0
        %7361 = vmatpush2.msra.mxu0 0.0
        %7362 = vmatprep.subr.mxu0 0.0
        %7363 = vmatpush2.msra.mxu0 0.0
        %7364 = vmatprep.subr.mxu0 0.0
        %7365 = vmatpush2.msra.mxu0 0.0
        %7366 = vmatprep.mubr.f32.mxu0 0.0
        %7367 = vmatmul.mubr.f32.gmra.mxu0 %v7300
        %v7368 = vpop.f32.mrf.mxu0
        %v7369 = vadd.f32 %v7293, %v7368
        %v7370 = vpop.f32.mrf.mxu0
        %7371 = vdwg.mxu0
        %v7372 = vld [vmem:[%s13] sm:$0x1]
        %v7373 = vadd.f32 %v7369, %v7372
        %vm7374 = vcmask 57344
        %7375 = vst.msk [vmem:[%s459] sm:$0x1] %vm7374, %v7373
        %s7376 = sand.u32 %s335, 1
        %s7377 = scalar_lea.sflag [#allocation5], %s7376
        %s7378 = sand.u32 %s335, 1
        %s7379 = scalar_lea.vmem [#allocation4], %s7378
        // Predicated region
        $region77: #{crnn_forward.1} parent=75 // pred_check
          %p7380 = pneg %p345
        $region78: #{crnn_forward.1} parent=75 // pred_check_branch
          %7382 = sbr.rel (%p7380) target = $region80
        $region79: #{crnn_forward.1} parent=75 // pred_region
          %s7384 = ssub.s32 16, 16
          %7385 = vsyncadd %s7377, %s7384
          %s7386 = smul.addr %s28, 16
          %s7387 = scalar_lea.hbm %s14, %s7386
          %s7389 = sshll.u32 %s7379, 4
          %s7390 = int_to_ptr.vmem [resolvable:$true] %s7389
          %7392 = dma.vmem_to_hbm [thread:$0]  %s7390, 16, %s7387, %s7377
        $region80: #{crnn_forward.1} parent=75 // pred_fallthru
          _
      $region76: #{crnn_forward.1} parent=5 // pred_fallthru
        _
      %p7393 = scmp.le.s32.totalorder 2, %s23
      // Predicated region
      $region81: #{crnn_forward.1} parent=5 // pred_check
        %p7394 = pneg %p7393
      $region82: #{crnn_forward.1} parent=5 // pred_check_branch
        %7396 = sbr.rel (%p7394) target = $region84
      $region83: #{crnn_forward.1} parent=5 // pred_region
        %s7397 = ssub.s32 %s23, 2
        // Predicated region
        $region85: #{crnn_forward.1} parent=83 // pred_check
          %p7398 = pneg %p351
        $region86: #{crnn_forward.1} parent=83 // pred_check_branch
          %7400 = sbr.rel (%p7398) target = $region88
        $region87: #{crnn_forward.1} parent=83 // pred_region
          %s7401 = sand.u32 %s336, 1
          %s7402 = scalar_lea.sflag [#allocation5], %s7401
          %s7403 = sand.u32 %s336, 1
          %s7404 = scalar_lea.vmem [#allocation4], %s7403
          %7405 = dma.done %s7402, 16
        $region88: #{crnn_forward.1} parent=83 // pred_fallthru
          _
      $region84: #{crnn_forward.1} parent=5 // pred_fallthru
        _
    $region6: #{crnn_forward.1} parent=1 // loop_footer
      %s27 = sadd.s32 1, %s23
    $region7: #{crnn_forward.1} parent=1 // loop_footer_branch
      %22 = sbr.rel target = $region3
    $region8: #{crnn_forward.1} parent=1 // loop_exit
      _
    %7406 = vsyncpa [#allocation5], 1
    %s7407 = scalar_lea.sflag [#allocation5], 1
    %7408 = vsyncpa %s7407, 1

</llo_original>
